<compile_context>
chip_gen: v6e
topology: v6e:2x2x1
jax: 0.10.0
libtpu: 0.0.40
codegen_flags: <defaults>
</compile_context>

<pallas_src>
import functools
import math

import jax
import jax.numpy as jnp
from jax import lax
from jax.experimental import pallas as pl
from jax.experimental.pallas import tpu as pltpu


# --------------------------------------------------------------------------
# In-kernel building blocks (traced inside the Pallas kernel)
# --------------------------------------------------------------------------

def _softmax_lastdim(s):
    s = s - jnp.max(s, axis=-1, keepdims=True)
    e = jnp.exp(s)
    return e * pl.reciprocal(jnp.sum(e, axis=-1, keepdims=True), approx=True)


def _layernorm(x, gamma, beta, eps):
    mu = jnp.mean(x, axis=-1, keepdims=True)
    var = jnp.mean(jnp.square(x - mu), axis=-1, keepdims=True)
    return (x - mu) * lax.rsqrt(var + eps) * gamma + beta


def _mlp(x, w1, b1, w2, b2, mxu_dtype):
    h = jnp.dot(x.astype(mxu_dtype), w1, preferred_element_type=jnp.float32) + b1
    # TODO(synk): torch nn.GELU() is exact (erf); tanh-approximate GELU used for a
    # guaranteed-safe Mosaic lowering (difference <= ~1e-3).
    h = jax.nn.gelu(h, approximate=True)
    return jnp.dot(h.astype(mxu_dtype), w2, preferred_element_type=jnp.float32) + b2


def _self_attention(x_win, wqkv, bqkv, wo, bo, *, n_heads, head_dim, mxu_dtype):
    """Per-window MHA over all windows at once.

    x_win : (W, S, D) f32.  wqkv: (D, 3D) [Wq*scale | Wk | Wv] bf16, bqkv: (1, 3D) f32,
    wo: (D, D) bf16, bo: (1, D) f32.  Returns (W*S, D) f32.
    Per-token projections run on the flattened (W*S, D) tile; only the tiny S x S
    score and P@V dots are done per (window, head), batched over windows.
    """
    W, S, D = x_win.shape
    hd = head_dim
    N = W * S
    xf = x_win.reshape(N, D)

    qkv = jnp.dot(xf.astype(mxu_dtype), wqkv,
                  preferred_element_type=jnp.float32) + bqkv            # (N, 3D)

    dn_qk = (((2,), (2,)), ((0,), (0,)))   # (W,S,hd) x (W,T,hd) -> (W,S,T)
    dn_pv = (((2,), (1,)), ((0,), (0,)))   # (W,S,T)  x (W,T,hd) -> (W,S,hd)

    ctx_heads = []
    for h in range(n_heads):               # static unroll; tiny per-head dots
        q = qkv[:, h * hd:(h + 1) * hd].reshape(W, S, hd)               # scale folded in
        k = qkv[:, D + h * hd: D + (h + 1) * hd].reshape(W, S, hd)
        v = qkv[:, 2 * D + h * hd: 2 * D + (h + 1) * hd].reshape(W, S, hd)
        s = lax.dot_general(q.astype(mxu_dtype), k.astype(mxu_dtype), dn_qk,
                            preferred_element_type=jnp.float32)         # (W, S, S)
        p = _softmax_lastdim(s)
        c = lax.dot_general(p.astype(mxu_dtype), v.astype(mxu_dtype), dn_pv,
                            preferred_element_type=jnp.float32)         # (W, S, hd)
        ctx_heads.append(c.reshape(N, hd))

    ctx = jnp.concatenate(ctx_heads, axis=-1)                           # (N, D)
    return jnp.dot(ctx.astype(mxu_dtype), wo,
                   preferred_element_type=jnp.float32) + bo             # (N, D)


def _cross_project(z, wqkv, bqkv, mxu_dtype):
    """Project one (S, D) window once; reused for both cross-attention directions."""
    return jnp.dot(z.astype(mxu_dtype), wqkv,
                   preferred_element_type=jnp.float32) + bqkv           # (S, 3D)


def _cross_attend(qkv_q, qkv_kv, wo, bo, *, n_heads, head_dim, d_model, mxu_dtype):
    """Attention with queries from qkv_q and keys/values from qkv_kv (both (S, 3D))."""
    D, hd = d_model, head_dim
    dn_nt = (((1,), (1,)), ((), ()))       # (S,hd) x (T,hd) -> (S,T)
    ctx = []
    for h in range(n_heads):
        q = qkv_q[:, h * hd:(h + 1) * hd]
        k = qkv_kv[:, D + h * hd: D + (h + 1) * hd]
        v = qkv_kv[:, 2 * D + h * hd: 2 * D + (h + 1) * hd]
        s = lax.dot_general(q.astype(mxu_dtype), k.astype(mxu_dtype), dn_nt,
                            preferred_element_type=jnp.float32)         # (S, T)
        p = _softmax_lastdim(s)
        ctx.append(jnp.dot(p.astype(mxu_dtype), v.astype(mxu_dtype),
                           preferred_element_type=jnp.float32))         # (S, hd)
    ctx = jnp.concatenate(ctx, axis=-1)                                 # (S, D)
    return jnp.dot(ctx.astype(mxu_dtype), wo,
                   preferred_element_type=jnp.float32) + bo


# --------------------------------------------------------------------------
# Fused Pallas kernel: one batch element per grid step
# --------------------------------------------------------------------------

def _mwin_layer_kernel(
        x_ref,
        # window self-attention (fused QKV, scale folded) + norm1 + MLP1 + norm2
        wqkv_w, bqkv_w, wo_w, bo_w,
        g1, be1, w11, b11, w12, b12, g2, be2,
        # cross attention (fused QKV, scale folded) + norm3 + MLP2 + norm4
        wqkv_c, bqkv_c, wo_c, bo_c,
        g3, be3, w21, b21, w22, b22, g4, be4,
        o_ref,
        *, win_num, n_heads, head_dim, eps, mxu_dtype):
    x = x_ref[0].astype(jnp.float32)                    # (W, S, D)
    W, S, D = x.shape
    N = W * S
    xf = x.reshape(N, D)

    # ---- stage 1: per-window self-attn + residual + norm1 + MLP1 + residual + norm2
    attn = _self_attention(x, wqkv_w[...], bqkv_w[...], wo_w[...], bo_w[...],
                           n_heads=n_heads, head_dim=head_dim, mxu_dtype=mxu_dtype)
    h = _layernorm(xf + attn, g1[...], be1[...], eps)
    h = h + _mlp(h, w11[...], b11[...], w12[...], b12[...], mxu_dtype)
    x2f = _layernorm(h, g2[...], be2[...], eps)         # norm2 output, (N, D)

    if win_num == 1:                                    # reference returns x2_in
        o_ref[0] = x2f.reshape(W, S, D).astype(o_ref.dtype)
        return

    x2 = x2f.reshape(W, S, D)

    # ---- stage 2: sequential cross-attention window merge (carry stays in vregs)
    project = functools.partial(_cross_project, wqkv=wqkv_c[...], bqkv=bqkv_c[...],
                                mxu_dtype=mxu_dtype)
    attend = functools.partial(_cross_attend, wo=wo_c[...], bo=bo_c[...],
                               n_heads=n_heads, head_dim=head_dim, d_model=D,
                               mxu_dtype=mxu_dtype)

    # TODO(synk): exact Winformer CrossAttention internals / return-value pairing are
    # not public; bidirectional scaled-dot-product cross attention with shared
    # Q/K/V/O weights is used, and the two branches mirror the reference's
    # (opposite) unpacking orders of the returned pair.
    if win_num == 2:
        mem, y = x2[0], x2[1]
        pm, py = project(mem), project(y)
        mem_ = attend(pm, py)          # mem queries -> y keys/values
        y_ = attend(py, pm)            # y queries   -> mem keys/values
        merged = [(mem + mem_) * 0.5, (y + y_) * 0.5]
    else:
        mem = x2[0]
        merged = [mem]                 # reference emits the original (pre-merge) window 0
        # static unroll (win_num small); use lax.fori_loop instead if win_num >> 8
        for ii in range(1, win_num):
            y = x2[ii]
            pm, py = project(mem), project(y)   # each input projected once per iter
            y_ = attend(pm, py)        # mirrors: y_, attn, mem_, _ = cross_attention(...)
            mem_ = attend(py, pm)
            mem = (mem + mem_) * 0.5
            merged.append((y + y_) * 0.5)

    merged_f = jnp.stack(merged, axis=0).reshape(N, D)

    # ---- residual + norm3 + MLP2 + residual + norm4
    h2 = _layernorm(x2f + merged_f, g3[...], be3[...], eps)
    h2 = h2 + _mlp(h2, w21[...], b21[...], w22[...], b22[...], mxu_dtype)
    out = _layernorm(h2, g4[...], be4[...], eps)
    o_ref[0] = out.reshape(W, S, D).astype(o_ref.dtype)


# --------------------------------------------------------------------------
# One-time weight preparation (hoisted out of the forward path)
# --------------------------------------------------------------------------

def prepare_params(params, *, n_heads, mxu_dtype=jnp.bfloat16):
    """Fuse Q/K/V weights, fold the softmax scale into Wq/bq, cast matmul weights."""
    d_model = params["norm1"][0].shape[-1]
    scale = 1.0 / math.sqrt(d_model // n_heads)

    def fuse_attn(p):
        wq, bq, wk, bk, wv, bv, wo, bo = p
        wqkv = jnp.concatenate([wq * scale, wk, wv], axis=1).astype(mxu_dtype)    # (D, 3D)
        bqkv = jnp.concatenate([bq * scale, bk, bv], axis=1).astype(jnp.float32)  # (1, 3D)
        return wqkv, bqkv, wo.astype(mxu_dtype), bo.astype(jnp.float32)

    def mlp(p):
        w1, b1, w2, b2 = p
        return (w1.astype(mxu_dtype), b1.astype(jnp.float32),
                w2.astype(mxu_dtype), b2.astype(jnp.float32))

    def ln(p):
        g, b = p
        return g.astype(jnp.float32), b.astype(jnp.float32)

    return {
        "win_attention": fuse_attn(params["win_attention"]),
        "cross_attention": fuse_attn(params["cross_attention"]),
        "norm1": ln(params["norm1"]), "norm2": ln(params["norm2"]),
        "norm3": ln(params["norm3"]), "norm4": ln(params["norm4"]),
        "mlp1": mlp(params["mlp1"]), "mlp2": mlp(params["mlp2"]),
    }


# --------------------------------------------------------------------------
# MWinAttentionLayer forward (single fused pallas_call)
# --------------------------------------------------------------------------

def mwin_attention_layer_forward(x, prepared, *, n_heads, eps=1e-5,
                                 mxu_dtype=jnp.bfloat16):
    B, win_num, win_size, d_model = x.shape
    head_dim = d_model // n_heads

    wa_wqkv, wa_bqkv, wa_wo, wa_bo = prepared["win_attention"]
    ca_wqkv, ca_bqkv, ca_wo, ca_bo = prepared["cross_attention"]
    g1, b1 = prepared["norm1"]
    g2, b2 = prepared["norm2"]
    g3, b3 = prepared["norm3"]
    g4, b4 = prepared["norm4"]
    m1w1, m1b1, m1w2, m1b2 = prepared["mlp1"]
    m2w1, m2b1, m2w2, m2b2 = prepared["mlp2"]

    operands = (x,
                wa_wqkv, wa_bqkv, wa_wo, wa_bo,
                g1, b1, m1w1, m1b1, m1w2, m1b2, g2, b2,
                ca_wqkv, ca_bqkv, ca_wo, ca_bo,
                g3, b3, m2w1, m2b1, m2w2, m2b2, g4, b4)

    x_spec = pl.BlockSpec((1, win_num, win_size, d_model), lambda b: (b, 0, 0, 0))

    def const_spec(t):
        nd = t.ndim
        return pl.BlockSpec(tuple(t.shape), lambda b, _nd=nd: (0,) * _nd)

    in_specs = [x_spec] + [const_spec(t) for t in operands[1:]]

    kern = functools.partial(_mwin_layer_kernel, win_num=win_num, n_heads=n_heads,
                             head_dim=head_dim, eps=eps, mxu_dtype=mxu_dtype)

    return pl.pallas_call(
        kern,
        out_shape=jax.ShapeDtypeStruct((B, win_num, win_size, d_model), x.dtype),
        grid=(B,),                       # B >= 2 -> both v7x TensorCores get work
        in_specs=in_specs,
        out_specs=x_spec,
        compiler_params=pltpu.CompilerParams(dimension_semantics=("parallel",)),
    )(*operands)


# --------------------------------------------------------------------------
# Deterministic parameter init (synthetic weights, shapes from __init__)
# --------------------------------------------------------------------------

def init_params(key, d_model, d_ff):
    keys = iter(jax.random.split(key, 32))

    def linear(din, dout):
        w = jax.random.normal(next(keys), (din, dout), jnp.float32) / math.sqrt(din)
        b = jnp.zeros((1, dout), jnp.float32)
        return w, b

    def attn_params():
        p = []
        for _ in range(4):                           # Wq, Wk, Wv, Wo
            w, b = linear(d_model, d_model)
            p.extend([w, b])
        return tuple(p)

    def ln_params():
        return (jnp.ones((1, d_model), jnp.float32),
                jnp.zeros((1, d_model), jnp.float32))

    def mlp_params():
        w1, b1 = linear(d_model, d_ff)
        w2, b2 = linear(d_ff, d_model)
        return (w1, b1, w2, b2)

    return {
        "win_attention": attn_params(),
        "cross_attention": attn_params(),
        "norm1": ln_params(),
        "norm2": ln_params(),
        "norm3": ln_params(),
        "norm4": ln_params(),
        "mlp1": mlp_params(),
        "mlp2": mlp_params(),
    }


# --------------------------------------------------------------------------

if __name__ == "__main__":
    B, win_num, win_size, d_model, n_heads = 2, 4, 16, 32, 4
    d_ff = 4 * d_model

    key = jax.random.PRNGKey(0)
    pkey, xkey = jax.random.split(key)
    raw_params = init_params(pkey, d_model, d_ff)
    params = prepare_params(raw_params, n_heads=n_heads)   # one-time weight layout prep
    x = jax.random.normal(xkey, (B, win_num, win_size, d_model), jnp.float32)

    fwd = jax.jit(functools.partial(mwin_attention_layer_forward, n_heads=n_heads))
    out = fwd(x, params)
    jax.block_until_ready(out)

    assert out.shape == (B, win_num, win_size, d_model)
    assert out.dtype == jnp.float32
    assert bool(jnp.all(jnp.isfinite(out)))
    print("KERNEL_OK")
</pallas_src>

<mosaic_0001>
module attributes {stable_mosaic.version = 11 : i64} {
  func.func @_mwin_layer_kernel(%arg0: i32, %arg1: memref<1x4x16x32xf32, #tpu.memory_space<vmem>>, %arg2: memref<32x96xbf16, #tpu.memory_space<vmem>>, %arg3: memref<1x96xf32, #tpu.memory_space<vmem>>, %arg4: memref<32x32xbf16, #tpu.memory_space<vmem>>, %arg5: memref<1x32xf32, #tpu.memory_space<vmem>>, %arg6: memref<1x32xf32, #tpu.memory_space<vmem>>, %arg7: memref<1x32xf32, #tpu.memory_space<vmem>>, %arg8: memref<32x128xbf16, #tpu.memory_space<vmem>>, %arg9: memref<1x128xf32, #tpu.memory_space<vmem>>, %arg10: memref<128x32xbf16, #tpu.memory_space<vmem>>, %arg11: memref<1x32xf32, #tpu.memory_space<vmem>>, %arg12: memref<1x32xf32, #tpu.memory_space<vmem>>, %arg13: memref<1x32xf32, #tpu.memory_space<vmem>>, %arg14: memref<32x96xbf16, #tpu.memory_space<vmem>>, %arg15: memref<1x96xf32, #tpu.memory_space<vmem>>, %arg16: memref<32x32xbf16, #tpu.memory_space<vmem>>, %arg17: memref<1x32xf32, #tpu.memory_space<vmem>>, %arg18: memref<1x32xf32, #tpu.memory_space<vmem>>, %arg19: memref<1x32xf32, #tpu.memory_space<vmem>>, %arg20: memref<32x128xbf16, #tpu.memory_space<vmem>>, %arg21: memref<1x128xf32, #tpu.memory_space<vmem>>, %arg22: memref<128x32xbf16, #tpu.memory_space<vmem>>, %arg23: memref<1x32xf32, #tpu.memory_space<vmem>>, %arg24: memref<1x32xf32, #tpu.memory_space<vmem>>, %arg25: memref<1x32xf32, #tpu.memory_space<vmem>>, %arg26: memref<1x4x16x32xf32, #tpu.memory_space<vmem>>) attributes {dimension_semantics = [#tpu.dimension_semantics<parallel>], iteration_bounds = array<i64: 2>, scalar_prefetch = 0 : i64, scratch_operands = 0 : i64, tpu.core_type = #tpu.core_type<tc>, window_params = [{transform_indices = @transform_0, window_bounds = array<i64: 1, 4, 16, 32>}, {pipeline_mode = #tpu.pipeline_mode<synchronous>, transform_indices = @transform_1, window_bounds = array<i64: 32, 96>}, {pipeline_mode = #tpu.pipeline_mode<synchronous>, transform_indices = @transform_2, window_bounds = array<i64: 1, 96>}, {pipeline_mode = #tpu.pipeline_mode<synchronous>, transform_indices = @transform_3, window_bounds = array<i64: 32, 32>}, {pipeline_mode = #tpu.pipeline_mode<synchronous>, transform_indices = @transform_4, window_bounds = array<i64: 1, 32>}, {pipeline_mode = #tpu.pipeline_mode<synchronous>, transform_indices = @transform_5, window_bounds = array<i64: 1, 32>}, {pipeline_mode = #tpu.pipeline_mode<synchronous>, transform_indices = @transform_6, window_bounds = array<i64: 1, 32>}, {pipeline_mode = #tpu.pipeline_mode<synchronous>, transform_indices = @transform_7, window_bounds = array<i64: 32, 128>}, {pipeline_mode = #tpu.pipeline_mode<synchronous>, transform_indices = @transform_8, window_bounds = array<i64: 1, 128>}, {pipeline_mode = #tpu.pipeline_mode<synchronous>, transform_indices = @transform_9, window_bounds = array<i64: 128, 32>}, {pipeline_mode = #tpu.pipeline_mode<synchronous>, transform_indices = @transform_10, window_bounds = array<i64: 1, 32>}, {pipeline_mode = #tpu.pipeline_mode<synchronous>, transform_indices = @transform_11, window_bounds = array<i64: 1, 32>}, {pipeline_mode = #tpu.pipeline_mode<synchronous>, transform_indices = @transform_12, window_bounds = array<i64: 1, 32>}, {pipeline_mode = #tpu.pipeline_mode<synchronous>, transform_indices = @transform_13, window_bounds = array<i64: 32, 96>}, {pipeline_mode = #tpu.pipeline_mode<synchronous>, transform_indices = @transform_14, window_bounds = array<i64: 1, 96>}, {pipeline_mode = #tpu.pipeline_mode<synchronous>, transform_indices = @transform_15, window_bounds = array<i64: 32, 32>}, {pipeline_mode = #tpu.pipeline_mode<synchronous>, transform_indices = @transform_16, window_bounds = array<i64: 1, 32>}, {pipeline_mode = #tpu.pipeline_mode<synchronous>, transform_indices = @transform_17, window_bounds = array<i64: 1, 32>}, {pipeline_mode = #tpu.pipeline_mode<synchronous>, transform_indices = @transform_18, window_bounds = array<i64: 1, 32>}, {pipeline_mode = #tpu.pipeline_mode<synchronous>, transform_indices = @transform_19, window_bounds = array<i64: 32, 128>}, {pipeline_mode = #tpu.pipeline_mode<synchronous>, transform_indices = @transform_20, window_bounds = array<i64: 1, 128>}, {pipeline_mode = #tpu.pipeline_mode<synchronous>, transform_indices = @transform_21, window_bounds = array<i64: 128, 32>}, {pipeline_mode = #tpu.pipeline_mode<synchronous>, transform_indices = @transform_22, window_bounds = array<i64: 1, 32>}, {pipeline_mode = #tpu.pipeline_mode<synchronous>, transform_indices = @transform_23, window_bounds = array<i64: 1, 32>}, {pipeline_mode = #tpu.pipeline_mode<synchronous>, transform_indices = @transform_24, window_bounds = array<i64: 1, 32>}, {transform_indices = @transform_25, window_bounds = array<i64: 1, 4, 16, 32>}]} {
    %c0 = arith.constant 0 : index
    %c0_0 = arith.constant 0 : index
    %c0_1 = arith.constant 0 : index
    %c0_2 = arith.constant 0 : index
    %0 = vector.load %arg1[%c0, %c0_0, %c0_1, %c0_2] : memref<1x4x16x32xf32, #tpu.memory_space<vmem>>, vector<1x4x16x32xf32>
    %1 = vector.shape_cast %0 : vector<1x4x16x32xf32> to vector<4x16x32xf32>
    %2 = vector.shape_cast %1 : vector<4x16x32xf32> to vector<64x32xf32>
    %c0_3 = arith.constant 0 : index
    %c0_4 = arith.constant 0 : index
    %3 = vector.load %arg2[%c0_3, %c0_4] : memref<32x96xbf16, #tpu.memory_space<vmem>>, vector<32x96xbf16>
    %c0_5 = arith.constant 0 : index
    %c0_6 = arith.constant 0 : index
    %4 = vector.load %arg3[%c0_5, %c0_6] : memref<1x96xf32, #tpu.memory_space<vmem>>, vector<1x96xf32>
    %c0_7 = arith.constant 0 : index
    %c0_8 = arith.constant 0 : index
    %5 = vector.load %arg4[%c0_7, %c0_8] : memref<32x32xbf16, #tpu.memory_space<vmem>>, vector<32x32xbf16>
    %c0_9 = arith.constant 0 : index
    %c0_10 = arith.constant 0 : index
    %6 = vector.load %arg5[%c0_9, %c0_10] : memref<1x32xf32, #tpu.memory_space<vmem>>, vector<1x32xf32>
    %7 = vector.shape_cast %1 : vector<4x16x32xf32> to vector<64x32xf32>
    %8 = arith.truncf %7 : vector<64x32xf32> to vector<64x32xbf16>
    %cst = arith.constant dense<0.000000e+00> : vector<64x96xf32>
    %9 = tpu.matmul %8, %3, %cst {dimension_numbers = #tpu.dot_dimension_numbers<[1], [0], [0], [1], [0, 0, 1, 1], [], []>} : vector<64x32xbf16>, vector<32x96xbf16>, vector<64x96xf32> -> vector<64x96xf32>
    %10 = vector.broadcast %4 : vector<1x96xf32> to vector<64x96xf32>
    %11 = arith.addf %9, %10 : vector<64x96xf32>
    %12 = vector.extract_strided_slice %11 {offsets = [0, 0], sizes = [64, 8], strides = [1, 1]} : vector<64x96xf32> to vector<64x8xf32>
    %13 = vector.shape_cast %12 : vector<64x8xf32> to vector<4x16x8xf32>
    %14 = vector.extract_strided_slice %11 {offsets = [0, 32], sizes = [64, 8], strides = [1, 1]} : vector<64x96xf32> to vector<64x8xf32>
    %15 = vector.shape_cast %14 : vector<64x8xf32> to vector<4x16x8xf32>
    %16 = vector.extract_strided_slice %11 {offsets = [0, 64], sizes = [64, 8], strides = [1, 1]} : vector<64x96xf32> to vector<64x8xf32>
    %17 = vector.shape_cast %16 : vector<64x8xf32> to vector<4x16x8xf32>
    %18 = arith.truncf %13 : vector<4x16x8xf32> to vector<4x16x8xbf16>
    %19 = arith.truncf %15 : vector<4x16x8xf32> to vector<4x16x8xbf16>
    %cst_11 = arith.constant dense<0.000000e+00> : vector<4x16x16xf32>
    %20 = tpu.matmul %18, %19, %cst_11 {dimension_numbers = #tpu.dot_dimension_numbers<[2], [2], [1], [1], [0, 0, 0, 1, 1, 1], [0], [0]>} : vector<4x16x8xbf16>, vector<4x16x8xbf16>, vector<4x16x16xf32> -> vector<4x16x16xf32>
    %cst_12 = arith.constant dense<0xFF800000> : vector<4x16xf32>
    %21 = vector.multi_reduction <maximumf>, %20, %cst_12 [2] : vector<4x16x16xf32> to vector<4x16xf32>
    %22 = vector.shape_cast %21 : vector<4x16xf32> to vector<4x16x1xf32>
    %23 = vector.broadcast %22 : vector<4x16x1xf32> to vector<4x16x16xf32>
    %24 = arith.subf %20, %23 : vector<4x16x16xf32>
    %25 = math.exp %24 : vector<4x16x16xf32>
    %cst_13 = arith.constant dense<0.000000e+00> : vector<4x16xf32>
    %26 = vector.multi_reduction <add>, %25, %cst_13 [2] : vector<4x16x16xf32> to vector<4x16xf32>
    %27 = vector.shape_cast %26 : vector<4x16xf32> to vector<4x16x1xf32>
    %28 = tpu.reciprocal %27 {approx = true} : vector<4x16x1xf32> -> vector<4x16x1xf32>
    %29 = vector.broadcast %28 : vector<4x16x1xf32> to vector<4x16x16xf32>
    %30 = arith.mulf %25, %29 : vector<4x16x16xf32>
    %31 = arith.truncf %30 : vector<4x16x16xf32> to vector<4x16x16xbf16>
    %32 = arith.truncf %17 : vector<4x16x8xf32> to vector<4x16x8xbf16>
    %cst_14 = arith.constant dense<0.000000e+00> : vector<4x16x8xf32>
    %33 = tpu.matmul %31, %32, %cst_14 {dimension_numbers = #tpu.dot_dimension_numbers<[2], [1], [1], [2], [0, 0, 0, 1, 1, 2], [0], [0]>} : vector<4x16x16xbf16>, vector<4x16x8xbf16>, vector<4x16x8xf32> -> vector<4x16x8xf32>
    %34 = vector.shape_cast %33 : vector<4x16x8xf32> to vector<64x8xf32>
    %35 = vector.extract_strided_slice %11 {offsets = [0, 8], sizes = [64, 8], strides = [1, 1]} : vector<64x96xf32> to vector<64x8xf32>
    %36 = vector.shape_cast %35 : vector<64x8xf32> to vector<4x16x8xf32>
    %37 = vector.extract_strided_slice %11 {offsets = [0, 40], sizes = [64, 8], strides = [1, 1]} : vector<64x96xf32> to vector<64x8xf32>
    %38 = vector.shape_cast %37 : vector<64x8xf32> to vector<4x16x8xf32>
    %39 = vector.extract_strided_slice %11 {offsets = [0, 72], sizes = [64, 8], strides = [1, 1]} : vector<64x96xf32> to vector<64x8xf32>
    %40 = vector.shape_cast %39 : vector<64x8xf32> to vector<4x16x8xf32>
    %41 = arith.truncf %36 : vector<4x16x8xf32> to vector<4x16x8xbf16>
    %42 = arith.truncf %38 : vector<4x16x8xf32> to vector<4x16x8xbf16>
    %cst_15 = arith.constant dense<0.000000e+00> : vector<4x16x16xf32>
    %43 = tpu.matmul %41, %42, %cst_15 {dimension_numbers = #tpu.dot_dimension_numbers<[2], [2], [1], [1], [0, 0, 0, 1, 1, 1], [0], [0]>} : vector<4x16x8xbf16>, vector<4x16x8xbf16>, vector<4x16x16xf32> -> vector<4x16x16xf32>
    %cst_16 = arith.constant dense<0xFF800000> : vector<4x16xf32>
    %44 = vector.multi_reduction <maximumf>, %43, %cst_16 [2] : vector<4x16x16xf32> to vector<4x16xf32>
    %45 = vector.shape_cast %44 : vector<4x16xf32> to vector<4x16x1xf32>
    %46 = vector.broadcast %45 : vector<4x16x1xf32> to vector<4x16x16xf32>
    %47 = arith.subf %43, %46 : vector<4x16x16xf32>
    %48 = math.exp %47 : vector<4x16x16xf32>
    %cst_17 = arith.constant dense<0.000000e+00> : vector<4x16xf32>
    %49 = vector.multi_reduction <add>, %48, %cst_17 [2] : vector<4x16x16xf32> to vector<4x16xf32>
    %50 = vector.shape_cast %49 : vector<4x16xf32> to vector<4x16x1xf32>
    %51 = tpu.reciprocal %50 {approx = true} : vector<4x16x1xf32> -> vector<4x16x1xf32>
    %52 = vector.broadcast %51 : vector<4x16x1xf32> to vector<4x16x16xf32>
    %53 = arith.mulf %48, %52 : vector<4x16x16xf32>
    %54 = arith.truncf %53 : vector<4x16x16xf32> to vector<4x16x16xbf16>
    %55 = arith.truncf %40 : vector<4x16x8xf32> to vector<4x16x8xbf16>
    %cst_18 = arith.constant dense<0.000000e+00> : vector<4x16x8xf32>
    %56 = tpu.matmul %54, %55, %cst_18 {dimension_numbers = #tpu.dot_dimension_numbers<[2], [1], [1], [2], [0, 0, 0, 1, 1, 2], [0], [0]>} : vector<4x16x16xbf16>, vector<4x16x8xbf16>, vector<4x16x8xf32> -> vector<4x16x8xf32>
    %57 = vector.shape_cast %56 : vector<4x16x8xf32> to vector<64x8xf32>
    %58 = vector.extract_strided_slice %11 {offsets = [0, 16], sizes = [64, 8], strides = [1, 1]} : vector<64x96xf32> to vector<64x8xf32>
    %59 = vector.shape_cast %58 : vector<64x8xf32> to vector<4x16x8xf32>
    %60 = vector.extract_strided_slice %11 {offsets = [0, 48], sizes = [64, 8], strides = [1, 1]} : vector<64x96xf32> to vector<64x8xf32>
    %61 = vector.shape_cast %60 : vector<64x8xf32> to vector<4x16x8xf32>
    %62 = vector.extract_strided_slice %11 {offsets = [0, 80], sizes = [64, 8], strides = [1, 1]} : vector<64x96xf32> to vector<64x8xf32>
    %63 = vector.shape_cast %62 : vector<64x8xf32> to vector<4x16x8xf32>
    %64 = arith.truncf %59 : vector<4x16x8xf32> to vector<4x16x8xbf16>
    %65 = arith.truncf %61 : vector<4x16x8xf32> to vector<4x16x8xbf16>
    %cst_19 = arith.constant dense<0.000000e+00> : vector<4x16x16xf32>
    %66 = tpu.matmul %64, %65, %cst_19 {dimension_numbers = #tpu.dot_dimension_numbers<[2], [2], [1], [1], [0, 0, 0, 1, 1, 1], [0], [0]>} : vector<4x16x8xbf16>, vector<4x16x8xbf16>, vector<4x16x16xf32> -> vector<4x16x16xf32>
    %cst_20 = arith.constant dense<0xFF800000> : vector<4x16xf32>
    %67 = vector.multi_reduction <maximumf>, %66, %cst_20 [2] : vector<4x16x16xf32> to vector<4x16xf32>
    %68 = vector.shape_cast %67 : vector<4x16xf32> to vector<4x16x1xf32>
    %69 = vector.broadcast %68 : vector<4x16x1xf32> to vector<4x16x16xf32>
    %70 = arith.subf %66, %69 : vector<4x16x16xf32>
    %71 = math.exp %70 : vector<4x16x16xf32>
    %cst_21 = arith.constant dense<0.000000e+00> : vector<4x16xf32>
    %72 = vector.multi_reduction <add>, %71, %cst_21 [2] : vector<4x16x16xf32> to vector<4x16xf32>
    %73 = vector.shape_cast %72 : vector<4x16xf32> to vector<4x16x1xf32>
    %74 = tpu.reciprocal %73 {approx = true} : vector<4x16x1xf32> -> vector<4x16x1xf32>
    %75 = vector.broadcast %74 : vector<4x16x1xf32> to vector<4x16x16xf32>
    %76 = arith.mulf %71, %75 : vector<4x16x16xf32>
    %77 = arith.truncf %76 : vector<4x16x16xf32> to vector<4x16x16xbf16>
    %78 = arith.truncf %63 : vector<4x16x8xf32> to vector<4x16x8xbf16>
    %cst_22 = arith.constant dense<0.000000e+00> : vector<4x16x8xf32>
    %79 = tpu.matmul %77, %78, %cst_22 {dimension_numbers = #tpu.dot_dimension_numbers<[2], [1], [1], [2], [0, 0, 0, 1, 1, 2], [0], [0]>} : vector<4x16x16xbf16>, vector<4x16x8xbf16>, vector<4x16x8xf32> -> vector<4x16x8xf32>
    %80 = vector.shape_cast %79 : vector<4x16x8xf32> to vector<64x8xf32>
    %81 = vector.extract_strided_slice %11 {offsets = [0, 24], sizes = [64, 8], strides = [1, 1]} : vector<64x96xf32> to vector<64x8xf32>
    %82 = vector.shape_cast %81 : vector<64x8xf32> to vector<4x16x8xf32>
    %83 = vector.extract_strided_slice %11 {offsets = [0, 56], sizes = [64, 8], strides = [1, 1]} : vector<64x96xf32> to vector<64x8xf32>
    %84 = vector.shape_cast %83 : vector<64x8xf32> to vector<4x16x8xf32>
    %85 = vector.extract_strided_slice %11 {offsets = [0, 88], sizes = [64, 8], strides = [1, 1]} : vector<64x96xf32> to vector<64x8xf32>
    %86 = vector.shape_cast %85 : vector<64x8xf32> to vector<4x16x8xf32>
    %87 = arith.truncf %82 : vector<4x16x8xf32> to vector<4x16x8xbf16>
    %88 = arith.truncf %84 : vector<4x16x8xf32> to vector<4x16x8xbf16>
    %cst_23 = arith.constant dense<0.000000e+00> : vector<4x16x16xf32>
    %89 = tpu.matmul %87, %88, %cst_23 {dimension_numbers = #tpu.dot_dimension_numbers<[2], [2], [1], [1], [0, 0, 0, 1, 1, 1], [0], [0]>} : vector<4x16x8xbf16>, vector<4x16x8xbf16>, vector<4x16x16xf32> -> vector<4x16x16xf32>
    %cst_24 = arith.constant dense<0xFF800000> : vector<4x16xf32>
    %90 = vector.multi_reduction <maximumf>, %89, %cst_24 [2] : vector<4x16x16xf32> to vector<4x16xf32>
    %91 = vector.shape_cast %90 : vector<4x16xf32> to vector<4x16x1xf32>
    %92 = vector.broadcast %91 : vector<4x16x1xf32> to vector<4x16x16xf32>
    %93 = arith.subf %89, %92 : vector<4x16x16xf32>
    %94 = math.exp %93 : vector<4x16x16xf32>
    %cst_25 = arith.constant dense<0.000000e+00> : vector<4x16xf32>
    %95 = vector.multi_reduction <add>, %94, %cst_25 [2] : vector<4x16x16xf32> to vector<4x16xf32>
    %96 = vector.shape_cast %95 : vector<4x16xf32> to vector<4x16x1xf32>
    %97 = tpu.reciprocal %96 {approx = true} : vector<4x16x1xf32> -> vector<4x16x1xf32>
    %98 = vector.broadcast %97 : vector<4x16x1xf32> to vector<4x16x16xf32>
    %99 = arith.mulf %94, %98 : vector<4x16x16xf32>
    %100 = arith.truncf %99 : vector<4x16x16xf32> to vector<4x16x16xbf16>
    %101 = arith.truncf %86 : vector<4x16x8xf32> to vector<4x16x8xbf16>
    %cst_26 = arith.constant dense<0.000000e+00> : vector<4x16x8xf32>
    %102 = tpu.matmul %100, %101, %cst_26 {dimension_numbers = #tpu.dot_dimension_numbers<[2], [1], [1], [2], [0, 0, 0, 1, 1, 2], [0], [0]>} : vector<4x16x16xbf16>, vector<4x16x8xbf16>, vector<4x16x8xf32> -> vector<4x16x8xf32>
    %103 = vector.shape_cast %102 : vector<4x16x8xf32> to vector<64x8xf32>
    %104 = tpu.concatenate %34, %57, %80, %103 in 1 : vector<64x8xf32>, vector<64x8xf32>, vector<64x8xf32>, vector<64x8xf32> -> vector<64x32xf32>
    %105 = arith.truncf %104 : vector<64x32xf32> to vector<64x32xbf16>
    %cst_27 = arith.constant dense<0.000000e+00> : vector<64x32xf32>
    %106 = tpu.matmul %105, %5, %cst_27 {dimension_numbers = #tpu.dot_dimension_numbers<[1], [0], [0], [1], [0, 0, 1, 1], [], []>} : vector<64x32xbf16>, vector<32x32xbf16>, vector<64x32xf32> -> vector<64x32xf32>
    %107 = vector.broadcast %6 : vector<1x32xf32> to vector<64x32xf32>
    %108 = arith.addf %106, %107 : vector<64x32xf32>
    %109 = arith.addf %2, %108 : vector<64x32xf32>
    %c0_28 = arith.constant 0 : index
    %c0_29 = arith.constant 0 : index
    %110 = vector.load %arg6[%c0_28, %c0_29] : memref<1x32xf32, #tpu.memory_space<vmem>>, vector<1x32xf32>
    %c0_30 = arith.constant 0 : index
    %c0_31 = arith.constant 0 : index
    %111 = vector.load %arg7[%c0_30, %c0_31] : memref<1x32xf32, #tpu.memory_space<vmem>>, vector<1x32xf32>
    %cst_32 = arith.constant dense<0.000000e+00> : vector<64xf32>
    %112 = vector.multi_reduction <add>, %109, %cst_32 [1] : vector<64x32xf32> to vector<64xf32>
    %113 = vector.shape_cast %112 : vector<64xf32> to vector<64x1xf32>
    %cst_33 = arith.constant 3.200000e+01 : f32
    %114 = vector.broadcast %cst_33 : f32 to vector<64x1xf32>
    %115 = arith.divf %113, %114 : vector<64x1xf32>
    %116 = vector.broadcast %115 : vector<64x1xf32> to vector<64x32xf32>
    %117 = arith.subf %109, %116 : vector<64x32xf32>
    %118 = arith.mulf %117, %117 : vector<64x32xf32>
    %cst_34 = arith.constant dense<0.000000e+00> : vector<64xf32>
    %119 = vector.multi_reduction <add>, %118, %cst_34 [1] : vector<64x32xf32> to vector<64xf32>
    %120 = vector.shape_cast %119 : vector<64xf32> to vector<64x1xf32>
    %cst_35 = arith.constant 3.200000e+01 : f32
    %121 = vector.broadcast %cst_35 : f32 to vector<64x1xf32>
    %122 = arith.divf %120, %121 : vector<64x1xf32>
    %123 = vector.broadcast %115 : vector<64x1xf32> to vector<64x32xf32>
    %124 = arith.subf %109, %123 : vector<64x32xf32>
    %cst_36 = arith.constant 9.99999974E-6 : f32
    %125 = vector.broadcast %cst_36 : f32 to vector<64x1xf32>
    %126 = arith.addf %122, %125 : vector<64x1xf32>
    %127 = math.rsqrt %126 : vector<64x1xf32>
    %128 = vector.broadcast %127 : vector<64x1xf32> to vector<64x32xf32>
    %129 = arith.mulf %124, %128 : vector<64x32xf32>
    %130 = vector.broadcast %110 : vector<1x32xf32> to vector<64x32xf32>
    %131 = arith.mulf %129, %130 : vector<64x32xf32>
    %132 = vector.broadcast %111 : vector<1x32xf32> to vector<64x32xf32>
    %133 = arith.addf %131, %132 : vector<64x32xf32>
    %c0_37 = arith.constant 0 : index
    %c0_38 = arith.constant 0 : index
    %134 = vector.load %arg8[%c0_37, %c0_38] : memref<32x128xbf16, #tpu.memory_space<vmem>>, vector<32x128xbf16>
    %c0_39 = arith.constant 0 : index
    %c0_40 = arith.constant 0 : index
    %135 = vector.load %arg9[%c0_39, %c0_40] : memref<1x128xf32, #tpu.memory_space<vmem>>, vector<1x128xf32>
    %c0_41 = arith.constant 0 : index
    %c0_42 = arith.constant 0 : index
    %136 = vector.load %arg10[%c0_41, %c0_42] : memref<128x32xbf16, #tpu.memory_space<vmem>>, vector<128x32xbf16>
    %c0_43 = arith.constant 0 : index
    %c0_44 = arith.constant 0 : index
    %137 = vector.load %arg11[%c0_43, %c0_44] : memref<1x32xf32, #tpu.memory_space<vmem>>, vector<1x32xf32>
    %138 = arith.truncf %133 : vector<64x32xf32> to vector<64x32xbf16>
    %cst_45 = arith.constant dense<0.000000e+00> : vector<64x128xf32>
    %139 = tpu.matmul %138, %134, %cst_45 {dimension_numbers = #tpu.dot_dimension_numbers<[1], [0], [0], [1], [0, 0, 1, 1], [], []>} : vector<64x32xbf16>, vector<32x128xbf16>, vector<64x128xf32> -> vector<64x128xf32>
    %140 = vector.broadcast %135 : vector<1x128xf32> to vector<64x128xf32>
    %141 = arith.addf %139, %140 : vector<64x128xf32>
    %142 = arith.mulf %141, %141 : vector<64x128xf32>
    %143 = arith.mulf %141, %142 : vector<64x128xf32>
    %cst_46 = arith.constant 4.471500e-02 : f32
    %144 = vector.broadcast %cst_46 : f32 to vector<64x128xf32>
    %145 = arith.mulf %144, %143 : vector<64x128xf32>
    %146 = arith.addf %141, %145 : vector<64x128xf32>
    %cst_47 = arith.constant 0.797884583 : f32
    %147 = vector.broadcast %cst_47 : f32 to vector<64x128xf32>
    %148 = arith.mulf %147, %146 : vector<64x128xf32>
    %149 = math.tanh %148 : vector<64x128xf32>
    %cst_48 = arith.constant 1.000000e+00 : f32
    %150 = vector.broadcast %cst_48 : f32 to vector<64x128xf32>
    %151 = arith.addf %150, %149 : vector<64x128xf32>
    %cst_49 = arith.constant 5.000000e-01 : f32
    %152 = vector.broadcast %cst_49 : f32 to vector<64x128xf32>
    %153 = arith.mulf %152, %151 : vector<64x128xf32>
    %154 = arith.mulf %141, %153 : vector<64x128xf32>
    %155 = arith.truncf %154 : vector<64x128xf32> to vector<64x128xbf16>
    %cst_50 = arith.constant dense<0.000000e+00> : vector<64x32xf32>
    %156 = tpu.matmul %155, %136, %cst_50 {dimension_numbers = #tpu.dot_dimension_numbers<[1], [0], [0], [1], [0, 0, 1, 1], [], []>} : vector<64x128xbf16>, vector<128x32xbf16>, vector<64x32xf32> -> vector<64x32xf32>
    %157 = vector.broadcast %137 : vector<1x32xf32> to vector<64x32xf32>
    %158 = arith.addf %156, %157 : vector<64x32xf32>
    %159 = arith.addf %133, %158 : vector<64x32xf32>
    %c0_51 = arith.constant 0 : index
    %c0_52 = arith.constant 0 : index
    %160 = vector.load %arg12[%c0_51, %c0_52] : memref<1x32xf32, #tpu.memory_space<vmem>>, vector<1x32xf32>
    %c0_53 = arith.constant 0 : index
    %c0_54 = arith.constant 0 : index
    %161 = vector.load %arg13[%c0_53, %c0_54] : memref<1x32xf32, #tpu.memory_space<vmem>>, vector<1x32xf32>
    %cst_55 = arith.constant dense<0.000000e+00> : vector<64xf32>
    %162 = vector.multi_reduction <add>, %159, %cst_55 [1] : vector<64x32xf32> to vector<64xf32>
    %163 = vector.shape_cast %162 : vector<64xf32> to vector<64x1xf32>
    %cst_56 = arith.constant 3.200000e+01 : f32
    %164 = vector.broadcast %cst_56 : f32 to vector<64x1xf32>
    %165 = arith.divf %163, %164 : vector<64x1xf32>
    %166 = vector.broadcast %165 : vector<64x1xf32> to vector<64x32xf32>
    %167 = arith.subf %159, %166 : vector<64x32xf32>
    %168 = arith.mulf %167, %167 : vector<64x32xf32>
    %cst_57 = arith.constant dense<0.000000e+00> : vector<64xf32>
    %169 = vector.multi_reduction <add>, %168, %cst_57 [1] : vector<64x32xf32> to vector<64xf32>
    %170 = vector.shape_cast %169 : vector<64xf32> to vector<64x1xf32>
    %cst_58 = arith.constant 3.200000e+01 : f32
    %171 = vector.broadcast %cst_58 : f32 to vector<64x1xf32>
    %172 = arith.divf %170, %171 : vector<64x1xf32>
    %173 = vector.broadcast %165 : vector<64x1xf32> to vector<64x32xf32>
    %174 = arith.subf %159, %173 : vector<64x32xf32>
    %cst_59 = arith.constant 9.99999974E-6 : f32
    %175 = vector.broadcast %cst_59 : f32 to vector<64x1xf32>
    %176 = arith.addf %172, %175 : vector<64x1xf32>
    %177 = math.rsqrt %176 : vector<64x1xf32>
    %178 = vector.broadcast %177 : vector<64x1xf32> to vector<64x32xf32>
    %179 = arith.mulf %174, %178 : vector<64x32xf32>
    %180 = vector.broadcast %160 : vector<1x32xf32> to vector<64x32xf32>
    %181 = arith.mulf %179, %180 : vector<64x32xf32>
    %182 = vector.broadcast %161 : vector<1x32xf32> to vector<64x32xf32>
    %183 = arith.addf %181, %182 : vector<64x32xf32>
    %184 = vector.shape_cast %183 : vector<64x32xf32> to vector<4x16x32xf32>
    %c0_60 = arith.constant 0 : index
    %c0_61 = arith.constant 0 : index
    %185 = vector.load %arg14[%c0_60, %c0_61] : memref<32x96xbf16, #tpu.memory_space<vmem>>, vector<32x96xbf16>
    %c0_62 = arith.constant 0 : index
    %c0_63 = arith.constant 0 : index
    %186 = vector.load %arg15[%c0_62, %c0_63] : memref<1x96xf32, #tpu.memory_space<vmem>>, vector<1x96xf32>
    %c0_64 = arith.constant 0 : index
    %c0_65 = arith.constant 0 : index
    %187 = vector.load %arg16[%c0_64, %c0_65] : memref<32x32xbf16, #tpu.memory_space<vmem>>, vector<32x32xbf16>
    %c0_66 = arith.constant 0 : index
    %c0_67 = arith.constant 0 : index
    %188 = vector.load %arg17[%c0_66, %c0_67] : memref<1x32xf32, #tpu.memory_space<vmem>>, vector<1x32xf32>
    %189 = vector.extract_strided_slice %184 {offsets = [0, 0, 0], sizes = [1, 16, 32], strides = [1, 1, 1]} : vector<4x16x32xf32> to vector<1x16x32xf32>
    %190 = vector.shape_cast %189 : vector<1x16x32xf32> to vector<16x32xf32>
    %191 = vector.extract_strided_slice %184 {offsets = [1, 0, 0], sizes = [1, 16, 32], strides = [1, 1, 1]} : vector<4x16x32xf32> to vector<1x16x32xf32>
    %192 = vector.shape_cast %191 : vector<1x16x32xf32> to vector<16x32xf32>
    %193 = arith.truncf %190 : vector<16x32xf32> to vector<16x32xbf16>
    %cst_68 = arith.constant dense<0.000000e+00> : vector<16x96xf32>
    %194 = tpu.matmul %193, %185, %cst_68 {dimension_numbers = #tpu.dot_dimension_numbers<[1], [0], [0], [1], [0, 0, 1, 1], [], []>} : vector<16x32xbf16>, vector<32x96xbf16>, vector<16x96xf32> -> vector<16x96xf32>
    %195 = vector.broadcast %186 : vector<1x96xf32> to vector<16x96xf32>
    %196 = arith.addf %194, %195 : vector<16x96xf32>
    %197 = arith.truncf %192 : vector<16x32xf32> to vector<16x32xbf16>
    %cst_69 = arith.constant dense<0.000000e+00> : vector<16x96xf32>
    %198 = tpu.matmul %197, %185, %cst_69 {dimension_numbers = #tpu.dot_dimension_numbers<[1], [0], [0], [1], [0, 0, 1, 1], [], []>} : vector<16x32xbf16>, vector<32x96xbf16>, vector<16x96xf32> -> vector<16x96xf32>
    %199 = vector.broadcast %186 : vector<1x96xf32> to vector<16x96xf32>
    %200 = arith.addf %198, %199 : vector<16x96xf32>
    %201 = vector.extract_strided_slice %196 {offsets = [0, 0], sizes = [16, 8], strides = [1, 1]} : vector<16x96xf32> to vector<16x8xf32>
    %202 = vector.extract_strided_slice %200 {offsets = [0, 32], sizes = [16, 8], strides = [1, 1]} : vector<16x96xf32> to vector<16x8xf32>
    %203 = vector.extract_strided_slice %200 {offsets = [0, 64], sizes = [16, 8], strides = [1, 1]} : vector<16x96xf32> to vector<16x8xf32>
    %204 = arith.truncf %201 : vector<16x8xf32> to vector<16x8xbf16>
    %205 = arith.truncf %202 : vector<16x8xf32> to vector<16x8xbf16>
    %cst_70 = arith.constant dense<0.000000e+00> : vector<16x16xf32>
    %206 = tpu.matmul %204, %205, %cst_70 {dimension_numbers = #tpu.dot_dimension_numbers<[1], [1], [0], [0], [0, 0, 1, 0], [], []>} : vector<16x8xbf16>, vector<16x8xbf16>, vector<16x16xf32> -> vector<16x16xf32>
    %cst_71 = arith.constant dense<0xFF800000> : vector<16xf32>
    %207 = vector.multi_reduction <maximumf>, %206, %cst_71 [1] : vector<16x16xf32> to vector<16xf32>
    %208 = vector.shape_cast %207 : vector<16xf32> to vector<16x1xf32>
    %209 = vector.broadcast %208 : vector<16x1xf32> to vector<16x16xf32>
    %210 = arith.subf %206, %209 : vector<16x16xf32>
    %211 = math.exp %210 : vector<16x16xf32>
    %cst_72 = arith.constant dense<0.000000e+00> : vector<16xf32>
    %212 = vector.multi_reduction <add>, %211, %cst_72 [1] : vector<16x16xf32> to vector<16xf32>
    %213 = vector.shape_cast %212 : vector<16xf32> to vector<16x1xf32>
    %214 = tpu.reciprocal %213 {approx = true} : vector<16x1xf32> -> vector<16x1xf32>
    %215 = vector.broadcast %214 : vector<16x1xf32> to vector<16x16xf32>
    %216 = arith.mulf %211, %215 : vector<16x16xf32>
    %217 = arith.truncf %216 : vector<16x16xf32> to vector<16x16xbf16>
    %218 = arith.truncf %203 : vector<16x8xf32> to vector<16x8xbf16>
    %cst_73 = arith.constant dense<0.000000e+00> : vector<16x8xf32>
    %219 = tpu.matmul %217, %218, %cst_73 {dimension_numbers = #tpu.dot_dimension_numbers<[1], [0], [0], [1], [0, 0, 1, 1], [], []>} : vector<16x16xbf16>, vector<16x8xbf16>, vector<16x8xf32> -> vector<16x8xf32>
    %220 = vector.extract_strided_slice %196 {offsets = [0, 8], sizes = [16, 8], strides = [1, 1]} : vector<16x96xf32> to vector<16x8xf32>
    %221 = vector.extract_strided_slice %200 {offsets = [0, 40], sizes = [16, 8], strides = [1, 1]} : vector<16x96xf32> to vector<16x8xf32>
    %222 = vector.extract_strided_slice %200 {offsets = [0, 72], sizes = [16, 8], strides = [1, 1]} : vector<16x96xf32> to vector<16x8xf32>
    %223 = arith.truncf %220 : vector<16x8xf32> to vector<16x8xbf16>
    %224 = arith.truncf %221 : vector<16x8xf32> to vector<16x8xbf16>
    %cst_74 = arith.constant dense<0.000000e+00> : vector<16x16xf32>
    %225 = tpu.matmul %223, %224, %cst_74 {dimension_numbers = #tpu.dot_dimension_numbers<[1], [1], [0], [0], [0, 0, 1, 0], [], []>} : vector<16x8xbf16>, vector<16x8xbf16>, vector<16x16xf32> -> vector<16x16xf32>
    %cst_75 = arith.constant dense<0xFF800000> : vector<16xf32>
    %226 = vector.multi_reduction <maximumf>, %225, %cst_75 [1] : vector<16x16xf32> to vector<16xf32>
    %227 = vector.shape_cast %226 : vector<16xf32> to vector<16x1xf32>
    %228 = vector.broadcast %227 : vector<16x1xf32> to vector<16x16xf32>
    %229 = arith.subf %225, %228 : vector<16x16xf32>
    %230 = math.exp %229 : vector<16x16xf32>
    %cst_76 = arith.constant dense<0.000000e+00> : vector<16xf32>
    %231 = vector.multi_reduction <add>, %230, %cst_76 [1] : vector<16x16xf32> to vector<16xf32>
    %232 = vector.shape_cast %231 : vector<16xf32> to vector<16x1xf32>
    %233 = tpu.reciprocal %232 {approx = true} : vector<16x1xf32> -> vector<16x1xf32>
    %234 = vector.broadcast %233 : vector<16x1xf32> to vector<16x16xf32>
    %235 = arith.mulf %230, %234 : vector<16x16xf32>
    %236 = arith.truncf %235 : vector<16x16xf32> to vector<16x16xbf16>
    %237 = arith.truncf %222 : vector<16x8xf32> to vector<16x8xbf16>
    %cst_77 = arith.constant dense<0.000000e+00> : vector<16x8xf32>
    %238 = tpu.matmul %236, %237, %cst_77 {dimension_numbers = #tpu.dot_dimension_numbers<[1], [0], [0], [1], [0, 0, 1, 1], [], []>} : vector<16x16xbf16>, vector<16x8xbf16>, vector<16x8xf32> -> vector<16x8xf32>
    %239 = vector.extract_strided_slice %196 {offsets = [0, 16], sizes = [16, 8], strides = [1, 1]} : vector<16x96xf32> to vector<16x8xf32>
    %240 = vector.extract_strided_slice %200 {offsets = [0, 48], sizes = [16, 8], strides = [1, 1]} : vector<16x96xf32> to vector<16x8xf32>
    %241 = vector.extract_strided_slice %200 {offsets = [0, 80], sizes = [16, 8], strides = [1, 1]} : vector<16x96xf32> to vector<16x8xf32>
    %242 = arith.truncf %239 : vector<16x8xf32> to vector<16x8xbf16>
    %243 = arith.truncf %240 : vector<16x8xf32> to vector<16x8xbf16>
    %cst_78 = arith.constant dense<0.000000e+00> : vector<16x16xf32>
    %244 = tpu.matmul %242, %243, %cst_78 {dimension_numbers = #tpu.dot_dimension_numbers<[1], [1], [0], [0], [0, 0, 1, 0], [], []>} : vector<16x8xbf16>, vector<16x8xbf16>, vector<16x16xf32> -> vector<16x16xf32>
    %cst_79 = arith.constant dense<0xFF800000> : vector<16xf32>
    %245 = vector.multi_reduction <maximumf>, %244, %cst_79 [1] : vector<16x16xf32> to vector<16xf32>
    %246 = vector.shape_cast %245 : vector<16xf32> to vector<16x1xf32>
    %247 = vector.broadcast %246 : vector<16x1xf32> to vector<16x16xf32>
    %248 = arith.subf %244, %247 : vector<16x16xf32>
    %249 = math.exp %248 : vector<16x16xf32>
    %cst_80 = arith.constant dense<0.000000e+00> : vector<16xf32>
    %250 = vector.multi_reduction <add>, %249, %cst_80 [1] : vector<16x16xf32> to vector<16xf32>
    %251 = vector.shape_cast %250 : vector<16xf32> to vector<16x1xf32>
    %252 = tpu.reciprocal %251 {approx = true} : vector<16x1xf32> -> vector<16x1xf32>
    %253 = vector.broadcast %252 : vector<16x1xf32> to vector<16x16xf32>
    %254 = arith.mulf %249, %253 : vector<16x16xf32>
    %255 = arith.truncf %254 : vector<16x16xf32> to vector<16x16xbf16>
    %256 = arith.truncf %241 : vector<16x8xf32> to vector<16x8xbf16>
    %cst_81 = arith.constant dense<0.000000e+00> : vector<16x8xf32>
    %257 = tpu.matmul %255, %256, %cst_81 {dimension_numbers = #tpu.dot_dimension_numbers<[1], [0], [0], [1], [0, 0, 1, 1], [], []>} : vector<16x16xbf16>, vector<16x8xbf16>, vector<16x8xf32> -> vector<16x8xf32>
    %258 = vector.extract_strided_slice %196 {offsets = [0, 24], sizes = [16, 8], strides = [1, 1]} : vector<16x96xf32> to vector<16x8xf32>
    %259 = vector.extract_strided_slice %200 {offsets = [0, 56], sizes = [16, 8], strides = [1, 1]} : vector<16x96xf32> to vector<16x8xf32>
    %260 = vector.extract_strided_slice %200 {offsets = [0, 88], sizes = [16, 8], strides = [1, 1]} : vector<16x96xf32> to vector<16x8xf32>
    %261 = arith.truncf %258 : vector<16x8xf32> to vector<16x8xbf16>
    %262 = arith.truncf %259 : vector<16x8xf32> to vector<16x8xbf16>
    %cst_82 = arith.constant dense<0.000000e+00> : vector<16x16xf32>
    %263 = tpu.matmul %261, %262, %cst_82 {dimension_numbers = #tpu.dot_dimension_numbers<[1], [1], [0], [0], [0, 0, 1, 0], [], []>} : vector<16x8xbf16>, vector<16x8xbf16>, vector<16x16xf32> -> vector<16x16xf32>
    %cst_83 = arith.constant dense<0xFF800000> : vector<16xf32>
    %264 = vector.multi_reduction <maximumf>, %263, %cst_83 [1] : vector<16x16xf32> to vector<16xf32>
    %265 = vector.shape_cast %264 : vector<16xf32> to vector<16x1xf32>
    %266 = vector.broadcast %265 : vector<16x1xf32> to vector<16x16xf32>
    %267 = arith.subf %263, %266 : vector<16x16xf32>
    %268 = math.exp %267 : vector<16x16xf32>
    %cst_84 = arith.constant dense<0.000000e+00> : vector<16xf32>
    %269 = vector.multi_reduction <add>, %268, %cst_84 [1] : vector<16x16xf32> to vector<16xf32>
    %270 = vector.shape_cast %269 : vector<16xf32> to vector<16x1xf32>
    %271 = tpu.reciprocal %270 {approx = true} : vector<16x1xf32> -> vector<16x1xf32>
    %272 = vector.broadcast %271 : vector<16x1xf32> to vector<16x16xf32>
    %273 = arith.mulf %268, %272 : vector<16x16xf32>
    %274 = arith.truncf %273 : vector<16x16xf32> to vector<16x16xbf16>
    %275 = arith.truncf %260 : vector<16x8xf32> to vector<16x8xbf16>
    %cst_85 = arith.constant dense<0.000000e+00> : vector<16x8xf32>
    %276 = tpu.matmul %274, %275, %cst_85 {dimension_numbers = #tpu.dot_dimension_numbers<[1], [0], [0], [1], [0, 0, 1, 1], [], []>} : vector<16x16xbf16>, vector<16x8xbf16>, vector<16x8xf32> -> vector<16x8xf32>
    %277 = tpu.concatenate %219, %238, %257, %276 in 1 : vector<16x8xf32>, vector<16x8xf32>, vector<16x8xf32>, vector<16x8xf32> -> vector<16x32xf32>
    %278 = arith.truncf %277 : vector<16x32xf32> to vector<16x32xbf16>
    %cst_86 = arith.constant dense<0.000000e+00> : vector<16x32xf32>
    %279 = tpu.matmul %278, %187, %cst_86 {dimension_numbers = #tpu.dot_dimension_numbers<[1], [0], [0], [1], [0, 0, 1, 1], [], []>} : vector<16x32xbf16>, vector<32x32xbf16>, vector<16x32xf32> -> vector<16x32xf32>
    %280 = vector.broadcast %188 : vector<1x32xf32> to vector<16x32xf32>
    %281 = arith.addf %279, %280 : vector<16x32xf32>
    %282 = vector.extract_strided_slice %200 {offsets = [0, 0], sizes = [16, 8], strides = [1, 1]} : vector<16x96xf32> to vector<16x8xf32>
    %283 = vector.extract_strided_slice %196 {offsets = [0, 32], sizes = [16, 8], strides = [1, 1]} : vector<16x96xf32> to vector<16x8xf32>
    %284 = vector.extract_strided_slice %196 {offsets = [0, 64], sizes = [16, 8], strides = [1, 1]} : vector<16x96xf32> to vector<16x8xf32>
    %285 = arith.truncf %282 : vector<16x8xf32> to vector<16x8xbf16>
    %286 = arith.truncf %283 : vector<16x8xf32> to vector<16x8xbf16>
    %cst_87 = arith.constant dense<0.000000e+00> : vector<16x16xf32>
    %287 = tpu.matmul %285, %286, %cst_87 {dimension_numbers = #tpu.dot_dimension_numbers<[1], [1], [0], [0], [0, 0, 1, 0], [], []>} : vector<16x8xbf16>, vector<16x8xbf16>, vector<16x16xf32> -> vector<16x16xf32>
    %cst_88 = arith.constant dense<0xFF800000> : vector<16xf32>
    %288 = vector.multi_reduction <maximumf>, %287, %cst_88 [1] : vector<16x16xf32> to vector<16xf32>
    %289 = vector.shape_cast %288 : vector<16xf32> to vector<16x1xf32>
    %290 = vector.broadcast %289 : vector<16x1xf32> to vector<16x16xf32>
    %291 = arith.subf %287, %290 : vector<16x16xf32>
    %292 = math.exp %291 : vector<16x16xf32>
    %cst_89 = arith.constant dense<0.000000e+00> : vector<16xf32>
    %293 = vector.multi_reduction <add>, %292, %cst_89 [1] : vector<16x16xf32> to vector<16xf32>
    %294 = vector.shape_cast %293 : vector<16xf32> to vector<16x1xf32>
    %295 = tpu.reciprocal %294 {approx = true} : vector<16x1xf32> -> vector<16x1xf32>
    %296 = vector.broadcast %295 : vector<16x1xf32> to vector<16x16xf32>
    %297 = arith.mulf %292, %296 : vector<16x16xf32>
    %298 = arith.truncf %297 : vector<16x16xf32> to vector<16x16xbf16>
    %299 = arith.truncf %284 : vector<16x8xf32> to vector<16x8xbf16>
    %cst_90 = arith.constant dense<0.000000e+00> : vector<16x8xf32>
    %300 = tpu.matmul %298, %299, %cst_90 {dimension_numbers = #tpu.dot_dimension_numbers<[1], [0], [0], [1], [0, 0, 1, 1], [], []>} : vector<16x16xbf16>, vector<16x8xbf16>, vector<16x8xf32> -> vector<16x8xf32>
    %301 = vector.extract_strided_slice %200 {offsets = [0, 8], sizes = [16, 8], strides = [1, 1]} : vector<16x96xf32> to vector<16x8xf32>
    %302 = vector.extract_strided_slice %196 {offsets = [0, 40], sizes = [16, 8], strides = [1, 1]} : vector<16x96xf32> to vector<16x8xf32>
    %303 = vector.extract_strided_slice %196 {offsets = [0, 72], sizes = [16, 8], strides = [1, 1]} : vector<16x96xf32> to vector<16x8xf32>
    %304 = arith.truncf %301 : vector<16x8xf32> to vector<16x8xbf16>
    %305 = arith.truncf %302 : vector<16x8xf32> to vector<16x8xbf16>
    %cst_91 = arith.constant dense<0.000000e+00> : vector<16x16xf32>
    %306 = tpu.matmul %304, %305, %cst_91 {dimension_numbers = #tpu.dot_dimension_numbers<[1], [1], [0], [0], [0, 0, 1, 0], [], []>} : vector<16x8xbf16>, vector<16x8xbf16>, vector<16x16xf32> -> vector<16x16xf32>
    %cst_92 = arith.constant dense<0xFF800000> : vector<16xf32>
    %307 = vector.multi_reduction <maximumf>, %306, %cst_92 [1] : vector<16x16xf32> to vector<16xf32>
    %308 = vector.shape_cast %307 : vector<16xf32> to vector<16x1xf32>
    %309 = vector.broadcast %308 : vector<16x1xf32> to vector<16x16xf32>
    %310 = arith.subf %306, %309 : vector<16x16xf32>
    %311 = math.exp %310 : vector<16x16xf32>
    %cst_93 = arith.constant dense<0.000000e+00> : vector<16xf32>
    %312 = vector.multi_reduction <add>, %311, %cst_93 [1] : vector<16x16xf32> to vector<16xf32>
    %313 = vector.shape_cast %312 : vector<16xf32> to vector<16x1xf32>
    %314 = tpu.reciprocal %313 {approx = true} : vector<16x1xf32> -> vector<16x1xf32>
    %315 = vector.broadcast %314 : vector<16x1xf32> to vector<16x16xf32>
    %316 = arith.mulf %311, %315 : vector<16x16xf32>
    %317 = arith.truncf %316 : vector<16x16xf32> to vector<16x16xbf16>
    %318 = arith.truncf %303 : vector<16x8xf32> to vector<16x8xbf16>
    %cst_94 = arith.constant dense<0.000000e+00> : vector<16x8xf32>
    %319 = tpu.matmul %317, %318, %cst_94 {dimension_numbers = #tpu.dot_dimension_numbers<[1], [0], [0], [1], [0, 0, 1, 1], [], []>} : vector<16x16xbf16>, vector<16x8xbf16>, vector<16x8xf32> -> vector<16x8xf32>
    %320 = vector.extract_strided_slice %200 {offsets = [0, 16], sizes = [16, 8], strides = [1, 1]} : vector<16x96xf32> to vector<16x8xf32>
    %321 = vector.extract_strided_slice %196 {offsets = [0, 48], sizes = [16, 8], strides = [1, 1]} : vector<16x96xf32> to vector<16x8xf32>
    %322 = vector.extract_strided_slice %196 {offsets = [0, 80], sizes = [16, 8], strides = [1, 1]} : vector<16x96xf32> to vector<16x8xf32>
    %323 = arith.truncf %320 : vector<16x8xf32> to vector<16x8xbf16>
    %324 = arith.truncf %321 : vector<16x8xf32> to vector<16x8xbf16>
    %cst_95 = arith.constant dense<0.000000e+00> : vector<16x16xf32>
    %325 = tpu.matmul %323, %324, %cst_95 {dimension_numbers = #tpu.dot_dimension_numbers<[1], [1], [0], [0], [0, 0, 1, 0], [], []>} : vector<16x8xbf16>, vector<16x8xbf16>, vector<16x16xf32> -> vector<16x16xf32>
    %cst_96 = arith.constant dense<0xFF800000> : vector<16xf32>
    %326 = vector.multi_reduction <maximumf>, %325, %cst_96 [1] : vector<16x16xf32> to vector<16xf32>
    %327 = vector.shape_cast %326 : vector<16xf32> to vector<16x1xf32>
    %328 = vector.broadcast %327 : vector<16x1xf32> to vector<16x16xf32>
    %329 = arith.subf %325, %328 : vector<16x16xf32>
    %330 = math.exp %329 : vector<16x16xf32>
    %cst_97 = arith.constant dense<0.000000e+00> : vector<16xf32>
    %331 = vector.multi_reduction <add>, %330, %cst_97 [1] : vector<16x16xf32> to vector<16xf32>
    %332 = vector.shape_cast %331 : vector<16xf32> to vector<16x1xf32>
    %333 = tpu.reciprocal %332 {approx = true} : vector<16x1xf32> -> vector<16x1xf32>
    %334 = vector.broadcast %333 : vector<16x1xf32> to vector<16x16xf32>
    %335 = arith.mulf %330, %334 : vector<16x16xf32>
    %336 = arith.truncf %335 : vector<16x16xf32> to vector<16x16xbf16>
    %337 = arith.truncf %322 : vector<16x8xf32> to vector<16x8xbf16>
    %cst_98 = arith.constant dense<0.000000e+00> : vector<16x8xf32>
    %338 = tpu.matmul %336, %337, %cst_98 {dimension_numbers = #tpu.dot_dimension_numbers<[1], [0], [0], [1], [0, 0, 1, 1], [], []>} : vector<16x16xbf16>, vector<16x8xbf16>, vector<16x8xf32> -> vector<16x8xf32>
    %339 = vector.extract_strided_slice %200 {offsets = [0, 24], sizes = [16, 8], strides = [1, 1]} : vector<16x96xf32> to vector<16x8xf32>
    %340 = vector.extract_strided_slice %196 {offsets = [0, 56], sizes = [16, 8], strides = [1, 1]} : vector<16x96xf32> to vector<16x8xf32>
    %341 = vector.extract_strided_slice %196 {offsets = [0, 88], sizes = [16, 8], strides = [1, 1]} : vector<16x96xf32> to vector<16x8xf32>
    %342 = arith.truncf %339 : vector<16x8xf32> to vector<16x8xbf16>
    %343 = arith.truncf %340 : vector<16x8xf32> to vector<16x8xbf16>
    %cst_99 = arith.constant dense<0.000000e+00> : vector<16x16xf32>
    %344 = tpu.matmul %342, %343, %cst_99 {dimension_numbers = #tpu.dot_dimension_numbers<[1], [1], [0], [0], [0, 0, 1, 0], [], []>} : vector<16x8xbf16>, vector<16x8xbf16>, vector<16x16xf32> -> vector<16x16xf32>
    %cst_100 = arith.constant dense<0xFF800000> : vector<16xf32>
    %345 = vector.multi_reduction <maximumf>, %344, %cst_100 [1] : vector<16x16xf32> to vector<16xf32>
    %346 = vector.shape_cast %345 : vector<16xf32> to vector<16x1xf32>
    %347 = vector.broadcast %346 : vector<16x1xf32> to vector<16x16xf32>
    %348 = arith.subf %344, %347 : vector<16x16xf32>
    %349 = math.exp %348 : vector<16x16xf32>
    %cst_101 = arith.constant dense<0.000000e+00> : vector<16xf32>
    %350 = vector.multi_reduction <add>, %349, %cst_101 [1] : vector<16x16xf32> to vector<16xf32>
    %351 = vector.shape_cast %350 : vector<16xf32> to vector<16x1xf32>
    %352 = tpu.reciprocal %351 {approx = true} : vector<16x1xf32> -> vector<16x1xf32>
    %353 = vector.broadcast %352 : vector<16x1xf32> to vector<16x16xf32>
    %354 = arith.mulf %349, %353 : vector<16x16xf32>
    %355 = arith.truncf %354 : vector<16x16xf32> to vector<16x16xbf16>
    %356 = arith.truncf %341 : vector<16x8xf32> to vector<16x8xbf16>
    %cst_102 = arith.constant dense<0.000000e+00> : vector<16x8xf32>
    %357 = tpu.matmul %355, %356, %cst_102 {dimension_numbers = #tpu.dot_dimension_numbers<[1], [0], [0], [1], [0, 0, 1, 1], [], []>} : vector<16x16xbf16>, vector<16x8xbf16>, vector<16x8xf32> -> vector<16x8xf32>
    %358 = tpu.concatenate %300, %319, %338, %357 in 1 : vector<16x8xf32>, vector<16x8xf32>, vector<16x8xf32>, vector<16x8xf32> -> vector<16x32xf32>
    %359 = arith.truncf %358 : vector<16x32xf32> to vector<16x32xbf16>
    %cst_103 = arith.constant dense<0.000000e+00> : vector<16x32xf32>
    %360 = tpu.matmul %359, %187, %cst_103 {dimension_numbers = #tpu.dot_dimension_numbers<[1], [0], [0], [1], [0, 0, 1, 1], [], []>} : vector<16x32xbf16>, vector<32x32xbf16>, vector<16x32xf32> -> vector<16x32xf32>
    %361 = vector.broadcast %188 : vector<1x32xf32> to vector<16x32xf32>
    %362 = arith.addf %360, %361 : vector<16x32xf32>
    %363 = arith.addf %190, %362 : vector<16x32xf32>
    %cst_104 = arith.constant 5.000000e-01 : f32
    %364 = vector.broadcast %cst_104 : f32 to vector<16x32xf32>
    %365 = arith.mulf %363, %364 : vector<16x32xf32>
    %366 = arith.addf %192, %281 : vector<16x32xf32>
    %cst_105 = arith.constant 5.000000e-01 : f32
    %367 = vector.broadcast %cst_105 : f32 to vector<16x32xf32>
    %368 = arith.mulf %366, %367 : vector<16x32xf32>
    %369 = vector.extract_strided_slice %184 {offsets = [2, 0, 0], sizes = [1, 16, 32], strides = [1, 1, 1]} : vector<4x16x32xf32> to vector<1x16x32xf32>
    %370 = vector.shape_cast %369 : vector<1x16x32xf32> to vector<16x32xf32>
    %371 = arith.truncf %365 : vector<16x32xf32> to vector<16x32xbf16>
    %cst_106 = arith.constant dense<0.000000e+00> : vector<16x96xf32>
    %372 = tpu.matmul %371, %185, %cst_106 {dimension_numbers = #tpu.dot_dimension_numbers<[1], [0], [0], [1], [0, 0, 1, 1], [], []>} : vector<16x32xbf16>, vector<32x96xbf16>, vector<16x96xf32> -> vector<16x96xf32>
    %373 = vector.broadcast %186 : vector<1x96xf32> to vector<16x96xf32>
    %374 = arith.addf %372, %373 : vector<16x96xf32>
    %375 = arith.truncf %370 : vector<16x32xf32> to vector<16x32xbf16>
    %cst_107 = arith.constant dense<0.000000e+00> : vector<16x96xf32>
    %376 = tpu.matmul %375, %185, %cst_107 {dimension_numbers = #tpu.dot_dimension_numbers<[1], [0], [0], [1], [0, 0, 1, 1], [], []>} : vector<16x32xbf16>, vector<32x96xbf16>, vector<16x96xf32> -> vector<16x96xf32>
    %377 = vector.broadcast %186 : vector<1x96xf32> to vector<16x96xf32>
    %378 = arith.addf %376, %377 : vector<16x96xf32>
    %379 = vector.extract_strided_slice %374 {offsets = [0, 0], sizes = [16, 8], strides = [1, 1]} : vector<16x96xf32> to vector<16x8xf32>
    %380 = vector.extract_strided_slice %378 {offsets = [0, 32], sizes = [16, 8], strides = [1, 1]} : vector<16x96xf32> to vector<16x8xf32>
    %381 = vector.extract_strided_slice %378 {offsets = [0, 64], sizes = [16, 8], strides = [1, 1]} : vector<16x96xf32> to vector<16x8xf32>
    %382 = arith.truncf %379 : vector<16x8xf32> to vector<16x8xbf16>
    %383 = arith.truncf %380 : vector<16x8xf32> to vector<16x8xbf16>
    %cst_108 = arith.constant dense<0.000000e+00> : vector<16x16xf32>
    %384 = tpu.matmul %382, %383, %cst_108 {dimension_numbers = #tpu.dot_dimension_numbers<[1], [1], [0], [0], [0, 0, 1, 0], [], []>} : vector<16x8xbf16>, vector<16x8xbf16>, vector<16x16xf32> -> vector<16x16xf32>
    %cst_109 = arith.constant dense<0xFF800000> : vector<16xf32>
    %385 = vector.multi_reduction <maximumf>, %384, %cst_109 [1] : vector<16x16xf32> to vector<16xf32>
    %386 = vector.shape_cast %385 : vector<16xf32> to vector<16x1xf32>
    %387 = vector.broadcast %386 : vector<16x1xf32> to vector<16x16xf32>
    %388 = arith.subf %384, %387 : vector<16x16xf32>
    %389 = math.exp %388 : vector<16x16xf32>
    %cst_110 = arith.constant dense<0.000000e+00> : vector<16xf32>
    %390 = vector.multi_reduction <add>, %389, %cst_110 [1] : vector<16x16xf32> to vector<16xf32>
    %391 = vector.shape_cast %390 : vector<16xf32> to vector<16x1xf32>
    %392 = tpu.reciprocal %391 {approx = true} : vector<16x1xf32> -> vector<16x1xf32>
    %393 = vector.broadcast %392 : vector<16x1xf32> to vector<16x16xf32>
    %394 = arith.mulf %389, %393 : vector<16x16xf32>
    %395 = arith.truncf %394 : vector<16x16xf32> to vector<16x16xbf16>
    %396 = arith.truncf %381 : vector<16x8xf32> to vector<16x8xbf16>
    %cst_111 = arith.constant dense<0.000000e+00> : vector<16x8xf32>
    %397 = tpu.matmul %395, %396, %cst_111 {dimension_numbers = #tpu.dot_dimension_numbers<[1], [0], [0], [1], [0, 0, 1, 1], [], []>} : vector<16x16xbf16>, vector<16x8xbf16>, vector<16x8xf32> -> vector<16x8xf32>
    %398 = vector.extract_strided_slice %374 {offsets = [0, 8], sizes = [16, 8], strides = [1, 1]} : vector<16x96xf32> to vector<16x8xf32>
    %399 = vector.extract_strided_slice %378 {offsets = [0, 40], sizes = [16, 8], strides = [1, 1]} : vector<16x96xf32> to vector<16x8xf32>
    %400 = vector.extract_strided_slice %378 {offsets = [0, 72], sizes = [16, 8], strides = [1, 1]} : vector<16x96xf32> to vector<16x8xf32>
    %401 = arith.truncf %398 : vector<16x8xf32> to vector<16x8xbf16>
    %402 = arith.truncf %399 : vector<16x8xf32> to vector<16x8xbf16>
    %cst_112 = arith.constant dense<0.000000e+00> : vector<16x16xf32>
    %403 = tpu.matmul %401, %402, %cst_112 {dimension_numbers = #tpu.dot_dimension_numbers<[1], [1], [0], [0], [0, 0, 1, 0], [], []>} : vector<16x8xbf16>, vector<16x8xbf16>, vector<16x16xf32> -> vector<16x16xf32>
    %cst_113 = arith.constant dense<0xFF800000> : vector<16xf32>
    %404 = vector.multi_reduction <maximumf>, %403, %cst_113 [1] : vector<16x16xf32> to vector<16xf32>
    %405 = vector.shape_cast %404 : vector<16xf32> to vector<16x1xf32>
    %406 = vector.broadcast %405 : vector<16x1xf32> to vector<16x16xf32>
    %407 = arith.subf %403, %406 : vector<16x16xf32>
    %408 = math.exp %407 : vector<16x16xf32>
    %cst_114 = arith.constant dense<0.000000e+00> : vector<16xf32>
    %409 = vector.multi_reduction <add>, %408, %cst_114 [1] : vector<16x16xf32> to vector<16xf32>
    %410 = vector.shape_cast %409 : vector<16xf32> to vector<16x1xf32>
    %411 = tpu.reciprocal %410 {approx = true} : vector<16x1xf32> -> vector<16x1xf32>
    %412 = vector.broadcast %411 : vector<16x1xf32> to vector<16x16xf32>
    %413 = arith.mulf %408, %412 : vector<16x16xf32>
    %414 = arith.truncf %413 : vector<16x16xf32> to vector<16x16xbf16>
    %415 = arith.truncf %400 : vector<16x8xf32> to vector<16x8xbf16>
    %cst_115 = arith.constant dense<0.000000e+00> : vector<16x8xf32>
    %416 = tpu.matmul %414, %415, %cst_115 {dimension_numbers = #tpu.dot_dimension_numbers<[1], [0], [0], [1], [0, 0, 1, 1], [], []>} : vector<16x16xbf16>, vector<16x8xbf16>, vector<16x8xf32> -> vector<16x8xf32>
    %417 = vector.extract_strided_slice %374 {offsets = [0, 16], sizes = [16, 8], strides = [1, 1]} : vector<16x96xf32> to vector<16x8xf32>
    %418 = vector.extract_strided_slice %378 {offsets = [0, 48], sizes = [16, 8], strides = [1, 1]} : vector<16x96xf32> to vector<16x8xf32>
    %419 = vector.extract_strided_slice %378 {offsets = [0, 80], sizes = [16, 8], strides = [1, 1]} : vector<16x96xf32> to vector<16x8xf32>
    %420 = arith.truncf %417 : vector<16x8xf32> to vector<16x8xbf16>
    %421 = arith.truncf %418 : vector<16x8xf32> to vector<16x8xbf16>
    %cst_116 = arith.constant dense<0.000000e+00> : vector<16x16xf32>
    %422 = tpu.matmul %420, %421, %cst_116 {dimension_numbers = #tpu.dot_dimension_numbers<[1], [1], [0], [0], [0, 0, 1, 0], [], []>} : vector<16x8xbf16>, vector<16x8xbf16>, vector<16x16xf32> -> vector<16x16xf32>
    %cst_117 = arith.constant dense<0xFF800000> : vector<16xf32>
    %423 = vector.multi_reduction <maximumf>, %422, %cst_117 [1] : vector<16x16xf32> to vector<16xf32>
    %424 = vector.shape_cast %423 : vector<16xf32> to vector<16x1xf32>
    %425 = vector.broadcast %424 : vector<16x1xf32> to vector<16x16xf32>
    %426 = arith.subf %422, %425 : vector<16x16xf32>
    %427 = math.exp %426 : vector<16x16xf32>
    %cst_118 = arith.constant dense<0.000000e+00> : vector<16xf32>
    %428 = vector.multi_reduction <add>, %427, %cst_118 [1] : vector<16x16xf32> to vector<16xf32>
    %429 = vector.shape_cast %428 : vector<16xf32> to vector<16x1xf32>
    %430 = tpu.reciprocal %429 {approx = true} : vector<16x1xf32> -> vector<16x1xf32>
    %431 = vector.broadcast %430 : vector<16x1xf32> to vector<16x16xf32>
    %432 = arith.mulf %427, %431 : vector<16x16xf32>
    %433 = arith.truncf %432 : vector<16x16xf32> to vector<16x16xbf16>
    %434 = arith.truncf %419 : vector<16x8xf32> to vector<16x8xbf16>
    %cst_119 = arith.constant dense<0.000000e+00> : vector<16x8xf32>
    %435 = tpu.matmul %433, %434, %cst_119 {dimension_numbers = #tpu.dot_dimension_numbers<[1], [0], [0], [1], [0, 0, 1, 1], [], []>} : vector<16x16xbf16>, vector<16x8xbf16>, vector<16x8xf32> -> vector<16x8xf32>
    %436 = vector.extract_strided_slice %374 {offsets = [0, 24], sizes = [16, 8], strides = [1, 1]} : vector<16x96xf32> to vector<16x8xf32>
    %437 = vector.extract_strided_slice %378 {offsets = [0, 56], sizes = [16, 8], strides = [1, 1]} : vector<16x96xf32> to vector<16x8xf32>
    %438 = vector.extract_strided_slice %378 {offsets = [0, 88], sizes = [16, 8], strides = [1, 1]} : vector<16x96xf32> to vector<16x8xf32>
    %439 = arith.truncf %436 : vector<16x8xf32> to vector<16x8xbf16>
    %440 = arith.truncf %437 : vector<16x8xf32> to vector<16x8xbf16>
    %cst_120 = arith.constant dense<0.000000e+00> : vector<16x16xf32>
    %441 = tpu.matmul %439, %440, %cst_120 {dimension_numbers = #tpu.dot_dimension_numbers<[1], [1], [0], [0], [0, 0, 1, 0], [], []>} : vector<16x8xbf16>, vector<16x8xbf16>, vector<16x16xf32> -> vector<16x16xf32>
    %cst_121 = arith.constant dense<0xFF800000> : vector<16xf32>
    %442 = vector.multi_reduction <maximumf>, %441, %cst_121 [1] : vector<16x16xf32> to vector<16xf32>
    %443 = vector.shape_cast %442 : vector<16xf32> to vector<16x1xf32>
    %444 = vector.broadcast %443 : vector<16x1xf32> to vector<16x16xf32>
    %445 = arith.subf %441, %444 : vector<16x16xf32>
    %446 = math.exp %445 : vector<16x16xf32>
    %cst_122 = arith.constant dense<0.000000e+00> : vector<16xf32>
    %447 = vector.multi_reduction <add>, %446, %cst_122 [1] : vector<16x16xf32> to vector<16xf32>
    %448 = vector.shape_cast %447 : vector<16xf32> to vector<16x1xf32>
    %449 = tpu.reciprocal %448 {approx = true} : vector<16x1xf32> -> vector<16x1xf32>
    %450 = vector.broadcast %449 : vector<16x1xf32> to vector<16x16xf32>
    %451 = arith.mulf %446, %450 : vector<16x16xf32>
    %452 = arith.truncf %451 : vector<16x16xf32> to vector<16x16xbf16>
    %453 = arith.truncf %438 : vector<16x8xf32> to vector<16x8xbf16>
    %cst_123 = arith.constant dense<0.000000e+00> : vector<16x8xf32>
    %454 = tpu.matmul %452, %453, %cst_123 {dimension_numbers = #tpu.dot_dimension_numbers<[1], [0], [0], [1], [0, 0, 1, 1], [], []>} : vector<16x16xbf16>, vector<16x8xbf16>, vector<16x8xf32> -> vector<16x8xf32>
    %455 = tpu.concatenate %397, %416, %435, %454 in 1 : vector<16x8xf32>, vector<16x8xf32>, vector<16x8xf32>, vector<16x8xf32> -> vector<16x32xf32>
    %456 = arith.truncf %455 : vector<16x32xf32> to vector<16x32xbf16>
    %cst_124 = arith.constant dense<0.000000e+00> : vector<16x32xf32>
    %457 = tpu.matmul %456, %187, %cst_124 {dimension_numbers = #tpu.dot_dimension_numbers<[1], [0], [0], [1], [0, 0, 1, 1], [], []>} : vector<16x32xbf16>, vector<32x32xbf16>, vector<16x32xf32> -> vector<16x32xf32>
    %458 = vector.broadcast %188 : vector<1x32xf32> to vector<16x32xf32>
    %459 = arith.addf %457, %458 : vector<16x32xf32>
    %460 = vector.extract_strided_slice %378 {offsets = [0, 0], sizes = [16, 8], strides = [1, 1]} : vector<16x96xf32> to vector<16x8xf32>
    %461 = vector.extract_strided_slice %374 {offsets = [0, 32], sizes = [16, 8], strides = [1, 1]} : vector<16x96xf32> to vector<16x8xf32>
    %462 = vector.extract_strided_slice %374 {offsets = [0, 64], sizes = [16, 8], strides = [1, 1]} : vector<16x96xf32> to vector<16x8xf32>
    %463 = arith.truncf %460 : vector<16x8xf32> to vector<16x8xbf16>
    %464 = arith.truncf %461 : vector<16x8xf32> to vector<16x8xbf16>
    %cst_125 = arith.constant dense<0.000000e+00> : vector<16x16xf32>
    %465 = tpu.matmul %463, %464, %cst_125 {dimension_numbers = #tpu.dot_dimension_numbers<[1], [1], [0], [0], [0, 0, 1, 0], [], []>} : vector<16x8xbf16>, vector<16x8xbf16>, vector<16x16xf32> -> vector<16x16xf32>
    %cst_126 = arith.constant dense<0xFF800000> : vector<16xf32>
    %466 = vector.multi_reduction <maximumf>, %465, %cst_126 [1] : vector<16x16xf32> to vector<16xf32>
    %467 = vector.shape_cast %466 : vector<16xf32> to vector<16x1xf32>
    %468 = vector.broadcast %467 : vector<16x1xf32> to vector<16x16xf32>
    %469 = arith.subf %465, %468 : vector<16x16xf32>
    %470 = math.exp %469 : vector<16x16xf32>
    %cst_127 = arith.constant dense<0.000000e+00> : vector<16xf32>
    %471 = vector.multi_reduction <add>, %470, %cst_127 [1] : vector<16x16xf32> to vector<16xf32>
    %472 = vector.shape_cast %471 : vector<16xf32> to vector<16x1xf32>
    %473 = tpu.reciprocal %472 {approx = true} : vector<16x1xf32> -> vector<16x1xf32>
    %474 = vector.broadcast %473 : vector<16x1xf32> to vector<16x16xf32>
    %475 = arith.mulf %470, %474 : vector<16x16xf32>
    %476 = arith.truncf %475 : vector<16x16xf32> to vector<16x16xbf16>
    %477 = arith.truncf %462 : vector<16x8xf32> to vector<16x8xbf16>
    %cst_128 = arith.constant dense<0.000000e+00> : vector<16x8xf32>
    %478 = tpu.matmul %476, %477, %cst_128 {dimension_numbers = #tpu.dot_dimension_numbers<[1], [0], [0], [1], [0, 0, 1, 1], [], []>} : vector<16x16xbf16>, vector<16x8xbf16>, vector<16x8xf32> -> vector<16x8xf32>
    %479 = vector.extract_strided_slice %378 {offsets = [0, 8], sizes = [16, 8], strides = [1, 1]} : vector<16x96xf32> to vector<16x8xf32>
    %480 = vector.extract_strided_slice %374 {offsets = [0, 40], sizes = [16, 8], strides = [1, 1]} : vector<16x96xf32> to vector<16x8xf32>
    %481 = vector.extract_strided_slice %374 {offsets = [0, 72], sizes = [16, 8], strides = [1, 1]} : vector<16x96xf32> to vector<16x8xf32>
    %482 = arith.truncf %479 : vector<16x8xf32> to vector<16x8xbf16>
    %483 = arith.truncf %480 : vector<16x8xf32> to vector<16x8xbf16>
    %cst_129 = arith.constant dense<0.000000e+00> : vector<16x16xf32>
    %484 = tpu.matmul %482, %483, %cst_129 {dimension_numbers = #tpu.dot_dimension_numbers<[1], [1], [0], [0], [0, 0, 1, 0], [], []>} : vector<16x8xbf16>, vector<16x8xbf16>, vector<16x16xf32> -> vector<16x16xf32>
    %cst_130 = arith.constant dense<0xFF800000> : vector<16xf32>
    %485 = vector.multi_reduction <maximumf>, %484, %cst_130 [1] : vector<16x16xf32> to vector<16xf32>
    %486 = vector.shape_cast %485 : vector<16xf32> to vector<16x1xf32>
    %487 = vector.broadcast %486 : vector<16x1xf32> to vector<16x16xf32>
    %488 = arith.subf %484, %487 : vector<16x16xf32>
    %489 = math.exp %488 : vector<16x16xf32>
    %cst_131 = arith.constant dense<0.000000e+00> : vector<16xf32>
    %490 = vector.multi_reduction <add>, %489, %cst_131 [1] : vector<16x16xf32> to vector<16xf32>
    %491 = vector.shape_cast %490 : vector<16xf32> to vector<16x1xf32>
    %492 = tpu.reciprocal %491 {approx = true} : vector<16x1xf32> -> vector<16x1xf32>
    %493 = vector.broadcast %492 : vector<16x1xf32> to vector<16x16xf32>
    %494 = arith.mulf %489, %493 : vector<16x16xf32>
    %495 = arith.truncf %494 : vector<16x16xf32> to vector<16x16xbf16>
    %496 = arith.truncf %481 : vector<16x8xf32> to vector<16x8xbf16>
    %cst_132 = arith.constant dense<0.000000e+00> : vector<16x8xf32>
    %497 = tpu.matmul %495, %496, %cst_132 {dimension_numbers = #tpu.dot_dimension_numbers<[1], [0], [0], [1], [0, 0, 1, 1], [], []>} : vector<16x16xbf16>, vector<16x8xbf16>, vector<16x8xf32> -> vector<16x8xf32>
    %498 = vector.extract_strided_slice %378 {offsets = [0, 16], sizes = [16, 8], strides = [1, 1]} : vector<16x96xf32> to vector<16x8xf32>
    %499 = vector.extract_strided_slice %374 {offsets = [0, 48], sizes = [16, 8], strides = [1, 1]} : vector<16x96xf32> to vector<16x8xf32>
    %500 = vector.extract_strided_slice %374 {offsets = [0, 80], sizes = [16, 8], strides = [1, 1]} : vector<16x96xf32> to vector<16x8xf32>
    %501 = arith.truncf %498 : vector<16x8xf32> to vector<16x8xbf16>
    %502 = arith.truncf %499 : vector<16x8xf32> to vector<16x8xbf16>
    %cst_133 = arith.constant dense<0.000000e+00> : vector<16x16xf32>
    %503 = tpu.matmul %501, %502, %cst_133 {dimension_numbers = #tpu.dot_dimension_numbers<[1], [1], [0], [0], [0, 0, 1, 0], [], []>} : vector<16x8xbf16>, vector<16x8xbf16>, vector<16x16xf32> -> vector<16x16xf32>
    %cst_134 = arith.constant dense<0xFF800000> : vector<16xf32>
    %504 = vector.multi_reduction <maximumf>, %503, %cst_134 [1] : vector<16x16xf32> to vector<16xf32>
    %505 = vector.shape_cast %504 : vector<16xf32> to vector<16x1xf32>
    %506 = vector.broadcast %505 : vector<16x1xf32> to vector<16x16xf32>
    %507 = arith.subf %503, %506 : vector<16x16xf32>
    %508 = math.exp %507 : vector<16x16xf32>
    %cst_135 = arith.constant dense<0.000000e+00> : vector<16xf32>
    %509 = vector.multi_reduction <add>, %508, %cst_135 [1] : vector<16x16xf32> to vector<16xf32>
    %510 = vector.shape_cast %509 : vector<16xf32> to vector<16x1xf32>
    %511 = tpu.reciprocal %510 {approx = true} : vector<16x1xf32> -> vector<16x1xf32>
    %512 = vector.broadcast %511 : vector<16x1xf32> to vector<16x16xf32>
    %513 = arith.mulf %508, %512 : vector<16x16xf32>
    %514 = arith.truncf %513 : vector<16x16xf32> to vector<16x16xbf16>
    %515 = arith.truncf %500 : vector<16x8xf32> to vector<16x8xbf16>
    %cst_136 = arith.constant dense<0.000000e+00> : vector<16x8xf32>
    %516 = tpu.matmul %514, %515, %cst_136 {dimension_numbers = #tpu.dot_dimension_numbers<[1], [0], [0], [1], [0, 0, 1, 1], [], []>} : vector<16x16xbf16>, vector<16x8xbf16>, vector<16x8xf32> -> vector<16x8xf32>
    %517 = vector.extract_strided_slice %378 {offsets = [0, 24], sizes = [16, 8], strides = [1, 1]} : vector<16x96xf32> to vector<16x8xf32>
    %518 = vector.extract_strided_slice %374 {offsets = [0, 56], sizes = [16, 8], strides = [1, 1]} : vector<16x96xf32> to vector<16x8xf32>
    %519 = vector.extract_strided_slice %374 {offsets = [0, 88], sizes = [16, 8], strides = [1, 1]} : vector<16x96xf32> to vector<16x8xf32>
    %520 = arith.truncf %517 : vector<16x8xf32> to vector<16x8xbf16>
    %521 = arith.truncf %518 : vector<16x8xf32> to vector<16x8xbf16>
    %cst_137 = arith.constant dense<0.000000e+00> : vector<16x16xf32>
    %522 = tpu.matmul %520, %521, %cst_137 {dimension_numbers = #tpu.dot_dimension_numbers<[1], [1], [0], [0], [0, 0, 1, 0], [], []>} : vector<16x8xbf16>, vector<16x8xbf16>, vector<16x16xf32> -> vector<16x16xf32>
    %cst_138 = arith.constant dense<0xFF800000> : vector<16xf32>
    %523 = vector.multi_reduction <maximumf>, %522, %cst_138 [1] : vector<16x16xf32> to vector<16xf32>
    %524 = vector.shape_cast %523 : vector<16xf32> to vector<16x1xf32>
    %525 = vector.broadcast %524 : vector<16x1xf32> to vector<16x16xf32>
    %526 = arith.subf %522, %525 : vector<16x16xf32>
    %527 = math.exp %526 : vector<16x16xf32>
    %cst_139 = arith.constant dense<0.000000e+00> : vector<16xf32>
    %528 = vector.multi_reduction <add>, %527, %cst_139 [1] : vector<16x16xf32> to vector<16xf32>
    %529 = vector.shape_cast %528 : vector<16xf32> to vector<16x1xf32>
    %530 = tpu.reciprocal %529 {approx = true} : vector<16x1xf32> -> vector<16x1xf32>
    %531 = vector.broadcast %530 : vector<16x1xf32> to vector<16x16xf32>
    %532 = arith.mulf %527, %531 : vector<16x16xf32>
    %533 = arith.truncf %532 : vector<16x16xf32> to vector<16x16xbf16>
    %534 = arith.truncf %519 : vector<16x8xf32> to vector<16x8xbf16>
    %cst_140 = arith.constant dense<0.000000e+00> : vector<16x8xf32>
    %535 = tpu.matmul %533, %534, %cst_140 {dimension_numbers = #tpu.dot_dimension_numbers<[1], [0], [0], [1], [0, 0, 1, 1], [], []>} : vector<16x16xbf16>, vector<16x8xbf16>, vector<16x8xf32> -> vector<16x8xf32>
    %536 = tpu.concatenate %478, %497, %516, %535 in 1 : vector<16x8xf32>, vector<16x8xf32>, vector<16x8xf32>, vector<16x8xf32> -> vector<16x32xf32>
    %537 = arith.truncf %536 : vector<16x32xf32> to vector<16x32xbf16>
    %cst_141 = arith.constant dense<0.000000e+00> : vector<16x32xf32>
    %538 = tpu.matmul %537, %187, %cst_141 {dimension_numbers = #tpu.dot_dimension_numbers<[1], [0], [0], [1], [0, 0, 1, 1], [], []>} : vector<16x32xbf16>, vector<32x32xbf16>, vector<16x32xf32> -> vector<16x32xf32>
    %539 = vector.broadcast %188 : vector<1x32xf32> to vector<16x32xf32>
    %540 = arith.addf %538, %539 : vector<16x32xf32>
    %541 = arith.addf %365, %540 : vector<16x32xf32>
    %cst_142 = arith.constant 5.000000e-01 : f32
    %542 = vector.broadcast %cst_142 : f32 to vector<16x32xf32>
    %543 = arith.mulf %541, %542 : vector<16x32xf32>
    %544 = arith.addf %370, %459 : vector<16x32xf32>
    %cst_143 = arith.constant 5.000000e-01 : f32
    %545 = vector.broadcast %cst_143 : f32 to vector<16x32xf32>
    %546 = arith.mulf %544, %545 : vector<16x32xf32>
    %547 = vector.extract_strided_slice %184 {offsets = [3, 0, 0], sizes = [1, 16, 32], strides = [1, 1, 1]} : vector<4x16x32xf32> to vector<1x16x32xf32>
    %548 = vector.shape_cast %547 : vector<1x16x32xf32> to vector<16x32xf32>
    %549 = arith.truncf %543 : vector<16x32xf32> to vector<16x32xbf16>
    %cst_144 = arith.constant dense<0.000000e+00> : vector<16x96xf32>
    %550 = tpu.matmul %549, %185, %cst_144 {dimension_numbers = #tpu.dot_dimension_numbers<[1], [0], [0], [1], [0, 0, 1, 1], [], []>} : vector<16x32xbf16>, vector<32x96xbf16>, vector<16x96xf32> -> vector<16x96xf32>
    %551 = vector.broadcast %186 : vector<1x96xf32> to vector<16x96xf32>
    %552 = arith.addf %550, %551 : vector<16x96xf32>
    %553 = arith.truncf %548 : vector<16x32xf32> to vector<16x32xbf16>
    %cst_145 = arith.constant dense<0.000000e+00> : vector<16x96xf32>
    %554 = tpu.matmul %553, %185, %cst_145 {dimension_numbers = #tpu.dot_dimension_numbers<[1], [0], [0], [1], [0, 0, 1, 1], [], []>} : vector<16x32xbf16>, vector<32x96xbf16>, vector<16x96xf32> -> vector<16x96xf32>
    %555 = vector.broadcast %186 : vector<1x96xf32> to vector<16x96xf32>
    %556 = arith.addf %554, %555 : vector<16x96xf32>
    %557 = vector.extract_strided_slice %552 {offsets = [0, 0], sizes = [16, 8], strides = [1, 1]} : vector<16x96xf32> to vector<16x8xf32>
    %558 = vector.extract_strided_slice %556 {offsets = [0, 32], sizes = [16, 8], strides = [1, 1]} : vector<16x96xf32> to vector<16x8xf32>
    %559 = vector.extract_strided_slice %556 {offsets = [0, 64], sizes = [16, 8], strides = [1, 1]} : vector<16x96xf32> to vector<16x8xf32>
    %560 = arith.truncf %557 : vector<16x8xf32> to vector<16x8xbf16>
    %561 = arith.truncf %558 : vector<16x8xf32> to vector<16x8xbf16>
    %cst_146 = arith.constant dense<0.000000e+00> : vector<16x16xf32>
    %562 = tpu.matmul %560, %561, %cst_146 {dimension_numbers = #tpu.dot_dimension_numbers<[1], [1], [0], [0], [0, 0, 1, 0], [], []>} : vector<16x8xbf16>, vector<16x8xbf16>, vector<16x16xf32> -> vector<16x16xf32>
    %cst_147 = arith.constant dense<0xFF800000> : vector<16xf32>
    %563 = vector.multi_reduction <maximumf>, %562, %cst_147 [1] : vector<16x16xf32> to vector<16xf32>
    %564 = vector.shape_cast %563 : vector<16xf32> to vector<16x1xf32>
    %565 = vector.broadcast %564 : vector<16x1xf32> to vector<16x16xf32>
    %566 = arith.subf %562, %565 : vector<16x16xf32>
    %567 = math.exp %566 : vector<16x16xf32>
    %cst_148 = arith.constant dense<0.000000e+00> : vector<16xf32>
    %568 = vector.multi_reduction <add>, %567, %cst_148 [1] : vector<16x16xf32> to vector<16xf32>
    %569 = vector.shape_cast %568 : vector<16xf32> to vector<16x1xf32>
    %570 = tpu.reciprocal %569 {approx = true} : vector<16x1xf32> -> vector<16x1xf32>
    %571 = vector.broadcast %570 : vector<16x1xf32> to vector<16x16xf32>
    %572 = arith.mulf %567, %571 : vector<16x16xf32>
    %573 = arith.truncf %572 : vector<16x16xf32> to vector<16x16xbf16>
    %574 = arith.truncf %559 : vector<16x8xf32> to vector<16x8xbf16>
    %cst_149 = arith.constant dense<0.000000e+00> : vector<16x8xf32>
    %575 = tpu.matmul %573, %574, %cst_149 {dimension_numbers = #tpu.dot_dimension_numbers<[1], [0], [0], [1], [0, 0, 1, 1], [], []>} : vector<16x16xbf16>, vector<16x8xbf16>, vector<16x8xf32> -> vector<16x8xf32>
    %576 = vector.extract_strided_slice %552 {offsets = [0, 8], sizes = [16, 8], strides = [1, 1]} : vector<16x96xf32> to vector<16x8xf32>
    %577 = vector.extract_strided_slice %556 {offsets = [0, 40], sizes = [16, 8], strides = [1, 1]} : vector<16x96xf32> to vector<16x8xf32>
    %578 = vector.extract_strided_slice %556 {offsets = [0, 72], sizes = [16, 8], strides = [1, 1]} : vector<16x96xf32> to vector<16x8xf32>
    %579 = arith.truncf %576 : vector<16x8xf32> to vector<16x8xbf16>
    %580 = arith.truncf %577 : vector<16x8xf32> to vector<16x8xbf16>
    %cst_150 = arith.constant dense<0.000000e+00> : vector<16x16xf32>
    %581 = tpu.matmul %579, %580, %cst_150 {dimension_numbers = #tpu.dot_dimension_numbers<[1], [1], [0], [0], [0, 0, 1, 0], [], []>} : vector<16x8xbf16>, vector<16x8xbf16>, vector<16x16xf32> -> vector<16x16xf32>
    %cst_151 = arith.constant dense<0xFF800000> : vector<16xf32>
    %582 = vector.multi_reduction <maximumf>, %581, %cst_151 [1] : vector<16x16xf32> to vector<16xf32>
    %583 = vector.shape_cast %582 : vector<16xf32> to vector<16x1xf32>
    %584 = vector.broadcast %583 : vector<16x1xf32> to vector<16x16xf32>
    %585 = arith.subf %581, %584 : vector<16x16xf32>
    %586 = math.exp %585 : vector<16x16xf32>
    %cst_152 = arith.constant dense<0.000000e+00> : vector<16xf32>
    %587 = vector.multi_reduction <add>, %586, %cst_152 [1] : vector<16x16xf32> to vector<16xf32>
    %588 = vector.shape_cast %587 : vector<16xf32> to vector<16x1xf32>
    %589 = tpu.reciprocal %588 {approx = true} : vector<16x1xf32> -> vector<16x1xf32>
    %590 = vector.broadcast %589 : vector<16x1xf32> to vector<16x16xf32>
    %591 = arith.mulf %586, %590 : vector<16x16xf32>
    %592 = arith.truncf %591 : vector<16x16xf32> to vector<16x16xbf16>
    %593 = arith.truncf %578 : vector<16x8xf32> to vector<16x8xbf16>
    %cst_153 = arith.constant dense<0.000000e+00> : vector<16x8xf32>
    %594 = tpu.matmul %592, %593, %cst_153 {dimension_numbers = #tpu.dot_dimension_numbers<[1], [0], [0], [1], [0, 0, 1, 1], [], []>} : vector<16x16xbf16>, vector<16x8xbf16>, vector<16x8xf32> -> vector<16x8xf32>
    %595 = vector.extract_strided_slice %552 {offsets = [0, 16], sizes = [16, 8], strides = [1, 1]} : vector<16x96xf32> to vector<16x8xf32>
    %596 = vector.extract_strided_slice %556 {offsets = [0, 48], sizes = [16, 8], strides = [1, 1]} : vector<16x96xf32> to vector<16x8xf32>
    %597 = vector.extract_strided_slice %556 {offsets = [0, 80], sizes = [16, 8], strides = [1, 1]} : vector<16x96xf32> to vector<16x8xf32>
    %598 = arith.truncf %595 : vector<16x8xf32> to vector<16x8xbf16>
    %599 = arith.truncf %596 : vector<16x8xf32> to vector<16x8xbf16>
    %cst_154 = arith.constant dense<0.000000e+00> : vector<16x16xf32>
    %600 = tpu.matmul %598, %599, %cst_154 {dimension_numbers = #tpu.dot_dimension_numbers<[1], [1], [0], [0], [0, 0, 1, 0], [], []>} : vector<16x8xbf16>, vector<16x8xbf16>, vector<16x16xf32> -> vector<16x16xf32>
    %cst_155 = arith.constant dense<0xFF800000> : vector<16xf32>
    %601 = vector.multi_reduction <maximumf>, %600, %cst_155 [1] : vector<16x16xf32> to vector<16xf32>
    %602 = vector.shape_cast %601 : vector<16xf32> to vector<16x1xf32>
    %603 = vector.broadcast %602 : vector<16x1xf32> to vector<16x16xf32>
    %604 = arith.subf %600, %603 : vector<16x16xf32>
    %605 = math.exp %604 : vector<16x16xf32>
    %cst_156 = arith.constant dense<0.000000e+00> : vector<16xf32>
    %606 = vector.multi_reduction <add>, %605, %cst_156 [1] : vector<16x16xf32> to vector<16xf32>
    %607 = vector.shape_cast %606 : vector<16xf32> to vector<16x1xf32>
    %608 = tpu.reciprocal %607 {approx = true} : vector<16x1xf32> -> vector<16x1xf32>
    %609 = vector.broadcast %608 : vector<16x1xf32> to vector<16x16xf32>
    %610 = arith.mulf %605, %609 : vector<16x16xf32>
    %611 = arith.truncf %610 : vector<16x16xf32> to vector<16x16xbf16>
    %612 = arith.truncf %597 : vector<16x8xf32> to vector<16x8xbf16>
    %cst_157 = arith.constant dense<0.000000e+00> : vector<16x8xf32>
    %613 = tpu.matmul %611, %612, %cst_157 {dimension_numbers = #tpu.dot_dimension_numbers<[1], [0], [0], [1], [0, 0, 1, 1], [], []>} : vector<16x16xbf16>, vector<16x8xbf16>, vector<16x8xf32> -> vector<16x8xf32>
    %614 = vector.extract_strided_slice %552 {offsets = [0, 24], sizes = [16, 8], strides = [1, 1]} : vector<16x96xf32> to vector<16x8xf32>
    %615 = vector.extract_strided_slice %556 {offsets = [0, 56], sizes = [16, 8], strides = [1, 1]} : vector<16x96xf32> to vector<16x8xf32>
    %616 = vector.extract_strided_slice %556 {offsets = [0, 88], sizes = [16, 8], strides = [1, 1]} : vector<16x96xf32> to vector<16x8xf32>
    %617 = arith.truncf %614 : vector<16x8xf32> to vector<16x8xbf16>
    %618 = arith.truncf %615 : vector<16x8xf32> to vector<16x8xbf16>
    %cst_158 = arith.constant dense<0.000000e+00> : vector<16x16xf32>
    %619 = tpu.matmul %617, %618, %cst_158 {dimension_numbers = #tpu.dot_dimension_numbers<[1], [1], [0], [0], [0, 0, 1, 0], [], []>} : vector<16x8xbf16>, vector<16x8xbf16>, vector<16x16xf32> -> vector<16x16xf32>
    %cst_159 = arith.constant dense<0xFF800000> : vector<16xf32>
    %620 = vector.multi_reduction <maximumf>, %619, %cst_159 [1] : vector<16x16xf32> to vector<16xf32>
    %621 = vector.shape_cast %620 : vector<16xf32> to vector<16x1xf32>
    %622 = vector.broadcast %621 : vector<16x1xf32> to vector<16x16xf32>
    %623 = arith.subf %619, %622 : vector<16x16xf32>
    %624 = math.exp %623 : vector<16x16xf32>
    %cst_160 = arith.constant dense<0.000000e+00> : vector<16xf32>
    %625 = vector.multi_reduction <add>, %624, %cst_160 [1] : vector<16x16xf32> to vector<16xf32>
    %626 = vector.shape_cast %625 : vector<16xf32> to vector<16x1xf32>
    %627 = tpu.reciprocal %626 {approx = true} : vector<16x1xf32> -> vector<16x1xf32>
    %628 = vector.broadcast %627 : vector<16x1xf32> to vector<16x16xf32>
    %629 = arith.mulf %624, %628 : vector<16x16xf32>
    %630 = arith.truncf %629 : vector<16x16xf32> to vector<16x16xbf16>
    %631 = arith.truncf %616 : vector<16x8xf32> to vector<16x8xbf16>
    %cst_161 = arith.constant dense<0.000000e+00> : vector<16x8xf32>
    %632 = tpu.matmul %630, %631, %cst_161 {dimension_numbers = #tpu.dot_dimension_numbers<[1], [0], [0], [1], [0, 0, 1, 1], [], []>} : vector<16x16xbf16>, vector<16x8xbf16>, vector<16x8xf32> -> vector<16x8xf32>
    %633 = tpu.concatenate %575, %594, %613, %632 in 1 : vector<16x8xf32>, vector<16x8xf32>, vector<16x8xf32>, vector<16x8xf32> -> vector<16x32xf32>
    %634 = arith.truncf %633 : vector<16x32xf32> to vector<16x32xbf16>
    %cst_162 = arith.constant dense<0.000000e+00> : vector<16x32xf32>
    %635 = tpu.matmul %634, %187, %cst_162 {dimension_numbers = #tpu.dot_dimension_numbers<[1], [0], [0], [1], [0, 0, 1, 1], [], []>} : vector<16x32xbf16>, vector<32x32xbf16>, vector<16x32xf32> -> vector<16x32xf32>
    %636 = vector.broadcast %188 : vector<1x32xf32> to vector<16x32xf32>
    %637 = arith.addf %635, %636 : vector<16x32xf32>
    %638 = arith.addf %548, %637 : vector<16x32xf32>
    %cst_163 = arith.constant 5.000000e-01 : f32
    %639 = vector.broadcast %cst_163 : f32 to vector<16x32xf32>
    %640 = arith.mulf %638, %639 : vector<16x32xf32>
    %641 = vector.shape_cast %190 : vector<16x32xf32> to vector<1x16x32xf32>
    %642 = vector.shape_cast %368 : vector<16x32xf32> to vector<1x16x32xf32>
    %643 = vector.shape_cast %546 : vector<16x32xf32> to vector<1x16x32xf32>
    %644 = vector.shape_cast %640 : vector<16x32xf32> to vector<1x16x32xf32>
    %645 = tpu.concatenate %641, %642, %643, %644 in 0 : vector<1x16x32xf32>, vector<1x16x32xf32>, vector<1x16x32xf32>, vector<1x16x32xf32> -> vector<4x16x32xf32>
    %646 = vector.shape_cast %645 : vector<4x16x32xf32> to vector<64x32xf32>
    %647 = arith.addf %183, %646 : vector<64x32xf32>
    %c0_164 = arith.constant 0 : index
    %c0_165 = arith.constant 0 : index
    %648 = vector.load %arg18[%c0_164, %c0_165] : memref<1x32xf32, #tpu.memory_space<vmem>>, vector<1x32xf32>
    %c0_166 = arith.constant 0 : index
    %c0_167 = arith.constant 0 : index
    %649 = vector.load %arg19[%c0_166, %c0_167] : memref<1x32xf32, #tpu.memory_space<vmem>>, vector<1x32xf32>
    %cst_168 = arith.constant dense<0.000000e+00> : vector<64xf32>
    %650 = vector.multi_reduction <add>, %647, %cst_168 [1] : vector<64x32xf32> to vector<64xf32>
    %651 = vector.shape_cast %650 : vector<64xf32> to vector<64x1xf32>
    %cst_169 = arith.constant 3.200000e+01 : f32
    %652 = vector.broadcast %cst_169 : f32 to vector<64x1xf32>
    %653 = arith.divf %651, %652 : vector<64x1xf32>
    %654 = vector.broadcast %653 : vector<64x1xf32> to vector<64x32xf32>
    %655 = arith.subf %647, %654 : vector<64x32xf32>
    %656 = arith.mulf %655, %655 : vector<64x32xf32>
    %cst_170 = arith.constant dense<0.000000e+00> : vector<64xf32>
    %657 = vector.multi_reduction <add>, %656, %cst_170 [1] : vector<64x32xf32> to vector<64xf32>
    %658 = vector.shape_cast %657 : vector<64xf32> to vector<64x1xf32>
    %cst_171 = arith.constant 3.200000e+01 : f32
    %659 = vector.broadcast %cst_171 : f32 to vector<64x1xf32>
    %660 = arith.divf %658, %659 : vector<64x1xf32>
    %661 = vector.broadcast %653 : vector<64x1xf32> to vector<64x32xf32>
    %662 = arith.subf %647, %661 : vector<64x32xf32>
    %cst_172 = arith.constant 9.99999974E-6 : f32
    %663 = vector.broadcast %cst_172 : f32 to vector<64x1xf32>
    %664 = arith.addf %660, %663 : vector<64x1xf32>
    %665 = math.rsqrt %664 : vector<64x1xf32>
    %666 = vector.broadcast %665 : vector<64x1xf32> to vector<64x32xf32>
    %667 = arith.mulf %662, %666 : vector<64x32xf32>
    %668 = vector.broadcast %648 : vector<1x32xf32> to vector<64x32xf32>
    %669 = arith.mulf %667, %668 : vector<64x32xf32>
    %670 = vector.broadcast %649 : vector<1x32xf32> to vector<64x32xf32>
    %671 = arith.addf %669, %670 : vector<64x32xf32>
    %c0_173 = arith.constant 0 : index
    %c0_174 = arith.constant 0 : index
    %672 = vector.load %arg20[%c0_173, %c0_174] : memref<32x128xbf16, #tpu.memory_space<vmem>>, vector<32x128xbf16>
    %c0_175 = arith.constant 0 : index
    %c0_176 = arith.constant 0 : index
    %673 = vector.load %arg21[%c0_175, %c0_176] : memref<1x128xf32, #tpu.memory_space<vmem>>, vector<1x128xf32>
    %c0_177 = arith.constant 0 : index
    %c0_178 = arith.constant 0 : index
    %674 = vector.load %arg22[%c0_177, %c0_178] : memref<128x32xbf16, #tpu.memory_space<vmem>>, vector<128x32xbf16>
    %c0_179 = arith.constant 0 : index
    %c0_180 = arith.constant 0 : index
    %675 = vector.load %arg23[%c0_179, %c0_180] : memref<1x32xf32, #tpu.memory_space<vmem>>, vector<1x32xf32>
    %676 = arith.truncf %671 : vector<64x32xf32> to vector<64x32xbf16>
    %cst_181 = arith.constant dense<0.000000e+00> : vector<64x128xf32>
    %677 = tpu.matmul %676, %672, %cst_181 {dimension_numbers = #tpu.dot_dimension_numbers<[1], [0], [0], [1], [0, 0, 1, 1], [], []>} : vector<64x32xbf16>, vector<32x128xbf16>, vector<64x128xf32> -> vector<64x128xf32>
    %678 = vector.broadcast %673 : vector<1x128xf32> to vector<64x128xf32>
    %679 = arith.addf %677, %678 : vector<64x128xf32>
    %680 = arith.mulf %679, %679 : vector<64x128xf32>
    %681 = arith.mulf %679, %680 : vector<64x128xf32>
    %cst_182 = arith.constant 4.471500e-02 : f32
    %682 = vector.broadcast %cst_182 : f32 to vector<64x128xf32>
    %683 = arith.mulf %682, %681 : vector<64x128xf32>
    %684 = arith.addf %679, %683 : vector<64x128xf32>
    %cst_183 = arith.constant 0.797884583 : f32
    %685 = vector.broadcast %cst_183 : f32 to vector<64x128xf32>
    %686 = arith.mulf %685, %684 : vector<64x128xf32>
    %687 = math.tanh %686 : vector<64x128xf32>
    %cst_184 = arith.constant 1.000000e+00 : f32
    %688 = vector.broadcast %cst_184 : f32 to vector<64x128xf32>
    %689 = arith.addf %688, %687 : vector<64x128xf32>
    %cst_185 = arith.constant 5.000000e-01 : f32
    %690 = vector.broadcast %cst_185 : f32 to vector<64x128xf32>
    %691 = arith.mulf %690, %689 : vector<64x128xf32>
    %692 = arith.mulf %679, %691 : vector<64x128xf32>
    %693 = arith.truncf %692 : vector<64x128xf32> to vector<64x128xbf16>
    %cst_186 = arith.constant dense<0.000000e+00> : vector<64x32xf32>
    %694 = tpu.matmul %693, %674, %cst_186 {dimension_numbers = #tpu.dot_dimension_numbers<[1], [0], [0], [1], [0, 0, 1, 1], [], []>} : vector<64x128xbf16>, vector<128x32xbf16>, vector<64x32xf32> -> vector<64x32xf32>
    %695 = vector.broadcast %675 : vector<1x32xf32> to vector<64x32xf32>
    %696 = arith.addf %694, %695 : vector<64x32xf32>
    %697 = arith.addf %671, %696 : vector<64x32xf32>
    %c0_187 = arith.constant 0 : index
    %c0_188 = arith.constant 0 : index
    %698 = vector.load %arg24[%c0_187, %c0_188] : memref<1x32xf32, #tpu.memory_space<vmem>>, vector<1x32xf32>
    %c0_189 = arith.constant 0 : index
    %c0_190 = arith.constant 0 : index
    %699 = vector.load %arg25[%c0_189, %c0_190] : memref<1x32xf32, #tpu.memory_space<vmem>>, vector<1x32xf32>
    %cst_191 = arith.constant dense<0.000000e+00> : vector<64xf32>
    %700 = vector.multi_reduction <add>, %697, %cst_191 [1] : vector<64x32xf32> to vector<64xf32>
    %701 = vector.shape_cast %700 : vector<64xf32> to vector<64x1xf32>
    %cst_192 = arith.constant 3.200000e+01 : f32
    %702 = vector.broadcast %cst_192 : f32 to vector<64x1xf32>
    %703 = arith.divf %701, %702 : vector<64x1xf32>
    %704 = vector.broadcast %703 : vector<64x1xf32> to vector<64x32xf32>
    %705 = arith.subf %697, %704 : vector<64x32xf32>
    %706 = arith.mulf %705, %705 : vector<64x32xf32>
    %cst_193 = arith.constant dense<0.000000e+00> : vector<64xf32>
    %707 = vector.multi_reduction <add>, %706, %cst_193 [1] : vector<64x32xf32> to vector<64xf32>
    %708 = vector.shape_cast %707 : vector<64xf32> to vector<64x1xf32>
    %cst_194 = arith.constant 3.200000e+01 : f32
    %709 = vector.broadcast %cst_194 : f32 to vector<64x1xf32>
    %710 = arith.divf %708, %709 : vector<64x1xf32>
    %711 = vector.broadcast %703 : vector<64x1xf32> to vector<64x32xf32>
    %712 = arith.subf %697, %711 : vector<64x32xf32>
    %cst_195 = arith.constant 9.99999974E-6 : f32
    %713 = vector.broadcast %cst_195 : f32 to vector<64x1xf32>
    %714 = arith.addf %710, %713 : vector<64x1xf32>
    %715 = math.rsqrt %714 : vector<64x1xf32>
    %716 = vector.broadcast %715 : vector<64x1xf32> to vector<64x32xf32>
    %717 = arith.mulf %712, %716 : vector<64x32xf32>
    %718 = vector.broadcast %698 : vector<1x32xf32> to vector<64x32xf32>
    %719 = arith.mulf %717, %718 : vector<64x32xf32>
    %720 = vector.broadcast %699 : vector<1x32xf32> to vector<64x32xf32>
    %721 = arith.addf %719, %720 : vector<64x32xf32>
    %722 = vector.shape_cast %721 : vector<64x32xf32> to vector<4x16x32xf32>
    %c0_196 = arith.constant 0 : index
    %c0_197 = arith.constant 0 : index
    %c0_198 = arith.constant 0 : index
    %c0_199 = arith.constant 0 : index
    %723 = vector.load %arg26[%c0_196, %c0_197, %c0_198, %c0_199] : memref<1x4x16x32xf32, #tpu.memory_space<vmem>>, vector<1x4x16x32xf32>
    %724 = vector.shape_cast %723 : vector<1x4x16x32xf32> to vector<4x16x32xf32>
    %725 = vector.shape_cast %722 : vector<4x16x32xf32> to vector<1x4x16x32xf32>
    tpu.vector_store %arg26[%c0_196, %c0_197, %c0_198, %c0_199], %725 {strides = array<i32>} : memref<1x4x16x32xf32, #tpu.memory_space<vmem>>, vector<1x4x16x32xf32>,
    return
  }
  func.func @transform_0(%arg0: i32) -> (i32, i32, i32, i32) {
    %c0_i32 = arith.constant 0 : i32
    %c0_i32_0 = arith.constant 0 : i32
    %c0_i32_1 = arith.constant 0 : i32
    %c0_i32_2 = arith.constant 0 : i32
    return %arg0, %c0_i32, %c0_i32_0, %c0_i32_1 : i32, i32, i32, i32
  }
  func.func @transform_1(%arg0: i32) -> (i32, i32) {
    %c0_i32 = arith.constant 0 : i32
    %c0_i32_0 = arith.constant 0 : i32
    %c0_i32_1 = arith.constant 0 : i32
    return %c0_i32, %c0_i32_0 : i32, i32
  }
  func.func @transform_2(%arg0: i32) -> (i32, i32) {
    %c0_i32 = arith.constant 0 : i32
    %c0_i32_0 = arith.constant 0 : i32
    %c0_i32_1 = arith.constant 0 : i32
    return %c0_i32, %c0_i32_0 : i32, i32
  }
  func.func @transform_3(%arg0: i32) -> (i32, i32) {
    %c0_i32 = arith.constant 0 : i32
    %c0_i32_0 = arith.constant 0 : i32
    %c0_i32_1 = arith.constant 0 : i32
    return %c0_i32, %c0_i32_0 : i32, i32
  }
  func.func @transform_4(%arg0: i32) -> (i32, i32) {
    %c0_i32 = arith.constant 0 : i32
    %c0_i32_0 = arith.constant 0 : i32
    %c0_i32_1 = arith.constant 0 : i32
    return %c0_i32, %c0_i32_0 : i32, i32
  }
  func.func @transform_5(%arg0: i32) -> (i32, i32) {
    %c0_i32 = arith.constant 0 : i32
    %c0_i32_0 = arith.constant 0 : i32
    %c0_i32_1 = arith.constant 0 : i32
    return %c0_i32, %c0_i32_0 : i32, i32
  }
  func.func @transform_6(%arg0: i32) -> (i32, i32) {
    %c0_i32 = arith.constant 0 : i32
    %c0_i32_0 = arith.constant 0 : i32
    %c0_i32_1 = arith.constant 0 : i32
    return %c0_i32, %c0_i32_0 : i32, i32
  }
  func.func @transform_7(%arg0: i32) -> (i32, i32) {
    %c0_i32 = arith.constant 0 : i32
    %c0_i32_0 = arith.constant 0 : i32
    %c0_i32_1 = arith.constant 0 : i32
    return %c0_i32, %c0_i32_0 : i32, i32
  }
  func.func @transform_8(%arg0: i32) -> (i32, i32) {
    %c0_i32 = arith.constant 0 : i32
    %c0_i32_0 = arith.constant 0 : i32
    %c0_i32_1 = arith.constant 0 : i32
    return %c0_i32, %c0_i32_0 : i32, i32
  }
  func.func @transform_9(%arg0: i32) -> (i32, i32) {
    %c0_i32 = arith.constant 0 : i32
    %c0_i32_0 = arith.constant 0 : i32
    %c0_i32_1 = arith.constant 0 : i32
    return %c0_i32, %c0_i32_0 : i32, i32
  }
  func.func @transform_10(%arg0: i32) -> (i32, i32) {
    %c0_i32 = arith.constant 0 : i32
    %c0_i32_0 = arith.constant 0 : i32
    %c0_i32_1 = arith.constant 0 : i32
    return %c0_i32, %c0_i32_0 : i32, i32
  }
  func.func @transform_11(%arg0: i32) -> (i32, i32) {
    %c0_i32 = arith.constant 0 : i32
    %c0_i32_0 = arith.constant 0 : i32
    %c0_i32_1 = arith.constant 0 : i32
    return %c0_i32, %c0_i32_0 : i32, i32
  }
  func.func @transform_12(%arg0: i32) -> (i32, i32) {
    %c0_i32 = arith.constant 0 : i32
    %c0_i32_0 = arith.constant 0 : i32
    %c0_i32_1 = arith.constant 0 : i32
    return %c0_i32, %c0_i32_0 : i32, i32
  }
  func.func @transform_13(%arg0: i32) -> (i32, i32) {
    %c0_i32 = arith.constant 0 : i32
    %c0_i32_0 = arith.constant 0 : i32
    %c0_i32_1 = arith.constant 0 : i32
    return %c0_i32, %c0_i32_0 : i32, i32
  }
  func.func @transform_14(%arg0: i32) -> (i32, i32) {
    %c0_i32 = arith.constant 0 : i32
    %c0_i32_0 = arith.constant 0 : i32
    %c0_i32_1 = arith.constant 0 : i32
    return %c0_i32, %c0_i32_0 : i32, i32
  }
  func.func @transform_15(%arg0: i32) -> (i32, i32) {
    %c0_i32 = arith.constant 0 : i32
    %c0_i32_0 = arith.constant 0 : i32
    %c0_i32_1 = arith.constant 0 : i32
    return %c0_i32, %c0_i32_0 : i32, i32
  }
  func.func @transform_16(%arg0: i32) -> (i32, i32) {
    %c0_i32 = arith.constant 0 : i32
    %c0_i32_0 = arith.constant 0 : i32
    %c0_i32_1 = arith.constant 0 : i32
    return %c0_i32, %c0_i32_0 : i32, i32
  }
  func.func @transform_17(%arg0: i32) -> (i32, i32) {
    %c0_i32 = arith.constant 0 : i32
    %c0_i32_0 = arith.constant 0 : i32
    %c0_i32_1 = arith.constant 0 : i32
    return %c0_i32, %c0_i32_0 : i32, i32
  }
  func.func @transform_18(%arg0: i32) -> (i32, i32) {
    %c0_i32 = arith.constant 0 : i32
    %c0_i32_0 = arith.constant 0 : i32
    %c0_i32_1 = arith.constant 0 : i32
    return %c0_i32, %c0_i32_0 : i32, i32
  }
  func.func @transform_19(%arg0: i32) -> (i32, i32) {
    %c0_i32 = arith.constant 0 : i32
    %c0_i32_0 = arith.constant 0 : i32
    %c0_i32_1 = arith.constant 0 : i32
    return %c0_i32, %c0_i32_0 : i32, i32
  }
  func.func @transform_20(%arg0: i32) -> (i32, i32) {
    %c0_i32 = arith.constant 0 : i32
    %c0_i32_0 = arith.constant 0 : i32
    %c0_i32_1 = arith.constant 0 : i32
    return %c0_i32, %c0_i32_0 : i32, i32
  }
  func.func @transform_21(%arg0: i32) -> (i32, i32) {
    %c0_i32 = arith.constant 0 : i32
    %c0_i32_0 = arith.constant 0 : i32
    %c0_i32_1 = arith.constant 0 : i32
    return %c0_i32, %c0_i32_0 : i32, i32
  }
  func.func @transform_22(%arg0: i32) -> (i32, i32) {
    %c0_i32 = arith.constant 0 : i32
    %c0_i32_0 = arith.constant 0 : i32
    %c0_i32_1 = arith.constant 0 : i32
    return %c0_i32, %c0_i32_0 : i32, i32
  }
  func.func @transform_23(%arg0: i32) -> (i32, i32) {
    %c0_i32 = arith.constant 0 : i32
    %c0_i32_0 = arith.constant 0 : i32
    %c0_i32_1 = arith.constant 0 : i32
    return %c0_i32, %c0_i32_0 : i32, i32
  }
  func.func @transform_24(%arg0: i32) -> (i32, i32) {
    %c0_i32 = arith.constant 0 : i32
    %c0_i32_0 = arith.constant 0 : i32
    %c0_i32_1 = arith.constant 0 : i32
    return %c0_i32, %c0_i32_0 : i32, i32
  }
  func.func @transform_25(%arg0: i32) -> (i32, i32, i32, i32) {
    %c0_i32 = arith.constant 0 : i32
    %c0_i32_0 = arith.constant 0 : i32
    %c0_i32_1 = arith.constant 0 : i32
    %c0_i32_2 = arith.constant 0 : i32
    return %arg0, %c0_i32, %c0_i32_0, %c0_i32_1 : i32, i32, i32, i32
  }
}

</mosaic_0001>

<llo_original>
// kernel: mwin_attention_layer_forward.1
$region0: #{mwin_attention_layer_forward.1}
  #allocation0 [shape = 'u32[]', space=smem, size = 0x4, offset = 0x4, fixed_abs, tag = 'smem constant byte address 0x4 - core index']
  #allocation1 [shape = 'u32[144,128]{1,0:T(1,128)}', space=vmem, size = 0x12000, scoped, tag = 'internal scratch']
  %s0 = inlined_call_operand.vmem [shape: f32[2,4,16,32], index: 0, kind: input, shape index: {}]
  %s1 = inlined_call_operand.vmem [shape: bf16[32,96], index: 1, kind: input, shape index: {}]
  %s2 = inlined_call_operand.vmem [shape: f32[1,96], index: 2, kind: input, shape index: {}]
  %s3 = inlined_call_operand.vmem [shape: bf16[32,32], index: 3, kind: input, shape index: {}]
  %s4 = inlined_call_operand.vmem [shape: f32[1,32], index: 4, kind: input, shape index: {}]
  %s5 = inlined_call_operand.vmem [shape: f32[1,32], index: 5, kind: input, shape index: {}]
  %s6 = inlined_call_operand.vmem [shape: f32[1,32], index: 6, kind: input, shape index: {}]
  %s7 = inlined_call_operand.hbm [shape: bf16[32,128], index: 7, kind: input, shape index: {}]
  %s8 = inlined_call_operand.hbm [shape: f32[1,128], index: 8, kind: input, shape index: {}]
  %s9 = inlined_call_operand.vmem [shape: bf16[128,32], index: 9, kind: input, shape index: {}]
  %s10 = inlined_call_operand.hbm [shape: f32[1,32], index: 10, kind: input, shape index: {}]
  %s11 = inlined_call_operand.vmem [shape: f32[1,32], index: 11, kind: input, shape index: {}]
  %s12 = inlined_call_operand.vmem [shape: f32[1,32], index: 12, kind: input, shape index: {}]
  %s13 = inlined_call_operand.hbm [shape: bf16[32,96], index: 13, kind: input, shape index: {}]
  %s14 = inlined_call_operand.hbm [shape: f32[1,96], index: 14, kind: input, shape index: {}]
  %s15 = inlined_call_operand.hbm [shape: bf16[32,32], index: 15, kind: input, shape index: {}]
  %s16 = inlined_call_operand.hbm [shape: f32[1,32], index: 16, kind: input, shape index: {}]
  %s17 = inlined_call_operand.vmem [shape: f32[1,32], index: 17, kind: input, shape index: {}]
  %s18 = inlined_call_operand.vmem [shape: f32[1,32], index: 18, kind: input, shape index: {}]
  %s19 = inlined_call_operand.hbm [shape: bf16[32,128], index: 19, kind: input, shape index: {}]
  %s20 = inlined_call_operand.hbm [shape: f32[1,128], index: 20, kind: input, shape index: {}]
  %s21 = inlined_call_operand.vmem [shape: bf16[128,32], index: 21, kind: input, shape index: {}]
  %s22 = inlined_call_operand.hbm [shape: f32[1,32], index: 22, kind: input, shape index: {}]
  %s23 = inlined_call_operand.vmem [shape: f32[1,32], index: 23, kind: input, shape index: {}]
  %s24 = inlined_call_operand.vmem [shape: f32[1,32], index: 24, kind: input, shape index: {}]
  %s25 = inlined_call_operand.hbm [shape: f32[2,4,16,32], index: 25, kind: output, shape index: {}]
  %s26 = sld [smem:[#allocation0]]
  $region173: #{mwin_attention_layer_forward.1} parent=0
    _
  %s28 = ssub.s32 1, %s26
  %s29 = scalar_select 0, %s28, %s26
  $region1: #{mwin_attention_layer_forward.1} parent=0
    #allocation2 [shape = 'u8[8192]{0}', space=vmem, size = 0x2000, scoped, tag = 'input window, operand 7, single buffered']
    #allocation3 [shape = 's32[2]{0}', space=sflag, size = 0x8, scoped, tag = 'scoped memory for mwin_attention_layer_forward.1']
    #allocation4 [shape = 's32[2]{0}', space=sflag, size = 0x8, scoped, tag = 'scoped memory for mwin_attention_layer_forward.1']
    #allocation5 [shape = 'u8[512]{0}', space=vmem, size = 0x400, scoped, tag = 'input window, operand 8, single buffered']
    #allocation6 [shape = 's32[1]{0}', space=sflag, size = 0x4, scoped, tag = 'scoped memory for mwin_attention_layer_forward.1']
    #allocation7 [shape = 'u8[512]{0}', space=vmem, size = 0x400, scoped, tag = 'input window, operand 10, single buffered']
    #allocation8 [shape = 'u8[8192]{0}', space=vmem, size = 0x2000, scoped, tag = 'input window, operand 13, single buffered']
    #allocation9 [shape = 's32[1]{0}', space=sflag, size = 0x4, scoped, tag = 'scoped memory for mwin_attention_layer_forward.1']
    #allocation10 [shape = 'u8[512]{0}', space=vmem, size = 0x400, scoped, tag = 'input window, operand 14, single buffered']
    #allocation11 [shape = 'u8[8192]{0}', space=vmem, size = 0x2000, scoped, tag = 'input window, operand 15, single buffered']
    #allocation12 [shape = 's32[1]{0}', space=sflag, size = 0x4, scoped, tag = 'scoped memory for mwin_attention_layer_forward.1']
    #allocation13 [shape = 'u8[512]{0}', space=vmem, size = 0x400, scoped, tag = 'input window, operand 16, single buffered']
    #allocation14 [shape = 'u8[8192]{0}', space=vmem, size = 0x2000, scoped, tag = 'input window, operand 19, single buffered']
    #allocation15 [shape = 's32[1]{0}', space=sflag, size = 0x4, scoped, tag = 'scoped memory for mwin_attention_layer_forward.1']
    #allocation16 [shape = 'u8[512]{0}', space=vmem, size = 0x400, scoped, tag = 'input window, operand 20, single buffered']
    #allocation17 [shape = 'u8[512]{0}', space=vmem, size = 0x400, scoped, tag = 'input window, operand 22, single buffered']
    #allocation18 [shape = 's32[1]{0}', space=sflag, size = 0x4, scoped, tag = 'scoped memory for mwin_attention_layer_forward.1']
    #allocation19 [shape = 'u8[65536]{0}', space=vmem, size = 0x10000, scoped, tag = 'output window, operand 0']
    %30 = vsyncpa [#allocation3], 0
    %31 = vsyncpa [#allocation6], 0
    %32 = vsyncpa [#allocation9], 0
    %33 = vsyncpa [#allocation12], 0
    %34 = vsyncpa [#allocation15], 0
    %35 = vsyncpa [#allocation18], 0
    %36 = vsyncpa [#allocation4], 0
    %s37 = scalar_lea.sflag [#allocation4], 1
    %38 = vsyncpa %s37, 0
    loop: start=0, step=1, limit=4
    $region2: #{mwin_attention_layer_forward.1} parent=1 // loop_pre_header
      _
    $region3: #{mwin_attention_layer_forward.1} parent=1 // loop_header
      %s40 = sphi 0, %s44
      %p41 = scmp.ge.s32.totalorder %s40, 4
      %s50 = sphi 0, %s52
      %s53 = sphi 0, %s50
      %s54 = sphi 0, %s53
      %s70 = sphi 0, %s54
      %s74 = sphi 0, %s74
      %s76 = sphi 0, %s74
      %s77 = sphi 0, %s76
      %s91 = sphi 0, %s77
      %s95 = sphi 0, %s95
      %s97 = sphi 0, %s95
      %s98 = sphi 0, %s97
      %s112 = sphi 0, %s98
      %s116 = sphi 0, %s116
      %s118 = sphi 0, %s116
      %s119 = sphi 0, %s118
      %s133 = sphi 0, %s119
      %s137 = sphi 0, %s137
      %s139 = sphi 0, %s137
      %s140 = sphi 0, %s139
      %s154 = sphi 0, %s140
      %s158 = sphi 0, %s158
      %s160 = sphi 0, %s158
      %s161 = sphi 0, %s160
      %s175 = sphi 0, %s161
      %s179 = sphi 0, %s179
      %s181 = sphi 0, %s179
      %s182 = sphi 0, %s181
      %s196 = sphi 0, %s182
      %s200 = sphi 0, %s200
      %s202 = sphi 0, %s200
      %s203 = sphi 0, %s202
      %s217 = sphi 0, %s203
      %s221 = sphi 0, %s221
      %s223 = sphi 0, %s221
      %s224 = sphi 0, %s223
      %s238 = sphi 0, %s224
      %s242 = sphi 0, %s242
      %s244 = sphi 0, %s242
      %s245 = sphi 0, %s244
      %s259 = sphi 0, %s245
      %s263 = sphi 0, %s263
      %s265 = sphi 0, %s263
      %s266 = sphi 0, %s265
      %s280 = sphi 0, %s266
      %s284 = sphi 0, %s284
      %s286 = sphi 0, %s284
      %s287 = sphi 0, %s286
      %s301 = sphi 0, %s287
      %s305 = sphi 0, %s305
      %s307 = sphi 0, %s305
      %s308 = sphi 0, %s307
      %s322 = sphi 0, %s308
      %s326 = sphi 0, %s326
      %s328 = sphi 0, %s326
      %s329 = sphi 0, %s328
      %s343 = sphi 0, %s329
      %s347 = sphi 0, %s347
      %s349 = sphi 0, %s347
      %s350 = sphi 0, %s349
      %s364 = sphi 0, %s350
      %s368 = sphi 0, %s368
      %s370 = sphi 0, %s368
      %s371 = sphi 0, %s370
      %s385 = sphi 0, %s371
      %s389 = sphi 0, %s389
      %s391 = sphi 0, %s389
      %s392 = sphi 0, %s391
      %s406 = sphi 0, %s392
      %s410 = sphi 0, %s410
      %s412 = sphi 0, %s410
      %s413 = sphi 0, %s412
      %s427 = sphi 0, %s413
      %s431 = sphi 0, %s431
      %s433 = sphi 0, %s431
      %s434 = sphi 0, %s433
      %s448 = sphi 0, %s434
      %s452 = sphi 0, %s452
      %s454 = sphi 0, %s452
      %s455 = sphi 0, %s454
      %s469 = sphi 0, %s455
      %s473 = sphi 0, %s473
      %s475 = sphi 0, %s473
      %s476 = sphi 0, %s475
      %s490 = sphi 0, %s476
      %s494 = sphi 0, %s494
      %s496 = sphi 0, %s494
      %s497 = sphi 0, %s496
      %s511 = sphi 0, %s497
      %s515 = sphi 0, %s515
      %s517 = sphi 0, %s515
      %s518 = sphi 0, %s517
      %s532 = sphi 0, %s518
      %s536 = sphi 0, %s536
      %s538 = sphi 0, %s536
      %s539 = sphi 0, %s538
      %s553 = sphi 0, %s539
      %s557 = sphi 0, %s557
      %s559 = sphi 0, %s557
      %s560 = sphi 0, %s559
      %s574 = sphi 0, %s560
      %s580 = sphi 0, %s582
      %s583 = sphi 0, %s580
      %s584 = sphi 0, %s583
      %s600 = sphi 0, %s584
    $region4: #{mwin_attention_layer_forward.1} parent=1 // loop_header_branch
      %43 = sbr.rel (%p41) target = $region8
    $region5: #{mwin_attention_layer_forward.1} parent=1 // loop_body
      %s45 = ssub.s32 %s40, 1
      %s46 = ssub.s32 %s40, 2
      %s47 = sadd.s32 %s40, 1
      %s48 = ssub.s32 %s40, %s47
      %p49 = scmp.eq.s32.totalorder %s48, 0
      %s51 = sadd.s32 %s50, 1
      %s52 = scalar_select %p49, %s50, %s51
      %p55 = pneg %p49
      %p56 = scmp.eq.s32.totalorder %s40, 1
      %p57 = por %p55, %p56
      %p58 = scmp.ne.s32.totalorder %s50, %s53
      %p59 = scmp.eq.s32.totalorder %s40, 0
      %p60 = por %p58, %p59
      %p61 = scmp.ne.s32.totalorder %s50, %s53
      %p62 = scmp.eq.s32.totalorder %s45, 1
      %p63 = por %p61, %p62
      %p64 = scmp.ne.s32.totalorder %s53, %s54
      %p65 = scmp.eq.s32.totalorder %s45, 0
      %p66 = por %p64, %p65
      %p67 = scmp.ne.s32.totalorder %s53, %s54
      %p68 = scmp.eq.s32.totalorder %s46, 1
      %p69 = por %p67, %p68
      %p71 = scmp.ne.s32.totalorder %s54, %s70
      %p72 = scmp.eq.s32.totalorder %s46, 0
      %p73 = por %p71, %p72
      %s75 = sadd.s32 %s74, 1
      %p78 = scmp.eq.s32.totalorder %s40, 1
      %p79 = scmp.ne.s32.totalorder %s74, %s76
      %p80 = scmp.eq.s32.totalorder %s40, 0
      %p81 = por %p79, %p80
      %p82 = scmp.ne.s32.totalorder %s74, %s76
      %p83 = scmp.eq.s32.totalorder %s45, 1
      %p84 = por %p82, %p83
      %p85 = scmp.ne.s32.totalorder %s76, %s77
      %p86 = scmp.eq.s32.totalorder %s45, 0
      %p87 = por %p85, %p86
      %p88 = scmp.ne.s32.totalorder %s76, %s77
      %p89 = scmp.eq.s32.totalorder %s46, 1
      %p90 = por %p88, %p89
      %p92 = scmp.ne.s32.totalorder %s77, %s91
      %p93 = scmp.eq.s32.totalorder %s46, 0
      %p94 = por %p92, %p93
      %s96 = sadd.s32 %s95, 1
      %p99 = scmp.eq.s32.totalorder %s40, 1
      %p100 = scmp.ne.s32.totalorder %s95, %s97
      %p101 = scmp.eq.s32.totalorder %s40, 0
      %p102 = por %p100, %p101
      %p103 = scmp.ne.s32.totalorder %s95, %s97
      %p104 = scmp.eq.s32.totalorder %s45, 1
      %p105 = por %p103, %p104
      %p106 = scmp.ne.s32.totalorder %s97, %s98
      %p107 = scmp.eq.s32.totalorder %s45, 0
      %p108 = por %p106, %p107
      %p109 = scmp.ne.s32.totalorder %s97, %s98
      %p110 = scmp.eq.s32.totalorder %s46, 1
      %p111 = por %p109, %p110
      %p113 = scmp.ne.s32.totalorder %s98, %s112
      %p114 = scmp.eq.s32.totalorder %s46, 0
      %p115 = por %p113, %p114
      %s117 = sadd.s32 %s116, 1
      %p120 = scmp.eq.s32.totalorder %s40, 1
      %p121 = scmp.ne.s32.totalorder %s116, %s118
      %p122 = scmp.eq.s32.totalorder %s40, 0
      %p123 = por %p121, %p122
      %p124 = scmp.ne.s32.totalorder %s116, %s118
      %p125 = scmp.eq.s32.totalorder %s45, 1
      %p126 = por %p124, %p125
      %p127 = scmp.ne.s32.totalorder %s118, %s119
      %p128 = scmp.eq.s32.totalorder %s45, 0
      %p129 = por %p127, %p128
      %p130 = scmp.ne.s32.totalorder %s118, %s119
      %p131 = scmp.eq.s32.totalorder %s46, 1
      %p132 = por %p130, %p131
      %p134 = scmp.ne.s32.totalorder %s119, %s133
      %p135 = scmp.eq.s32.totalorder %s46, 0
      %p136 = por %p134, %p135
      %s138 = sadd.s32 %s137, 1
      %p141 = scmp.eq.s32.totalorder %s40, 1
      %p142 = scmp.ne.s32.totalorder %s137, %s139
      %p143 = scmp.eq.s32.totalorder %s40, 0
      %p144 = por %p142, %p143
      %p145 = scmp.ne.s32.totalorder %s137, %s139
      %p146 = scmp.eq.s32.totalorder %s45, 1
      %p147 = por %p145, %p146
      %p148 = scmp.ne.s32.totalorder %s139, %s140
      %p149 = scmp.eq.s32.totalorder %s45, 0
      %p150 = por %p148, %p149
      %p151 = scmp.ne.s32.totalorder %s139, %s140
      %p152 = scmp.eq.s32.totalorder %s46, 1
      %p153 = por %p151, %p152
      %p155 = scmp.ne.s32.totalorder %s140, %s154
      %p156 = scmp.eq.s32.totalorder %s46, 0
      %p157 = por %p155, %p156
      %s159 = sadd.s32 %s158, 1
      %p162 = scmp.eq.s32.totalorder %s40, 1
      %p163 = scmp.ne.s32.totalorder %s158, %s160
      %p164 = scmp.eq.s32.totalorder %s40, 0
      %p165 = por %p163, %p164
      %p166 = scmp.ne.s32.totalorder %s158, %s160
      %p167 = scmp.eq.s32.totalorder %s45, 1
      %p168 = por %p166, %p167
      %p169 = scmp.ne.s32.totalorder %s160, %s161
      %p170 = scmp.eq.s32.totalorder %s45, 0
      %p171 = por %p169, %p170
      %p172 = scmp.ne.s32.totalorder %s160, %s161
      %p173 = scmp.eq.s32.totalorder %s46, 1
      %p174 = por %p172, %p173
      %p176 = scmp.ne.s32.totalorder %s161, %s175
      %p177 = scmp.eq.s32.totalorder %s46, 0
      %p178 = por %p176, %p177
      %s180 = sadd.s32 %s179, 1
      %p183 = scmp.eq.s32.totalorder %s40, 1
      %p184 = scmp.ne.s32.totalorder %s179, %s181
      %p185 = scmp.eq.s32.totalorder %s40, 0
      %p186 = por %p184, %p185
      %p187 = scmp.ne.s32.totalorder %s179, %s181
      %p188 = scmp.eq.s32.totalorder %s45, 1
      %p189 = por %p187, %p188
      %p190 = scmp.ne.s32.totalorder %s181, %s182
      %p191 = scmp.eq.s32.totalorder %s45, 0
      %p192 = por %p190, %p191
      %p193 = scmp.ne.s32.totalorder %s181, %s182
      %p194 = scmp.eq.s32.totalorder %s46, 1
      %p195 = por %p193, %p194
      %p197 = scmp.ne.s32.totalorder %s182, %s196
      %p198 = scmp.eq.s32.totalorder %s46, 0
      %p199 = por %p197, %p198
      %s201 = sadd.s32 %s200, 1
      %p204 = scmp.eq.s32.totalorder %s40, 1
      %p205 = scmp.ne.s32.totalorder %s200, %s202
      %p206 = scmp.eq.s32.totalorder %s40, 0
      %p207 = por %p205, %p206
      %p208 = scmp.ne.s32.totalorder %s200, %s202
      %p209 = scmp.eq.s32.totalorder %s45, 1
      %p210 = por %p208, %p209
      %p211 = scmp.ne.s32.totalorder %s202, %s203
      %p212 = scmp.eq.s32.totalorder %s45, 0
      %p213 = por %p211, %p212
      %p214 = scmp.ne.s32.totalorder %s202, %s203
      %p215 = scmp.eq.s32.totalorder %s46, 1
      %p216 = por %p214, %p215
      %p218 = scmp.ne.s32.totalorder %s203, %s217
      %p219 = scmp.eq.s32.totalorder %s46, 0
      %p220 = por %p218, %p219
      %s222 = sadd.s32 %s221, 1
      %p225 = scmp.eq.s32.totalorder %s40, 1
      %p226 = scmp.ne.s32.totalorder %s221, %s223
      %p227 = scmp.eq.s32.totalorder %s40, 0
      %p228 = por %p226, %p227
      %p229 = scmp.ne.s32.totalorder %s221, %s223
      %p230 = scmp.eq.s32.totalorder %s45, 1
      %p231 = por %p229, %p230
      %p232 = scmp.ne.s32.totalorder %s223, %s224
      %p233 = scmp.eq.s32.totalorder %s45, 0
      %p234 = por %p232, %p233
      %p235 = scmp.ne.s32.totalorder %s223, %s224
      %p236 = scmp.eq.s32.totalorder %s46, 1
      %p237 = por %p235, %p236
      %p239 = scmp.ne.s32.totalorder %s224, %s238
      %p240 = scmp.eq.s32.totalorder %s46, 0
      %p241 = por %p239, %p240
      %s243 = sadd.s32 %s242, 1
      %p246 = scmp.eq.s32.totalorder %s40, 1
      %p247 = scmp.ne.s32.totalorder %s242, %s244
      %p248 = scmp.eq.s32.totalorder %s40, 0
      %p249 = por %p247, %p248
      %p250 = scmp.ne.s32.totalorder %s242, %s244
      %p251 = scmp.eq.s32.totalorder %s45, 1
      %p252 = por %p250, %p251
      %p253 = scmp.ne.s32.totalorder %s244, %s245
      %p254 = scmp.eq.s32.totalorder %s45, 0
      %p255 = por %p253, %p254
      %p256 = scmp.ne.s32.totalorder %s244, %s245
      %p257 = scmp.eq.s32.totalorder %s46, 1
      %p258 = por %p256, %p257
      %p260 = scmp.ne.s32.totalorder %s245, %s259
      %p261 = scmp.eq.s32.totalorder %s46, 0
      %p262 = por %p260, %p261
      %s264 = sadd.s32 %s263, 1
      %p267 = scmp.eq.s32.totalorder %s40, 1
      %p268 = scmp.ne.s32.totalorder %s263, %s265
      %p269 = scmp.eq.s32.totalorder %s40, 0
      %p270 = por %p268, %p269
      %p271 = scmp.ne.s32.totalorder %s263, %s265
      %p272 = scmp.eq.s32.totalorder %s45, 1
      %p273 = por %p271, %p272
      %p274 = scmp.ne.s32.totalorder %s265, %s266
      %p275 = scmp.eq.s32.totalorder %s45, 0
      %p276 = por %p274, %p275
      %p277 = scmp.ne.s32.totalorder %s265, %s266
      %p278 = scmp.eq.s32.totalorder %s46, 1
      %p279 = por %p277, %p278
      %p281 = scmp.ne.s32.totalorder %s266, %s280
      %p282 = scmp.eq.s32.totalorder %s46, 0
      %p283 = por %p281, %p282
      %s285 = sadd.s32 %s284, 1
      %p288 = scmp.eq.s32.totalorder %s40, 1
      %p289 = scmp.ne.s32.totalorder %s284, %s286
      %p290 = scmp.eq.s32.totalorder %s40, 0
      %p291 = por %p289, %p290
      %p292 = scmp.ne.s32.totalorder %s284, %s286
      %p293 = scmp.eq.s32.totalorder %s45, 1
      %p294 = por %p292, %p293
      %p295 = scmp.ne.s32.totalorder %s286, %s287
      %p296 = scmp.eq.s32.totalorder %s45, 0
      %p297 = por %p295, %p296
      %p298 = scmp.ne.s32.totalorder %s286, %s287
      %p299 = scmp.eq.s32.totalorder %s46, 1
      %p300 = por %p298, %p299
      %p302 = scmp.ne.s32.totalorder %s287, %s301
      %p303 = scmp.eq.s32.totalorder %s46, 0
      %p304 = por %p302, %p303
      %s306 = sadd.s32 %s305, 1
      %p309 = scmp.eq.s32.totalorder %s40, 1
      %p310 = scmp.ne.s32.totalorder %s305, %s307
      %p311 = scmp.eq.s32.totalorder %s40, 0
      %p312 = por %p310, %p311
      %p313 = scmp.ne.s32.totalorder %s305, %s307
      %p314 = scmp.eq.s32.totalorder %s45, 1
      %p315 = por %p313, %p314
      %p316 = scmp.ne.s32.totalorder %s307, %s308
      %p317 = scmp.eq.s32.totalorder %s45, 0
      %p318 = por %p316, %p317
      %p319 = scmp.ne.s32.totalorder %s307, %s308
      %p320 = scmp.eq.s32.totalorder %s46, 1
      %p321 = por %p319, %p320
      %p323 = scmp.ne.s32.totalorder %s308, %s322
      %p324 = scmp.eq.s32.totalorder %s46, 0
      %p325 = por %p323, %p324
      %s327 = sadd.s32 %s326, 1
      %p330 = scmp.eq.s32.totalorder %s40, 1
      %p331 = scmp.ne.s32.totalorder %s326, %s328
      %p332 = scmp.eq.s32.totalorder %s40, 0
      %p333 = por %p331, %p332
      %p334 = scmp.ne.s32.totalorder %s326, %s328
      %p335 = scmp.eq.s32.totalorder %s45, 1
      %p336 = por %p334, %p335
      %p337 = scmp.ne.s32.totalorder %s328, %s329
      %p338 = scmp.eq.s32.totalorder %s45, 0
      %p339 = por %p337, %p338
      %p340 = scmp.ne.s32.totalorder %s328, %s329
      %p341 = scmp.eq.s32.totalorder %s46, 1
      %p342 = por %p340, %p341
      %p344 = scmp.ne.s32.totalorder %s329, %s343
      %p345 = scmp.eq.s32.totalorder %s46, 0
      %p346 = por %p344, %p345
      %s348 = sadd.s32 %s347, 1
      %p351 = scmp.eq.s32.totalorder %s40, 1
      %p352 = scmp.ne.s32.totalorder %s347, %s349
      %p353 = scmp.eq.s32.totalorder %s40, 0
      %p354 = por %p352, %p353
      %p355 = scmp.ne.s32.totalorder %s347, %s349
      %p356 = scmp.eq.s32.totalorder %s45, 1
      %p357 = por %p355, %p356
      %p358 = scmp.ne.s32.totalorder %s349, %s350
      %p359 = scmp.eq.s32.totalorder %s45, 0
      %p360 = por %p358, %p359
      %p361 = scmp.ne.s32.totalorder %s349, %s350
      %p362 = scmp.eq.s32.totalorder %s46, 1
      %p363 = por %p361, %p362
      %p365 = scmp.ne.s32.totalorder %s350, %s364
      %p366 = scmp.eq.s32.totalorder %s46, 0
      %p367 = por %p365, %p366
      %s369 = sadd.s32 %s368, 1
      %p372 = scmp.eq.s32.totalorder %s40, 1
      %p373 = scmp.ne.s32.totalorder %s368, %s370
      %p374 = scmp.eq.s32.totalorder %s40, 0
      %p375 = por %p373, %p374
      %p376 = scmp.ne.s32.totalorder %s368, %s370
      %p377 = scmp.eq.s32.totalorder %s45, 1
      %p378 = por %p376, %p377
      %p379 = scmp.ne.s32.totalorder %s370, %s371
      %p380 = scmp.eq.s32.totalorder %s45, 0
      %p381 = por %p379, %p380
      %p382 = scmp.ne.s32.totalorder %s370, %s371
      %p383 = scmp.eq.s32.totalorder %s46, 1
      %p384 = por %p382, %p383
      %p386 = scmp.ne.s32.totalorder %s371, %s385
      %p387 = scmp.eq.s32.totalorder %s46, 0
      %p388 = por %p386, %p387
      %s390 = sadd.s32 %s389, 1
      %p393 = scmp.eq.s32.totalorder %s40, 1
      %p394 = scmp.ne.s32.totalorder %s389, %s391
      %p395 = scmp.eq.s32.totalorder %s40, 0
      %p396 = por %p394, %p395
      %p397 = scmp.ne.s32.totalorder %s389, %s391
      %p398 = scmp.eq.s32.totalorder %s45, 1
      %p399 = por %p397, %p398
      %p400 = scmp.ne.s32.totalorder %s391, %s392
      %p401 = scmp.eq.s32.totalorder %s45, 0
      %p402 = por %p400, %p401
      %p403 = scmp.ne.s32.totalorder %s391, %s392
      %p404 = scmp.eq.s32.totalorder %s46, 1
      %p405 = por %p403, %p404
      %p407 = scmp.ne.s32.totalorder %s392, %s406
      %p408 = scmp.eq.s32.totalorder %s46, 0
      %p409 = por %p407, %p408
      %s411 = sadd.s32 %s410, 1
      %p414 = scmp.eq.s32.totalorder %s40, 1
      %p415 = scmp.ne.s32.totalorder %s410, %s412
      %p416 = scmp.eq.s32.totalorder %s40, 0
      %p417 = por %p415, %p416
      %p418 = scmp.ne.s32.totalorder %s410, %s412
      %p419 = scmp.eq.s32.totalorder %s45, 1
      %p420 = por %p418, %p419
      %p421 = scmp.ne.s32.totalorder %s412, %s413
      %p422 = scmp.eq.s32.totalorder %s45, 0
      %p423 = por %p421, %p422
      %p424 = scmp.ne.s32.totalorder %s412, %s413
      %p425 = scmp.eq.s32.totalorder %s46, 1
      %p426 = por %p424, %p425
      %p428 = scmp.ne.s32.totalorder %s413, %s427
      %p429 = scmp.eq.s32.totalorder %s46, 0
      %p430 = por %p428, %p429
      %s432 = sadd.s32 %s431, 1
      %p435 = scmp.eq.s32.totalorder %s40, 1
      %p436 = scmp.ne.s32.totalorder %s431, %s433
      %p437 = scmp.eq.s32.totalorder %s40, 0
      %p438 = por %p436, %p437
      %p439 = scmp.ne.s32.totalorder %s431, %s433
      %p440 = scmp.eq.s32.totalorder %s45, 1
      %p441 = por %p439, %p440
      %p442 = scmp.ne.s32.totalorder %s433, %s434
      %p443 = scmp.eq.s32.totalorder %s45, 0
      %p444 = por %p442, %p443
      %p445 = scmp.ne.s32.totalorder %s433, %s434
      %p446 = scmp.eq.s32.totalorder %s46, 1
      %p447 = por %p445, %p446
      %p449 = scmp.ne.s32.totalorder %s434, %s448
      %p450 = scmp.eq.s32.totalorder %s46, 0
      %p451 = por %p449, %p450
      %s453 = sadd.s32 %s452, 1
      %p456 = scmp.eq.s32.totalorder %s40, 1
      %p457 = scmp.ne.s32.totalorder %s452, %s454
      %p458 = scmp.eq.s32.totalorder %s40, 0
      %p459 = por %p457, %p458
      %p460 = scmp.ne.s32.totalorder %s452, %s454
      %p461 = scmp.eq.s32.totalorder %s45, 1
      %p462 = por %p460, %p461
      %p463 = scmp.ne.s32.totalorder %s454, %s455
      %p464 = scmp.eq.s32.totalorder %s45, 0
      %p465 = por %p463, %p464
      %p466 = scmp.ne.s32.totalorder %s454, %s455
      %p467 = scmp.eq.s32.totalorder %s46, 1
      %p468 = por %p466, %p467
      %p470 = scmp.ne.s32.totalorder %s455, %s469
      %p471 = scmp.eq.s32.totalorder %s46, 0
      %p472 = por %p470, %p471
      %s474 = sadd.s32 %s473, 1
      %p477 = scmp.eq.s32.totalorder %s40, 1
      %p478 = scmp.ne.s32.totalorder %s473, %s475
      %p479 = scmp.eq.s32.totalorder %s40, 0
      %p480 = por %p478, %p479
      %p481 = scmp.ne.s32.totalorder %s473, %s475
      %p482 = scmp.eq.s32.totalorder %s45, 1
      %p483 = por %p481, %p482
      %p484 = scmp.ne.s32.totalorder %s475, %s476
      %p485 = scmp.eq.s32.totalorder %s45, 0
      %p486 = por %p484, %p485
      %p487 = scmp.ne.s32.totalorder %s475, %s476
      %p488 = scmp.eq.s32.totalorder %s46, 1
      %p489 = por %p487, %p488
      %p491 = scmp.ne.s32.totalorder %s476, %s490
      %p492 = scmp.eq.s32.totalorder %s46, 0
      %p493 = por %p491, %p492
      %s495 = sadd.s32 %s494, 1
      %p498 = scmp.eq.s32.totalorder %s40, 1
      %p499 = scmp.ne.s32.totalorder %s494, %s496
      %p500 = scmp.eq.s32.totalorder %s40, 0
      %p501 = por %p499, %p500
      %p502 = scmp.ne.s32.totalorder %s494, %s496
      %p503 = scmp.eq.s32.totalorder %s45, 1
      %p504 = por %p502, %p503
      %p505 = scmp.ne.s32.totalorder %s496, %s497
      %p506 = scmp.eq.s32.totalorder %s45, 0
      %p507 = por %p505, %p506
      %p508 = scmp.ne.s32.totalorder %s496, %s497
      %p509 = scmp.eq.s32.totalorder %s46, 1
      %p510 = por %p508, %p509
      %p512 = scmp.ne.s32.totalorder %s497, %s511
      %p513 = scmp.eq.s32.totalorder %s46, 0
      %p514 = por %p512, %p513
      %s516 = sadd.s32 %s515, 1
      %p519 = scmp.eq.s32.totalorder %s40, 1
      %p520 = scmp.ne.s32.totalorder %s515, %s517
      %p521 = scmp.eq.s32.totalorder %s40, 0
      %p522 = por %p520, %p521
      %p523 = scmp.ne.s32.totalorder %s515, %s517
      %p524 = scmp.eq.s32.totalorder %s45, 1
      %p525 = por %p523, %p524
      %p526 = scmp.ne.s32.totalorder %s517, %s518
      %p527 = scmp.eq.s32.totalorder %s45, 0
      %p528 = por %p526, %p527
      %p529 = scmp.ne.s32.totalorder %s517, %s518
      %p530 = scmp.eq.s32.totalorder %s46, 1
      %p531 = por %p529, %p530
      %p533 = scmp.ne.s32.totalorder %s518, %s532
      %p534 = scmp.eq.s32.totalorder %s46, 0
      %p535 = por %p533, %p534
      %s537 = sadd.s32 %s536, 1
      %p540 = scmp.eq.s32.totalorder %s40, 1
      %p541 = scmp.ne.s32.totalorder %s536, %s538
      %p542 = scmp.eq.s32.totalorder %s40, 0
      %p543 = por %p541, %p542
      %p544 = scmp.ne.s32.totalorder %s536, %s538
      %p545 = scmp.eq.s32.totalorder %s45, 1
      %p546 = por %p544, %p545
      %p547 = scmp.ne.s32.totalorder %s538, %s539
      %p548 = scmp.eq.s32.totalorder %s45, 0
      %p549 = por %p547, %p548
      %p550 = scmp.ne.s32.totalorder %s538, %s539
      %p551 = scmp.eq.s32.totalorder %s46, 1
      %p552 = por %p550, %p551
      %p554 = scmp.ne.s32.totalorder %s539, %s553
      %p555 = scmp.eq.s32.totalorder %s46, 0
      %p556 = por %p554, %p555
      %s558 = sadd.s32 %s557, 1
      %p561 = scmp.eq.s32.totalorder %s40, 1
      %p562 = scmp.ne.s32.totalorder %s557, %s559
      %p563 = scmp.eq.s32.totalorder %s40, 0
      %p564 = por %p562, %p563
      %p565 = scmp.ne.s32.totalorder %s557, %s559
      %p566 = scmp.eq.s32.totalorder %s45, 1
      %p567 = por %p565, %p566
      %p568 = scmp.ne.s32.totalorder %s559, %s560
      %p569 = scmp.eq.s32.totalorder %s45, 0
      %p570 = por %p568, %p569
      %p571 = scmp.ne.s32.totalorder %s559, %s560
      %p572 = scmp.eq.s32.totalorder %s46, 1
      %p573 = por %p571, %p572
      %p575 = scmp.ne.s32.totalorder %s560, %s574
      %p576 = scmp.eq.s32.totalorder %s46, 0
      %p577 = por %p575, %p576
      %s578 = ssub.s32 %s40, %s47
      %p579 = scmp.eq.s32.totalorder %s578, 0
      %s581 = sadd.s32 %s580, 1
      %s582 = scalar_select %p579, %s580, %s581
      %p585 = pneg %p579
      %p586 = scmp.eq.s32.totalorder %s40, 1
      %p587 = por %p585, %p586
      %p588 = scmp.ne.s32.totalorder %s580, %s583
      %p589 = scmp.eq.s32.totalorder %s40, 0
      %p590 = por %p588, %p589
      %p591 = scmp.ne.s32.totalorder %s580, %s583
      %p592 = scmp.eq.s32.totalorder %s45, 1
      %p593 = por %p591, %p592
      %p594 = scmp.ne.s32.totalorder %s583, %s584
      %p595 = scmp.eq.s32.totalorder %s45, 0
      %p596 = por %p594, %p595
      %p597 = scmp.ne.s32.totalorder %s583, %s584
      %p598 = scmp.eq.s32.totalorder %s46, 1
      %p599 = por %p597, %p598
      %p601 = scmp.ne.s32.totalorder %s584, %s600
      %p602 = scmp.eq.s32.totalorder %s46, 0
      %p603 = por %p601, %p602
      %p604 = scmp.le.s32.totalorder 1, %s40
      %p605 = scmp.lt.s32.totalorder %s40, 3
      %p606 = pnand %p604, %p605
      %p607 = pneg %p606
      // Predicated region
      $region9: #{mwin_attention_layer_forward.1} parent=5 // pred_check
        _
      $region10: #{mwin_attention_layer_forward.1} parent=5 // pred_check_branch
        %609 = sbr.rel (%p606) target = $region12
      $region11: #{mwin_attention_layer_forward.1} parent=5 // pred_region
        %s610 = ssub.s32 %s40, 1
        // Predicated region
        $region13: #{mwin_attention_layer_forward.1} parent=11 // pred_check
          %p611 = pneg %p87
        $region14: #{mwin_attention_layer_forward.1} parent=11 // pred_check_branch
          %613 = sbr.rel (%p611) target = $region16
        $region15: #{mwin_attention_layer_forward.1} parent=11 // pred_region
          _
        $region16: #{mwin_attention_layer_forward.1} parent=11 // pred_fallthru
          _
        // Predicated region
        $region17: #{mwin_attention_layer_forward.1} parent=11 // pred_check
          %p614 = pneg %p108
        $region18: #{mwin_attention_layer_forward.1} parent=11 // pred_check_branch
          %616 = sbr.rel (%p614) target = $region20
        $region19: #{mwin_attention_layer_forward.1} parent=11 // pred_region
          _
        $region20: #{mwin_attention_layer_forward.1} parent=11 // pred_fallthru
          _
        // Predicated region
        $region21: #{mwin_attention_layer_forward.1} parent=11 // pred_check
          %p617 = pneg %p129
        $region22: #{mwin_attention_layer_forward.1} parent=11 // pred_check_branch
          %619 = sbr.rel (%p617) target = $region24
        $region23: #{mwin_attention_layer_forward.1} parent=11 // pred_region
          _
        $region24: #{mwin_attention_layer_forward.1} parent=11 // pred_fallthru
          _
        // Predicated region
        $region25: #{mwin_attention_layer_forward.1} parent=11 // pred_check
          %p620 = pneg %p150
        $region26: #{mwin_attention_layer_forward.1} parent=11 // pred_check_branch
          %622 = sbr.rel (%p620) target = $region28
        $region27: #{mwin_attention_layer_forward.1} parent=11 // pred_region
          _
        $region28: #{mwin_attention_layer_forward.1} parent=11 // pred_fallthru
          _
        // Predicated region
        $region29: #{mwin_attention_layer_forward.1} parent=11 // pred_check
          %p623 = pneg %p171
        $region30: #{mwin_attention_layer_forward.1} parent=11 // pred_check_branch
          %625 = sbr.rel (%p623) target = $region32
        $region31: #{mwin_attention_layer_forward.1} parent=11 // pred_region
          _
        $region32: #{mwin_attention_layer_forward.1} parent=11 // pred_fallthru
          _
        // Predicated region
        $region33: #{mwin_attention_layer_forward.1} parent=11 // pred_check
          %p626 = pneg %p192
        $region34: #{mwin_attention_layer_forward.1} parent=11 // pred_check_branch
          %628 = sbr.rel (%p626) target = $region36
        $region35: #{mwin_attention_layer_forward.1} parent=11 // pred_region
          _
        $region36: #{mwin_attention_layer_forward.1} parent=11 // pred_fallthru
          _
        // Predicated region
        $region37: #{mwin_attention_layer_forward.1} parent=11 // pred_check
          %p629 = pneg %p213
        $region38: #{mwin_attention_layer_forward.1} parent=11 // pred_check_branch
          %631 = sbr.rel (%p629) target = $region40
        $region39: #{mwin_attention_layer_forward.1} parent=11 // pred_region
          %s633 = ssub.s32 256, 256
          %634 = vsyncadd [#allocation3], %s633
          %s635 = sshll.u32 [#allocation2], 4
          %s636 = int_to_ptr.vmem [resolvable:$true] %s635
          %641 = dma.hbm_to_vmem [thread:$0]  %s7, 256, %s636, [#allocation3], 64, 64, 4
        $region40: #{mwin_attention_layer_forward.1} parent=11 // pred_fallthru
          _
        // Predicated region
        $region41: #{mwin_attention_layer_forward.1} parent=11 // pred_check
          %p642 = pneg %p234
        $region42: #{mwin_attention_layer_forward.1} parent=11 // pred_check_branch
          %644 = sbr.rel (%p642) target = $region44
        $region43: #{mwin_attention_layer_forward.1} parent=11 // pred_region
          %s646 = ssub.s32 16, 16
          %647 = vsyncadd [#allocation6], %s646
          %s649 = sshll.u32 [#allocation5], 4
          %s650 = int_to_ptr.vmem [resolvable:$true] %s649
          %652 = dma.hbm_to_vmem [thread:$0]  %s8, 16, %s650, [#allocation6]
        $region44: #{mwin_attention_layer_forward.1} parent=11 // pred_fallthru
          _
        // Predicated region
        $region45: #{mwin_attention_layer_forward.1} parent=11 // pred_check
          %p653 = pneg %p255
        $region46: #{mwin_attention_layer_forward.1} parent=11 // pred_check_branch
          %655 = sbr.rel (%p653) target = $region48
        $region47: #{mwin_attention_layer_forward.1} parent=11 // pred_region
          _
        $region48: #{mwin_attention_layer_forward.1} parent=11 // pred_fallthru
          _
        // Predicated region
        $region49: #{mwin_attention_layer_forward.1} parent=11 // pred_check
          %p656 = pneg %p276
        $region50: #{mwin_attention_layer_forward.1} parent=11 // pred_check_branch
          %658 = sbr.rel (%p656) target = $region52
        $region51: #{mwin_attention_layer_forward.1} parent=11 // pred_region
          %s660 = ssub.s32 16, 16
          %661 = vsyncadd [#allocation6], %s660
          %s663 = sshll.u32 [#allocation7], 4
          %s664 = int_to_ptr.vmem [resolvable:$true] %s663
          %666 = dma.hbm_to_vmem [thread:$0]  %s10, 16, %s664, [#allocation6]
        $region52: #{mwin_attention_layer_forward.1} parent=11 // pred_fallthru
          _
        // Predicated region
        $region53: #{mwin_attention_layer_forward.1} parent=11 // pred_check
          %p667 = pneg %p297
        $region54: #{mwin_attention_layer_forward.1} parent=11 // pred_check_branch
          %669 = sbr.rel (%p667) target = $region56
        $region55: #{mwin_attention_layer_forward.1} parent=11 // pred_region
          _
        $region56: #{mwin_attention_layer_forward.1} parent=11 // pred_fallthru
          _
        // Predicated region
        $region57: #{mwin_attention_layer_forward.1} parent=11 // pred_check
          %p670 = pneg %p318
        $region58: #{mwin_attention_layer_forward.1} parent=11 // pred_check_branch
          %672 = sbr.rel (%p670) target = $region60
        $region59: #{mwin_attention_layer_forward.1} parent=11 // pred_region
          _
        $region60: #{mwin_attention_layer_forward.1} parent=11 // pred_fallthru
          _
        // Predicated region
        $region61: #{mwin_attention_layer_forward.1} parent=11 // pred_check
          %p673 = pneg %p339
        $region62: #{mwin_attention_layer_forward.1} parent=11 // pred_check_branch
          %675 = sbr.rel (%p673) target = $region64
        $region63: #{mwin_attention_layer_forward.1} parent=11 // pred_region
          %s677 = ssub.s32 256, 256
          %678 = vsyncadd [#allocation9], %s677
          %s679 = sshll.u32 [#allocation8], 4
          %s680 = int_to_ptr.vmem [resolvable:$true] %s679
          %685 = dma.hbm_to_vmem [thread:$0]  %s13, 256, %s680, [#allocation9], 64, 64, 4
        $region64: #{mwin_attention_layer_forward.1} parent=11 // pred_fallthru
          _
        // Predicated region
        $region65: #{mwin_attention_layer_forward.1} parent=11 // pred_check
          %p686 = pneg %p360
        $region66: #{mwin_attention_layer_forward.1} parent=11 // pred_check_branch
          %688 = sbr.rel (%p686) target = $region68
        $region67: #{mwin_attention_layer_forward.1} parent=11 // pred_region
          %s690 = ssub.s32 16, 16
          %691 = vsyncadd [#allocation9], %s690
          %s693 = sshll.u32 [#allocation10], 4
          %s694 = int_to_ptr.vmem [resolvable:$true] %s693
          %696 = dma.hbm_to_vmem [thread:$0]  %s14, 16, %s694, [#allocation9]
        $region68: #{mwin_attention_layer_forward.1} parent=11 // pred_fallthru
          _
        // Predicated region
        $region69: #{mwin_attention_layer_forward.1} parent=11 // pred_check
          %p697 = pneg %p381
        $region70: #{mwin_attention_layer_forward.1} parent=11 // pred_check_branch
          %699 = sbr.rel (%p697) target = $region72
        $region71: #{mwin_attention_layer_forward.1} parent=11 // pred_region
          %s701 = ssub.s32 256, 256
          %702 = vsyncadd [#allocation12], %s701
          %s703 = sshll.u32 [#allocation11], 4
          %s704 = int_to_ptr.vmem [resolvable:$true] %s703
          %709 = dma.hbm_to_vmem [thread:$0]  %s15, 256, %s704, [#allocation12], 64, 64, 4
        $region72: #{mwin_attention_layer_forward.1} parent=11 // pred_fallthru
          _
        // Predicated region
        $region73: #{mwin_attention_layer_forward.1} parent=11 // pred_check
          %p710 = pneg %p402
        $region74: #{mwin_attention_layer_forward.1} parent=11 // pred_check_branch
          %712 = sbr.rel (%p710) target = $region76
        $region75: #{mwin_attention_layer_forward.1} parent=11 // pred_region
          %s714 = ssub.s32 16, 16
          %715 = vsyncadd [#allocation12], %s714
          %s717 = sshll.u32 [#allocation13], 4
          %s718 = int_to_ptr.vmem [resolvable:$true] %s717
          %720 = dma.hbm_to_vmem [thread:$0]  %s16, 16, %s718, [#allocation12]
        $region76: #{mwin_attention_layer_forward.1} parent=11 // pred_fallthru
          _
        // Predicated region
        $region77: #{mwin_attention_layer_forward.1} parent=11 // pred_check
          %p721 = pneg %p423
        $region78: #{mwin_attention_layer_forward.1} parent=11 // pred_check_branch
          %723 = sbr.rel (%p721) target = $region80
        $region79: #{mwin_attention_layer_forward.1} parent=11 // pred_region
          _
        $region80: #{mwin_attention_layer_forward.1} parent=11 // pred_fallthru
          _
        // Predicated region
        $region81: #{mwin_attention_layer_forward.1} parent=11 // pred_check
          %p724 = pneg %p444
        $region82: #{mwin_attention_layer_forward.1} parent=11 // pred_check_branch
          %726 = sbr.rel (%p724) target = $region84
        $region83: #{mwin_attention_layer_forward.1} parent=11 // pred_region
          _
        $region84: #{mwin_attention_layer_forward.1} parent=11 // pred_fallthru
          _
        // Predicated region
        $region85: #{mwin_attention_layer_forward.1} parent=11 // pred_check
          %p727 = pneg %p465
        $region86: #{mwin_attention_layer_forward.1} parent=11 // pred_check_branch
          %729 = sbr.rel (%p727) target = $region88
        $region87: #{mwin_attention_layer_forward.1} parent=11 // pred_region
          %s731 = ssub.s32 256, 256
          %732 = vsyncadd [#allocation15], %s731
          %s733 = sshll.u32 [#allocation14], 4
          %s734 = int_to_ptr.vmem [resolvable:$true] %s733
          %739 = dma.hbm_to_vmem [thread:$0]  %s19, 256, %s734, [#allocation15], 64, 64, 4
        $region88: #{mwin_attention_layer_forward.1} parent=11 // pred_fallthru
          _
        // Predicated region
        $region89: #{mwin_attention_layer_forward.1} parent=11 // pred_check
          %p740 = pneg %p486
        $region90: #{mwin_attention_layer_forward.1} parent=11 // pred_check_branch
          %742 = sbr.rel (%p740) target = $region92
        $region91: #{mwin_attention_layer_forward.1} parent=11 // pred_region
          %s744 = ssub.s32 16, 16
          %745 = vsyncadd [#allocation15], %s744
          %s747 = sshll.u32 [#allocation16], 4
          %s748 = int_to_ptr.vmem [resolvable:$true] %s747
          %750 = dma.hbm_to_vmem [thread:$0]  %s20, 16, %s748, [#allocation15]
        $region92: #{mwin_attention_layer_forward.1} parent=11 // pred_fallthru
          _
        // Predicated region
        $region93: #{mwin_attention_layer_forward.1} parent=11 // pred_check
          %p751 = pneg %p507
        $region94: #{mwin_attention_layer_forward.1} parent=11 // pred_check_branch
          %753 = sbr.rel (%p751) target = $region96
        $region95: #{mwin_attention_layer_forward.1} parent=11 // pred_region
          _
        $region96: #{mwin_attention_layer_forward.1} parent=11 // pred_fallthru
          _
        // Predicated region
        $region97: #{mwin_attention_layer_forward.1} parent=11 // pred_check
          %p754 = pneg %p528
        $region98: #{mwin_attention_layer_forward.1} parent=11 // pred_check_branch
          %756 = sbr.rel (%p754) target = $region100
        $region99: #{mwin_attention_layer_forward.1} parent=11 // pred_region
          %s758 = ssub.s32 16, 16
          %759 = vsyncadd [#allocation18], %s758
          %s761 = sshll.u32 [#allocation17], 4
          %s762 = int_to_ptr.vmem [resolvable:$true] %s761
          %764 = dma.hbm_to_vmem [thread:$0]  %s22, 16, %s762, [#allocation18]
        $region100: #{mwin_attention_layer_forward.1} parent=11 // pred_fallthru
          _
        // Predicated region
        $region101: #{mwin_attention_layer_forward.1} parent=11 // pred_check
          %p765 = pneg %p549
        $region102: #{mwin_attention_layer_forward.1} parent=11 // pred_check_branch
          %767 = sbr.rel (%p765) target = $region104
        $region103: #{mwin_attention_layer_forward.1} parent=11 // pred_region
          _
        $region104: #{mwin_attention_layer_forward.1} parent=11 // pred_fallthru
          _
        // Predicated region
        $region105: #{mwin_attention_layer_forward.1} parent=11 // pred_check
          %p768 = pneg %p570
        $region106: #{mwin_attention_layer_forward.1} parent=11 // pred_check_branch
          %770 = sbr.rel (%p768) target = $region108
        $region107: #{mwin_attention_layer_forward.1} parent=11 // pred_region
          _
        $region108: #{mwin_attention_layer_forward.1} parent=11 // pred_fallthru
          _
      $region12: #{mwin_attention_layer_forward.1} parent=5 // pred_fallthru
        _
      %p771 = scmp.lt.s32.totalorder %s40, 2
      // Predicated region
      $region109: #{mwin_attention_layer_forward.1} parent=5 // pred_check
        %p772 = pneg %p771
      $region110: #{mwin_attention_layer_forward.1} parent=5 // pred_check_branch
        %774 = sbr.rel (%p772) target = $region112
      $region111: #{mwin_attention_layer_forward.1} parent=5 // pred_region
        // Predicated region
        $region113: #{mwin_attention_layer_forward.1} parent=111 // pred_check
          %p775 = pneg %p60
        $region114: #{mwin_attention_layer_forward.1} parent=111 // pred_check_branch
          %777 = sbr.rel (%p775) target = $region116
        $region115: #{mwin_attention_layer_forward.1} parent=111 // pred_region
          %p778 = scmp.lt.s32.totalorder %s40, 1
          %s779 = scalar_select %p778, %s40, 1
          %s780 = smul.addr %s779, 8
          %s781 = smul.addr %s780, 8
          %s782 = scalar_lea.vmem %s0, %s781
        $region116: #{mwin_attention_layer_forward.1} parent=111 // pred_fallthru
          _
      $region112: #{mwin_attention_layer_forward.1} parent=5 // pred_fallthru
        _
      %p783 = scmp.le.s32.totalorder 1, %s40
      %p784 = scmp.lt.s32.totalorder %s40, 3
      %p785 = pnand %p783, %p784
      %p786 = pneg %p785
      // Predicated region
      $region117: #{mwin_attention_layer_forward.1} parent=5 // pred_check
        _
      $region118: #{mwin_attention_layer_forward.1} parent=5 // pred_check_branch
        %788 = sbr.rel (%p785) target = $region120
      $region119: #{mwin_attention_layer_forward.1} parent=5 // pred_region
        %s789 = ssub.s32 %s40, 1
        // Predicated region
        $region121: #{mwin_attention_layer_forward.1} parent=119 // pred_check
          %p790 = pneg %p213
        $region122: #{mwin_attention_layer_forward.1} parent=119 // pred_check_branch
          %792 = sbr.rel (%p790) target = $region124
        $region123: #{mwin_attention_layer_forward.1} parent=119 // pred_region
          %793 = dma.done [#allocation3], 256
        $region124: #{mwin_attention_layer_forward.1} parent=119 // pred_fallthru
          _
        // Predicated region
        $region125: #{mwin_attention_layer_forward.1} parent=119 // pred_check
          %p794 = pneg %p234
        $region126: #{mwin_attention_layer_forward.1} parent=119 // pred_check_branch
          %796 = sbr.rel (%p794) target = $region128
        $region127: #{mwin_attention_layer_forward.1} parent=119 // pred_region
          %797 = dma.done [#allocation6], 16
        $region128: #{mwin_attention_layer_forward.1} parent=119 // pred_fallthru
          _
        // Predicated region
        $region129: #{mwin_attention_layer_forward.1} parent=119 // pred_check
          %p798 = pneg %p276
        $region130: #{mwin_attention_layer_forward.1} parent=119 // pred_check_branch
          %800 = sbr.rel (%p798) target = $region132
        $region131: #{mwin_attention_layer_forward.1} parent=119 // pred_region
          %801 = dma.done [#allocation6], 16
        $region132: #{mwin_attention_layer_forward.1} parent=119 // pred_fallthru
          _
        // Predicated region
        $region133: #{mwin_attention_layer_forward.1} parent=119 // pred_check
          %p802 = pneg %p339
        $region134: #{mwin_attention_layer_forward.1} parent=119 // pred_check_branch
          %804 = sbr.rel (%p802) target = $region136
        $region135: #{mwin_attention_layer_forward.1} parent=119 // pred_region
          %805 = dma.done [#allocation9], 256
        $region136: #{mwin_attention_layer_forward.1} parent=119 // pred_fallthru
          _
        // Predicated region
        $region137: #{mwin_attention_layer_forward.1} parent=119 // pred_check
          %p806 = pneg %p360
        $region138: #{mwin_attention_layer_forward.1} parent=119 // pred_check_branch
          %808 = sbr.rel (%p806) target = $region140
        $region139: #{mwin_attention_layer_forward.1} parent=119 // pred_region
          %809 = dma.done [#allocation9], 16
        $region140: #{mwin_attention_layer_forward.1} parent=119 // pred_fallthru
          _
        // Predicated region
        $region141: #{mwin_attention_layer_forward.1} parent=119 // pred_check
          %p810 = pneg %p381
        $region142: #{mwin_attention_layer_forward.1} parent=119 // pred_check_branch
          %812 = sbr.rel (%p810) target = $region144
        $region143: #{mwin_attention_layer_forward.1} parent=119 // pred_region
          %813 = dma.done [#allocation12], 256
        $region144: #{mwin_attention_layer_forward.1} parent=119 // pred_fallthru
          _
        // Predicated region
        $region145: #{mwin_attention_layer_forward.1} parent=119 // pred_check
          %p814 = pneg %p402
        $region146: #{mwin_attention_layer_forward.1} parent=119 // pred_check_branch
          %816 = sbr.rel (%p814) target = $region148
        $region147: #{mwin_attention_layer_forward.1} parent=119 // pred_region
          %817 = dma.done [#allocation12], 16
        $region148: #{mwin_attention_layer_forward.1} parent=119 // pred_fallthru
          _
        // Predicated region
        $region149: #{mwin_attention_layer_forward.1} parent=119 // pred_check
          %p818 = pneg %p465
        $region150: #{mwin_attention_layer_forward.1} parent=119 // pred_check_branch
          %820 = sbr.rel (%p818) target = $region152
        $region151: #{mwin_attention_layer_forward.1} parent=119 // pred_region
          %821 = dma.done [#allocation15], 256
        $region152: #{mwin_attention_layer_forward.1} parent=119 // pred_fallthru
          _
        // Predicated region
        $region153: #{mwin_attention_layer_forward.1} parent=119 // pred_check
          %p822 = pneg %p486
        $region154: #{mwin_attention_layer_forward.1} parent=119 // pred_check_branch
          %824 = sbr.rel (%p822) target = $region156
        $region155: #{mwin_attention_layer_forward.1} parent=119 // pred_region
          %825 = dma.done [#allocation15], 16
        $region156: #{mwin_attention_layer_forward.1} parent=119 // pred_fallthru
          _
        // Predicated region
        $region157: #{mwin_attention_layer_forward.1} parent=119 // pred_check
          %p826 = pneg %p528
        $region158: #{mwin_attention_layer_forward.1} parent=119 // pred_check_branch
          %828 = sbr.rel (%p826) target = $region160
        $region159: #{mwin_attention_layer_forward.1} parent=119 // pred_region
          %829 = dma.done [#allocation18], 16
        $region160: #{mwin_attention_layer_forward.1} parent=119 // pred_fallthru
          _
        %p830 = scmp.lt.s32.totalorder %s45, 1
        %s831 = scalar_select %p830, %s45, 1
        %s832 = smul.addr %s831, 8
        %s833 = smul.addr %s832, 8
        %s834 = scalar_lea.vmem %s0, %s833
        %p835 = pneg %p66
        %p836 = pneg %p63
        %p837 = pneg %p87
        %p838 = pneg %p84
        %p839 = pneg %p108
        %p840 = pneg %p105
        %p841 = pneg %p129
        %p842 = pneg %p126
        %p843 = pneg %p150
        %p844 = pneg %p147
        %p845 = pneg %p171
        %p846 = pneg %p168
        %p847 = pneg %p192
        %p848 = pneg %p189
        %p849 = pneg %p213
        %p850 = pneg %p210
        %p851 = pneg %p234
        %p852 = pneg %p231
        %p853 = pneg %p255
        %p854 = pneg %p252
        %p855 = pneg %p276
        %p856 = pneg %p273
        %p857 = pneg %p297
        %p858 = pneg %p294
        %p859 = pneg %p318
        %p860 = pneg %p315
        %p861 = pneg %p339
        %p862 = pneg %p336
        %p863 = pneg %p360
        %p864 = pneg %p357
        %p865 = pneg %p381
        %p866 = pneg %p378
        %p867 = pneg %p402
        %p868 = pneg %p399
        %p869 = pneg %p423
        %p870 = pneg %p420
        %p871 = pneg %p444
        %p872 = pneg %p441
        %p873 = pneg %p465
        %p874 = pneg %p462
        %p875 = pneg %p486
        %p876 = pneg %p483
        %p877 = pneg %p507
        %p878 = pneg %p504
        %p879 = pneg %p528
        %p880 = pneg %p525
        %p881 = pneg %p549
        %p882 = pneg %p546
        %p883 = pneg %p570
        %p884 = pneg %p567
        %p885 = pneg %p596
        %p886 = pneg %p593
        %s887 = sand.u32 %s583, 1
        %s888 = scalar_lea.sflag [#allocation4], %s887
        %s889 = sand.u32 %s583, 1
        %s890 = smul.addr %s889, 64
        %s891 = scalar_lea.vmem [#allocation19], %s890
        %p892 = scmp.lt.s32.totalorder %s45, 1
        %s893 = scalar_select %p892, %s45, 1
        %s894 = smul.addr %s893, 8
        %s895 = smul.addr %s894, 8
        %s896 = scalar_lea.vmem %s0, %s895
        %v898 = vld [vmem:[%s896] sm:$0xff]
        %v899 = vld [vmem:[%s896 + $0x8] sm:$0xff]
        %v900 = vld [vmem:[%s896 + $0x10] sm:$0xff]
        %v901 = vld [vmem:[%s896 + $0x18] sm:$0xff]
        %v902 = vld [vmem:[%s896 + $0x20] sm:$0xff]
        %v903 = vld [vmem:[%s896 + $0x28] sm:$0xff]
        %v904 = vld [vmem:[%s896 + $0x30] sm:$0xff]
        %v905 = vld [vmem:[%s896 + $0x38] sm:$0xff]
        %v906 = vld [vmem:[%s1] sm:$0xf]
        %v907 = vld [vmem:[%s1 + $0x4] sm:$0xf]
        %v908 = vld [vmem:[%s1 + $0x8] sm:$0xf]
        %v909 = vld [vmem:[%s1 + $0xc] sm:$0xf]
        %v910 = vld [vmem:[%s2] sm:$0x1]
        %v911 = vld [vmem:[%s3] sm:$0xf]
        %v912 = vld [vmem:[%s3 + $0x4] sm:$0xf]
        %v913 = vld [vmem:[%s3 + $0x8] sm:$0xf]
        %v914 = vld [vmem:[%s3 + $0xc] sm:$0xf]
        %v915 = vld [vmem:[%s4] sm:$0x1]
        %v916 = vpack.c.bf16 %v899, %v898
        %v917 = vpack.c.bf16 %v901, %v900
        %v918 = vpack.c.bf16 %v903, %v902
        %v919 = vpack.c.bf16 %v905, %v904
        %v921 = vlaneseq
        %v922 = vshrl.u32 %v921, 7
        %v923 = vsub.s32 0, %v922
        %v924 = vrot.slane %v910, %v923
        %v930 = vunpack.c.l.b16 %v906
        %v931 = vunpack.c.l.b16 %v907
        %v932 = vunpack.c.l.b16 %v908
        %v933 = vunpack.c.l.b16 %v909
        %v934 = vpack.c.b16 %v931, %v930
        %v935 = vpack.c.b16 %v933, %v932
        %vm938 = vcmask 261120
        %v940 = vsel %vm938, %v916, 0
        %v943 = vsel %vm938, %v917, 0
        %v946 = vsel %vm938, %v918, 0
        %v949 = vsel %vm938, %v919, 0
        %951 = vmatprep.subr.bf16.mxu0 0
        %952 = vmatpush1.bf16.msra.mxu0 0
        %953 = vmatprep.subr.bf16.mxu0 0
        %954 = vmatpush1.bf16.msra.mxu0 0
        %955 = vmatprep.subr.bf16.mxu0 0
        %956 = vmatpush1.bf16.msra.mxu0 0
        %957 = vmatprep.subr.bf16.mxu0 0
        %958 = vmatpush1.bf16.msra.mxu0 0
        %959 = vmatprep.subr.bf16.mxu0 0
        %960 = vmatpush1.bf16.msra.mxu0 0
        %961 = vmatprep.subr.bf16.mxu0 0
        %962 = vmatpush1.bf16.msra.mxu0 0
        %963 = vmatprep.subr.bf16.mxu0 0
        %964 = vmatpush1.bf16.msra.mxu0 %v935
        %965 = vmatprep.subr.bf16.mxu0 0
        %966 = vmatpush1.bf16.msra.mxu0 %v934
        %967 = vmatprep.subr.bf16.mxu0 0
        %968 = vmatpush2.bf16.msra.mxu0 0
        %969 = vmatprep.subr.bf16.mxu0 0
        %970 = vmatpush2.bf16.msra.mxu0 0
        %971 = vmatprep.subr.bf16.mxu0 0
        %972 = vmatpush2.bf16.msra.mxu0 0
        %973 = vmatprep.subr.bf16.mxu0 0
        %974 = vmatpush2.bf16.msra.mxu0 0
        %975 = vmatprep.subr.bf16.mxu0 0
        %976 = vmatpush2.bf16.msra.mxu0 0
        %977 = vmatprep.subr.bf16.mxu0 0
        %978 = vmatpush2.bf16.msra.mxu0 0
        %979 = vmatprep.subr.bf16.mxu0 0
        %980 = vmatpush2.bf16.msra.mxu0 0
        %981 = vmatprep.subr.bf16.mxu0 0
        %982 = vmatpush2.bf16.msra.mxu0 0
        %983 = vmatprep.mubr.bf16.mxu0 0
        %984 = vmatmul.mubr.bf16.gmra.mxu0 %v940
        %v985 = vpop.f32.mrf.mxu0
        %v986 = vadd.f32 %v924, %v985
        %v987 = vpop.f32.mrf.mxu0
        %v988 = vpop.f32.mrf.mxu0
        %v989 = vadd.f32 %v924, %v988
        %v990 = vpop.f32.mrf.mxu0
        %991 = vmatprep.mubr.bf16.mxu0 0
        %992 = vmatmul.mubr.bf16.gmra.mxu0 %v943
        %v993 = vpop.f32.mrf.mxu0
        %v994 = vadd.f32 %v924, %v993
        %v995 = vpop.f32.mrf.mxu0
        %v996 = vpop.f32.mrf.mxu0
        %v997 = vadd.f32 %v924, %v996
        %v998 = vpop.f32.mrf.mxu0
        %999 = vmatprep.mubr.bf16.mxu0 0
        %1000 = vmatmul.mubr.bf16.gmra.mxu0 %v946
        %v1001 = vpop.f32.mrf.mxu0
        %v1002 = vadd.f32 %v924, %v1001
        %v1003 = vpop.f32.mrf.mxu0
        %v1004 = vpop.f32.mrf.mxu0
        %v1005 = vadd.f32 %v924, %v1004
        %v1006 = vpop.f32.mrf.mxu0
        %1007 = vmatprep.mubr.bf16.mxu0 0
        %1008 = vmatmul.mubr.bf16.gmra.mxu0 %v949
        %v1009 = vpop.f32.mrf.mxu0
        %v1010 = vadd.f32 %v924, %v1009
        %v1011 = vpop.f32.mrf.mxu0
        %v1012 = vpop.f32.mrf.mxu0
        %v1013 = vadd.f32 %v924, %v1012
        %v1014 = vpop.f32.mrf.mxu0
        %1015 = vdwg.mxu0
        %v1016 = vpack.c.bf16 %v989, %v986
        %v1017 = vpack.c.bf16 %v997, %v994
        %v1018 = vpack.c.bf16 %v1005, %v1002
        %v1019 = vpack.c.bf16 %v1013, %v1010
        %1021 = vrot.lane.b32.xlu0 %v1016, 96
        %v1022 = vpop.permute.xlu0 %1021
        %vm1023 = vcmask 64512
        %v1025 = vsel %vm1023, %v1016, 0
        %v1028 = vsel %vm1023, %v1022, 0
        %1030 = vmatprep.subr.bf16.mxu0 0
        %1031 = vmatpush1.bf16.xpose.msra.mxu0 0
        %1032 = vmatprep.subr.bf16.mxu0 0
        %1033 = vmatpush1.bf16.xpose.msra.mxu0 0
        %1034 = vmatprep.subr.bf16.mxu0 0
        %1035 = vmatpush1.bf16.xpose.msra.mxu0 0
        %1036 = vmatprep.subr.bf16.mxu0 0
        %1037 = vmatpush1.bf16.xpose.msra.mxu0 0
        %1038 = vmatprep.subr.bf16.mxu0 0
        %1039 = vmatpush1.bf16.xpose.msra.mxu0 0
        %1040 = vmatprep.subr.bf16.mxu0 0
        %1041 = vmatpush1.bf16.xpose.msra.mxu0 0
        %1042 = vmatprep.subr.bf16.mxu0 0
        %1043 = vmatpush1.bf16.xpose.msra.mxu0 0
        %1044 = vmatprep.subr.bf16.mxu0 0
        %1045 = vmatpush1.bf16.xpose.msra.mxu0 %v1028
        %1046 = vmatprep.subr.bf16.mxu0 0
        %1047 = vmatpush2.bf16.xpose.msra.mxu0 0
        %1048 = vmatprep.subr.bf16.mxu0 0
        %1049 = vmatpush2.bf16.xpose.msra.mxu0 0
        %1050 = vmatprep.subr.bf16.mxu0 0
        %1051 = vmatpush2.bf16.xpose.msra.mxu0 0
        %1052 = vmatprep.subr.bf16.mxu0 0
        %1053 = vmatpush2.bf16.xpose.msra.mxu0 0
        %1054 = vmatprep.subr.bf16.mxu0 0
        %1055 = vmatpush2.bf16.xpose.msra.mxu0 0
        %1056 = vmatprep.subr.bf16.mxu0 0
        %1057 = vmatpush2.bf16.xpose.msra.mxu0 0
        %1058 = vmatprep.subr.bf16.mxu0 0
        %1059 = vmatpush2.bf16.xpose.msra.mxu0 0
        %1060 = vmatprep.subr.bf16.mxu0 0
        %1061 = vmatpush2.bf16.xpose.msra.mxu0 0
        %1062 = vmatprep.mubr.bf16.mxu0 0
        %1063 = vmatmul.mubr.bf16.gmra.mxu0 %v1025
        %v1064 = vpop.f32.mrf.mxu0
        %v1065 = vadd.f32 0.0, %v1064
        %v1066 = vpop.f32.mrf.mxu0
        %v1067 = vpop.f32.mrf.mxu0
        %v1068 = vadd.f32 0.0, %v1067
        %v1069 = vpop.f32.mrf.mxu0
        %1070 = vdwg.mxu0
        %1072 = vrot.lane.b32.xlu0 %v1017, 96
        %v1073 = vpop.permute.xlu0 %1072
        %v1075 = vsel %vm1023, %v1017, 0
        %v1078 = vsel %vm1023, %v1073, 0
        %1080 = vmatprep.subr.bf16.mxu0 0
        %1081 = vmatpush1.bf16.xpose.msra.mxu0 0
        %1082 = vmatprep.subr.bf16.mxu0 0
        %1083 = vmatpush1.bf16.xpose.msra.mxu0 0
        %1084 = vmatprep.subr.bf16.mxu0 0
        %1085 = vmatpush1.bf16.xpose.msra.mxu0 0
        %1086 = vmatprep.subr.bf16.mxu0 0
        %1087 = vmatpush1.bf16.xpose.msra.mxu0 0
        %1088 = vmatprep.subr.bf16.mxu0 0
        %1089 = vmatpush1.bf16.xpose.msra.mxu0 0
        %1090 = vmatprep.subr.bf16.mxu0 0
        %1091 = vmatpush1.bf16.xpose.msra.mxu0 0
        %1092 = vmatprep.subr.bf16.mxu0 0
        %1093 = vmatpush1.bf16.xpose.msra.mxu0 0
        %1094 = vmatprep.subr.bf16.mxu0 0
        %1095 = vmatpush1.bf16.xpose.msra.mxu0 %v1078
        %1096 = vmatprep.subr.bf16.mxu0 0
        %1097 = vmatpush2.bf16.xpose.msra.mxu0 0
        %1098 = vmatprep.subr.bf16.mxu0 0
        %1099 = vmatpush2.bf16.xpose.msra.mxu0 0
        %1100 = vmatprep.subr.bf16.mxu0 0
        %1101 = vmatpush2.bf16.xpose.msra.mxu0 0
        %1102 = vmatprep.subr.bf16.mxu0 0
        %1103 = vmatpush2.bf16.xpose.msra.mxu0 0
        %1104 = vmatprep.subr.bf16.mxu0 0
        %1105 = vmatpush2.bf16.xpose.msra.mxu0 0
        %1106 = vmatprep.subr.bf16.mxu0 0
        %1107 = vmatpush2.bf16.xpose.msra.mxu0 0
        %1108 = vmatprep.subr.bf16.mxu0 0
        %1109 = vmatpush2.bf16.xpose.msra.mxu0 0
        %1110 = vmatprep.subr.bf16.mxu0 0
        %1111 = vmatpush2.bf16.xpose.msra.mxu0 0
        %1112 = vmatprep.mubr.bf16.mxu0 0
        %1113 = vmatmul.mubr.bf16.gmra.mxu0 %v1075
        %v1114 = vpop.f32.mrf.mxu0
        %v1115 = vadd.f32 0.0, %v1114
        %v1116 = vpop.f32.mrf.mxu0
        %v1117 = vpop.f32.mrf.mxu0
        %v1118 = vadd.f32 0.0, %v1117
        %v1119 = vpop.f32.mrf.mxu0
        %1120 = vdwg.mxu0
        %1122 = vrot.lane.b32.xlu0 %v1018, 96
        %v1123 = vpop.permute.xlu0 %1122
        %v1125 = vsel %vm1023, %v1018, 0
        %v1128 = vsel %vm1023, %v1123, 0
        %1130 = vmatprep.subr.bf16.mxu0 0
        %1131 = vmatpush1.bf16.xpose.msra.mxu0 0
        %1132 = vmatprep.subr.bf16.mxu0 0
        %1133 = vmatpush1.bf16.xpose.msra.mxu0 0
        %1134 = vmatprep.subr.bf16.mxu0 0
        %1135 = vmatpush1.bf16.xpose.msra.mxu0 0
        %1136 = vmatprep.subr.bf16.mxu0 0
        %1137 = vmatpush1.bf16.xpose.msra.mxu0 0
        %1138 = vmatprep.subr.bf16.mxu0 0
        %1139 = vmatpush1.bf16.xpose.msra.mxu0 0
        %1140 = vmatprep.subr.bf16.mxu0 0
        %1141 = vmatpush1.bf16.xpose.msra.mxu0 0
        %1142 = vmatprep.subr.bf16.mxu0 0
        %1143 = vmatpush1.bf16.xpose.msra.mxu0 0
        %1144 = vmatprep.subr.bf16.mxu0 0
        %1145 = vmatpush1.bf16.xpose.msra.mxu0 %v1128
        %1146 = vmatprep.subr.bf16.mxu0 0
        %1147 = vmatpush2.bf16.xpose.msra.mxu0 0
        %1148 = vmatprep.subr.bf16.mxu0 0
        %1149 = vmatpush2.bf16.xpose.msra.mxu0 0
        %1150 = vmatprep.subr.bf16.mxu0 0
        %1151 = vmatpush2.bf16.xpose.msra.mxu0 0
        %1152 = vmatprep.subr.bf16.mxu0 0
        %1153 = vmatpush2.bf16.xpose.msra.mxu0 0
        %1154 = vmatprep.subr.bf16.mxu0 0
        %1155 = vmatpush2.bf16.xpose.msra.mxu0 0
        %1156 = vmatprep.subr.bf16.mxu0 0
        %1157 = vmatpush2.bf16.xpose.msra.mxu0 0
        %1158 = vmatprep.subr.bf16.mxu0 0
        %1159 = vmatpush2.bf16.xpose.msra.mxu0 0
        %1160 = vmatprep.subr.bf16.mxu0 0
        %1161 = vmatpush2.bf16.xpose.msra.mxu0 0
        %1162 = vmatprep.mubr.bf16.mxu0 0
        %1163 = vmatmul.mubr.bf16.gmra.mxu0 %v1125
        %v1164 = vpop.f32.mrf.mxu0
        %v1165 = vadd.f32 0.0, %v1164
        %v1166 = vpop.f32.mrf.mxu0
        %v1167 = vpop.f32.mrf.mxu0
        %v1168 = vadd.f32 0.0, %v1167
        %v1169 = vpop.f32.mrf.mxu0
        %1170 = vdwg.mxu0
        %1172 = vrot.lane.b32.xlu0 %v1019, 96
        %v1173 = vpop.permute.xlu0 %1172
        %v1175 = vsel %vm1023, %v1019, 0
        %v1178 = vsel %vm1023, %v1173, 0
        %1180 = vmatprep.subr.bf16.mxu0 0
        %1181 = vmatpush1.bf16.xpose.msra.mxu0 0
        %1182 = vmatprep.subr.bf16.mxu0 0
        %1183 = vmatpush1.bf16.xpose.msra.mxu0 0
        %1184 = vmatprep.subr.bf16.mxu0 0
        %1185 = vmatpush1.bf16.xpose.msra.mxu0 0
        %1186 = vmatprep.subr.bf16.mxu0 0
        %1187 = vmatpush1.bf16.xpose.msra.mxu0 0
        %1188 = vmatprep.subr.bf16.mxu0 0
        %1189 = vmatpush1.bf16.xpose.msra.mxu0 0
        %1190 = vmatprep.subr.bf16.mxu0 0
        %1191 = vmatpush1.bf16.xpose.msra.mxu0 0
        %1192 = vmatprep.subr.bf16.mxu0 0
        %1193 = vmatpush1.bf16.xpose.msra.mxu0 0
        %1194 = vmatprep.subr.bf16.mxu0 0
        %1195 = vmatpush1.bf16.xpose.msra.mxu0 %v1178
        %1196 = vmatprep.subr.bf16.mxu0 0
        %1197 = vmatpush2.bf16.xpose.msra.mxu0 0
        %1198 = vmatprep.subr.bf16.mxu0 0
        %1199 = vmatpush2.bf16.xpose.msra.mxu0 0
        %1200 = vmatprep.subr.bf16.mxu0 0
        %1201 = vmatpush2.bf16.xpose.msra.mxu0 0
        %1202 = vmatprep.subr.bf16.mxu0 0
        %1203 = vmatpush2.bf16.xpose.msra.mxu0 0
        %1204 = vmatprep.subr.bf16.mxu0 0
        %1205 = vmatpush2.bf16.xpose.msra.mxu0 0
        %1206 = vmatprep.subr.bf16.mxu0 0
        %1207 = vmatpush2.bf16.xpose.msra.mxu0 0
        %1208 = vmatprep.subr.bf16.mxu0 0
        %1209 = vmatpush2.bf16.xpose.msra.mxu0 0
        %1210 = vmatprep.subr.bf16.mxu0 0
        %1211 = vmatpush2.bf16.xpose.msra.mxu0 0
        %1212 = vmatprep.mubr.bf16.mxu0 0
        %1213 = vmatmul.mubr.bf16.gmra.mxu0 %v1175
        %v1214 = vpop.f32.mrf.mxu0
        %v1215 = vadd.f32 0.0, %v1214
        %v1216 = vpop.f32.mrf.mxu0
        %v1217 = vpop.f32.mrf.mxu0
        %v1218 = vadd.f32 0.0, %v1217
        %v1219 = vpop.f32.mrf.mxu0
        %1220 = vdwg.mxu0
        %vm1221 = vcmask 130048
        %v1222 = vsel %vm1221, %v1065, -inf
        %1223 = vmax.xlane.f32.xlu0 %v1222
        %v1224 = vpop.xlane.xlu0 %1223
        %v1225 = vsel %vm1221, %v1068, -inf
        %1226 = vmax.xlane.f32.xlu0 %v1225
        %v1227 = vpop.xlane.xlu0 %1226
        %v1228 = vsel %vm1221, %v1115, -inf
        %1229 = vmax.xlane.f32.xlu0 %v1228
        %v1230 = vpop.xlane.xlu0 %1229
        %v1231 = vsel %vm1221, %v1118, -inf
        %1232 = vmax.xlane.f32.xlu0 %v1231
        %v1233 = vpop.xlane.xlu0 %1232
        %v1234 = vsel %vm1221, %v1165, -inf
        %1235 = vmax.xlane.f32.xlu0 %v1234
        %v1236 = vpop.xlane.xlu0 %1235
        %v1237 = vsel %vm1221, %v1168, -inf
        %1238 = vmax.xlane.f32.xlu0 %v1237
        %v1239 = vpop.xlane.xlu0 %1238
        %v1240 = vsel %vm1221, %v1215, -inf
        %1241 = vmax.xlane.f32.xlu0 %v1240
        %v1242 = vpop.xlane.xlu0 %1241
        %v1243 = vsel %vm1221, %v1218, -inf
        %1244 = vmax.xlane.f32.xlu0 %v1243
        %v1245 = vpop.xlane.xlu0 %1244
        %v1246 = vsub.f32 %v1065, %v1224
        %v1247 = vsub.f32 %v1068, %v1227
        %v1248 = vsub.f32 %v1115, %v1230
        %v1249 = vsub.f32 %v1118, %v1233
        %v1250 = vsub.f32 %v1165, %v1236
        %v1251 = vsub.f32 %v1168, %v1239
        %v1252 = vsub.f32 %v1215, %v1242
        %v1253 = vsub.f32 %v1218, %v1245
        %v1254 = vmul.f32 %v1246, 1.442695
        %v1255 = vpow.pop %v1254
        %v1256 = vmul.f32 %v1247, 1.442695
        %v1257 = vpow.pop %v1256
        %v1258 = vmul.f32 %v1248, 1.442695
        %v1259 = vpow.pop %v1258
        %v1260 = vmul.f32 %v1249, 1.442695
        %v1261 = vpow.pop %v1260
        %v1262 = vmul.f32 %v1250, 1.442695
        %v1263 = vpow.pop %v1262
        %v1264 = vmul.f32 %v1251, 1.442695
        %v1265 = vpow.pop %v1264
        %v1266 = vmul.f32 %v1252, 1.442695
        %v1267 = vpow.pop %v1266
        %v1268 = vmul.f32 %v1253, 1.442695
        %v1269 = vpow.pop %v1268
        %v1270 = vsel %vm1221, %v1255, 0.0
        %1271 = vadd.xlane.f32.xlu0 %v1270
        %v1272 = vpop.xlane.xlu0 %1271
        %v1273 = vsel %vm1221, %v1257, 0.0
        %1274 = vadd.xlane.f32.xlu0 %v1273
        %v1275 = vpop.xlane.xlu0 %1274
        %v1276 = vsel %vm1221, %v1259, 0.0
        %1277 = vadd.xlane.f32.xlu0 %v1276
        %v1278 = vpop.xlane.xlu0 %1277
        %v1279 = vsel %vm1221, %v1261, 0.0
        %1280 = vadd.xlane.f32.xlu0 %v1279
        %v1281 = vpop.xlane.xlu0 %1280
        %v1282 = vsel %vm1221, %v1263, 0.0
        %1283 = vadd.xlane.f32.xlu0 %v1282
        %v1284 = vpop.xlane.xlu0 %1283
        %v1285 = vsel %vm1221, %v1265, 0.0
        %1286 = vadd.xlane.f32.xlu0 %v1285
        %v1287 = vpop.xlane.xlu0 %1286
        %v1288 = vsel %vm1221, %v1267, 0.0
        %1289 = vadd.xlane.f32.xlu0 %v1288
        %v1290 = vpop.xlane.xlu0 %1289
        %v1291 = vsel %vm1221, %v1269, 0.0
        %1292 = vadd.xlane.f32.xlu0 %v1291
        %v1293 = vpop.xlane.xlu0 %1292
        %v1294 = vrcp.pop %v1272
        %v1295 = vrcp.pop %v1275
        %v1296 = vrcp.pop %v1278
        %v1297 = vrcp.pop %v1281
        %v1298 = vrcp.pop %v1284
        %v1299 = vrcp.pop %v1287
        %v1300 = vrcp.pop %v1290
        %v1301 = vrcp.pop %v1293
        %v1302 = vmul.f32 %v1255, %v1294
        %v1303 = vmul.f32 %v1257, %v1295
        %v1304 = vmul.f32 %v1259, %v1296
        %v1305 = vmul.f32 %v1261, %v1297
        %v1306 = vmul.f32 %v1263, %v1298
        %v1307 = vmul.f32 %v1265, %v1299
        %v1308 = vmul.f32 %v1267, %v1300
        %v1309 = vmul.f32 %v1269, %v1301
        %v1310 = vpack.c.bf16 %v1303, %v1302
        %v1311 = vpack.c.bf16 %v1305, %v1304
        %v1312 = vpack.c.bf16 %v1307, %v1306
        %v1313 = vpack.c.bf16 %v1309, %v1308
        %1314 = vrot.lane.b32.xlu0 %v1016, 64
        %v1315 = vpop.permute.xlu0 %1314
        %v1318 = vsel %vm1221, %v1310, 0
        %1320 = vmatprep.subr.bf16.mxu0 0
        %1321 = vmatpush1.bf16.msra.mxu0 0
        %1322 = vmatprep.subr.bf16.mxu0 0
        %1323 = vmatpush1.bf16.msra.mxu0 0
        %1324 = vmatprep.subr.bf16.mxu0 0
        %1325 = vmatpush1.bf16.msra.mxu0 0
        %1326 = vmatprep.subr.bf16.mxu0 0
        %1327 = vmatpush1.bf16.msra.mxu0 0
        %1328 = vmatprep.subr.bf16.mxu0 0
        %1329 = vmatpush1.bf16.msra.mxu0 0
        %1330 = vmatprep.subr.bf16.mxu0 0
        %1331 = vmatpush1.bf16.msra.mxu0 0
        %1332 = vmatprep.subr.bf16.mxu0 0
        %1333 = vmatpush1.bf16.msra.mxu0 0
        %1334 = vmatprep.subr.bf16.mxu0 0
        %1335 = vmatpush1.bf16.msra.mxu0 %v1315
        %1336 = vmatprep.subr.bf16.mxu0 0
        %1337 = vmatpush2.bf16.msra.mxu0 0
        %1338 = vmatprep.subr.bf16.mxu0 0
        %1339 = vmatpush2.bf16.msra.mxu0 0
        %1340 = vmatprep.subr.bf16.mxu0 0
        %1341 = vmatpush2.bf16.msra.mxu0 0
        %1342 = vmatprep.subr.bf16.mxu0 0
        %1343 = vmatpush2.bf16.msra.mxu0 0
        %1344 = vmatprep.subr.bf16.mxu0 0
        %1345 = vmatpush2.bf16.msra.mxu0 0
        %1346 = vmatprep.subr.bf16.mxu0 0
        %1347 = vmatpush2.bf16.msra.mxu0 0
        %1348 = vmatprep.subr.bf16.mxu0 0
        %1349 = vmatpush2.bf16.msra.mxu0 0
        %1350 = vmatprep.subr.bf16.mxu0 0
        %1351 = vmatpush2.bf16.msra.mxu0 0
        %1352 = vmatprep.mubr.bf16.mxu0 0
        %1353 = vmatmul.mubr.bf16.gmra.mxu0 %v1318
        %v1354 = vpop.f32.mrf.mxu0
        %v1355 = vadd.f32 0.0, %v1354
        %v1356 = vpop.f32.mrf.mxu0
        %v1357 = vpop.f32.mrf.mxu0
        %v1358 = vadd.f32 0.0, %v1357
        %v1359 = vpop.f32.mrf.mxu0
        %1360 = vdwg.mxu0
        %1361 = vrot.lane.b32.xlu0 %v1017, 64
        %v1362 = vpop.permute.xlu0 %1361
        %v1365 = vsel %vm1221, %v1311, 0
        %1367 = vmatprep.subr.bf16.mxu0 0
        %1368 = vmatpush1.bf16.msra.mxu0 0
        %1369 = vmatprep.subr.bf16.mxu0 0
        %1370 = vmatpush1.bf16.msra.mxu0 0
        %1371 = vmatprep.subr.bf16.mxu0 0
        %1372 = vmatpush1.bf16.msra.mxu0 0
        %1373 = vmatprep.subr.bf16.mxu0 0
        %1374 = vmatpush1.bf16.msra.mxu0 0
        %1375 = vmatprep.subr.bf16.mxu0 0
        %1376 = vmatpush1.bf16.msra.mxu0 0
        %1377 = vmatprep.subr.bf16.mxu0 0
        %1378 = vmatpush1.bf16.msra.mxu0 0
        %1379 = vmatprep.subr.bf16.mxu0 0
        %1380 = vmatpush1.bf16.msra.mxu0 0
        %1381 = vmatprep.subr.bf16.mxu0 0
        %1382 = vmatpush1.bf16.msra.mxu0 %v1362
        %1383 = vmatprep.subr.bf16.mxu0 0
        %1384 = vmatpush2.bf16.msra.mxu0 0
        %1385 = vmatprep.subr.bf16.mxu0 0
        %1386 = vmatpush2.bf16.msra.mxu0 0
        %1387 = vmatprep.subr.bf16.mxu0 0
        %1388 = vmatpush2.bf16.msra.mxu0 0
        %1389 = vmatprep.subr.bf16.mxu0 0
        %1390 = vmatpush2.bf16.msra.mxu0 0
        %1391 = vmatprep.subr.bf16.mxu0 0
        %1392 = vmatpush2.bf16.msra.mxu0 0
        %1393 = vmatprep.subr.bf16.mxu0 0
        %1394 = vmatpush2.bf16.msra.mxu0 0
        %1395 = vmatprep.subr.bf16.mxu0 0
        %1396 = vmatpush2.bf16.msra.mxu0 0
        %1397 = vmatprep.subr.bf16.mxu0 0
        %1398 = vmatpush2.bf16.msra.mxu0 0
        %1399 = vmatprep.mubr.bf16.mxu0 0
        %1400 = vmatmul.mubr.bf16.gmra.mxu0 %v1365
        %v1401 = vpop.f32.mrf.mxu0
        %v1402 = vadd.f32 0.0, %v1401
        %v1403 = vpop.f32.mrf.mxu0
        %v1404 = vpop.f32.mrf.mxu0
        %v1405 = vadd.f32 0.0, %v1404
        %v1406 = vpop.f32.mrf.mxu0
        %1407 = vdwg.mxu0
        %1408 = vrot.lane.b32.xlu0 %v1018, 64
        %v1409 = vpop.permute.xlu0 %1408
        %v1412 = vsel %vm1221, %v1312, 0
        %1414 = vmatprep.subr.bf16.mxu0 0
        %1415 = vmatpush1.bf16.msra.mxu0 0
        %1416 = vmatprep.subr.bf16.mxu0 0
        %1417 = vmatpush1.bf16.msra.mxu0 0
        %1418 = vmatprep.subr.bf16.mxu0 0
        %1419 = vmatpush1.bf16.msra.mxu0 0
        %1420 = vmatprep.subr.bf16.mxu0 0
        %1421 = vmatpush1.bf16.msra.mxu0 0
        %1422 = vmatprep.subr.bf16.mxu0 0
        %1423 = vmatpush1.bf16.msra.mxu0 0
        %1424 = vmatprep.subr.bf16.mxu0 0
        %1425 = vmatpush1.bf16.msra.mxu0 0
        %1426 = vmatprep.subr.bf16.mxu0 0
        %1427 = vmatpush1.bf16.msra.mxu0 0
        %1428 = vmatprep.subr.bf16.mxu0 0
        %1429 = vmatpush1.bf16.msra.mxu0 %v1409
        %1430 = vmatprep.subr.bf16.mxu0 0
        %1431 = vmatpush2.bf16.msra.mxu0 0
        %1432 = vmatprep.subr.bf16.mxu0 0
        %1433 = vmatpush2.bf16.msra.mxu0 0
        %1434 = vmatprep.subr.bf16.mxu0 0
        %1435 = vmatpush2.bf16.msra.mxu0 0
        %1436 = vmatprep.subr.bf16.mxu0 0
        %1437 = vmatpush2.bf16.msra.mxu0 0
        %1438 = vmatprep.subr.bf16.mxu0 0
        %1439 = vmatpush2.bf16.msra.mxu0 0
        %1440 = vmatprep.subr.bf16.mxu0 0
        %1441 = vmatpush2.bf16.msra.mxu0 0
        %1442 = vmatprep.subr.bf16.mxu0 0
        %1443 = vmatpush2.bf16.msra.mxu0 0
        %1444 = vmatprep.subr.bf16.mxu0 0
        %1445 = vmatpush2.bf16.msra.mxu0 0
        %1446 = vmatprep.mubr.bf16.mxu0 0
        %1447 = vmatmul.mubr.bf16.gmra.mxu0 %v1412
        %v1448 = vpop.f32.mrf.mxu0
        %v1449 = vadd.f32 0.0, %v1448
        %v1450 = vpop.f32.mrf.mxu0
        %v1451 = vpop.f32.mrf.mxu0
        %v1452 = vadd.f32 0.0, %v1451
        %v1453 = vpop.f32.mrf.mxu0
        %1454 = vdwg.mxu0
        %1455 = vrot.lane.b32.xlu0 %v1019, 64
        %v1456 = vpop.permute.xlu0 %1455
        %v1459 = vsel %vm1221, %v1313, 0
        %1461 = vmatprep.subr.bf16.mxu0 0
        %1462 = vmatpush1.bf16.msra.mxu0 0
        %1463 = vmatprep.subr.bf16.mxu0 0
        %1464 = vmatpush1.bf16.msra.mxu0 0
        %1465 = vmatprep.subr.bf16.mxu0 0
        %1466 = vmatpush1.bf16.msra.mxu0 0
        %1467 = vmatprep.subr.bf16.mxu0 0
        %1468 = vmatpush1.bf16.msra.mxu0 0
        %1469 = vmatprep.subr.bf16.mxu0 0
        %1470 = vmatpush1.bf16.msra.mxu0 0
        %1471 = vmatprep.subr.bf16.mxu0 0
        %1472 = vmatpush1.bf16.msra.mxu0 0
        %1473 = vmatprep.subr.bf16.mxu0 0
        %1474 = vmatpush1.bf16.msra.mxu0 0
        %1475 = vmatprep.subr.bf16.mxu0 0
        %1476 = vmatpush1.bf16.msra.mxu0 %v1456
        %1477 = vmatprep.subr.bf16.mxu0 0
        %1478 = vmatpush2.bf16.msra.mxu0 0
        %1479 = vmatprep.subr.bf16.mxu0 0
        %1480 = vmatpush2.bf16.msra.mxu0 0
        %1481 = vmatprep.subr.bf16.mxu0 0
        %1482 = vmatpush2.bf16.msra.mxu0 0
        %1483 = vmatprep.subr.bf16.mxu0 0
        %1484 = vmatpush2.bf16.msra.mxu0 0
        %1485 = vmatprep.subr.bf16.mxu0 0
        %1486 = vmatpush2.bf16.msra.mxu0 0
        %1487 = vmatprep.subr.bf16.mxu0 0
        %1488 = vmatpush2.bf16.msra.mxu0 0
        %1489 = vmatprep.subr.bf16.mxu0 0
        %1490 = vmatpush2.bf16.msra.mxu0 0
        %1491 = vmatprep.subr.bf16.mxu0 0
        %1492 = vmatpush2.bf16.msra.mxu0 0
        %1493 = vmatprep.mubr.bf16.mxu0 0
        %1494 = vmatmul.mubr.bf16.gmra.mxu0 %v1459
        %v1495 = vpop.f32.mrf.mxu0
        %v1496 = vadd.f32 0.0, %v1495
        %v1497 = vpop.f32.mrf.mxu0
        %v1498 = vpop.f32.mrf.mxu0
        %v1499 = vadd.f32 0.0, %v1498
        %v1500 = vpop.f32.mrf.mxu0
        %1501 = vdwg.mxu0
        %1502 = vrot.lane.b32.xlu0 %v1016, 120
        %v1503 = vpop.permute.xlu0 %1502
        %1504 = vrot.lane.b32.xlu0 %v1016, 88
        %v1505 = vpop.permute.xlu0 %1504
        %v1507 = vsel %vm1023, %v1503, 0
        %v1510 = vsel %vm1023, %v1505, 0
        %1512 = vmatprep.subr.bf16.mxu0 0
        %1513 = vmatpush1.bf16.xpose.msra.mxu0 0
        %1514 = vmatprep.subr.bf16.mxu0 0
        %1515 = vmatpush1.bf16.xpose.msra.mxu0 0
        %1516 = vmatprep.subr.bf16.mxu0 0
        %1517 = vmatpush1.bf16.xpose.msra.mxu0 0
        %1518 = vmatprep.subr.bf16.mxu0 0
        %1519 = vmatpush1.bf16.xpose.msra.mxu0 0
        %1520 = vmatprep.subr.bf16.mxu0 0
        %1521 = vmatpush1.bf16.xpose.msra.mxu0 0
        %1522 = vmatprep.subr.bf16.mxu0 0
        %1523 = vmatpush1.bf16.xpose.msra.mxu0 0
        %1524 = vmatprep.subr.bf16.mxu0 0
        %1525 = vmatpush1.bf16.xpose.msra.mxu0 0
        %1526 = vmatprep.subr.bf16.mxu0 0
        %1527 = vmatpush1.bf16.xpose.msra.mxu0 %v1510
        %1528 = vmatprep.subr.bf16.mxu0 0
        %1529 = vmatpush2.bf16.xpose.msra.mxu0 0
        %1530 = vmatprep.subr.bf16.mxu0 0
        %1531 = vmatpush2.bf16.xpose.msra.mxu0 0
        %1532 = vmatprep.subr.bf16.mxu0 0
        %1533 = vmatpush2.bf16.xpose.msra.mxu0 0
        %1534 = vmatprep.subr.bf16.mxu0 0
        %1535 = vmatpush2.bf16.xpose.msra.mxu0 0
        %1536 = vmatprep.subr.bf16.mxu0 0
        %1537 = vmatpush2.bf16.xpose.msra.mxu0 0
        %1538 = vmatprep.subr.bf16.mxu0 0
        %1539 = vmatpush2.bf16.xpose.msra.mxu0 0
        %1540 = vmatprep.subr.bf16.mxu0 0
        %1541 = vmatpush2.bf16.xpose.msra.mxu0 0
        %1542 = vmatprep.subr.bf16.mxu0 0
        %1543 = vmatpush2.bf16.xpose.msra.mxu0 0
        %1544 = vmatprep.mubr.bf16.mxu0 0
        %1545 = vmatmul.mubr.bf16.gmra.mxu0 %v1507
        %v1546 = vpop.f32.mrf.mxu0
        %v1547 = vadd.f32 0.0, %v1546
        %v1548 = vpop.f32.mrf.mxu0
        %v1549 = vpop.f32.mrf.mxu0
        %v1550 = vadd.f32 0.0, %v1549
        %v1551 = vpop.f32.mrf.mxu0
        %1552 = vdwg.mxu0
        %1553 = vrot.lane.b32.xlu0 %v1017, 120
        %v1554 = vpop.permute.xlu0 %1553
        %1555 = vrot.lane.b32.xlu0 %v1017, 88
        %v1556 = vpop.permute.xlu0 %1555
        %v1558 = vsel %vm1023, %v1554, 0
        %v1561 = vsel %vm1023, %v1556, 0
        %1563 = vmatprep.subr.bf16.mxu0 0
        %1564 = vmatpush1.bf16.xpose.msra.mxu0 0
        %1565 = vmatprep.subr.bf16.mxu0 0
        %1566 = vmatpush1.bf16.xpose.msra.mxu0 0
        %1567 = vmatprep.subr.bf16.mxu0 0
        %1568 = vmatpush1.bf16.xpose.msra.mxu0 0
        %1569 = vmatprep.subr.bf16.mxu0 0
        %1570 = vmatpush1.bf16.xpose.msra.mxu0 0
        %1571 = vmatprep.subr.bf16.mxu0 0
        %1572 = vmatpush1.bf16.xpose.msra.mxu0 0
        %1573 = vmatprep.subr.bf16.mxu0 0
        %1574 = vmatpush1.bf16.xpose.msra.mxu0 0
        %1575 = vmatprep.subr.bf16.mxu0 0
        %1576 = vmatpush1.bf16.xpose.msra.mxu0 0
        %1577 = vmatprep.subr.bf16.mxu0 0
        %1578 = vmatpush1.bf16.xpose.msra.mxu0 %v1561
        %1579 = vmatprep.subr.bf16.mxu0 0
        %1580 = vmatpush2.bf16.xpose.msra.mxu0 0
        %1581 = vmatprep.subr.bf16.mxu0 0
        %1582 = vmatpush2.bf16.xpose.msra.mxu0 0
        %1583 = vmatprep.subr.bf16.mxu0 0
        %1584 = vmatpush2.bf16.xpose.msra.mxu0 0
        %1585 = vmatprep.subr.bf16.mxu0 0
        %1586 = vmatpush2.bf16.xpose.msra.mxu0 0
        %1587 = vmatprep.subr.bf16.mxu0 0
        %1588 = vmatpush2.bf16.xpose.msra.mxu0 0
        %1589 = vmatprep.subr.bf16.mxu0 0
        %1590 = vmatpush2.bf16.xpose.msra.mxu0 0
        %1591 = vmatprep.subr.bf16.mxu0 0
        %1592 = vmatpush2.bf16.xpose.msra.mxu0 0
        %1593 = vmatprep.subr.bf16.mxu0 0
        %1594 = vmatpush2.bf16.xpose.msra.mxu0 0
        %1595 = vmatprep.mubr.bf16.mxu0 0
        %1596 = vmatmul.mubr.bf16.gmra.mxu0 %v1558
        %v1597 = vpop.f32.mrf.mxu0
        %v1598 = vadd.f32 0.0, %v1597
        %v1599 = vpop.f32.mrf.mxu0
        %v1600 = vpop.f32.mrf.mxu0
        %v1601 = vadd.f32 0.0, %v1600
        %v1602 = vpop.f32.mrf.mxu0
        %1603 = vdwg.mxu0
        %1604 = vrot.lane.b32.xlu0 %v1018, 120
        %v1605 = vpop.permute.xlu0 %1604
        %1606 = vrot.lane.b32.xlu0 %v1018, 88
        %v1607 = vpop.permute.xlu0 %1606
        %v1609 = vsel %vm1023, %v1605, 0
        %v1612 = vsel %vm1023, %v1607, 0
        %1614 = vmatprep.subr.bf16.mxu0 0
        %1615 = vmatpush1.bf16.xpose.msra.mxu0 0
        %1616 = vmatprep.subr.bf16.mxu0 0
        %1617 = vmatpush1.bf16.xpose.msra.mxu0 0
        %1618 = vmatprep.subr.bf16.mxu0 0
        %1619 = vmatpush1.bf16.xpose.msra.mxu0 0
        %1620 = vmatprep.subr.bf16.mxu0 0
        %1621 = vmatpush1.bf16.xpose.msra.mxu0 0
        %1622 = vmatprep.subr.bf16.mxu0 0
        %1623 = vmatpush1.bf16.xpose.msra.mxu0 0
        %1624 = vmatprep.subr.bf16.mxu0 0
        %1625 = vmatpush1.bf16.xpose.msra.mxu0 0
        %1626 = vmatprep.subr.bf16.mxu0 0
        %1627 = vmatpush1.bf16.xpose.msra.mxu0 0
        %1628 = vmatprep.subr.bf16.mxu0 0
        %1629 = vmatpush1.bf16.xpose.msra.mxu0 %v1612
        %1630 = vmatprep.subr.bf16.mxu0 0
        %1631 = vmatpush2.bf16.xpose.msra.mxu0 0
        %1632 = vmatprep.subr.bf16.mxu0 0
        %1633 = vmatpush2.bf16.xpose.msra.mxu0 0
        %1634 = vmatprep.subr.bf16.mxu0 0
        %1635 = vmatpush2.bf16.xpose.msra.mxu0 0
        %1636 = vmatprep.subr.bf16.mxu0 0
        %1637 = vmatpush2.bf16.xpose.msra.mxu0 0
        %1638 = vmatprep.subr.bf16.mxu0 0
        %1639 = vmatpush2.bf16.xpose.msra.mxu0 0
        %1640 = vmatprep.subr.bf16.mxu0 0
        %1641 = vmatpush2.bf16.xpose.msra.mxu0 0
        %1642 = vmatprep.subr.bf16.mxu0 0
        %1643 = vmatpush2.bf16.xpose.msra.mxu0 0
        %1644 = vmatprep.subr.bf16.mxu0 0
        %1645 = vmatpush2.bf16.xpose.msra.mxu0 0
        %1646 = vmatprep.mubr.bf16.mxu0 0
        %1647 = vmatmul.mubr.bf16.gmra.mxu0 %v1609
        %v1648 = vpop.f32.mrf.mxu0
        %v1649 = vadd.f32 0.0, %v1648
        %v1650 = vpop.f32.mrf.mxu0
        %v1651 = vpop.f32.mrf.mxu0
        %v1652 = vadd.f32 0.0, %v1651
        %v1653 = vpop.f32.mrf.mxu0
        %1654 = vdwg.mxu0
        %1655 = vrot.lane.b32.xlu0 %v1019, 120
        %v1656 = vpop.permute.xlu0 %1655
        %1657 = vrot.lane.b32.xlu0 %v1019, 88
        %v1658 = vpop.permute.xlu0 %1657
        %v1660 = vsel %vm1023, %v1656, 0
        %v1663 = vsel %vm1023, %v1658, 0
        %1665 = vmatprep.subr.bf16.mxu0 0
        %1666 = vmatpush1.bf16.xpose.msra.mxu0 0
        %1667 = vmatprep.subr.bf16.mxu0 0
        %1668 = vmatpush1.bf16.xpose.msra.mxu0 0
        %1669 = vmatprep.subr.bf16.mxu0 0
        %1670 = vmatpush1.bf16.xpose.msra.mxu0 0
        %1671 = vmatprep.subr.bf16.mxu0 0
        %1672 = vmatpush1.bf16.xpose.msra.mxu0 0
        %1673 = vmatprep.subr.bf16.mxu0 0
        %1674 = vmatpush1.bf16.xpose.msra.mxu0 0
        %1675 = vmatprep.subr.bf16.mxu0 0
        %1676 = vmatpush1.bf16.xpose.msra.mxu0 0
        %1677 = vmatprep.subr.bf16.mxu0 0
        %1678 = vmatpush1.bf16.xpose.msra.mxu0 0
        %1679 = vmatprep.subr.bf16.mxu0 0
        %1680 = vmatpush1.bf16.xpose.msra.mxu0 %v1663
        %1681 = vmatprep.subr.bf16.mxu0 0
        %1682 = vmatpush2.bf16.xpose.msra.mxu0 0
        %1683 = vmatprep.subr.bf16.mxu0 0
        %1684 = vmatpush2.bf16.xpose.msra.mxu0 0
        %1685 = vmatprep.subr.bf16.mxu0 0
        %1686 = vmatpush2.bf16.xpose.msra.mxu0 0
        %1687 = vmatprep.subr.bf16.mxu0 0
        %1688 = vmatpush2.bf16.xpose.msra.mxu0 0
        %1689 = vmatprep.subr.bf16.mxu0 0
        %1690 = vmatpush2.bf16.xpose.msra.mxu0 0
        %1691 = vmatprep.subr.bf16.mxu0 0
        %1692 = vmatpush2.bf16.xpose.msra.mxu0 0
        %1693 = vmatprep.subr.bf16.mxu0 0
        %1694 = vmatpush2.bf16.xpose.msra.mxu0 0
        %1695 = vmatprep.subr.bf16.mxu0 0
        %1696 = vmatpush2.bf16.xpose.msra.mxu0 0
        %1697 = vmatprep.mubr.bf16.mxu0 0
        %1698 = vmatmul.mubr.bf16.gmra.mxu0 %v1660
        %v1699 = vpop.f32.mrf.mxu0
        %v1700 = vadd.f32 0.0, %v1699
        %v1701 = vpop.f32.mrf.mxu0
        %v1702 = vpop.f32.mrf.mxu0
        %v1703 = vadd.f32 0.0, %v1702
        %v1704 = vpop.f32.mrf.mxu0
        %1705 = vdwg.mxu0
        %v1706 = vsel %vm1221, %v1547, -inf
        %1707 = vmax.xlane.f32.xlu0 %v1706
        %v1708 = vpop.xlane.xlu0 %1707
        %v1709 = vsel %vm1221, %v1550, -inf
        %1710 = vmax.xlane.f32.xlu0 %v1709
        %v1711 = vpop.xlane.xlu0 %1710
        %v1712 = vsel %vm1221, %v1598, -inf
        %1713 = vmax.xlane.f32.xlu0 %v1712
        %v1714 = vpop.xlane.xlu0 %1713
        %v1715 = vsel %vm1221, %v1601, -inf
        %1716 = vmax.xlane.f32.xlu0 %v1715
        %v1717 = vpop.xlane.xlu0 %1716
        %v1718 = vsel %vm1221, %v1649, -inf
        %1719 = vmax.xlane.f32.xlu0 %v1718
        %v1720 = vpop.xlane.xlu0 %1719
        %v1721 = vsel %vm1221, %v1652, -inf
        %1722 = vmax.xlane.f32.xlu0 %v1721
        %v1723 = vpop.xlane.xlu0 %1722
        %v1724 = vsel %vm1221, %v1700, -inf
        %1725 = vmax.xlane.f32.xlu0 %v1724
        %v1726 = vpop.xlane.xlu0 %1725
        %v1727 = vsel %vm1221, %v1703, -inf
        %1728 = vmax.xlane.f32.xlu0 %v1727
        %v1729 = vpop.xlane.xlu0 %1728
        %v1730 = vsub.f32 %v1547, %v1708
        %v1731 = vsub.f32 %v1550, %v1711
        %v1732 = vsub.f32 %v1598, %v1714
        %v1733 = vsub.f32 %v1601, %v1717
        %v1734 = vsub.f32 %v1649, %v1720
        %v1735 = vsub.f32 %v1652, %v1723
        %v1736 = vsub.f32 %v1700, %v1726
        %v1737 = vsub.f32 %v1703, %v1729
        %v1738 = vmul.f32 %v1730, 1.442695
        %v1739 = vpow.pop %v1738
        %v1740 = vmul.f32 %v1731, 1.442695
        %v1741 = vpow.pop %v1740
        %v1742 = vmul.f32 %v1732, 1.442695
        %v1743 = vpow.pop %v1742
        %v1744 = vmul.f32 %v1733, 1.442695
        %v1745 = vpow.pop %v1744
        %v1746 = vmul.f32 %v1734, 1.442695
        %v1747 = vpow.pop %v1746
        %v1748 = vmul.f32 %v1735, 1.442695
        %v1749 = vpow.pop %v1748
        %v1750 = vmul.f32 %v1736, 1.442695
        %v1751 = vpow.pop %v1750
        %v1752 = vmul.f32 %v1737, 1.442695
        %v1753 = vpow.pop %v1752
        %v1754 = vsel %vm1221, %v1739, 0.0
        %1755 = vadd.xlane.f32.xlu0 %v1754
        %v1756 = vpop.xlane.xlu0 %1755
        %v1757 = vsel %vm1221, %v1741, 0.0
        %1758 = vadd.xlane.f32.xlu0 %v1757
        %v1759 = vpop.xlane.xlu0 %1758
        %v1760 = vsel %vm1221, %v1743, 0.0
        %1761 = vadd.xlane.f32.xlu0 %v1760
        %v1762 = vpop.xlane.xlu0 %1761
        %v1763 = vsel %vm1221, %v1745, 0.0
        %1764 = vadd.xlane.f32.xlu0 %v1763
        %v1765 = vpop.xlane.xlu0 %1764
        %v1766 = vsel %vm1221, %v1747, 0.0
        %1767 = vadd.xlane.f32.xlu0 %v1766
        %v1768 = vpop.xlane.xlu0 %1767
        %v1769 = vsel %vm1221, %v1749, 0.0
        %1770 = vadd.xlane.f32.xlu0 %v1769
        %v1771 = vpop.xlane.xlu0 %1770
        %v1772 = vsel %vm1221, %v1751, 0.0
        %1773 = vadd.xlane.f32.xlu0 %v1772
        %v1774 = vpop.xlane.xlu0 %1773
        %v1775 = vsel %vm1221, %v1753, 0.0
        %1776 = vadd.xlane.f32.xlu0 %v1775
        %v1777 = vpop.xlane.xlu0 %1776
        %v1778 = vrcp.pop %v1756
        %v1779 = vrcp.pop %v1759
        %v1780 = vrcp.pop %v1762
        %v1781 = vrcp.pop %v1765
        %v1782 = vrcp.pop %v1768
        %v1783 = vrcp.pop %v1771
        %v1784 = vrcp.pop %v1774
        %v1785 = vrcp.pop %v1777
        %v1786 = vmul.f32 %v1739, %v1778
        %v1787 = vmul.f32 %v1741, %v1779
        %v1788 = vmul.f32 %v1743, %v1780
        %v1789 = vmul.f32 %v1745, %v1781
        %v1790 = vmul.f32 %v1747, %v1782
        %v1791 = vmul.f32 %v1749, %v1783
        %v1792 = vmul.f32 %v1751, %v1784
        %v1793 = vmul.f32 %v1753, %v1785
        %v1794 = vpack.c.bf16 %v1787, %v1786
        %v1795 = vpack.c.bf16 %v1789, %v1788
        %v1796 = vpack.c.bf16 %v1791, %v1790
        %v1797 = vpack.c.bf16 %v1793, %v1792
        %1798 = vrot.lane.b32.xlu0 %v1016, 56
        %v1799 = vpop.permute.xlu0 %1798
        %v1802 = vsel %vm1221, %v1794, 0
        %1804 = vmatprep.subr.bf16.mxu0 0
        %1805 = vmatpush1.bf16.msra.mxu0 0
        %1806 = vmatprep.subr.bf16.mxu0 0
        %1807 = vmatpush1.bf16.msra.mxu0 0
        %1808 = vmatprep.subr.bf16.mxu0 0
        %1809 = vmatpush1.bf16.msra.mxu0 0
        %1810 = vmatprep.subr.bf16.mxu0 0
        %1811 = vmatpush1.bf16.msra.mxu0 0
        %1812 = vmatprep.subr.bf16.mxu0 0
        %1813 = vmatpush1.bf16.msra.mxu0 0
        %1814 = vmatprep.subr.bf16.mxu0 0
        %1815 = vmatpush1.bf16.msra.mxu0 0
        %1816 = vmatprep.subr.bf16.mxu0 0
        %1817 = vmatpush1.bf16.msra.mxu0 0
        %1818 = vmatprep.subr.bf16.mxu0 0
        %1819 = vmatpush1.bf16.msra.mxu0 %v1799
        %1820 = vmatprep.subr.bf16.mxu0 0
        %1821 = vmatpush2.bf16.msra.mxu0 0
        %1822 = vmatprep.subr.bf16.mxu0 0
        %1823 = vmatpush2.bf16.msra.mxu0 0
        %1824 = vmatprep.subr.bf16.mxu0 0
        %1825 = vmatpush2.bf16.msra.mxu0 0
        %1826 = vmatprep.subr.bf16.mxu0 0
        %1827 = vmatpush2.bf16.msra.mxu0 0
        %1828 = vmatprep.subr.bf16.mxu0 0
        %1829 = vmatpush2.bf16.msra.mxu0 0
        %1830 = vmatprep.subr.bf16.mxu0 0
        %1831 = vmatpush2.bf16.msra.mxu0 0
        %1832 = vmatprep.subr.bf16.mxu0 0
        %1833 = vmatpush2.bf16.msra.mxu0 0
        %1834 = vmatprep.subr.bf16.mxu0 0
        %1835 = vmatpush2.bf16.msra.mxu0 0
        %1836 = vmatprep.mubr.bf16.mxu0 0
        %1837 = vmatmul.mubr.bf16.gmra.mxu0 %v1802
        %v1838 = vpop.f32.mrf.mxu0
        %v1839 = vadd.f32 0.0, %v1838
        %v1840 = vpop.f32.mrf.mxu0
        %v1841 = vpop.f32.mrf.mxu0
        %v1842 = vadd.f32 0.0, %v1841
        %v1843 = vpop.f32.mrf.mxu0
        %1844 = vdwg.mxu0
        %1845 = vrot.lane.b32.xlu0 %v1017, 56
        %v1846 = vpop.permute.xlu0 %1845
        %v1849 = vsel %vm1221, %v1795, 0
        %1851 = vmatprep.subr.bf16.mxu0 0
        %1852 = vmatpush1.bf16.msra.mxu0 0
        %1853 = vmatprep.subr.bf16.mxu0 0
        %1854 = vmatpush1.bf16.msra.mxu0 0
        %1855 = vmatprep.subr.bf16.mxu0 0
        %1856 = vmatpush1.bf16.msra.mxu0 0
        %1857 = vmatprep.subr.bf16.mxu0 0
        %1858 = vmatpush1.bf16.msra.mxu0 0
        %1859 = vmatprep.subr.bf16.mxu0 0
        %1860 = vmatpush1.bf16.msra.mxu0 0
        %1861 = vmatprep.subr.bf16.mxu0 0
        %1862 = vmatpush1.bf16.msra.mxu0 0
        %1863 = vmatprep.subr.bf16.mxu0 0
        %1864 = vmatpush1.bf16.msra.mxu0 0
        %1865 = vmatprep.subr.bf16.mxu0 0
        %1866 = vmatpush1.bf16.msra.mxu0 %v1846
        %1867 = vmatprep.subr.bf16.mxu0 0
        %1868 = vmatpush2.bf16.msra.mxu0 0
        %1869 = vmatprep.subr.bf16.mxu0 0
        %1870 = vmatpush2.bf16.msra.mxu0 0
        %1871 = vmatprep.subr.bf16.mxu0 0
        %1872 = vmatpush2.bf16.msra.mxu0 0
        %1873 = vmatprep.subr.bf16.mxu0 0
        %1874 = vmatpush2.bf16.msra.mxu0 0
        %1875 = vmatprep.subr.bf16.mxu0 0
        %1876 = vmatpush2.bf16.msra.mxu0 0
        %1877 = vmatprep.subr.bf16.mxu0 0
        %1878 = vmatpush2.bf16.msra.mxu0 0
        %1879 = vmatprep.subr.bf16.mxu0 0
        %1880 = vmatpush2.bf16.msra.mxu0 0
        %1881 = vmatprep.subr.bf16.mxu0 0
        %1882 = vmatpush2.bf16.msra.mxu0 0
        %1883 = vmatprep.mubr.bf16.mxu0 0
        %1884 = vmatmul.mubr.bf16.gmra.mxu0 %v1849
        %v1885 = vpop.f32.mrf.mxu0
        %v1886 = vadd.f32 0.0, %v1885
        %v1887 = vpop.f32.mrf.mxu0
        %v1888 = vpop.f32.mrf.mxu0
        %v1889 = vadd.f32 0.0, %v1888
        %v1890 = vpop.f32.mrf.mxu0
        %1891 = vdwg.mxu0
        %1892 = vrot.lane.b32.xlu0 %v1018, 56
        %v1893 = vpop.permute.xlu0 %1892
        %v1896 = vsel %vm1221, %v1796, 0
        %1898 = vmatprep.subr.bf16.mxu0 0
        %1899 = vmatpush1.bf16.msra.mxu0 0
        %1900 = vmatprep.subr.bf16.mxu0 0
        %1901 = vmatpush1.bf16.msra.mxu0 0
        %1902 = vmatprep.subr.bf16.mxu0 0
        %1903 = vmatpush1.bf16.msra.mxu0 0
        %1904 = vmatprep.subr.bf16.mxu0 0
        %1905 = vmatpush1.bf16.msra.mxu0 0
        %1906 = vmatprep.subr.bf16.mxu0 0
        %1907 = vmatpush1.bf16.msra.mxu0 0
        %1908 = vmatprep.subr.bf16.mxu0 0
        %1909 = vmatpush1.bf16.msra.mxu0 0
        %1910 = vmatprep.subr.bf16.mxu0 0
        %1911 = vmatpush1.bf16.msra.mxu0 0
        %1912 = vmatprep.subr.bf16.mxu0 0
        %1913 = vmatpush1.bf16.msra.mxu0 %v1893
        %1914 = vmatprep.subr.bf16.mxu0 0
        %1915 = vmatpush2.bf16.msra.mxu0 0
        %1916 = vmatprep.subr.bf16.mxu0 0
        %1917 = vmatpush2.bf16.msra.mxu0 0
        %1918 = vmatprep.subr.bf16.mxu0 0
        %1919 = vmatpush2.bf16.msra.mxu0 0
        %1920 = vmatprep.subr.bf16.mxu0 0
        %1921 = vmatpush2.bf16.msra.mxu0 0
        %1922 = vmatprep.subr.bf16.mxu0 0
        %1923 = vmatpush2.bf16.msra.mxu0 0
        %1924 = vmatprep.subr.bf16.mxu0 0
        %1925 = vmatpush2.bf16.msra.mxu0 0
        %1926 = vmatprep.subr.bf16.mxu0 0
        %1927 = vmatpush2.bf16.msra.mxu0 0
        %1928 = vmatprep.subr.bf16.mxu0 0
        %1929 = vmatpush2.bf16.msra.mxu0 0
        %1930 = vmatprep.mubr.bf16.mxu0 0
        %1931 = vmatmul.mubr.bf16.gmra.mxu0 %v1896
        %v1932 = vpop.f32.mrf.mxu0
        %v1933 = vadd.f32 0.0, %v1932
        %v1934 = vpop.f32.mrf.mxu0
        %v1935 = vpop.f32.mrf.mxu0
        %v1936 = vadd.f32 0.0, %v1935
        %v1937 = vpop.f32.mrf.mxu0
        %1938 = vdwg.mxu0
        %1939 = vrot.lane.b32.xlu0 %v1019, 56
        %v1940 = vpop.permute.xlu0 %1939
        %v1943 = vsel %vm1221, %v1797, 0
        %1945 = vmatprep.subr.bf16.mxu0 0
        %1946 = vmatpush1.bf16.msra.mxu0 0
        %1947 = vmatprep.subr.bf16.mxu0 0
        %1948 = vmatpush1.bf16.msra.mxu0 0
        %1949 = vmatprep.subr.bf16.mxu0 0
        %1950 = vmatpush1.bf16.msra.mxu0 0
        %1951 = vmatprep.subr.bf16.mxu0 0
        %1952 = vmatpush1.bf16.msra.mxu0 0
        %1953 = vmatprep.subr.bf16.mxu0 0
        %1954 = vmatpush1.bf16.msra.mxu0 0
        %1955 = vmatprep.subr.bf16.mxu0 0
        %1956 = vmatpush1.bf16.msra.mxu0 0
        %1957 = vmatprep.subr.bf16.mxu0 0
        %1958 = vmatpush1.bf16.msra.mxu0 0
        %1959 = vmatprep.subr.bf16.mxu0 0
        %1960 = vmatpush1.bf16.msra.mxu0 %v1940
        %1961 = vmatprep.subr.bf16.mxu0 0
        %1962 = vmatpush2.bf16.msra.mxu0 0
        %1963 = vmatprep.subr.bf16.mxu0 0
        %1964 = vmatpush2.bf16.msra.mxu0 0
        %1965 = vmatprep.subr.bf16.mxu0 0
        %1966 = vmatpush2.bf16.msra.mxu0 0
        %1967 = vmatprep.subr.bf16.mxu0 0
        %1968 = vmatpush2.bf16.msra.mxu0 0
        %1969 = vmatprep.subr.bf16.mxu0 0
        %1970 = vmatpush2.bf16.msra.mxu0 0
        %1971 = vmatprep.subr.bf16.mxu0 0
        %1972 = vmatpush2.bf16.msra.mxu0 0
        %1973 = vmatprep.subr.bf16.mxu0 0
        %1974 = vmatpush2.bf16.msra.mxu0 0
        %1975 = vmatprep.subr.bf16.mxu0 0
        %1976 = vmatpush2.bf16.msra.mxu0 0
        %1977 = vmatprep.mubr.bf16.mxu0 0
        %1978 = vmatmul.mubr.bf16.gmra.mxu0 %v1943
        %v1979 = vpop.f32.mrf.mxu0
        %v1980 = vadd.f32 0.0, %v1979
        %v1981 = vpop.f32.mrf.mxu0
        %v1982 = vpop.f32.mrf.mxu0
        %v1983 = vadd.f32 0.0, %v1982
        %v1984 = vpop.f32.mrf.mxu0
        %1985 = vdwg.mxu0
        %1986 = vrot.lane.b32.xlu0 %v1016, 112
        %v1987 = vpop.permute.xlu0 %1986
        %1988 = vrot.lane.b32.xlu0 %v1016, 80
        %v1989 = vpop.permute.xlu0 %1988
        %v1991 = vsel %vm1023, %v1987, 0
        %v1994 = vsel %vm1023, %v1989, 0
        %1996 = vmatprep.subr.bf16.mxu0 0
        %1997 = vmatpush1.bf16.xpose.msra.mxu0 0
        %1998 = vmatprep.subr.bf16.mxu0 0
        %1999 = vmatpush1.bf16.xpose.msra.mxu0 0
        %2000 = vmatprep.subr.bf16.mxu0 0
        %2001 = vmatpush1.bf16.xpose.msra.mxu0 0
        %2002 = vmatprep.subr.bf16.mxu0 0
        %2003 = vmatpush1.bf16.xpose.msra.mxu0 0
        %2004 = vmatprep.subr.bf16.mxu0 0
        %2005 = vmatpush1.bf16.xpose.msra.mxu0 0
        %2006 = vmatprep.subr.bf16.mxu0 0
        %2007 = vmatpush1.bf16.xpose.msra.mxu0 0
        %2008 = vmatprep.subr.bf16.mxu0 0
        %2009 = vmatpush1.bf16.xpose.msra.mxu0 0
        %2010 = vmatprep.subr.bf16.mxu0 0
        %2011 = vmatpush1.bf16.xpose.msra.mxu0 %v1994
        %2012 = vmatprep.subr.bf16.mxu0 0
        %2013 = vmatpush2.bf16.xpose.msra.mxu0 0
        %2014 = vmatprep.subr.bf16.mxu0 0
        %2015 = vmatpush2.bf16.xpose.msra.mxu0 0
        %2016 = vmatprep.subr.bf16.mxu0 0
        %2017 = vmatpush2.bf16.xpose.msra.mxu0 0
        %2018 = vmatprep.subr.bf16.mxu0 0
        %2019 = vmatpush2.bf16.xpose.msra.mxu0 0
        %2020 = vmatprep.subr.bf16.mxu0 0
        %2021 = vmatpush2.bf16.xpose.msra.mxu0 0
        %2022 = vmatprep.subr.bf16.mxu0 0
        %2023 = vmatpush2.bf16.xpose.msra.mxu0 0
        %2024 = vmatprep.subr.bf16.mxu0 0
        %2025 = vmatpush2.bf16.xpose.msra.mxu0 0
        %2026 = vmatprep.subr.bf16.mxu0 0
        %2027 = vmatpush2.bf16.xpose.msra.mxu0 0
        %2028 = vmatprep.mubr.bf16.mxu0 0
        %2029 = vmatmul.mubr.bf16.gmra.mxu0 %v1991
        %v2030 = vpop.f32.mrf.mxu0
        %v2031 = vadd.f32 0.0, %v2030
        %v2032 = vpop.f32.mrf.mxu0
        %v2033 = vpop.f32.mrf.mxu0
        %v2034 = vadd.f32 0.0, %v2033
        %v2035 = vpop.f32.mrf.mxu0
        %2036 = vdwg.mxu0
        %2037 = vrot.lane.b32.xlu0 %v1017, 112
        %v2038 = vpop.permute.xlu0 %2037
        %2039 = vrot.lane.b32.xlu0 %v1017, 80
        %v2040 = vpop.permute.xlu0 %2039
        %v2042 = vsel %vm1023, %v2038, 0
        %v2045 = vsel %vm1023, %v2040, 0
        %2047 = vmatprep.subr.bf16.mxu0 0
        %2048 = vmatpush1.bf16.xpose.msra.mxu0 0
        %2049 = vmatprep.subr.bf16.mxu0 0
        %2050 = vmatpush1.bf16.xpose.msra.mxu0 0
        %2051 = vmatprep.subr.bf16.mxu0 0
        %2052 = vmatpush1.bf16.xpose.msra.mxu0 0
        %2053 = vmatprep.subr.bf16.mxu0 0
        %2054 = vmatpush1.bf16.xpose.msra.mxu0 0
        %2055 = vmatprep.subr.bf16.mxu0 0
        %2056 = vmatpush1.bf16.xpose.msra.mxu0 0
        %2057 = vmatprep.subr.bf16.mxu0 0
        %2058 = vmatpush1.bf16.xpose.msra.mxu0 0
        %2059 = vmatprep.subr.bf16.mxu0 0
        %2060 = vmatpush1.bf16.xpose.msra.mxu0 0
        %2061 = vmatprep.subr.bf16.mxu0 0
        %2062 = vmatpush1.bf16.xpose.msra.mxu0 %v2045
        %2063 = vmatprep.subr.bf16.mxu0 0
        %2064 = vmatpush2.bf16.xpose.msra.mxu0 0
        %2065 = vmatprep.subr.bf16.mxu0 0
        %2066 = vmatpush2.bf16.xpose.msra.mxu0 0
        %2067 = vmatprep.subr.bf16.mxu0 0
        %2068 = vmatpush2.bf16.xpose.msra.mxu0 0
        %2069 = vmatprep.subr.bf16.mxu0 0
        %2070 = vmatpush2.bf16.xpose.msra.mxu0 0
        %2071 = vmatprep.subr.bf16.mxu0 0
        %2072 = vmatpush2.bf16.xpose.msra.mxu0 0
        %2073 = vmatprep.subr.bf16.mxu0 0
        %2074 = vmatpush2.bf16.xpose.msra.mxu0 0
        %2075 = vmatprep.subr.bf16.mxu0 0
        %2076 = vmatpush2.bf16.xpose.msra.mxu0 0
        %2077 = vmatprep.subr.bf16.mxu0 0
        %2078 = vmatpush2.bf16.xpose.msra.mxu0 0
        %2079 = vmatprep.mubr.bf16.mxu0 0
        %2080 = vmatmul.mubr.bf16.gmra.mxu0 %v2042
        %v2081 = vpop.f32.mrf.mxu0
        %v2082 = vadd.f32 0.0, %v2081
        %v2083 = vpop.f32.mrf.mxu0
        %v2084 = vpop.f32.mrf.mxu0
        %v2085 = vadd.f32 0.0, %v2084
        %v2086 = vpop.f32.mrf.mxu0
        %2087 = vdwg.mxu0
        %2088 = vrot.lane.b32.xlu0 %v1018, 112
        %v2089 = vpop.permute.xlu0 %2088
        %2090 = vrot.lane.b32.xlu0 %v1018, 80
        %v2091 = vpop.permute.xlu0 %2090
        %v2093 = vsel %vm1023, %v2089, 0
        %v2096 = vsel %vm1023, %v2091, 0
        %2098 = vmatprep.subr.bf16.mxu0 0
        %2099 = vmatpush1.bf16.xpose.msra.mxu0 0
        %2100 = vmatprep.subr.bf16.mxu0 0
        %2101 = vmatpush1.bf16.xpose.msra.mxu0 0
        %2102 = vmatprep.subr.bf16.mxu0 0
        %2103 = vmatpush1.bf16.xpose.msra.mxu0 0
        %2104 = vmatprep.subr.bf16.mxu0 0
        %2105 = vmatpush1.bf16.xpose.msra.mxu0 0
        %2106 = vmatprep.subr.bf16.mxu0 0
        %2107 = vmatpush1.bf16.xpose.msra.mxu0 0
        %2108 = vmatprep.subr.bf16.mxu0 0
        %2109 = vmatpush1.bf16.xpose.msra.mxu0 0
        %2110 = vmatprep.subr.bf16.mxu0 0
        %2111 = vmatpush1.bf16.xpose.msra.mxu0 0
        %2112 = vmatprep.subr.bf16.mxu0 0
        %2113 = vmatpush1.bf16.xpose.msra.mxu0 %v2096
        %2114 = vmatprep.subr.bf16.mxu0 0
        %2115 = vmatpush2.bf16.xpose.msra.mxu0 0
        %2116 = vmatprep.subr.bf16.mxu0 0
        %2117 = vmatpush2.bf16.xpose.msra.mxu0 0
        %2118 = vmatprep.subr.bf16.mxu0 0
        %2119 = vmatpush2.bf16.xpose.msra.mxu0 0
        %2120 = vmatprep.subr.bf16.mxu0 0
        %2121 = vmatpush2.bf16.xpose.msra.mxu0 0
        %2122 = vmatprep.subr.bf16.mxu0 0
        %2123 = vmatpush2.bf16.xpose.msra.mxu0 0
        %2124 = vmatprep.subr.bf16.mxu0 0
        %2125 = vmatpush2.bf16.xpose.msra.mxu0 0
        %2126 = vmatprep.subr.bf16.mxu0 0
        %2127 = vmatpush2.bf16.xpose.msra.mxu0 0
        %2128 = vmatprep.subr.bf16.mxu0 0
        %2129 = vmatpush2.bf16.xpose.msra.mxu0 0
        %2130 = vmatprep.mubr.bf16.mxu0 0
        %2131 = vmatmul.mubr.bf16.gmra.mxu0 %v2093
        %v2132 = vpop.f32.mrf.mxu0
        %v2133 = vadd.f32 0.0, %v2132
        %v2134 = vpop.f32.mrf.mxu0
        %v2135 = vpop.f32.mrf.mxu0
        %v2136 = vadd.f32 0.0, %v2135
        %v2137 = vpop.f32.mrf.mxu0
        %2138 = vdwg.mxu0
        %2139 = vrot.lane.b32.xlu0 %v1019, 112
        %v2140 = vpop.permute.xlu0 %2139
        %2141 = vrot.lane.b32.xlu0 %v1019, 80
        %v2142 = vpop.permute.xlu0 %2141
        %v2144 = vsel %vm1023, %v2140, 0
        %v2147 = vsel %vm1023, %v2142, 0
        %2149 = vmatprep.subr.bf16.mxu0 0
        %2150 = vmatpush1.bf16.xpose.msra.mxu0 0
        %2151 = vmatprep.subr.bf16.mxu0 0
        %2152 = vmatpush1.bf16.xpose.msra.mxu0 0
        %2153 = vmatprep.subr.bf16.mxu0 0
        %2154 = vmatpush1.bf16.xpose.msra.mxu0 0
        %2155 = vmatprep.subr.bf16.mxu0 0
        %2156 = vmatpush1.bf16.xpose.msra.mxu0 0
        %2157 = vmatprep.subr.bf16.mxu0 0
        %2158 = vmatpush1.bf16.xpose.msra.mxu0 0
        %2159 = vmatprep.subr.bf16.mxu0 0
        %2160 = vmatpush1.bf16.xpose.msra.mxu0 0
        %2161 = vmatprep.subr.bf16.mxu0 0
        %2162 = vmatpush1.bf16.xpose.msra.mxu0 0
        %2163 = vmatprep.subr.bf16.mxu0 0
        %2164 = vmatpush1.bf16.xpose.msra.mxu0 %v2147
        %2165 = vmatprep.subr.bf16.mxu0 0
        %2166 = vmatpush2.bf16.xpose.msra.mxu0 0
        %2167 = vmatprep.subr.bf16.mxu0 0
        %2168 = vmatpush2.bf16.xpose.msra.mxu0 0
        %2169 = vmatprep.subr.bf16.mxu0 0
        %2170 = vmatpush2.bf16.xpose.msra.mxu0 0
        %2171 = vmatprep.subr.bf16.mxu0 0
        %2172 = vmatpush2.bf16.xpose.msra.mxu0 0
        %2173 = vmatprep.subr.bf16.mxu0 0
        %2174 = vmatpush2.bf16.xpose.msra.mxu0 0
        %2175 = vmatprep.subr.bf16.mxu0 0
        %2176 = vmatpush2.bf16.xpose.msra.mxu0 0
        %2177 = vmatprep.subr.bf16.mxu0 0
        %2178 = vmatpush2.bf16.xpose.msra.mxu0 0
        %2179 = vmatprep.subr.bf16.mxu0 0
        %2180 = vmatpush2.bf16.xpose.msra.mxu0 0
        %2181 = vmatprep.mubr.bf16.mxu0 0
        %2182 = vmatmul.mubr.bf16.gmra.mxu0 %v2144
        %v2183 = vpop.f32.mrf.mxu0
        %v2184 = vadd.f32 0.0, %v2183
        %v2185 = vpop.f32.mrf.mxu0
        %v2186 = vpop.f32.mrf.mxu0
        %v2187 = vadd.f32 0.0, %v2186
        %v2188 = vpop.f32.mrf.mxu0
        %2189 = vdwg.mxu0
        %v2190 = vsel %vm1221, %v2031, -inf
        %2191 = vmax.xlane.f32.xlu0 %v2190
        %v2192 = vpop.xlane.xlu0 %2191
        %v2193 = vsel %vm1221, %v2034, -inf
        %2194 = vmax.xlane.f32.xlu0 %v2193
        %v2195 = vpop.xlane.xlu0 %2194
        %v2196 = vsel %vm1221, %v2082, -inf
        %2197 = vmax.xlane.f32.xlu0 %v2196
        %v2198 = vpop.xlane.xlu0 %2197
        %v2199 = vsel %vm1221, %v2085, -inf
        %2200 = vmax.xlane.f32.xlu0 %v2199
        %v2201 = vpop.xlane.xlu0 %2200
        %v2202 = vsel %vm1221, %v2133, -inf
        %2203 = vmax.xlane.f32.xlu0 %v2202
        %v2204 = vpop.xlane.xlu0 %2203
        %v2205 = vsel %vm1221, %v2136, -inf
        %2206 = vmax.xlane.f32.xlu0 %v2205
        %v2207 = vpop.xlane.xlu0 %2206
        %v2208 = vsel %vm1221, %v2184, -inf
        %2209 = vmax.xlane.f32.xlu0 %v2208
        %v2210 = vpop.xlane.xlu0 %2209
        %v2211 = vsel %vm1221, %v2187, -inf
        %2212 = vmax.xlane.f32.xlu0 %v2211
        %v2213 = vpop.xlane.xlu0 %2212
        %v2214 = vsub.f32 %v2031, %v2192
        %v2215 = vsub.f32 %v2034, %v2195
        %v2216 = vsub.f32 %v2082, %v2198
        %v2217 = vsub.f32 %v2085, %v2201
        %v2218 = vsub.f32 %v2133, %v2204
        %v2219 = vsub.f32 %v2136, %v2207
        %v2220 = vsub.f32 %v2184, %v2210
        %v2221 = vsub.f32 %v2187, %v2213
        %v2222 = vmul.f32 %v2214, 1.442695
        %v2223 = vpow.pop %v2222
        %v2224 = vmul.f32 %v2215, 1.442695
        %v2225 = vpow.pop %v2224
        %v2226 = vmul.f32 %v2216, 1.442695
        %v2227 = vpow.pop %v2226
        %v2228 = vmul.f32 %v2217, 1.442695
        %v2229 = vpow.pop %v2228
        %v2230 = vmul.f32 %v2218, 1.442695
        %v2231 = vpow.pop %v2230
        %v2232 = vmul.f32 %v2219, 1.442695
        %v2233 = vpow.pop %v2232
        %v2234 = vmul.f32 %v2220, 1.442695
        %v2235 = vpow.pop %v2234
        %v2236 = vmul.f32 %v2221, 1.442695
        %v2237 = vpow.pop %v2236
        %v2238 = vsel %vm1221, %v2223, 0.0
        %2239 = vadd.xlane.f32.xlu0 %v2238
        %v2240 = vpop.xlane.xlu0 %2239
        %v2241 = vsel %vm1221, %v2225, 0.0
        %2242 = vadd.xlane.f32.xlu0 %v2241
        %v2243 = vpop.xlane.xlu0 %2242
        %v2244 = vsel %vm1221, %v2227, 0.0
        %2245 = vadd.xlane.f32.xlu0 %v2244
        %v2246 = vpop.xlane.xlu0 %2245
        %v2247 = vsel %vm1221, %v2229, 0.0
        %2248 = vadd.xlane.f32.xlu0 %v2247
        %v2249 = vpop.xlane.xlu0 %2248
        %v2250 = vsel %vm1221, %v2231, 0.0
        %2251 = vadd.xlane.f32.xlu0 %v2250
        %v2252 = vpop.xlane.xlu0 %2251
        %v2253 = vsel %vm1221, %v2233, 0.0
        %2254 = vadd.xlane.f32.xlu0 %v2253
        %v2255 = vpop.xlane.xlu0 %2254
        %v2256 = vsel %vm1221, %v2235, 0.0
        %2257 = vadd.xlane.f32.xlu0 %v2256
        %v2258 = vpop.xlane.xlu0 %2257
        %v2259 = vsel %vm1221, %v2237, 0.0
        %2260 = vadd.xlane.f32.xlu0 %v2259
        %v2261 = vpop.xlane.xlu0 %2260
        %v2262 = vrcp.pop %v2240
        %v2263 = vrcp.pop %v2243
        %v2264 = vrcp.pop %v2246
        %v2265 = vrcp.pop %v2249
        %v2266 = vrcp.pop %v2252
        %v2267 = vrcp.pop %v2255
        %v2268 = vrcp.pop %v2258
        %v2269 = vrcp.pop %v2261
        %v2270 = vmul.f32 %v2223, %v2262
        %v2271 = vmul.f32 %v2225, %v2263
        %v2272 = vmul.f32 %v2227, %v2264
        %v2273 = vmul.f32 %v2229, %v2265
        %v2274 = vmul.f32 %v2231, %v2266
        %v2275 = vmul.f32 %v2233, %v2267
        %v2276 = vmul.f32 %v2235, %v2268
        %v2277 = vmul.f32 %v2237, %v2269
        %v2278 = vpack.c.bf16 %v2271, %v2270
        %v2279 = vpack.c.bf16 %v2273, %v2272
        %v2280 = vpack.c.bf16 %v2275, %v2274
        %v2281 = vpack.c.bf16 %v2277, %v2276
        %2282 = vrot.lane.b32.xlu0 %v1016, 48
        %v2283 = vpop.permute.xlu0 %2282
        %v2286 = vsel %vm1221, %v2278, 0
        %2288 = vmatprep.subr.bf16.mxu0 0
        %2289 = vmatpush1.bf16.msra.mxu0 0
        %2290 = vmatprep.subr.bf16.mxu0 0
        %2291 = vmatpush1.bf16.msra.mxu0 0
        %2292 = vmatprep.subr.bf16.mxu0 0
        %2293 = vmatpush1.bf16.msra.mxu0 0
        %2294 = vmatprep.subr.bf16.mxu0 0
        %2295 = vmatpush1.bf16.msra.mxu0 0
        %2296 = vmatprep.subr.bf16.mxu0 0
        %2297 = vmatpush1.bf16.msra.mxu0 0
        %2298 = vmatprep.subr.bf16.mxu0 0
        %2299 = vmatpush1.bf16.msra.mxu0 0
        %2300 = vmatprep.subr.bf16.mxu0 0
        %2301 = vmatpush1.bf16.msra.mxu0 0
        %2302 = vmatprep.subr.bf16.mxu0 0
        %2303 = vmatpush1.bf16.msra.mxu0 %v2283
        %2304 = vmatprep.subr.bf16.mxu0 0
        %2305 = vmatpush2.bf16.msra.mxu0 0
        %2306 = vmatprep.subr.bf16.mxu0 0
        %2307 = vmatpush2.bf16.msra.mxu0 0
        %2308 = vmatprep.subr.bf16.mxu0 0
        %2309 = vmatpush2.bf16.msra.mxu0 0
        %2310 = vmatprep.subr.bf16.mxu0 0
        %2311 = vmatpush2.bf16.msra.mxu0 0
        %2312 = vmatprep.subr.bf16.mxu0 0
        %2313 = vmatpush2.bf16.msra.mxu0 0
        %2314 = vmatprep.subr.bf16.mxu0 0
        %2315 = vmatpush2.bf16.msra.mxu0 0
        %2316 = vmatprep.subr.bf16.mxu0 0
        %2317 = vmatpush2.bf16.msra.mxu0 0
        %2318 = vmatprep.subr.bf16.mxu0 0
        %2319 = vmatpush2.bf16.msra.mxu0 0
        %2320 = vmatprep.mubr.bf16.mxu0 0
        %2321 = vmatmul.mubr.bf16.gmra.mxu0 %v2286
        %v2322 = vpop.f32.mrf.mxu0
        %v2323 = vadd.f32 0.0, %v2322
        %v2324 = vpop.f32.mrf.mxu0
        %v2325 = vpop.f32.mrf.mxu0
        %v2326 = vadd.f32 0.0, %v2325
        %v2327 = vpop.f32.mrf.mxu0
        %2328 = vdwg.mxu0
        %2329 = vrot.lane.b32.xlu0 %v1017, 48
        %v2330 = vpop.permute.xlu0 %2329
        %v2333 = vsel %vm1221, %v2279, 0
        %2335 = vmatprep.subr.bf16.mxu0 0
        %2336 = vmatpush1.bf16.msra.mxu0 0
        %2337 = vmatprep.subr.bf16.mxu0 0
        %2338 = vmatpush1.bf16.msra.mxu0 0
        %2339 = vmatprep.subr.bf16.mxu0 0
        %2340 = vmatpush1.bf16.msra.mxu0 0
        %2341 = vmatprep.subr.bf16.mxu0 0
        %2342 = vmatpush1.bf16.msra.mxu0 0
        %2343 = vmatprep.subr.bf16.mxu0 0
        %2344 = vmatpush1.bf16.msra.mxu0 0
        %2345 = vmatprep.subr.bf16.mxu0 0
        %2346 = vmatpush1.bf16.msra.mxu0 0
        %2347 = vmatprep.subr.bf16.mxu0 0
        %2348 = vmatpush1.bf16.msra.mxu0 0
        %2349 = vmatprep.subr.bf16.mxu0 0
        %2350 = vmatpush1.bf16.msra.mxu0 %v2330
        %2351 = vmatprep.subr.bf16.mxu0 0
        %2352 = vmatpush2.bf16.msra.mxu0 0
        %2353 = vmatprep.subr.bf16.mxu0 0
        %2354 = vmatpush2.bf16.msra.mxu0 0
        %2355 = vmatprep.subr.bf16.mxu0 0
        %2356 = vmatpush2.bf16.msra.mxu0 0
        %2357 = vmatprep.subr.bf16.mxu0 0
        %2358 = vmatpush2.bf16.msra.mxu0 0
        %2359 = vmatprep.subr.bf16.mxu0 0
        %2360 = vmatpush2.bf16.msra.mxu0 0
        %2361 = vmatprep.subr.bf16.mxu0 0
        %2362 = vmatpush2.bf16.msra.mxu0 0
        %2363 = vmatprep.subr.bf16.mxu0 0
        %2364 = vmatpush2.bf16.msra.mxu0 0
        %2365 = vmatprep.subr.bf16.mxu0 0
        %2366 = vmatpush2.bf16.msra.mxu0 0
        %2367 = vmatprep.mubr.bf16.mxu0 0
        %2368 = vmatmul.mubr.bf16.gmra.mxu0 %v2333
        %v2369 = vpop.f32.mrf.mxu0
        %v2370 = vadd.f32 0.0, %v2369
        %v2371 = vpop.f32.mrf.mxu0
        %v2372 = vpop.f32.mrf.mxu0
        %v2373 = vadd.f32 0.0, %v2372
        %v2374 = vpop.f32.mrf.mxu0
        %2375 = vdwg.mxu0
        %2376 = vrot.lane.b32.xlu0 %v1018, 48
        %v2377 = vpop.permute.xlu0 %2376
        %v2380 = vsel %vm1221, %v2280, 0
        %2382 = vmatprep.subr.bf16.mxu0 0
        %2383 = vmatpush1.bf16.msra.mxu0 0
        %2384 = vmatprep.subr.bf16.mxu0 0
        %2385 = vmatpush1.bf16.msra.mxu0 0
        %2386 = vmatprep.subr.bf16.mxu0 0
        %2387 = vmatpush1.bf16.msra.mxu0 0
        %2388 = vmatprep.subr.bf16.mxu0 0
        %2389 = vmatpush1.bf16.msra.mxu0 0
        %2390 = vmatprep.subr.bf16.mxu0 0
        %2391 = vmatpush1.bf16.msra.mxu0 0
        %2392 = vmatprep.subr.bf16.mxu0 0
        %2393 = vmatpush1.bf16.msra.mxu0 0
        %2394 = vmatprep.subr.bf16.mxu0 0
        %2395 = vmatpush1.bf16.msra.mxu0 0
        %2396 = vmatprep.subr.bf16.mxu0 0
        %2397 = vmatpush1.bf16.msra.mxu0 %v2377
        %2398 = vmatprep.subr.bf16.mxu0 0
        %2399 = vmatpush2.bf16.msra.mxu0 0
        %2400 = vmatprep.subr.bf16.mxu0 0
        %2401 = vmatpush2.bf16.msra.mxu0 0
        %2402 = vmatprep.subr.bf16.mxu0 0
        %2403 = vmatpush2.bf16.msra.mxu0 0
        %2404 = vmatprep.subr.bf16.mxu0 0
        %2405 = vmatpush2.bf16.msra.mxu0 0
        %2406 = vmatprep.subr.bf16.mxu0 0
        %2407 = vmatpush2.bf16.msra.mxu0 0
        %2408 = vmatprep.subr.bf16.mxu0 0
        %2409 = vmatpush2.bf16.msra.mxu0 0
        %2410 = vmatprep.subr.bf16.mxu0 0
        %2411 = vmatpush2.bf16.msra.mxu0 0
        %2412 = vmatprep.subr.bf16.mxu0 0
        %2413 = vmatpush2.bf16.msra.mxu0 0
        %2414 = vmatprep.mubr.bf16.mxu0 0
        %2415 = vmatmul.mubr.bf16.gmra.mxu0 %v2380
        %v2416 = vpop.f32.mrf.mxu0
        %v2417 = vadd.f32 0.0, %v2416
        %v2418 = vpop.f32.mrf.mxu0
        %v2419 = vpop.f32.mrf.mxu0
        %v2420 = vadd.f32 0.0, %v2419
        %v2421 = vpop.f32.mrf.mxu0
        %2422 = vdwg.mxu0
        %2423 = vrot.lane.b32.xlu0 %v1019, 48
        %v2424 = vpop.permute.xlu0 %2423
        %v2427 = vsel %vm1221, %v2281, 0
        %2429 = vmatprep.subr.bf16.mxu0 0
        %2430 = vmatpush1.bf16.msra.mxu0 0
        %2431 = vmatprep.subr.bf16.mxu0 0
        %2432 = vmatpush1.bf16.msra.mxu0 0
        %2433 = vmatprep.subr.bf16.mxu0 0
        %2434 = vmatpush1.bf16.msra.mxu0 0
        %2435 = vmatprep.subr.bf16.mxu0 0
        %2436 = vmatpush1.bf16.msra.mxu0 0
        %2437 = vmatprep.subr.bf16.mxu0 0
        %2438 = vmatpush1.bf16.msra.mxu0 0
        %2439 = vmatprep.subr.bf16.mxu0 0
        %2440 = vmatpush1.bf16.msra.mxu0 0
        %2441 = vmatprep.subr.bf16.mxu0 0
        %2442 = vmatpush1.bf16.msra.mxu0 0
        %2443 = vmatprep.subr.bf16.mxu0 0
        %2444 = vmatpush1.bf16.msra.mxu0 %v2424
        %2445 = vmatprep.subr.bf16.mxu0 0
        %2446 = vmatpush2.bf16.msra.mxu0 0
        %2447 = vmatprep.subr.bf16.mxu0 0
        %2448 = vmatpush2.bf16.msra.mxu0 0
        %2449 = vmatprep.subr.bf16.mxu0 0
        %2450 = vmatpush2.bf16.msra.mxu0 0
        %2451 = vmatprep.subr.bf16.mxu0 0
        %2452 = vmatpush2.bf16.msra.mxu0 0
        %2453 = vmatprep.subr.bf16.mxu0 0
        %2454 = vmatpush2.bf16.msra.mxu0 0
        %2455 = vmatprep.subr.bf16.mxu0 0
        %2456 = vmatpush2.bf16.msra.mxu0 0
        %2457 = vmatprep.subr.bf16.mxu0 0
        %2458 = vmatpush2.bf16.msra.mxu0 0
        %2459 = vmatprep.subr.bf16.mxu0 0
        %2460 = vmatpush2.bf16.msra.mxu0 0
        %2461 = vmatprep.mubr.bf16.mxu0 0
        %2462 = vmatmul.mubr.bf16.gmra.mxu0 %v2427
        %v2463 = vpop.f32.mrf.mxu0
        %v2464 = vadd.f32 0.0, %v2463
        %v2465 = vpop.f32.mrf.mxu0
        %v2466 = vpop.f32.mrf.mxu0
        %v2467 = vadd.f32 0.0, %v2466
        %v2468 = vpop.f32.mrf.mxu0
        %2469 = vdwg.mxu0
        %2470 = vrot.lane.b32.xlu0 %v1016, 104
        %v2471 = vpop.permute.xlu0 %2470
        %2472 = vrot.lane.b32.xlu0 %v1016, 72
        %v2473 = vpop.permute.xlu0 %2472
        %v2475 = vsel %vm1023, %v2471, 0
        %v2478 = vsel %vm1023, %v2473, 0
        %2480 = vmatprep.subr.bf16.mxu0 0
        %2481 = vmatpush1.bf16.xpose.msra.mxu0 0
        %2482 = vmatprep.subr.bf16.mxu0 0
        %2483 = vmatpush1.bf16.xpose.msra.mxu0 0
        %2484 = vmatprep.subr.bf16.mxu0 0
        %2485 = vmatpush1.bf16.xpose.msra.mxu0 0
        %2486 = vmatprep.subr.bf16.mxu0 0
        %2487 = vmatpush1.bf16.xpose.msra.mxu0 0
        %2488 = vmatprep.subr.bf16.mxu0 0
        %2489 = vmatpush1.bf16.xpose.msra.mxu0 0
        %2490 = vmatprep.subr.bf16.mxu0 0
        %2491 = vmatpush1.bf16.xpose.msra.mxu0 0
        %2492 = vmatprep.subr.bf16.mxu0 0
        %2493 = vmatpush1.bf16.xpose.msra.mxu0 0
        %2494 = vmatprep.subr.bf16.mxu0 0
        %2495 = vmatpush1.bf16.xpose.msra.mxu0 %v2478
        %2496 = vmatprep.subr.bf16.mxu0 0
        %2497 = vmatpush2.bf16.xpose.msra.mxu0 0
        %2498 = vmatprep.subr.bf16.mxu0 0
        %2499 = vmatpush2.bf16.xpose.msra.mxu0 0
        %2500 = vmatprep.subr.bf16.mxu0 0
        %2501 = vmatpush2.bf16.xpose.msra.mxu0 0
        %2502 = vmatprep.subr.bf16.mxu0 0
        %2503 = vmatpush2.bf16.xpose.msra.mxu0 0
        %2504 = vmatprep.subr.bf16.mxu0 0
        %2505 = vmatpush2.bf16.xpose.msra.mxu0 0
        %2506 = vmatprep.subr.bf16.mxu0 0
        %2507 = vmatpush2.bf16.xpose.msra.mxu0 0
        %2508 = vmatprep.subr.bf16.mxu0 0
        %2509 = vmatpush2.bf16.xpose.msra.mxu0 0
        %2510 = vmatprep.subr.bf16.mxu0 0
        %2511 = vmatpush2.bf16.xpose.msra.mxu0 0
        %2512 = vmatprep.mubr.bf16.mxu0 0
        %2513 = vmatmul.mubr.bf16.gmra.mxu0 %v2475
        %v2514 = vpop.f32.mrf.mxu0
        %v2515 = vadd.f32 0.0, %v2514
        %v2516 = vpop.f32.mrf.mxu0
        %v2517 = vpop.f32.mrf.mxu0
        %v2518 = vadd.f32 0.0, %v2517
        %v2519 = vpop.f32.mrf.mxu0
        %2520 = vdwg.mxu0
        %2521 = vrot.lane.b32.xlu0 %v1017, 104
        %v2522 = vpop.permute.xlu0 %2521
        %2523 = vrot.lane.b32.xlu0 %v1017, 72
        %v2524 = vpop.permute.xlu0 %2523
        %v2526 = vsel %vm1023, %v2522, 0
        %v2529 = vsel %vm1023, %v2524, 0
        %2531 = vmatprep.subr.bf16.mxu0 0
        %2532 = vmatpush1.bf16.xpose.msra.mxu0 0
        %2533 = vmatprep.subr.bf16.mxu0 0
        %2534 = vmatpush1.bf16.xpose.msra.mxu0 0
        %2535 = vmatprep.subr.bf16.mxu0 0
        %2536 = vmatpush1.bf16.xpose.msra.mxu0 0
        %2537 = vmatprep.subr.bf16.mxu0 0
        %2538 = vmatpush1.bf16.xpose.msra.mxu0 0
        %2539 = vmatprep.subr.bf16.mxu0 0
        %2540 = vmatpush1.bf16.xpose.msra.mxu0 0
        %2541 = vmatprep.subr.bf16.mxu0 0
        %2542 = vmatpush1.bf16.xpose.msra.mxu0 0
        %2543 = vmatprep.subr.bf16.mxu0 0
        %2544 = vmatpush1.bf16.xpose.msra.mxu0 0
        %2545 = vmatprep.subr.bf16.mxu0 0
        %2546 = vmatpush1.bf16.xpose.msra.mxu0 %v2529
        %2547 = vmatprep.subr.bf16.mxu0 0
        %2548 = vmatpush2.bf16.xpose.msra.mxu0 0
        %2549 = vmatprep.subr.bf16.mxu0 0
        %2550 = vmatpush2.bf16.xpose.msra.mxu0 0
        %2551 = vmatprep.subr.bf16.mxu0 0
        %2552 = vmatpush2.bf16.xpose.msra.mxu0 0
        %2553 = vmatprep.subr.bf16.mxu0 0
        %2554 = vmatpush2.bf16.xpose.msra.mxu0 0
        %2555 = vmatprep.subr.bf16.mxu0 0
        %2556 = vmatpush2.bf16.xpose.msra.mxu0 0
        %2557 = vmatprep.subr.bf16.mxu0 0
        %2558 = vmatpush2.bf16.xpose.msra.mxu0 0
        %2559 = vmatprep.subr.bf16.mxu0 0
        %2560 = vmatpush2.bf16.xpose.msra.mxu0 0
        %2561 = vmatprep.subr.bf16.mxu0 0
        %2562 = vmatpush2.bf16.xpose.msra.mxu0 0
        %2563 = vmatprep.mubr.bf16.mxu0 0
        %2564 = vmatmul.mubr.bf16.gmra.mxu0 %v2526
        %v2565 = vpop.f32.mrf.mxu0
        %v2566 = vadd.f32 0.0, %v2565
        %v2567 = vpop.f32.mrf.mxu0
        %v2568 = vpop.f32.mrf.mxu0
        %v2569 = vadd.f32 0.0, %v2568
        %v2570 = vpop.f32.mrf.mxu0
        %2571 = vdwg.mxu0
        %2572 = vrot.lane.b32.xlu0 %v1018, 104
        %v2573 = vpop.permute.xlu0 %2572
        %2574 = vrot.lane.b32.xlu0 %v1018, 72
        %v2575 = vpop.permute.xlu0 %2574
        %v2577 = vsel %vm1023, %v2573, 0
        %v2580 = vsel %vm1023, %v2575, 0
        %2582 = vmatprep.subr.bf16.mxu0 0
        %2583 = vmatpush1.bf16.xpose.msra.mxu0 0
        %2584 = vmatprep.subr.bf16.mxu0 0
        %2585 = vmatpush1.bf16.xpose.msra.mxu0 0
        %2586 = vmatprep.subr.bf16.mxu0 0
        %2587 = vmatpush1.bf16.xpose.msra.mxu0 0
        %2588 = vmatprep.subr.bf16.mxu0 0
        %2589 = vmatpush1.bf16.xpose.msra.mxu0 0
        %2590 = vmatprep.subr.bf16.mxu0 0
        %2591 = vmatpush1.bf16.xpose.msra.mxu0 0
        %2592 = vmatprep.subr.bf16.mxu0 0
        %2593 = vmatpush1.bf16.xpose.msra.mxu0 0
        %2594 = vmatprep.subr.bf16.mxu0 0
        %2595 = vmatpush1.bf16.xpose.msra.mxu0 0
        %2596 = vmatprep.subr.bf16.mxu0 0
        %2597 = vmatpush1.bf16.xpose.msra.mxu0 %v2580
        %2598 = vmatprep.subr.bf16.mxu0 0
        %2599 = vmatpush2.bf16.xpose.msra.mxu0 0
        %2600 = vmatprep.subr.bf16.mxu0 0
        %2601 = vmatpush2.bf16.xpose.msra.mxu0 0
        %2602 = vmatprep.subr.bf16.mxu0 0
        %2603 = vmatpush2.bf16.xpose.msra.mxu0 0
        %2604 = vmatprep.subr.bf16.mxu0 0
        %2605 = vmatpush2.bf16.xpose.msra.mxu0 0
        %2606 = vmatprep.subr.bf16.mxu0 0
        %2607 = vmatpush2.bf16.xpose.msra.mxu0 0
        %2608 = vmatprep.subr.bf16.mxu0 0
        %2609 = vmatpush2.bf16.xpose.msra.mxu0 0
        %2610 = vmatprep.subr.bf16.mxu0 0
        %2611 = vmatpush2.bf16.xpose.msra.mxu0 0
        %2612 = vmatprep.subr.bf16.mxu0 0
        %2613 = vmatpush2.bf16.xpose.msra.mxu0 0
        %2614 = vmatprep.mubr.bf16.mxu0 0
        %2615 = vmatmul.mubr.bf16.gmra.mxu0 %v2577
        %v2616 = vpop.f32.mrf.mxu0
        %v2617 = vadd.f32 0.0, %v2616
        %v2618 = vpop.f32.mrf.mxu0
        %v2619 = vpop.f32.mrf.mxu0
        %v2620 = vadd.f32 0.0, %v2619
        %v2621 = vpop.f32.mrf.mxu0
        %2622 = vdwg.mxu0
        %2623 = vrot.lane.b32.xlu0 %v1019, 104
        %v2624 = vpop.permute.xlu0 %2623
        %2625 = vrot.lane.b32.xlu0 %v1019, 72
        %v2626 = vpop.permute.xlu0 %2625
        %v2628 = vsel %vm1023, %v2624, 0
        %v2631 = vsel %vm1023, %v2626, 0
        %2633 = vmatprep.subr.bf16.mxu0 0
        %2634 = vmatpush1.bf16.xpose.msra.mxu0 0
        %2635 = vmatprep.subr.bf16.mxu0 0
        %2636 = vmatpush1.bf16.xpose.msra.mxu0 0
        %2637 = vmatprep.subr.bf16.mxu0 0
        %2638 = vmatpush1.bf16.xpose.msra.mxu0 0
        %2639 = vmatprep.subr.bf16.mxu0 0
        %2640 = vmatpush1.bf16.xpose.msra.mxu0 0
        %2641 = vmatprep.subr.bf16.mxu0 0
        %2642 = vmatpush1.bf16.xpose.msra.mxu0 0
        %2643 = vmatprep.subr.bf16.mxu0 0
        %2644 = vmatpush1.bf16.xpose.msra.mxu0 0
        %2645 = vmatprep.subr.bf16.mxu0 0
        %2646 = vmatpush1.bf16.xpose.msra.mxu0 0
        %2647 = vmatprep.subr.bf16.mxu0 0
        %2648 = vmatpush1.bf16.xpose.msra.mxu0 %v2631
        %2649 = vmatprep.subr.bf16.mxu0 0
        %2650 = vmatpush2.bf16.xpose.msra.mxu0 0
        %2651 = vmatprep.subr.bf16.mxu0 0
        %2652 = vmatpush2.bf16.xpose.msra.mxu0 0
        %2653 = vmatprep.subr.bf16.mxu0 0
        %2654 = vmatpush2.bf16.xpose.msra.mxu0 0
        %2655 = vmatprep.subr.bf16.mxu0 0
        %2656 = vmatpush2.bf16.xpose.msra.mxu0 0
        %2657 = vmatprep.subr.bf16.mxu0 0
        %2658 = vmatpush2.bf16.xpose.msra.mxu0 0
        %2659 = vmatprep.subr.bf16.mxu0 0
        %2660 = vmatpush2.bf16.xpose.msra.mxu0 0
        %2661 = vmatprep.subr.bf16.mxu0 0
        %2662 = vmatpush2.bf16.xpose.msra.mxu0 0
        %2663 = vmatprep.subr.bf16.mxu0 0
        %2664 = vmatpush2.bf16.xpose.msra.mxu0 0
        %2665 = vmatprep.mubr.bf16.mxu0 0
        %2666 = vmatmul.mubr.bf16.gmra.mxu0 %v2628
        %v2667 = vpop.f32.mrf.mxu0
        %v2668 = vadd.f32 0.0, %v2667
        %v2669 = vpop.f32.mrf.mxu0
        %v2670 = vpop.f32.mrf.mxu0
        %v2671 = vadd.f32 0.0, %v2670
        %v2672 = vpop.f32.mrf.mxu0
        %2673 = vdwg.mxu0
        %v2674 = vsel %vm1221, %v2515, -inf
        %2675 = vmax.xlane.f32.xlu0 %v2674
        %v2676 = vpop.xlane.xlu0 %2675
        %v2677 = vsel %vm1221, %v2518, -inf
        %2678 = vmax.xlane.f32.xlu0 %v2677
        %v2679 = vpop.xlane.xlu0 %2678
        %v2680 = vsel %vm1221, %v2566, -inf
        %2681 = vmax.xlane.f32.xlu0 %v2680
        %v2682 = vpop.xlane.xlu0 %2681
        %v2683 = vsel %vm1221, %v2569, -inf
        %2684 = vmax.xlane.f32.xlu0 %v2683
        %v2685 = vpop.xlane.xlu0 %2684
        %v2686 = vsel %vm1221, %v2617, -inf
        %2687 = vmax.xlane.f32.xlu0 %v2686
        %v2688 = vpop.xlane.xlu0 %2687
        %v2689 = vsel %vm1221, %v2620, -inf
        %2690 = vmax.xlane.f32.xlu0 %v2689
        %v2691 = vpop.xlane.xlu0 %2690
        %v2692 = vsel %vm1221, %v2668, -inf
        %2693 = vmax.xlane.f32.xlu0 %v2692
        %v2694 = vpop.xlane.xlu0 %2693
        %v2695 = vsel %vm1221, %v2671, -inf
        %2696 = vmax.xlane.f32.xlu0 %v2695
        %v2697 = vpop.xlane.xlu0 %2696
        %v2698 = vsub.f32 %v2515, %v2676
        %v2699 = vsub.f32 %v2518, %v2679
        %v2700 = vsub.f32 %v2566, %v2682
        %v2701 = vsub.f32 %v2569, %v2685
        %v2702 = vsub.f32 %v2617, %v2688
        %v2703 = vsub.f32 %v2620, %v2691
        %v2704 = vsub.f32 %v2668, %v2694
        %v2705 = vsub.f32 %v2671, %v2697
        %v2706 = vmul.f32 %v2698, 1.442695
        %v2707 = vpow.pop %v2706
        %v2708 = vmul.f32 %v2699, 1.442695
        %v2709 = vpow.pop %v2708
        %v2710 = vmul.f32 %v2700, 1.442695
        %v2711 = vpow.pop %v2710
        %v2712 = vmul.f32 %v2701, 1.442695
        %v2713 = vpow.pop %v2712
        %v2714 = vmul.f32 %v2702, 1.442695
        %v2715 = vpow.pop %v2714
        %v2716 = vmul.f32 %v2703, 1.442695
        %v2717 = vpow.pop %v2716
        %v2718 = vmul.f32 %v2704, 1.442695
        %v2719 = vpow.pop %v2718
        %v2720 = vmul.f32 %v2705, 1.442695
        %v2721 = vpow.pop %v2720
        %v2722 = vsel %vm1221, %v2707, 0.0
        %2723 = vadd.xlane.f32.xlu0 %v2722
        %v2724 = vpop.xlane.xlu0 %2723
        %v2725 = vsel %vm1221, %v2709, 0.0
        %2726 = vadd.xlane.f32.xlu0 %v2725
        %v2727 = vpop.xlane.xlu0 %2726
        %v2728 = vsel %vm1221, %v2711, 0.0
        %2729 = vadd.xlane.f32.xlu0 %v2728
        %v2730 = vpop.xlane.xlu0 %2729
        %v2731 = vsel %vm1221, %v2713, 0.0
        %2732 = vadd.xlane.f32.xlu0 %v2731
        %v2733 = vpop.xlane.xlu0 %2732
        %v2734 = vsel %vm1221, %v2715, 0.0
        %2735 = vadd.xlane.f32.xlu0 %v2734
        %v2736 = vpop.xlane.xlu0 %2735
        %v2737 = vsel %vm1221, %v2717, 0.0
        %2738 = vadd.xlane.f32.xlu0 %v2737
        %v2739 = vpop.xlane.xlu0 %2738
        %v2740 = vsel %vm1221, %v2719, 0.0
        %2741 = vadd.xlane.f32.xlu0 %v2740
        %v2742 = vpop.xlane.xlu0 %2741
        %v2743 = vsel %vm1221, %v2721, 0.0
        %2744 = vadd.xlane.f32.xlu0 %v2743
        %v2745 = vpop.xlane.xlu0 %2744
        %v2746 = vrcp.pop %v2724
        %v2747 = vrcp.pop %v2727
        %v2748 = vrcp.pop %v2730
        %v2749 = vrcp.pop %v2733
        %v2750 = vrcp.pop %v2736
        %v2751 = vrcp.pop %v2739
        %v2752 = vrcp.pop %v2742
        %v2753 = vrcp.pop %v2745
        %v2754 = vmul.f32 %v2707, %v2746
        %v2755 = vmul.f32 %v2709, %v2747
        %v2756 = vmul.f32 %v2711, %v2748
        %v2757 = vmul.f32 %v2713, %v2749
        %v2758 = vmul.f32 %v2715, %v2750
        %v2759 = vmul.f32 %v2717, %v2751
        %v2760 = vmul.f32 %v2719, %v2752
        %v2761 = vmul.f32 %v2721, %v2753
        %v2762 = vpack.c.bf16 %v2755, %v2754
        %v2763 = vpack.c.bf16 %v2757, %v2756
        %v2764 = vpack.c.bf16 %v2759, %v2758
        %v2765 = vpack.c.bf16 %v2761, %v2760
        %2766 = vrot.lane.b32.xlu0 %v1016, 40
        %v2767 = vpop.permute.xlu0 %2766
        %v2770 = vsel %vm1221, %v2762, 0
        %2772 = vmatprep.subr.bf16.mxu0 0
        %2773 = vmatpush1.bf16.msra.mxu0 0
        %2774 = vmatprep.subr.bf16.mxu0 0
        %2775 = vmatpush1.bf16.msra.mxu0 0
        %2776 = vmatprep.subr.bf16.mxu0 0
        %2777 = vmatpush1.bf16.msra.mxu0 0
        %2778 = vmatprep.subr.bf16.mxu0 0
        %2779 = vmatpush1.bf16.msra.mxu0 0
        %2780 = vmatprep.subr.bf16.mxu0 0
        %2781 = vmatpush1.bf16.msra.mxu0 0
        %2782 = vmatprep.subr.bf16.mxu0 0
        %2783 = vmatpush1.bf16.msra.mxu0 0
        %2784 = vmatprep.subr.bf16.mxu0 0
        %2785 = vmatpush1.bf16.msra.mxu0 0
        %2786 = vmatprep.subr.bf16.mxu0 0
        %2787 = vmatpush1.bf16.msra.mxu0 %v2767
        %2788 = vmatprep.subr.bf16.mxu0 0
        %2789 = vmatpush2.bf16.msra.mxu0 0
        %2790 = vmatprep.subr.bf16.mxu0 0
        %2791 = vmatpush2.bf16.msra.mxu0 0
        %2792 = vmatprep.subr.bf16.mxu0 0
        %2793 = vmatpush2.bf16.msra.mxu0 0
        %2794 = vmatprep.subr.bf16.mxu0 0
        %2795 = vmatpush2.bf16.msra.mxu0 0
        %2796 = vmatprep.subr.bf16.mxu0 0
        %2797 = vmatpush2.bf16.msra.mxu0 0
        %2798 = vmatprep.subr.bf16.mxu0 0
        %2799 = vmatpush2.bf16.msra.mxu0 0
        %2800 = vmatprep.subr.bf16.mxu0 0
        %2801 = vmatpush2.bf16.msra.mxu0 0
        %2802 = vmatprep.subr.bf16.mxu0 0
        %2803 = vmatpush2.bf16.msra.mxu0 0
        %2804 = vmatprep.mubr.bf16.mxu0 0
        %2805 = vmatmul.mubr.bf16.gmra.mxu0 %v2770
        %v2806 = vpop.f32.mrf.mxu0
        %v2807 = vadd.f32 0.0, %v2806
        %v2808 = vpop.f32.mrf.mxu0
        %v2809 = vpop.f32.mrf.mxu0
        %v2810 = vadd.f32 0.0, %v2809
        %v2811 = vpop.f32.mrf.mxu0
        %2812 = vdwg.mxu0
        %2813 = vrot.lane.b32.xlu0 %v1017, 40
        %v2814 = vpop.permute.xlu0 %2813
        %v2817 = vsel %vm1221, %v2763, 0
        %2819 = vmatprep.subr.bf16.mxu0 0
        %2820 = vmatpush1.bf16.msra.mxu0 0
        %2821 = vmatprep.subr.bf16.mxu0 0
        %2822 = vmatpush1.bf16.msra.mxu0 0
        %2823 = vmatprep.subr.bf16.mxu0 0
        %2824 = vmatpush1.bf16.msra.mxu0 0
        %2825 = vmatprep.subr.bf16.mxu0 0
        %2826 = vmatpush1.bf16.msra.mxu0 0
        %2827 = vmatprep.subr.bf16.mxu0 0
        %2828 = vmatpush1.bf16.msra.mxu0 0
        %2829 = vmatprep.subr.bf16.mxu0 0
        %2830 = vmatpush1.bf16.msra.mxu0 0
        %2831 = vmatprep.subr.bf16.mxu0 0
        %2832 = vmatpush1.bf16.msra.mxu0 0
        %2833 = vmatprep.subr.bf16.mxu0 0
        %2834 = vmatpush1.bf16.msra.mxu0 %v2814
        %2835 = vmatprep.subr.bf16.mxu0 0
        %2836 = vmatpush2.bf16.msra.mxu0 0
        %2837 = vmatprep.subr.bf16.mxu0 0
        %2838 = vmatpush2.bf16.msra.mxu0 0
        %2839 = vmatprep.subr.bf16.mxu0 0
        %2840 = vmatpush2.bf16.msra.mxu0 0
        %2841 = vmatprep.subr.bf16.mxu0 0
        %2842 = vmatpush2.bf16.msra.mxu0 0
        %2843 = vmatprep.subr.bf16.mxu0 0
        %2844 = vmatpush2.bf16.msra.mxu0 0
        %2845 = vmatprep.subr.bf16.mxu0 0
        %2846 = vmatpush2.bf16.msra.mxu0 0
        %2847 = vmatprep.subr.bf16.mxu0 0
        %2848 = vmatpush2.bf16.msra.mxu0 0
        %2849 = vmatprep.subr.bf16.mxu0 0
        %2850 = vmatpush2.bf16.msra.mxu0 0
        %2851 = vmatprep.mubr.bf16.mxu0 0
        %2852 = vmatmul.mubr.bf16.gmra.mxu0 %v2817
        %v2853 = vpop.f32.mrf.mxu0
        %v2854 = vadd.f32 0.0, %v2853
        %v2855 = vpop.f32.mrf.mxu0
        %v2856 = vpop.f32.mrf.mxu0
        %v2857 = vadd.f32 0.0, %v2856
        %v2858 = vpop.f32.mrf.mxu0
        %2859 = vdwg.mxu0
        %2860 = vrot.lane.b32.xlu0 %v1018, 40
        %v2861 = vpop.permute.xlu0 %2860
        %v2864 = vsel %vm1221, %v2764, 0
        %2866 = vmatprep.subr.bf16.mxu0 0
        %2867 = vmatpush1.bf16.msra.mxu0 0
        %2868 = vmatprep.subr.bf16.mxu0 0
        %2869 = vmatpush1.bf16.msra.mxu0 0
        %2870 = vmatprep.subr.bf16.mxu0 0
        %2871 = vmatpush1.bf16.msra.mxu0 0
        %2872 = vmatprep.subr.bf16.mxu0 0
        %2873 = vmatpush1.bf16.msra.mxu0 0
        %2874 = vmatprep.subr.bf16.mxu0 0
        %2875 = vmatpush1.bf16.msra.mxu0 0
        %2876 = vmatprep.subr.bf16.mxu0 0
        %2877 = vmatpush1.bf16.msra.mxu0 0
        %2878 = vmatprep.subr.bf16.mxu0 0
        %2879 = vmatpush1.bf16.msra.mxu0 0
        %2880 = vmatprep.subr.bf16.mxu0 0
        %2881 = vmatpush1.bf16.msra.mxu0 %v2861
        %2882 = vmatprep.subr.bf16.mxu0 0
        %2883 = vmatpush2.bf16.msra.mxu0 0
        %2884 = vmatprep.subr.bf16.mxu0 0
        %2885 = vmatpush2.bf16.msra.mxu0 0
        %2886 = vmatprep.subr.bf16.mxu0 0
        %2887 = vmatpush2.bf16.msra.mxu0 0
        %2888 = vmatprep.subr.bf16.mxu0 0
        %2889 = vmatpush2.bf16.msra.mxu0 0
        %2890 = vmatprep.subr.bf16.mxu0 0
        %2891 = vmatpush2.bf16.msra.mxu0 0
        %2892 = vmatprep.subr.bf16.mxu0 0
        %2893 = vmatpush2.bf16.msra.mxu0 0
        %2894 = vmatprep.subr.bf16.mxu0 0
        %2895 = vmatpush2.bf16.msra.mxu0 0
        %2896 = vmatprep.subr.bf16.mxu0 0
        %2897 = vmatpush2.bf16.msra.mxu0 0
        %2898 = vmatprep.mubr.bf16.mxu0 0
        %2899 = vmatmul.mubr.bf16.gmra.mxu0 %v2864
        %v2900 = vpop.f32.mrf.mxu0
        %v2901 = vadd.f32 0.0, %v2900
        %v2902 = vpop.f32.mrf.mxu0
        %v2903 = vpop.f32.mrf.mxu0
        %v2904 = vadd.f32 0.0, %v2903
        %v2905 = vpop.f32.mrf.mxu0
        %2906 = vdwg.mxu0
        %2907 = vrot.lane.b32.xlu0 %v1019, 40
        %v2908 = vpop.permute.xlu0 %2907
        %v2911 = vsel %vm1221, %v2765, 0
        %2913 = vmatprep.subr.bf16.mxu0 0
        %2914 = vmatpush1.bf16.msra.mxu0 0
        %2915 = vmatprep.subr.bf16.mxu0 0
        %2916 = vmatpush1.bf16.msra.mxu0 0
        %2917 = vmatprep.subr.bf16.mxu0 0
        %2918 = vmatpush1.bf16.msra.mxu0 0
        %2919 = vmatprep.subr.bf16.mxu0 0
        %2920 = vmatpush1.bf16.msra.mxu0 0
        %2921 = vmatprep.subr.bf16.mxu0 0
        %2922 = vmatpush1.bf16.msra.mxu0 0
        %2923 = vmatprep.subr.bf16.mxu0 0
        %2924 = vmatpush1.bf16.msra.mxu0 0
        %2925 = vmatprep.subr.bf16.mxu0 0
        %2926 = vmatpush1.bf16.msra.mxu0 0
        %2927 = vmatprep.subr.bf16.mxu0 0
        %2928 = vmatpush1.bf16.msra.mxu0 %v2908
        %2929 = vmatprep.subr.bf16.mxu0 0
        %2930 = vmatpush2.bf16.msra.mxu0 0
        %2931 = vmatprep.subr.bf16.mxu0 0
        %2932 = vmatpush2.bf16.msra.mxu0 0
        %2933 = vmatprep.subr.bf16.mxu0 0
        %2934 = vmatpush2.bf16.msra.mxu0 0
        %2935 = vmatprep.subr.bf16.mxu0 0
        %2936 = vmatpush2.bf16.msra.mxu0 0
        %2937 = vmatprep.subr.bf16.mxu0 0
        %2938 = vmatpush2.bf16.msra.mxu0 0
        %2939 = vmatprep.subr.bf16.mxu0 0
        %2940 = vmatpush2.bf16.msra.mxu0 0
        %2941 = vmatprep.subr.bf16.mxu0 0
        %2942 = vmatpush2.bf16.msra.mxu0 0
        %2943 = vmatprep.subr.bf16.mxu0 0
        %2944 = vmatpush2.bf16.msra.mxu0 0
        %2945 = vmatprep.mubr.bf16.mxu0 0
        %2946 = vmatmul.mubr.bf16.gmra.mxu0 %v2911
        %v2947 = vpop.f32.mrf.mxu0
        %v2948 = vadd.f32 0.0, %v2947
        %v2949 = vpop.f32.mrf.mxu0
        %v2950 = vpop.f32.mrf.mxu0
        %v2951 = vadd.f32 0.0, %v2950
        %v2952 = vpop.f32.mrf.mxu0
        %2953 = vdwg.mxu0
        %2962 = vrot.lane.b32.xlu0 %v1839, 8
        %v2963 = vpop.permute.xlu0 %2962
        %2964 = vrot.lane.b32.xlu0 %v1842, 8
        %v2965 = vpop.permute.xlu0 %2964
        %2966 = vrot.lane.b32.xlu0 %v1886, 8
        %v2967 = vpop.permute.xlu0 %2966
        %2968 = vrot.lane.b32.xlu0 %v1889, 8
        %v2969 = vpop.permute.xlu0 %2968
        %2970 = vrot.lane.b32.xlu0 %v1933, 8
        %v2971 = vpop.permute.xlu0 %2970
        %2972 = vrot.lane.b32.xlu0 %v1936, 8
        %v2973 = vpop.permute.xlu0 %2972
        %2974 = vrot.lane.b32.xlu0 %v1980, 8
        %v2975 = vpop.permute.xlu0 %2974
        %2976 = vrot.lane.b32.xlu0 %v1983, 8
        %v2977 = vpop.permute.xlu0 %2976
        %2994 = vrot.lane.b32.xlu0 %v2323, 16
        %v2995 = vpop.permute.xlu0 %2994
        %2996 = vrot.lane.b32.xlu0 %v2326, 16
        %v2997 = vpop.permute.xlu0 %2996
        %2998 = vrot.lane.b32.xlu0 %v2370, 16
        %v2999 = vpop.permute.xlu0 %2998
        %3000 = vrot.lane.b32.xlu0 %v2373, 16
        %v3001 = vpop.permute.xlu0 %3000
        %3002 = vrot.lane.b32.xlu0 %v2417, 16
        %v3003 = vpop.permute.xlu0 %3002
        %3004 = vrot.lane.b32.xlu0 %v2420, 16
        %v3005 = vpop.permute.xlu0 %3004
        %3006 = vrot.lane.b32.xlu0 %v2464, 16
        %v3007 = vpop.permute.xlu0 %3006
        %3008 = vrot.lane.b32.xlu0 %v2467, 16
        %v3009 = vpop.permute.xlu0 %3008
        %3026 = vrot.lane.b32.xlu0 %v2807, 24
        %v3027 = vpop.permute.xlu0 %3026
        %3028 = vrot.lane.b32.xlu0 %v2810, 24
        %v3029 = vpop.permute.xlu0 %3028
        %3030 = vrot.lane.b32.xlu0 %v2854, 24
        %v3031 = vpop.permute.xlu0 %3030
        %3032 = vrot.lane.b32.xlu0 %v2857, 24
        %v3033 = vpop.permute.xlu0 %3032
        %3034 = vrot.lane.b32.xlu0 %v2901, 24
        %v3035 = vpop.permute.xlu0 %3034
        %3036 = vrot.lane.b32.xlu0 %v2904, 24
        %v3037 = vpop.permute.xlu0 %3036
        %3038 = vrot.lane.b32.xlu0 %v2948, 24
        %v3039 = vpop.permute.xlu0 %3038
        %3040 = vrot.lane.b32.xlu0 %v2951, 24
        %v3041 = vpop.permute.xlu0 %3040
        %v3050 = vsel %vm1023, %v1355, %v2963
        %v3051 = vsel %vm1023, %v1358, %v2965
        %v3052 = vsel %vm1023, %v1402, %v2967
        %v3053 = vsel %vm1023, %v1405, %v2969
        %v3054 = vsel %vm1023, %v1449, %v2971
        %v3055 = vsel %vm1023, %v1452, %v2973
        %v3056 = vsel %vm1023, %v1496, %v2975
        %v3057 = vsel %vm1023, %v1499, %v2977
        %v3058 = vsel %vm1221, %v3050, %v2995
        %v3059 = vsel %vm1221, %v3051, %v2997
        %v3060 = vsel %vm1221, %v3052, %v2999
        %v3061 = vsel %vm1221, %v3053, %v3001
        %v3062 = vsel %vm1221, %v3054, %v3003
        %v3063 = vsel %vm1221, %v3055, %v3005
        %v3064 = vsel %vm1221, %v3056, %v3007
        %v3065 = vsel %vm1221, %v3057, %v3009
        %vm3066 = vcmask 195584
        %v3067 = vsel %vm3066, %v3058, %v3027
        %v3068 = vsel %vm3066, %v3059, %v3029
        %v3069 = vsel %vm3066, %v3060, %v3031
        %v3070 = vsel %vm3066, %v3061, %v3033
        %v3071 = vsel %vm3066, %v3062, %v3035
        %v3072 = vsel %vm3066, %v3063, %v3037
        %v3073 = vsel %vm3066, %v3064, %v3039
        %v3074 = vsel %vm3066, %v3065, %v3041
        %v3075 = vpack.c.bf16 %v3068, %v3067
        %v3076 = vpack.c.bf16 %v3070, %v3069
        %v3077 = vpack.c.bf16 %v3072, %v3071
        %v3078 = vpack.c.bf16 %v3074, %v3073
        %v3080 = vlaneseq
        %v3081 = vshrl.u32 %v3080, 7
        %v3082 = vsub.s32 0, %v3081
        %v3083 = vrot.slane %v915, %v3082
        %v3089 = vunpack.c.l.b16 %v911
        %v3090 = vunpack.c.l.b16 %v912
        %v3091 = vunpack.c.l.b16 %v913
        %v3092 = vunpack.c.l.b16 %v914
        %v3093 = vpack.c.b16 %v3090, %v3089
        %v3094 = vpack.c.b16 %v3092, %v3091
        %v3098 = vsel %vm938, %v3075, 0
        %v3101 = vsel %vm938, %v3076, 0
        %v3104 = vsel %vm938, %v3077, 0
        %v3107 = vsel %vm938, %v3078, 0
        %3109 = vmatprep.subr.bf16.mxu0 0
        %3110 = vmatpush1.bf16.msra.mxu0 0
        %3111 = vmatprep.subr.bf16.mxu0 0
        %3112 = vmatpush1.bf16.msra.mxu0 0
        %3113 = vmatprep.subr.bf16.mxu0 0
        %3114 = vmatpush1.bf16.msra.mxu0 0
        %3115 = vmatprep.subr.bf16.mxu0 0
        %3116 = vmatpush1.bf16.msra.mxu0 0
        %3117 = vmatprep.subr.bf16.mxu0 0
        %3118 = vmatpush1.bf16.msra.mxu0 0
        %3119 = vmatprep.subr.bf16.mxu0 0
        %3120 = vmatpush1.bf16.msra.mxu0 0
        %3121 = vmatprep.subr.bf16.mxu0 0
        %3122 = vmatpush1.bf16.msra.mxu0 %v3094
        %3123 = vmatprep.subr.bf16.mxu0 0
        %3124 = vmatpush1.bf16.msra.mxu0 %v3093
        %3125 = vmatprep.subr.bf16.mxu0 0
        %3126 = vmatpush2.bf16.msra.mxu0 0
        %3127 = vmatprep.subr.bf16.mxu0 0
        %3128 = vmatpush2.bf16.msra.mxu0 0
        %3129 = vmatprep.subr.bf16.mxu0 0
        %3130 = vmatpush2.bf16.msra.mxu0 0
        %3131 = vmatprep.subr.bf16.mxu0 0
        %3132 = vmatpush2.bf16.msra.mxu0 0
        %3133 = vmatprep.subr.bf16.mxu0 0
        %3134 = vmatpush2.bf16.msra.mxu0 0
        %3135 = vmatprep.subr.bf16.mxu0 0
        %3136 = vmatpush2.bf16.msra.mxu0 0
        %3137 = vmatprep.subr.bf16.mxu0 0
        %3138 = vmatpush2.bf16.msra.mxu0 0
        %3139 = vmatprep.subr.bf16.mxu0 0
        %3140 = vmatpush2.bf16.msra.mxu0 0
        %3141 = vmatprep.mubr.bf16.mxu0 0
        %3142 = vmatmul.mubr.bf16.gmra.mxu0 %v3098
        %v3143 = vpop.f32.mrf.mxu0
        %v3144 = vadd.f32 %v3083, %v3143
        %v3145 = vpop.f32.mrf.mxu0
        %v3146 = vpop.f32.mrf.mxu0
        %v3147 = vadd.f32 %v3083, %v3146
        %v3148 = vpop.f32.mrf.mxu0
        %3149 = vmatprep.mubr.bf16.mxu0 0
        %3150 = vmatmul.mubr.bf16.gmra.mxu0 %v3101
        %v3151 = vpop.f32.mrf.mxu0
        %v3152 = vadd.f32 %v3083, %v3151
        %v3153 = vpop.f32.mrf.mxu0
        %v3154 = vpop.f32.mrf.mxu0
        %v3155 = vadd.f32 %v3083, %v3154
        %v3156 = vpop.f32.mrf.mxu0
        %3157 = vmatprep.mubr.bf16.mxu0 0
        %3158 = vmatmul.mubr.bf16.gmra.mxu0 %v3104
        %v3159 = vpop.f32.mrf.mxu0
        %v3160 = vadd.f32 %v3083, %v3159
        %v3161 = vpop.f32.mrf.mxu0
        %v3162 = vpop.f32.mrf.mxu0
        %v3163 = vadd.f32 %v3083, %v3162
        %v3164 = vpop.f32.mrf.mxu0
        %3165 = vmatprep.mubr.bf16.mxu0 0
        %3166 = vmatmul.mubr.bf16.gmra.mxu0 %v3107
        %v3167 = vpop.f32.mrf.mxu0
        %v3168 = vadd.f32 %v3083, %v3167
        %v3169 = vpop.f32.mrf.mxu0
        %v3170 = vpop.f32.mrf.mxu0
        %v3171 = vadd.f32 %v3083, %v3170
        %v3172 = vpop.f32.mrf.mxu0
        %3173 = vdwg.mxu0
        %v3174 = vadd.f32 %v898, %v3144
        %v3175 = vadd.f32 %v899, %v3147
        %v3176 = vadd.f32 %v900, %v3152
        %v3177 = vadd.f32 %v901, %v3155
        %v3178 = vadd.f32 %v902, %v3160
        %v3179 = vadd.f32 %v903, %v3163
        %v3180 = vadd.f32 %v904, %v3168
        %v3181 = vadd.f32 %v905, %v3171
        %v3182 = vld [vmem:[%s5] sm:$0x1]
        %v3183 = vld [vmem:[%s6] sm:$0x1]
        %v3184 = vsel %vm938, %v3174, 0.0
        %3185 = vadd.xlane.f32.xlu0 %v3184
        %v3186 = vpop.xlane.xlu0 %3185
        %v3187 = vsel %vm938, %v3175, 0.0
        %3188 = vadd.xlane.f32.xlu0 %v3187
        %v3189 = vpop.xlane.xlu0 %3188
        %v3190 = vsel %vm938, %v3176, 0.0
        %3191 = vadd.xlane.f32.xlu0 %v3190
        %v3192 = vpop.xlane.xlu0 %3191
        %v3193 = vsel %vm938, %v3177, 0.0
        %3194 = vadd.xlane.f32.xlu0 %v3193
        %v3195 = vpop.xlane.xlu0 %3194
        %v3196 = vsel %vm938, %v3178, 0.0
        %3197 = vadd.xlane.f32.xlu0 %v3196
        %v3198 = vpop.xlane.xlu0 %3197
        %v3199 = vsel %vm938, %v3179, 0.0
        %3200 = vadd.xlane.f32.xlu0 %v3199
        %v3201 = vpop.xlane.xlu0 %3200
        %v3202 = vsel %vm938, %v3180, 0.0
        %3203 = vadd.xlane.f32.xlu0 %v3202
        %v3204 = vpop.xlane.xlu0 %3203
        %v3205 = vsel %vm938, %v3181, 0.0
        %3206 = vadd.xlane.f32.xlu0 %v3205
        %v3207 = vpop.xlane.xlu0 %3206
        %v3208 = vrcp.pop 32.0
        %v3209 = vmul.f32 %v3186, %v3208
        %v3210 = vmul.f32 %v3189, %v3208
        %v3211 = vmul.f32 %v3192, %v3208
        %v3212 = vmul.f32 %v3195, %v3208
        %v3213 = vmul.f32 %v3198, %v3208
        %v3214 = vmul.f32 %v3201, %v3208
        %v3215 = vmul.f32 %v3204, %v3208
        %v3216 = vmul.f32 %v3207, %v3208
        %v3217 = vsub.f32 %v3174, %v3209
        %v3218 = vsub.f32 %v3175, %v3210
        %v3219 = vsub.f32 %v3176, %v3211
        %v3220 = vsub.f32 %v3177, %v3212
        %v3221 = vsub.f32 %v3178, %v3213
        %v3222 = vsub.f32 %v3179, %v3214
        %v3223 = vsub.f32 %v3180, %v3215
        %v3224 = vsub.f32 %v3181, %v3216
        %v3225 = vmul.f32 %v3217, %v3217
        %v3226 = vmul.f32 %v3218, %v3218
        %v3227 = vmul.f32 %v3219, %v3219
        %v3228 = vmul.f32 %v3220, %v3220
        %v3229 = vmul.f32 %v3221, %v3221
        %v3230 = vmul.f32 %v3222, %v3222
        %v3231 = vmul.f32 %v3223, %v3223
        %v3232 = vmul.f32 %v3224, %v3224
        %v3233 = vsel %vm938, %v3225, 0.0
        %3234 = vadd.xlane.f32.xlu0 %v3233
        %v3235 = vpop.xlane.xlu0 %3234
        %v3236 = vsel %vm938, %v3226, 0.0
        %3237 = vadd.xlane.f32.xlu0 %v3236
        %v3238 = vpop.xlane.xlu0 %3237
        %v3239 = vsel %vm938, %v3227, 0.0
        %3240 = vadd.xlane.f32.xlu0 %v3239
        %v3241 = vpop.xlane.xlu0 %3240
        %v3242 = vsel %vm938, %v3228, 0.0
        %3243 = vadd.xlane.f32.xlu0 %v3242
        %v3244 = vpop.xlane.xlu0 %3243
        %v3245 = vsel %vm938, %v3229, 0.0
        %3246 = vadd.xlane.f32.xlu0 %v3245
        %v3247 = vpop.xlane.xlu0 %3246
        %v3248 = vsel %vm938, %v3230, 0.0
        %3249 = vadd.xlane.f32.xlu0 %v3248
        %v3250 = vpop.xlane.xlu0 %3249
        %v3251 = vsel %vm938, %v3231, 0.0
        %3252 = vadd.xlane.f32.xlu0 %v3251
        %v3253 = vpop.xlane.xlu0 %3252
        %v3254 = vsel %vm938, %v3232, 0.0
        %3255 = vadd.xlane.f32.xlu0 %v3254
        %v3256 = vpop.xlane.xlu0 %3255
        %v3257 = vmul.f32 %v3235, %v3208
        %v3258 = vmul.f32 %v3238, %v3208
        %v3259 = vmul.f32 %v3241, %v3208
        %v3260 = vmul.f32 %v3244, %v3208
        %v3261 = vmul.f32 %v3247, %v3208
        %v3262 = vmul.f32 %v3250, %v3208
        %v3263 = vmul.f32 %v3253, %v3208
        %v3264 = vmul.f32 %v3256, %v3208
        %v3265 = vadd.f32 %v3257, 1e-05
        %v3266 = vadd.f32 %v3258, 1e-05
        %v3267 = vadd.f32 %v3259, 1e-05
        %v3268 = vadd.f32 %v3260, 1e-05
        %v3269 = vadd.f32 %v3261, 1e-05
        %v3270 = vadd.f32 %v3262, 1e-05
        %v3271 = vadd.f32 %v3263, 1e-05
        %v3272 = vadd.f32 %v3264, 1e-05
        %v3273 = vrsqrt.pop %v3265
        %v3274 = vrsqrt.pop %v3266
        %v3275 = vrsqrt.pop %v3267
        %v3276 = vrsqrt.pop %v3268
        %v3277 = vrsqrt.pop %v3269
        %v3278 = vrsqrt.pop %v3270
        %v3279 = vrsqrt.pop %v3271
        %v3280 = vrsqrt.pop %v3272
        %v3281 = vmul.f32 %v3217, %v3273
        %v3282 = vmul.f32 %v3218, %v3274
        %v3283 = vmul.f32 %v3219, %v3275
        %v3284 = vmul.f32 %v3220, %v3276
        %v3285 = vmul.f32 %v3221, %v3277
        %v3286 = vmul.f32 %v3222, %v3278
        %v3287 = vmul.f32 %v3223, %v3279
        %v3288 = vmul.f32 %v3224, %v3280
        %v3290 = vlaneseq
        %v3291 = vshrl.u32 %v3290, 7
        %v3292 = vsub.s32 0, %v3291
        %v3293 = vrot.slane %v3182, %v3292
        %v3295 = vmul.f32 %v3281, %v3293
        %v3296 = vmul.f32 %v3282, %v3293
        %v3297 = vmul.f32 %v3283, %v3293
        %v3298 = vmul.f32 %v3284, %v3293
        %v3299 = vmul.f32 %v3285, %v3293
        %v3300 = vmul.f32 %v3286, %v3293
        %v3301 = vmul.f32 %v3287, %v3293
        %v3302 = vmul.f32 %v3288, %v3293
        %v3304 = vlaneseq
        %v3305 = vshrl.u32 %v3304, 7
        %v3306 = vsub.s32 0, %v3305
        %v3307 = vrot.slane %v3183, %v3306
        %v3309 = vadd.f32 %v3295, %v3307
        %v3310 = vadd.f32 %v3296, %v3307
        %v3311 = vadd.f32 %v3297, %v3307
        %v3312 = vadd.f32 %v3298, %v3307
        %v3313 = vadd.f32 %v3299, %v3307
        %v3314 = vadd.f32 %v3300, %v3307
        %v3315 = vadd.f32 %v3301, %v3307
        %v3316 = vadd.f32 %v3302, %v3307
        %v3317 = vld [vmem:[#allocation2] sm:$0xf]
        %v3318 = vld [vmem:[#allocation2 + $0x4] sm:$0xf]
        %v3319 = vld [vmem:[#allocation2 + $0x8] sm:$0xf]
        %v3320 = vld [vmem:[#allocation2 + $0xc] sm:$0xf]
        %v3321 = vld [vmem:[#allocation5] sm:$0x1]
        %v3322 = vld [vmem:[%s9] sm:$0xf]
        %v3323 = vld [vmem:[%s9 + $0x4] sm:$0xf]
        %v3324 = vld [vmem:[%s9 + $0x8] sm:$0xf]
        %v3325 = vld [vmem:[%s9 + $0xc] sm:$0xf]
        %v3326 = vld [vmem:[%s9 + $0x10] sm:$0xf]
        %v3327 = vld [vmem:[%s9 + $0x14] sm:$0xf]
        %v3328 = vld [vmem:[%s9 + $0x18] sm:$0xf]
        %v3329 = vld [vmem:[%s9 + $0x1c] sm:$0xf]
        %v3330 = vld [vmem:[%s9 + $0x20] sm:$0xf]
        %v3331 = vld [vmem:[%s9 + $0x24] sm:$0xf]
        %v3332 = vld [vmem:[%s9 + $0x28] sm:$0xf]
        %v3333 = vld [vmem:[%s9 + $0x2c] sm:$0xf]
        %v3334 = vld [vmem:[%s9 + $0x30] sm:$0xf]
        %v3335 = vld [vmem:[%s9 + $0x34] sm:$0xf]
        %v3336 = vld [vmem:[%s9 + $0x38] sm:$0xf]
        %v3337 = vld [vmem:[%s9 + $0x3c] sm:$0xf]
        %v3338 = vld [vmem:[#allocation7] sm:$0x1]
        %v3339 = vpack.c.bf16 %v3310, %v3309
        %v3340 = vpack.c.bf16 %v3312, %v3311
        %v3341 = vpack.c.bf16 %v3314, %v3313
        %v3342 = vpack.c.bf16 %v3316, %v3315
        %v3344 = vlaneseq
        %v3345 = vshrl.u32 %v3344, 7
        %v3346 = vsub.s32 0, %v3345
        %v3347 = vrot.slane %v3321, %v3346
        %v3353 = vunpack.c.l.b16 %v3317
        %v3354 = vunpack.c.l.b16 %v3318
        %v3355 = vunpack.c.l.b16 %v3319
        %v3356 = vunpack.c.l.b16 %v3320
        %v3357 = vpack.c.b16 %v3354, %v3353
        %v3358 = vpack.c.b16 %v3356, %v3355
        %v3362 = vsel %vm938, %v3339, 0
        %v3365 = vsel %vm938, %v3340, 0
        %v3368 = vsel %vm938, %v3341, 0
        %v3371 = vsel %vm938, %v3342, 0
        %3373 = vmatprep.subr.bf16.mxu0 0
        %3374 = vmatpush1.bf16.msra.mxu0 0
        %3375 = vmatprep.subr.bf16.mxu0 0
        %3376 = vmatpush1.bf16.msra.mxu0 0
        %3377 = vmatprep.subr.bf16.mxu0 0
        %3378 = vmatpush1.bf16.msra.mxu0 0
        %3379 = vmatprep.subr.bf16.mxu0 0
        %3380 = vmatpush1.bf16.msra.mxu0 0
        %3381 = vmatprep.subr.bf16.mxu0 0
        %3382 = vmatpush1.bf16.msra.mxu0 0
        %3383 = vmatprep.subr.bf16.mxu0 0
        %3384 = vmatpush1.bf16.msra.mxu0 0
        %3385 = vmatprep.subr.bf16.mxu0 0
        %3386 = vmatpush1.bf16.msra.mxu0 %v3358
        %3387 = vmatprep.subr.bf16.mxu0 0
        %3388 = vmatpush1.bf16.msra.mxu0 %v3357
        %3389 = vmatprep.subr.bf16.mxu0 0
        %3390 = vmatpush2.bf16.msra.mxu0 0
        %3391 = vmatprep.subr.bf16.mxu0 0
        %3392 = vmatpush2.bf16.msra.mxu0 0
        %3393 = vmatprep.subr.bf16.mxu0 0
        %3394 = vmatpush2.bf16.msra.mxu0 0
        %3395 = vmatprep.subr.bf16.mxu0 0
        %3396 = vmatpush2.bf16.msra.mxu0 0
        %3397 = vmatprep.subr.bf16.mxu0 0
        %3398 = vmatpush2.bf16.msra.mxu0 0
        %3399 = vmatprep.subr.bf16.mxu0 0
        %3400 = vmatpush2.bf16.msra.mxu0 0
        %3401 = vmatprep.subr.bf16.mxu0 0
        %3402 = vmatpush2.bf16.msra.mxu0 0
        %3403 = vmatprep.subr.bf16.mxu0 0
        %3404 = vmatpush2.bf16.msra.mxu0 0
        %3405 = vmatprep.mubr.bf16.mxu0 0
        %3406 = vmatmul.mubr.bf16.gmra.mxu0 %v3362
        %v3407 = vpop.f32.mrf.mxu0
        %v3408 = vadd.f32 %v3347, %v3407
        %v3409 = vpop.f32.mrf.mxu0
        %v3410 = vpop.f32.mrf.mxu0
        %v3411 = vadd.f32 %v3347, %v3410
        %v3412 = vpop.f32.mrf.mxu0
        %3413 = vmatprep.mubr.bf16.mxu0 0
        %3414 = vmatmul.mubr.bf16.gmra.mxu0 %v3365
        %v3415 = vpop.f32.mrf.mxu0
        %v3416 = vadd.f32 %v3347, %v3415
        %v3417 = vpop.f32.mrf.mxu0
        %v3418 = vpop.f32.mrf.mxu0
        %v3419 = vadd.f32 %v3347, %v3418
        %v3420 = vpop.f32.mrf.mxu0
        %3421 = vmatprep.mubr.bf16.mxu0 0
        %3422 = vmatmul.mubr.bf16.gmra.mxu0 %v3368
        %v3423 = vpop.f32.mrf.mxu0
        %v3424 = vadd.f32 %v3347, %v3423
        %v3425 = vpop.f32.mrf.mxu0
        %v3426 = vpop.f32.mrf.mxu0
        %v3427 = vadd.f32 %v3347, %v3426
        %v3428 = vpop.f32.mrf.mxu0
        %3429 = vmatprep.mubr.bf16.mxu0 0
        %3430 = vmatmul.mubr.bf16.gmra.mxu0 %v3371
        %v3431 = vpop.f32.mrf.mxu0
        %v3432 = vadd.f32 %v3347, %v3431
        %v3433 = vpop.f32.mrf.mxu0
        %v3434 = vpop.f32.mrf.mxu0
        %v3435 = vadd.f32 %v3347, %v3434
        %v3436 = vpop.f32.mrf.mxu0
        %3437 = vdwg.mxu0
        %v3438 = vmul.f32 %v3408, %v3408
        %v3439 = vmul.f32 %v3411, %v3411
        %v3440 = vmul.f32 %v3416, %v3416
        %v3441 = vmul.f32 %v3419, %v3419
        %v3442 = vmul.f32 %v3424, %v3424
        %v3443 = vmul.f32 %v3427, %v3427
        %v3444 = vmul.f32 %v3432, %v3432
        %v3445 = vmul.f32 %v3435, %v3435
        %v3446 = vmul.f32 %v3408, %v3438
        %v3447 = vmul.f32 %v3411, %v3439
        %v3448 = vmul.f32 %v3416, %v3440
        %v3449 = vmul.f32 %v3419, %v3441
        %v3450 = vmul.f32 %v3424, %v3442
        %v3451 = vmul.f32 %v3427, %v3443
        %v3452 = vmul.f32 %v3432, %v3444
        %v3453 = vmul.f32 %v3435, %v3445
        %v3454 = vmul.f32 %v3446, 0.044715
        %v3455 = vmul.f32 %v3447, 0.044715
        %v3456 = vmul.f32 %v3448, 0.044715
        %v3457 = vmul.f32 %v3449, 0.044715
        %v3458 = vmul.f32 %v3450, 0.044715
        %v3459 = vmul.f32 %v3451, 0.044715
        %v3460 = vmul.f32 %v3452, 0.044715
        %v3461 = vmul.f32 %v3453, 0.044715
        %v3462 = vadd.f32 %v3408, %v3454
        %v3463 = vadd.f32 %v3411, %v3455
        %v3464 = vadd.f32 %v3416, %v3456
        %v3465 = vadd.f32 %v3419, %v3457
        %v3466 = vadd.f32 %v3424, %v3458
        %v3467 = vadd.f32 %v3427, %v3459
        %v3468 = vadd.f32 %v3432, %v3460
        %v3469 = vadd.f32 %v3435, %v3461
        %v3470 = vmul.f32 %v3462, 0.7978846
        %v3471 = vmul.f32 %v3463, 0.7978846
        %v3472 = vmul.f32 %v3464, 0.7978846
        %v3473 = vmul.f32 %v3465, 0.7978846
        %v3474 = vmul.f32 %v3466, 0.7978846
        %v3475 = vmul.f32 %v3467, 0.7978846
        %v3476 = vmul.f32 %v3468, 0.7978846
        %v3477 = vmul.f32 %v3469, 0.7978846
        %v3478 = vtanh.pop %v3470
        %v3479 = vtanh.pop %v3471
        %v3480 = vtanh.pop %v3472
        %v3481 = vtanh.pop %v3473
        %v3482 = vtanh.pop %v3474
        %v3483 = vtanh.pop %v3475
        %v3484 = vtanh.pop %v3476
        %v3485 = vtanh.pop %v3477
        %v3486 = vadd.f32 %v3478, 1.0
        %v3487 = vadd.f32 %v3479, 1.0
        %v3488 = vadd.f32 %v3480, 1.0
        %v3489 = vadd.f32 %v3481, 1.0
        %v3490 = vadd.f32 %v3482, 1.0
        %v3491 = vadd.f32 %v3483, 1.0
        %v3492 = vadd.f32 %v3484, 1.0
        %v3493 = vadd.f32 %v3485, 1.0
        %v3494 = vmul.f32 %v3486, 0.5
        %v3495 = vmul.f32 %v3487, 0.5
        %v3496 = vmul.f32 %v3488, 0.5
        %v3497 = vmul.f32 %v3489, 0.5
        %v3498 = vmul.f32 %v3490, 0.5
        %v3499 = vmul.f32 %v3491, 0.5
        %v3500 = vmul.f32 %v3492, 0.5
        %v3501 = vmul.f32 %v3493, 0.5
        %v3502 = vmul.f32 %v3408, %v3494
        %v3503 = vmul.f32 %v3411, %v3495
        %v3504 = vmul.f32 %v3416, %v3496
        %v3505 = vmul.f32 %v3419, %v3497
        %v3506 = vmul.f32 %v3424, %v3498
        %v3507 = vmul.f32 %v3427, %v3499
        %v3508 = vmul.f32 %v3432, %v3500
        %v3509 = vmul.f32 %v3435, %v3501
        %v3510 = vpack.c.bf16 %v3503, %v3502
        %v3511 = vpack.c.bf16 %v3505, %v3504
        %v3512 = vpack.c.bf16 %v3507, %v3506
        %v3513 = vpack.c.bf16 %v3509, %v3508
        %v3515 = vlaneseq
        %v3516 = vshrl.u32 %v3515, 7
        %v3517 = vsub.s32 0, %v3516
        %v3518 = vrot.slane %v3338, %v3517
        %v3536 = vunpack.c.l.b16 %v3322
        %v3537 = vunpack.c.l.b16 %v3323
        %v3538 = vunpack.c.l.b16 %v3324
        %v3539 = vunpack.c.l.b16 %v3325
        %v3540 = vunpack.c.l.b16 %v3326
        %v3541 = vunpack.c.l.b16 %v3327
        %v3542 = vunpack.c.l.b16 %v3328
        %v3543 = vunpack.c.l.b16 %v3329
        %v3544 = vunpack.c.l.b16 %v3330
        %v3545 = vunpack.c.l.b16 %v3331
        %v3546 = vunpack.c.l.b16 %v3332
        %v3547 = vunpack.c.l.b16 %v3333
        %v3548 = vunpack.c.l.b16 %v3334
        %v3549 = vunpack.c.l.b16 %v3335
        %v3550 = vunpack.c.l.b16 %v3336
        %v3551 = vunpack.c.l.b16 %v3337
        %v3552 = vpack.c.b16 %v3537, %v3536
        %v3553 = vpack.c.b16 %v3539, %v3538
        %v3554 = vpack.c.b16 %v3541, %v3540
        %v3555 = vpack.c.b16 %v3543, %v3542
        %v3556 = vpack.c.b16 %v3545, %v3544
        %v3557 = vpack.c.b16 %v3547, %v3546
        %v3558 = vpack.c.b16 %v3549, %v3548
        %v3559 = vpack.c.b16 %v3551, %v3550
        %3568 = vmatprep.subr.bf16.mxu0 0
        %3569 = vmatpush1.bf16.msra.mxu0 %v3559
        %3570 = vmatprep.subr.bf16.mxu0 0
        %3571 = vmatpush1.bf16.msra.mxu0 %v3558
        %3572 = vmatprep.subr.bf16.mxu0 0
        %3573 = vmatpush1.bf16.msra.mxu0 %v3557
        %3574 = vmatprep.subr.bf16.mxu0 0
        %3575 = vmatpush1.bf16.msra.mxu0 %v3556
        %3576 = vmatprep.subr.bf16.mxu0 0
        %3577 = vmatpush1.bf16.msra.mxu0 %v3555
        %3578 = vmatprep.subr.bf16.mxu0 0
        %3579 = vmatpush1.bf16.msra.mxu0 %v3554
        %3580 = vmatprep.subr.bf16.mxu0 0
        %3581 = vmatpush1.bf16.msra.mxu0 %v3553
        %3582 = vmatprep.subr.bf16.mxu0 0
        %3583 = vmatpush1.bf16.msra.mxu0 %v3552
        %3584 = vmatprep.subr.bf16.mxu0 0
        %3585 = vmatpush2.bf16.msra.mxu0 0
        %3586 = vmatprep.subr.bf16.mxu0 0
        %3587 = vmatpush2.bf16.msra.mxu0 0
        %3588 = vmatprep.subr.bf16.mxu0 0
        %3589 = vmatpush2.bf16.msra.mxu0 0
        %3590 = vmatprep.subr.bf16.mxu0 0
        %3591 = vmatpush2.bf16.msra.mxu0 0
        %3592 = vmatprep.subr.bf16.mxu0 0
        %3593 = vmatpush2.bf16.msra.mxu0 0
        %3594 = vmatprep.subr.bf16.mxu0 0
        %3595 = vmatpush2.bf16.msra.mxu0 0
        %3596 = vmatprep.subr.bf16.mxu0 0
        %3597 = vmatpush2.bf16.msra.mxu0 0
        %3598 = vmatprep.subr.bf16.mxu0 0
        %3599 = vmatpush2.bf16.msra.mxu0 0
        %3600 = vmatprep.mubr.bf16.mxu0 0
        %3601 = vmatmul.mubr.bf16.gmra.mxu0 %v3510
        %v3602 = vpop.f32.mrf.mxu0
        %v3603 = vadd.f32 %v3518, %v3602
        %v3604 = vpop.f32.mrf.mxu0
        %v3605 = vpop.f32.mrf.mxu0
        %v3606 = vadd.f32 %v3518, %v3605
        %v3607 = vpop.f32.mrf.mxu0
        %3608 = vmatprep.mubr.bf16.mxu0 0
        %3609 = vmatmul.mubr.bf16.gmra.mxu0 %v3511
        %v3610 = vpop.f32.mrf.mxu0
        %v3611 = vadd.f32 %v3518, %v3610
        %v3612 = vpop.f32.mrf.mxu0
        %v3613 = vpop.f32.mrf.mxu0
        %v3614 = vadd.f32 %v3518, %v3613
        %v3615 = vpop.f32.mrf.mxu0
        %3616 = vmatprep.mubr.bf16.mxu0 0
        %3617 = vmatmul.mubr.bf16.gmra.mxu0 %v3512
        %v3618 = vpop.f32.mrf.mxu0
        %v3619 = vadd.f32 %v3518, %v3618
        %v3620 = vpop.f32.mrf.mxu0
        %v3621 = vpop.f32.mrf.mxu0
        %v3622 = vadd.f32 %v3518, %v3621
        %v3623 = vpop.f32.mrf.mxu0
        %3624 = vmatprep.mubr.bf16.mxu0 0
        %3625 = vmatmul.mubr.bf16.gmra.mxu0 %v3513
        %v3626 = vpop.f32.mrf.mxu0
        %v3627 = vadd.f32 %v3518, %v3626
        %v3628 = vpop.f32.mrf.mxu0
        %v3629 = vpop.f32.mrf.mxu0
        %v3630 = vadd.f32 %v3518, %v3629
        %v3631 = vpop.f32.mrf.mxu0
        %3632 = vdwg.mxu0
        %v3633 = vadd.f32 %v3309, %v3603
        %v3634 = vadd.f32 %v3310, %v3606
        %v3635 = vadd.f32 %v3311, %v3611
        %v3636 = vadd.f32 %v3312, %v3614
        %v3637 = vadd.f32 %v3313, %v3619
        %v3638 = vadd.f32 %v3314, %v3622
        %v3639 = vadd.f32 %v3315, %v3627
        %v3640 = vadd.f32 %v3316, %v3630
        %v3641 = vld [vmem:[%s11] sm:$0x1]
        %v3642 = vld [vmem:[%s12] sm:$0x1]
        %v3643 = vsel %vm938, %v3633, 0.0
        %3644 = vadd.xlane.f32.xlu0 %v3643
        %v3645 = vpop.xlane.xlu0 %3644
        %v3646 = vsel %vm938, %v3634, 0.0
        %3647 = vadd.xlane.f32.xlu0 %v3646
        %v3648 = vpop.xlane.xlu0 %3647
        %v3649 = vsel %vm938, %v3635, 0.0
        %3650 = vadd.xlane.f32.xlu0 %v3649
        %v3651 = vpop.xlane.xlu0 %3650
        %v3652 = vsel %vm938, %v3636, 0.0
        %3653 = vadd.xlane.f32.xlu0 %v3652
        %v3654 = vpop.xlane.xlu0 %3653
        %v3655 = vsel %vm938, %v3637, 0.0
        %3656 = vadd.xlane.f32.xlu0 %v3655
        %v3657 = vpop.xlane.xlu0 %3656
        %v3658 = vsel %vm938, %v3638, 0.0
        %3659 = vadd.xlane.f32.xlu0 %v3658
        %v3660 = vpop.xlane.xlu0 %3659
        %v3661 = vsel %vm938, %v3639, 0.0
        %3662 = vadd.xlane.f32.xlu0 %v3661
        %v3663 = vpop.xlane.xlu0 %3662
        %v3664 = vsel %vm938, %v3640, 0.0
        %3665 = vadd.xlane.f32.xlu0 %v3664
        %v3666 = vpop.xlane.xlu0 %3665
        %v3667 = vmul.f32 %v3645, %v3208
        %v3668 = vmul.f32 %v3648, %v3208
        %v3669 = vmul.f32 %v3651, %v3208
        %v3670 = vmul.f32 %v3654, %v3208
        %v3671 = vmul.f32 %v3657, %v3208
        %v3672 = vmul.f32 %v3660, %v3208
        %v3673 = vmul.f32 %v3663, %v3208
        %v3674 = vmul.f32 %v3666, %v3208
        %v3675 = vsub.f32 %v3633, %v3667
        %v3676 = vsub.f32 %v3634, %v3668
        %v3677 = vsub.f32 %v3635, %v3669
        %v3678 = vsub.f32 %v3636, %v3670
        %v3679 = vsub.f32 %v3637, %v3671
        %v3680 = vsub.f32 %v3638, %v3672
        %v3681 = vsub.f32 %v3639, %v3673
        %v3682 = vsub.f32 %v3640, %v3674
        %v3683 = vmul.f32 %v3675, %v3675
        %v3684 = vmul.f32 %v3676, %v3676
        %v3685 = vmul.f32 %v3677, %v3677
        %v3686 = vmul.f32 %v3678, %v3678
        %v3687 = vmul.f32 %v3679, %v3679
        %v3688 = vmul.f32 %v3680, %v3680
        %v3689 = vmul.f32 %v3681, %v3681
        %v3690 = vmul.f32 %v3682, %v3682
        %v3691 = vsel %vm938, %v3683, 0.0
        %3692 = vadd.xlane.f32.xlu0 %v3691
        %v3693 = vpop.xlane.xlu0 %3692
        %v3694 = vsel %vm938, %v3684, 0.0
        %3695 = vadd.xlane.f32.xlu0 %v3694
        %v3696 = vpop.xlane.xlu0 %3695
        %v3697 = vsel %vm938, %v3685, 0.0
        %3698 = vadd.xlane.f32.xlu0 %v3697
        %v3699 = vpop.xlane.xlu0 %3698
        %v3700 = vsel %vm938, %v3686, 0.0
        %3701 = vadd.xlane.f32.xlu0 %v3700
        %v3702 = vpop.xlane.xlu0 %3701
        %v3703 = vsel %vm938, %v3687, 0.0
        %3704 = vadd.xlane.f32.xlu0 %v3703
        %v3705 = vpop.xlane.xlu0 %3704
        %v3706 = vsel %vm938, %v3688, 0.0
        %3707 = vadd.xlane.f32.xlu0 %v3706
        %v3708 = vpop.xlane.xlu0 %3707
        %v3709 = vsel %vm938, %v3689, 0.0
        %3710 = vadd.xlane.f32.xlu0 %v3709
        %v3711 = vpop.xlane.xlu0 %3710
        %v3712 = vsel %vm938, %v3690, 0.0
        %3713 = vadd.xlane.f32.xlu0 %v3712
        %v3714 = vpop.xlane.xlu0 %3713
        %v3715 = vmul.f32 %v3693, %v3208
        %v3716 = vmul.f32 %v3696, %v3208
        %v3717 = vmul.f32 %v3699, %v3208
        %v3718 = vmul.f32 %v3702, %v3208
        %v3719 = vmul.f32 %v3705, %v3208
        %v3720 = vmul.f32 %v3708, %v3208
        %v3721 = vmul.f32 %v3711, %v3208
        %v3722 = vmul.f32 %v3714, %v3208
        %v3723 = vadd.f32 %v3715, 1e-05
        %v3724 = vadd.f32 %v3716, 1e-05
        %v3725 = vadd.f32 %v3717, 1e-05
        %v3726 = vadd.f32 %v3718, 1e-05
        %v3727 = vadd.f32 %v3719, 1e-05
        %v3728 = vadd.f32 %v3720, 1e-05
        %v3729 = vadd.f32 %v3721, 1e-05
        %v3730 = vadd.f32 %v3722, 1e-05
        %v3731 = vrsqrt.pop %v3723
        %v3732 = vrsqrt.pop %v3724
        %v3733 = vrsqrt.pop %v3725
        %v3734 = vrsqrt.pop %v3726
        %v3735 = vrsqrt.pop %v3727
        %v3736 = vrsqrt.pop %v3728
        %v3737 = vrsqrt.pop %v3729
        %v3738 = vrsqrt.pop %v3730
        %v3739 = vmul.f32 %v3675, %v3731
        %v3740 = vmul.f32 %v3676, %v3732
        %v3741 = vmul.f32 %v3677, %v3733
        %v3742 = vmul.f32 %v3678, %v3734
        %v3743 = vmul.f32 %v3679, %v3735
        %v3744 = vmul.f32 %v3680, %v3736
        %v3745 = vmul.f32 %v3681, %v3737
        %v3746 = vmul.f32 %v3682, %v3738
        %v3748 = vlaneseq
        %v3749 = vshrl.u32 %v3748, 7
        %v3750 = vsub.s32 0, %v3749
        %v3751 = vrot.slane %v3641, %v3750
        %v3753 = vmul.f32 %v3739, %v3751
        %v3754 = vmul.f32 %v3740, %v3751
        %v3755 = vmul.f32 %v3741, %v3751
        %v3756 = vmul.f32 %v3742, %v3751
        %v3757 = vmul.f32 %v3743, %v3751
        %v3758 = vmul.f32 %v3744, %v3751
        %v3759 = vmul.f32 %v3745, %v3751
        %v3760 = vmul.f32 %v3746, %v3751
        %v3762 = vlaneseq
        %v3763 = vshrl.u32 %v3762, 7
        %v3764 = vsub.s32 0, %v3763
        %v3765 = vrot.slane %v3642, %v3764
        %v3767 = vadd.f32 %v3753, %v3765
        %v3768 = vadd.f32 %v3754, %v3765
        %v3769 = vadd.f32 %v3755, %v3765
        %v3770 = vadd.f32 %v3756, %v3765
        %v3771 = vadd.f32 %v3757, %v3765
        %v3772 = vadd.f32 %v3758, %v3765
        %v3773 = vadd.f32 %v3759, %v3765
        %v3774 = vadd.f32 %v3760, %v3765
        %v3775 = vld [vmem:[#allocation8] sm:$0xf]
        %v3776 = vld [vmem:[#allocation8 + $0x4] sm:$0xf]
        %v3777 = vld [vmem:[#allocation8 + $0x8] sm:$0xf]
        %v3778 = vld [vmem:[#allocation8 + $0xc] sm:$0xf]
        %v3779 = vld [vmem:[#allocation10] sm:$0x1]
        %v3780 = vld [vmem:[#allocation11] sm:$0xf]
        %v3781 = vld [vmem:[#allocation11 + $0x4] sm:$0xf]
        %v3782 = vld [vmem:[#allocation11 + $0x8] sm:$0xf]
        %v3783 = vld [vmem:[#allocation11 + $0xc] sm:$0xf]
        %v3784 = vld [vmem:[#allocation13] sm:$0x1]
        %v3785 = vpack.c.bf16 %v3768, %v3767
        %v3787 = vlaneseq
        %v3788 = vshrl.u32 %v3787, 7
        %v3789 = vsub.s32 0, %v3788
        %v3790 = vrot.slane %v3779, %v3789
        %v3796 = vunpack.c.l.b16 %v3775
        %v3797 = vunpack.c.l.b16 %v3776
        %v3798 = vunpack.c.l.b16 %v3777
        %v3799 = vunpack.c.l.b16 %v3778
        %v3800 = vpack.c.b16 %v3797, %v3796
        %v3801 = vpack.c.b16 %v3799, %v3798
        %v3805 = vsel %vm938, %v3785, 0
        %3807 = vmatprep.subr.bf16.mxu0 0
        %3808 = vmatpush1.bf16.msra.mxu0 0
        %3809 = vmatprep.subr.bf16.mxu0 0
        %3810 = vmatpush1.bf16.msra.mxu0 0
        %3811 = vmatprep.subr.bf16.mxu0 0
        %3812 = vmatpush1.bf16.msra.mxu0 0
        %3813 = vmatprep.subr.bf16.mxu0 0
        %3814 = vmatpush1.bf16.msra.mxu0 0
        %3815 = vmatprep.subr.bf16.mxu0 0
        %3816 = vmatpush1.bf16.msra.mxu0 0
        %3817 = vmatprep.subr.bf16.mxu0 0
        %3818 = vmatpush1.bf16.msra.mxu0 0
        %3819 = vmatprep.subr.bf16.mxu0 0
        %3820 = vmatpush1.bf16.msra.mxu0 %v3801
        %3821 = vmatprep.subr.bf16.mxu0 0
        %3822 = vmatpush1.bf16.msra.mxu0 %v3800
        %3823 = vmatprep.subr.bf16.mxu0 0
        %3824 = vmatpush2.bf16.msra.mxu0 0
        %3825 = vmatprep.subr.bf16.mxu0 0
        %3826 = vmatpush2.bf16.msra.mxu0 0
        %3827 = vmatprep.subr.bf16.mxu0 0
        %3828 = vmatpush2.bf16.msra.mxu0 0
        %3829 = vmatprep.subr.bf16.mxu0 0
        %3830 = vmatpush2.bf16.msra.mxu0 0
        %3831 = vmatprep.subr.bf16.mxu0 0
        %3832 = vmatpush2.bf16.msra.mxu0 0
        %3833 = vmatprep.subr.bf16.mxu0 0
        %3834 = vmatpush2.bf16.msra.mxu0 0
        %3835 = vmatprep.subr.bf16.mxu0 0
        %3836 = vmatpush2.bf16.msra.mxu0 0
        %3837 = vmatprep.subr.bf16.mxu0 0
        %3838 = vmatpush2.bf16.msra.mxu0 0
        %3839 = vmatprep.mubr.bf16.mxu0 0
        %3840 = vmatmul.mubr.bf16.gmra.mxu0 %v3805
        %v3841 = vpop.f32.mrf.mxu0
        %v3842 = vadd.f32 %v3790, %v3841
        %v3843 = vpop.f32.mrf.mxu0
        %v3844 = vpop.f32.mrf.mxu0
        %v3845 = vadd.f32 %v3790, %v3844
        %v3846 = vpop.f32.mrf.mxu0
        %3847 = vdwg.mxu0
        %v3848 = vpack.c.bf16 %v3770, %v3769
        %v3850 = vsel %vm938, %v3848, 0
        %3852 = vmatprep.subr.bf16.mxu0 0
        %3853 = vmatpush1.bf16.msra.mxu0 0
        %3854 = vmatprep.subr.bf16.mxu0 0
        %3855 = vmatpush1.bf16.msra.mxu0 0
        %3856 = vmatprep.subr.bf16.mxu0 0
        %3857 = vmatpush1.bf16.msra.mxu0 0
        %3858 = vmatprep.subr.bf16.mxu0 0
        %3859 = vmatpush1.bf16.msra.mxu0 0
        %3860 = vmatprep.subr.bf16.mxu0 0
        %3861 = vmatpush1.bf16.msra.mxu0 0
        %3862 = vmatprep.subr.bf16.mxu0 0
        %3863 = vmatpush1.bf16.msra.mxu0 0
        %3864 = vmatprep.subr.bf16.mxu0 0
        %3865 = vmatpush1.bf16.msra.mxu0 %v3801
        %3866 = vmatprep.subr.bf16.mxu0 0
        %3867 = vmatpush1.bf16.msra.mxu0 %v3800
        %3868 = vmatprep.subr.bf16.mxu0 0
        %3869 = vmatpush2.bf16.msra.mxu0 0
        %3870 = vmatprep.subr.bf16.mxu0 0
        %3871 = vmatpush2.bf16.msra.mxu0 0
        %3872 = vmatprep.subr.bf16.mxu0 0
        %3873 = vmatpush2.bf16.msra.mxu0 0
        %3874 = vmatprep.subr.bf16.mxu0 0
        %3875 = vmatpush2.bf16.msra.mxu0 0
        %3876 = vmatprep.subr.bf16.mxu0 0
        %3877 = vmatpush2.bf16.msra.mxu0 0
        %3878 = vmatprep.subr.bf16.mxu0 0
        %3879 = vmatpush2.bf16.msra.mxu0 0
        %3880 = vmatprep.subr.bf16.mxu0 0
        %3881 = vmatpush2.bf16.msra.mxu0 0
        %3882 = vmatprep.subr.bf16.mxu0 0
        %3883 = vmatpush2.bf16.msra.mxu0 0
        %3884 = vmatprep.mubr.bf16.mxu0 0
        %3885 = vmatmul.mubr.bf16.gmra.mxu0 %v3850
        %v3886 = vpop.f32.mrf.mxu0
        %v3887 = vadd.f32 %v3790, %v3886
        %v3888 = vpop.f32.mrf.mxu0
        %v3889 = vpop.f32.mrf.mxu0
        %v3890 = vadd.f32 %v3790, %v3889
        %v3891 = vpop.f32.mrf.mxu0
        %3892 = vdwg.mxu0
        %v3893 = vpack.c.bf16 %v3845, %v3842
        %v3894 = vpack.c.bf16 %v3890, %v3887
        %3896 = vrot.lane.b32.xlu0 %v3894, 96
        %v3897 = vpop.permute.xlu0 %3896
        %v3899 = vsel %vm1023, %v3893, 0
        %v3902 = vsel %vm1023, %v3897, 0
        %3904 = vmatprep.subr.bf16.mxu0 0
        %3905 = vmatpush1.bf16.xpose.msra.mxu0 0
        %3906 = vmatprep.subr.bf16.mxu0 0
        %3907 = vmatpush1.bf16.xpose.msra.mxu0 0
        %3908 = vmatprep.subr.bf16.mxu0 0
        %3909 = vmatpush1.bf16.xpose.msra.mxu0 0
        %3910 = vmatprep.subr.bf16.mxu0 0
        %3911 = vmatpush1.bf16.xpose.msra.mxu0 0
        %3912 = vmatprep.subr.bf16.mxu0 0
        %3913 = vmatpush1.bf16.xpose.msra.mxu0 0
        %3914 = vmatprep.subr.bf16.mxu0 0
        %3915 = vmatpush1.bf16.xpose.msra.mxu0 0
        %3916 = vmatprep.subr.bf16.mxu0 0
        %3917 = vmatpush1.bf16.xpose.msra.mxu0 0
        %3918 = vmatprep.subr.bf16.mxu0 0
        %3919 = vmatpush1.bf16.xpose.msra.mxu0 %v3902
        %3920 = vmatprep.subr.bf16.mxu0 0
        %3921 = vmatpush2.bf16.xpose.msra.mxu0 0
        %3922 = vmatprep.subr.bf16.mxu0 0
        %3923 = vmatpush2.bf16.xpose.msra.mxu0 0
        %3924 = vmatprep.subr.bf16.mxu0 0
        %3925 = vmatpush2.bf16.xpose.msra.mxu0 0
        %3926 = vmatprep.subr.bf16.mxu0 0
        %3927 = vmatpush2.bf16.xpose.msra.mxu0 0
        %3928 = vmatprep.subr.bf16.mxu0 0
        %3929 = vmatpush2.bf16.xpose.msra.mxu0 0
        %3930 = vmatprep.subr.bf16.mxu0 0
        %3931 = vmatpush2.bf16.xpose.msra.mxu0 0
        %3932 = vmatprep.subr.bf16.mxu0 0
        %3933 = vmatpush2.bf16.xpose.msra.mxu0 0
        %3934 = vmatprep.subr.bf16.mxu0 0
        %3935 = vmatpush2.bf16.xpose.msra.mxu0 0
        %3936 = vmatprep.mubr.bf16.mxu0 0
        %3937 = vmatmul.mubr.bf16.gmra.mxu0 %v3899
        %v3938 = vpop.f32.mrf.mxu0
        %v3939 = vadd.f32 0.0, %v3938
        %v3940 = vpop.f32.mrf.mxu0
        %v3941 = vpop.f32.mrf.mxu0
        %v3942 = vadd.f32 0.0, %v3941
        %v3943 = vpop.f32.mrf.mxu0
        %3944 = vdwg.mxu0
        %v3945 = vsel %vm1221, %v3939, -inf
        %3946 = vmax.xlane.f32.xlu0 %v3945
        %v3947 = vpop.xlane.xlu0 %3946
        %v3948 = vsel %vm1221, %v3942, -inf
        %3949 = vmax.xlane.f32.xlu0 %v3948
        %v3950 = vpop.xlane.xlu0 %3949
        %v3951 = vsub.f32 %v3939, %v3947
        %v3952 = vsub.f32 %v3942, %v3950
        %v3953 = vmul.f32 %v3951, 1.442695
        %v3954 = vpow.pop %v3953
        %v3955 = vmul.f32 %v3952, 1.442695
        %v3956 = vpow.pop %v3955
        %v3957 = vsel %vm1221, %v3954, 0.0
        %3958 = vadd.xlane.f32.xlu0 %v3957
        %v3959 = vpop.xlane.xlu0 %3958
        %v3960 = vsel %vm1221, %v3956, 0.0
        %3961 = vadd.xlane.f32.xlu0 %v3960
        %v3962 = vpop.xlane.xlu0 %3961
        %v3963 = vrcp.pop %v3959
        %v3964 = vrcp.pop %v3962
        %v3965 = vmul.f32 %v3954, %v3963
        %v3966 = vmul.f32 %v3956, %v3964
        %v3967 = vpack.c.bf16 %v3966, %v3965
        %3968 = vrot.lane.b32.xlu0 %v3894, 64
        %v3969 = vpop.permute.xlu0 %3968
        %v3972 = vsel %vm1221, %v3967, 0
        %3974 = vmatprep.subr.bf16.mxu0 0
        %3975 = vmatpush1.bf16.msra.mxu0 0
        %3976 = vmatprep.subr.bf16.mxu0 0
        %3977 = vmatpush1.bf16.msra.mxu0 0
        %3978 = vmatprep.subr.bf16.mxu0 0
        %3979 = vmatpush1.bf16.msra.mxu0 0
        %3980 = vmatprep.subr.bf16.mxu0 0
        %3981 = vmatpush1.bf16.msra.mxu0 0
        %3982 = vmatprep.subr.bf16.mxu0 0
        %3983 = vmatpush1.bf16.msra.mxu0 0
        %3984 = vmatprep.subr.bf16.mxu0 0
        %3985 = vmatpush1.bf16.msra.mxu0 0
        %3986 = vmatprep.subr.bf16.mxu0 0
        %3987 = vmatpush1.bf16.msra.mxu0 0
        %3988 = vmatprep.subr.bf16.mxu0 0
        %3989 = vmatpush1.bf16.msra.mxu0 %v3969
        %3990 = vmatprep.subr.bf16.mxu0 0
        %3991 = vmatpush2.bf16.msra.mxu0 0
        %3992 = vmatprep.subr.bf16.mxu0 0
        %3993 = vmatpush2.bf16.msra.mxu0 0
        %3994 = vmatprep.subr.bf16.mxu0 0
        %3995 = vmatpush2.bf16.msra.mxu0 0
        %3996 = vmatprep.subr.bf16.mxu0 0
        %3997 = vmatpush2.bf16.msra.mxu0 0
        %3998 = vmatprep.subr.bf16.mxu0 0
        %3999 = vmatpush2.bf16.msra.mxu0 0
        %4000 = vmatprep.subr.bf16.mxu0 0
        %4001 = vmatpush2.bf16.msra.mxu0 0
        %4002 = vmatprep.subr.bf16.mxu0 0
        %4003 = vmatpush2.bf16.msra.mxu0 0
        %4004 = vmatprep.subr.bf16.mxu0 0
        %4005 = vmatpush2.bf16.msra.mxu0 0
        %4006 = vmatprep.mubr.bf16.mxu0 0
        %4007 = vmatmul.mubr.bf16.gmra.mxu0 %v3972
        %v4008 = vpop.f32.mrf.mxu0
        %v4009 = vadd.f32 0.0, %v4008
        %v4010 = vpop.f32.mrf.mxu0
        %v4011 = vpop.f32.mrf.mxu0
        %v4012 = vadd.f32 0.0, %v4011
        %v4013 = vpop.f32.mrf.mxu0
        %4014 = vdwg.mxu0
        %4016 = vrot.lane.b32.xlu0 %v3893, 120
        %v4017 = vpop.permute.xlu0 %4016
        %4018 = vrot.lane.b32.xlu0 %v3894, 88
        %v4019 = vpop.permute.xlu0 %4018
        %v4021 = vsel %vm1023, %v4017, 0
        %v4024 = vsel %vm1023, %v4019, 0
        %4026 = vmatprep.subr.bf16.mxu0 0
        %4027 = vmatpush1.bf16.xpose.msra.mxu0 0
        %4028 = vmatprep.subr.bf16.mxu0 0
        %4029 = vmatpush1.bf16.xpose.msra.mxu0 0
        %4030 = vmatprep.subr.bf16.mxu0 0
        %4031 = vmatpush1.bf16.xpose.msra.mxu0 0
        %4032 = vmatprep.subr.bf16.mxu0 0
        %4033 = vmatpush1.bf16.xpose.msra.mxu0 0
        %4034 = vmatprep.subr.bf16.mxu0 0
        %4035 = vmatpush1.bf16.xpose.msra.mxu0 0
        %4036 = vmatprep.subr.bf16.mxu0 0
        %4037 = vmatpush1.bf16.xpose.msra.mxu0 0
        %4038 = vmatprep.subr.bf16.mxu0 0
        %4039 = vmatpush1.bf16.xpose.msra.mxu0 0
        %4040 = vmatprep.subr.bf16.mxu0 0
        %4041 = vmatpush1.bf16.xpose.msra.mxu0 %v4024
        %4042 = vmatprep.subr.bf16.mxu0 0
        %4043 = vmatpush2.bf16.xpose.msra.mxu0 0
        %4044 = vmatprep.subr.bf16.mxu0 0
        %4045 = vmatpush2.bf16.xpose.msra.mxu0 0
        %4046 = vmatprep.subr.bf16.mxu0 0
        %4047 = vmatpush2.bf16.xpose.msra.mxu0 0
        %4048 = vmatprep.subr.bf16.mxu0 0
        %4049 = vmatpush2.bf16.xpose.msra.mxu0 0
        %4050 = vmatprep.subr.bf16.mxu0 0
        %4051 = vmatpush2.bf16.xpose.msra.mxu0 0
        %4052 = vmatprep.subr.bf16.mxu0 0
        %4053 = vmatpush2.bf16.xpose.msra.mxu0 0
        %4054 = vmatprep.subr.bf16.mxu0 0
        %4055 = vmatpush2.bf16.xpose.msra.mxu0 0
        %4056 = vmatprep.subr.bf16.mxu0 0
        %4057 = vmatpush2.bf16.xpose.msra.mxu0 0
        %4058 = vmatprep.mubr.bf16.mxu0 0
        %4059 = vmatmul.mubr.bf16.gmra.mxu0 %v4021
        %v4060 = vpop.f32.mrf.mxu0
        %v4061 = vadd.f32 0.0, %v4060
        %v4062 = vpop.f32.mrf.mxu0
        %v4063 = vpop.f32.mrf.mxu0
        %v4064 = vadd.f32 0.0, %v4063
        %v4065 = vpop.f32.mrf.mxu0
        %4066 = vdwg.mxu0
        %v4067 = vsel %vm1221, %v4061, -inf
        %4068 = vmax.xlane.f32.xlu0 %v4067
        %v4069 = vpop.xlane.xlu0 %4068
        %v4070 = vsel %vm1221, %v4064, -inf
        %4071 = vmax.xlane.f32.xlu0 %v4070
        %v4072 = vpop.xlane.xlu0 %4071
        %v4073 = vsub.f32 %v4061, %v4069
        %v4074 = vsub.f32 %v4064, %v4072
        %v4075 = vmul.f32 %v4073, 1.442695
        %v4076 = vpow.pop %v4075
        %v4077 = vmul.f32 %v4074, 1.442695
        %v4078 = vpow.pop %v4077
        %v4079 = vsel %vm1221, %v4076, 0.0
        %4080 = vadd.xlane.f32.xlu0 %v4079
        %v4081 = vpop.xlane.xlu0 %4080
        %v4082 = vsel %vm1221, %v4078, 0.0
        %4083 = vadd.xlane.f32.xlu0 %v4082
        %v4084 = vpop.xlane.xlu0 %4083
        %v4085 = vrcp.pop %v4081
        %v4086 = vrcp.pop %v4084
        %v4087 = vmul.f32 %v4076, %v4085
        %v4088 = vmul.f32 %v4078, %v4086
        %v4089 = vpack.c.bf16 %v4088, %v4087
        %4090 = vrot.lane.b32.xlu0 %v3894, 56
        %v4091 = vpop.permute.xlu0 %4090
        %v4094 = vsel %vm1221, %v4089, 0
        %4096 = vmatprep.subr.bf16.mxu0 0
        %4097 = vmatpush1.bf16.msra.mxu0 0
        %4098 = vmatprep.subr.bf16.mxu0 0
        %4099 = vmatpush1.bf16.msra.mxu0 0
        %4100 = vmatprep.subr.bf16.mxu0 0
        %4101 = vmatpush1.bf16.msra.mxu0 0
        %4102 = vmatprep.subr.bf16.mxu0 0
        %4103 = vmatpush1.bf16.msra.mxu0 0
        %4104 = vmatprep.subr.bf16.mxu0 0
        %4105 = vmatpush1.bf16.msra.mxu0 0
        %4106 = vmatprep.subr.bf16.mxu0 0
        %4107 = vmatpush1.bf16.msra.mxu0 0
        %4108 = vmatprep.subr.bf16.mxu0 0
        %4109 = vmatpush1.bf16.msra.mxu0 0
        %4110 = vmatprep.subr.bf16.mxu0 0
        %4111 = vmatpush1.bf16.msra.mxu0 %v4091
        %4112 = vmatprep.subr.bf16.mxu0 0
        %4113 = vmatpush2.bf16.msra.mxu0 0
        %4114 = vmatprep.subr.bf16.mxu0 0
        %4115 = vmatpush2.bf16.msra.mxu0 0
        %4116 = vmatprep.subr.bf16.mxu0 0
        %4117 = vmatpush2.bf16.msra.mxu0 0
        %4118 = vmatprep.subr.bf16.mxu0 0
        %4119 = vmatpush2.bf16.msra.mxu0 0
        %4120 = vmatprep.subr.bf16.mxu0 0
        %4121 = vmatpush2.bf16.msra.mxu0 0
        %4122 = vmatprep.subr.bf16.mxu0 0
        %4123 = vmatpush2.bf16.msra.mxu0 0
        %4124 = vmatprep.subr.bf16.mxu0 0
        %4125 = vmatpush2.bf16.msra.mxu0 0
        %4126 = vmatprep.subr.bf16.mxu0 0
        %4127 = vmatpush2.bf16.msra.mxu0 0
        %4128 = vmatprep.mubr.bf16.mxu0 0
        %4129 = vmatmul.mubr.bf16.gmra.mxu0 %v4094
        %v4130 = vpop.f32.mrf.mxu0
        %v4131 = vadd.f32 0.0, %v4130
        %v4132 = vpop.f32.mrf.mxu0
        %v4133 = vpop.f32.mrf.mxu0
        %v4134 = vadd.f32 0.0, %v4133
        %v4135 = vpop.f32.mrf.mxu0
        %4136 = vdwg.mxu0
        %4137 = vrot.lane.b32.xlu0 %v3893, 112
        %v4138 = vpop.permute.xlu0 %4137
        %4139 = vrot.lane.b32.xlu0 %v3894, 80
        %v4140 = vpop.permute.xlu0 %4139
        %v4142 = vsel %vm1023, %v4138, 0
        %v4145 = vsel %vm1023, %v4140, 0
        %4147 = vmatprep.subr.bf16.mxu0 0
        %4148 = vmatpush1.bf16.xpose.msra.mxu0 0
        %4149 = vmatprep.subr.bf16.mxu0 0
        %4150 = vmatpush1.bf16.xpose.msra.mxu0 0
        %4151 = vmatprep.subr.bf16.mxu0 0
        %4152 = vmatpush1.bf16.xpose.msra.mxu0 0
        %4153 = vmatprep.subr.bf16.mxu0 0
        %4154 = vmatpush1.bf16.xpose.msra.mxu0 0
        %4155 = vmatprep.subr.bf16.mxu0 0
        %4156 = vmatpush1.bf16.xpose.msra.mxu0 0
        %4157 = vmatprep.subr.bf16.mxu0 0
        %4158 = vmatpush1.bf16.xpose.msra.mxu0 0
        %4159 = vmatprep.subr.bf16.mxu0 0
        %4160 = vmatpush1.bf16.xpose.msra.mxu0 0
        %4161 = vmatprep.subr.bf16.mxu0 0
        %4162 = vmatpush1.bf16.xpose.msra.mxu0 %v4145
        %4163 = vmatprep.subr.bf16.mxu0 0
        %4164 = vmatpush2.bf16.xpose.msra.mxu0 0
        %4165 = vmatprep.subr.bf16.mxu0 0
        %4166 = vmatpush2.bf16.xpose.msra.mxu0 0
        %4167 = vmatprep.subr.bf16.mxu0 0
        %4168 = vmatpush2.bf16.xpose.msra.mxu0 0
        %4169 = vmatprep.subr.bf16.mxu0 0
        %4170 = vmatpush2.bf16.xpose.msra.mxu0 0
        %4171 = vmatprep.subr.bf16.mxu0 0
        %4172 = vmatpush2.bf16.xpose.msra.mxu0 0
        %4173 = vmatprep.subr.bf16.mxu0 0
        %4174 = vmatpush2.bf16.xpose.msra.mxu0 0
        %4175 = vmatprep.subr.bf16.mxu0 0
        %4176 = vmatpush2.bf16.xpose.msra.mxu0 0
        %4177 = vmatprep.subr.bf16.mxu0 0
        %4178 = vmatpush2.bf16.xpose.msra.mxu0 0
        %4179 = vmatprep.mubr.bf16.mxu0 0
        %4180 = vmatmul.mubr.bf16.gmra.mxu0 %v4142
        %v4181 = vpop.f32.mrf.mxu0
        %v4182 = vadd.f32 0.0, %v4181
        %v4183 = vpop.f32.mrf.mxu0
        %v4184 = vpop.f32.mrf.mxu0
        %v4185 = vadd.f32 0.0, %v4184
        %v4186 = vpop.f32.mrf.mxu0
        %4187 = vdwg.mxu0
        %v4188 = vsel %vm1221, %v4182, -inf
        %4189 = vmax.xlane.f32.xlu0 %v4188
        %v4190 = vpop.xlane.xlu0 %4189
        %v4191 = vsel %vm1221, %v4185, -inf
        %4192 = vmax.xlane.f32.xlu0 %v4191
        %v4193 = vpop.xlane.xlu0 %4192
        %v4194 = vsub.f32 %v4182, %v4190
        %v4195 = vsub.f32 %v4185, %v4193
        %v4196 = vmul.f32 %v4194, 1.442695
        %v4197 = vpow.pop %v4196
        %v4198 = vmul.f32 %v4195, 1.442695
        %v4199 = vpow.pop %v4198
        %v4200 = vsel %vm1221, %v4197, 0.0
        %4201 = vadd.xlane.f32.xlu0 %v4200
        %v4202 = vpop.xlane.xlu0 %4201
        %v4203 = vsel %vm1221, %v4199, 0.0
        %4204 = vadd.xlane.f32.xlu0 %v4203
        %v4205 = vpop.xlane.xlu0 %4204
        %v4206 = vrcp.pop %v4202
        %v4207 = vrcp.pop %v4205
        %v4208 = vmul.f32 %v4197, %v4206
        %v4209 = vmul.f32 %v4199, %v4207
        %v4210 = vpack.c.bf16 %v4209, %v4208
        %4211 = vrot.lane.b32.xlu0 %v3894, 48
        %v4212 = vpop.permute.xlu0 %4211
        %v4215 = vsel %vm1221, %v4210, 0
        %4217 = vmatprep.subr.bf16.mxu0 0
        %4218 = vmatpush1.bf16.msra.mxu0 0
        %4219 = vmatprep.subr.bf16.mxu0 0
        %4220 = vmatpush1.bf16.msra.mxu0 0
        %4221 = vmatprep.subr.bf16.mxu0 0
        %4222 = vmatpush1.bf16.msra.mxu0 0
        %4223 = vmatprep.subr.bf16.mxu0 0
        %4224 = vmatpush1.bf16.msra.mxu0 0
        %4225 = vmatprep.subr.bf16.mxu0 0
        %4226 = vmatpush1.bf16.msra.mxu0 0
        %4227 = vmatprep.subr.bf16.mxu0 0
        %4228 = vmatpush1.bf16.msra.mxu0 0
        %4229 = vmatprep.subr.bf16.mxu0 0
        %4230 = vmatpush1.bf16.msra.mxu0 0
        %4231 = vmatprep.subr.bf16.mxu0 0
        %4232 = vmatpush1.bf16.msra.mxu0 %v4212
        %4233 = vmatprep.subr.bf16.mxu0 0
        %4234 = vmatpush2.bf16.msra.mxu0 0
        %4235 = vmatprep.subr.bf16.mxu0 0
        %4236 = vmatpush2.bf16.msra.mxu0 0
        %4237 = vmatprep.subr.bf16.mxu0 0
        %4238 = vmatpush2.bf16.msra.mxu0 0
        %4239 = vmatprep.subr.bf16.mxu0 0
        %4240 = vmatpush2.bf16.msra.mxu0 0
        %4241 = vmatprep.subr.bf16.mxu0 0
        %4242 = vmatpush2.bf16.msra.mxu0 0
        %4243 = vmatprep.subr.bf16.mxu0 0
        %4244 = vmatpush2.bf16.msra.mxu0 0
        %4245 = vmatprep.subr.bf16.mxu0 0
        %4246 = vmatpush2.bf16.msra.mxu0 0
        %4247 = vmatprep.subr.bf16.mxu0 0
        %4248 = vmatpush2.bf16.msra.mxu0 0
        %4249 = vmatprep.mubr.bf16.mxu0 0
        %4250 = vmatmul.mubr.bf16.gmra.mxu0 %v4215
        %v4251 = vpop.f32.mrf.mxu0
        %v4252 = vadd.f32 0.0, %v4251
        %v4253 = vpop.f32.mrf.mxu0
        %v4254 = vpop.f32.mrf.mxu0
        %v4255 = vadd.f32 0.0, %v4254
        %v4256 = vpop.f32.mrf.mxu0
        %4257 = vdwg.mxu0
        %4258 = vrot.lane.b32.xlu0 %v3893, 104
        %v4259 = vpop.permute.xlu0 %4258
        %4260 = vrot.lane.b32.xlu0 %v3894, 72
        %v4261 = vpop.permute.xlu0 %4260
        %v4263 = vsel %vm1023, %v4259, 0
        %v4266 = vsel %vm1023, %v4261, 0
        %4268 = vmatprep.subr.bf16.mxu0 0
        %4269 = vmatpush1.bf16.xpose.msra.mxu0 0
        %4270 = vmatprep.subr.bf16.mxu0 0
        %4271 = vmatpush1.bf16.xpose.msra.mxu0 0
        %4272 = vmatprep.subr.bf16.mxu0 0
        %4273 = vmatpush1.bf16.xpose.msra.mxu0 0
        %4274 = vmatprep.subr.bf16.mxu0 0
        %4275 = vmatpush1.bf16.xpose.msra.mxu0 0
        %4276 = vmatprep.subr.bf16.mxu0 0
        %4277 = vmatpush1.bf16.xpose.msra.mxu0 0
        %4278 = vmatprep.subr.bf16.mxu0 0
        %4279 = vmatpush1.bf16.xpose.msra.mxu0 0
        %4280 = vmatprep.subr.bf16.mxu0 0
        %4281 = vmatpush1.bf16.xpose.msra.mxu0 0
        %4282 = vmatprep.subr.bf16.mxu0 0
        %4283 = vmatpush1.bf16.xpose.msra.mxu0 %v4266
        %4284 = vmatprep.subr.bf16.mxu0 0
        %4285 = vmatpush2.bf16.xpose.msra.mxu0 0
        %4286 = vmatprep.subr.bf16.mxu0 0
        %4287 = vmatpush2.bf16.xpose.msra.mxu0 0
        %4288 = vmatprep.subr.bf16.mxu0 0
        %4289 = vmatpush2.bf16.xpose.msra.mxu0 0
        %4290 = vmatprep.subr.bf16.mxu0 0
        %4291 = vmatpush2.bf16.xpose.msra.mxu0 0
        %4292 = vmatprep.subr.bf16.mxu0 0
        %4293 = vmatpush2.bf16.xpose.msra.mxu0 0
        %4294 = vmatprep.subr.bf16.mxu0 0
        %4295 = vmatpush2.bf16.xpose.msra.mxu0 0
        %4296 = vmatprep.subr.bf16.mxu0 0
        %4297 = vmatpush2.bf16.xpose.msra.mxu0 0
        %4298 = vmatprep.subr.bf16.mxu0 0
        %4299 = vmatpush2.bf16.xpose.msra.mxu0 0
        %4300 = vmatprep.mubr.bf16.mxu0 0
        %4301 = vmatmul.mubr.bf16.gmra.mxu0 %v4263
        %v4302 = vpop.f32.mrf.mxu0
        %v4303 = vadd.f32 0.0, %v4302
        %v4304 = vpop.f32.mrf.mxu0
        %v4305 = vpop.f32.mrf.mxu0
        %v4306 = vadd.f32 0.0, %v4305
        %v4307 = vpop.f32.mrf.mxu0
        %4308 = vdwg.mxu0
        %v4309 = vsel %vm1221, %v4303, -inf
        %4310 = vmax.xlane.f32.xlu0 %v4309
        %v4311 = vpop.xlane.xlu0 %4310
        %v4312 = vsel %vm1221, %v4306, -inf
        %4313 = vmax.xlane.f32.xlu0 %v4312
        %v4314 = vpop.xlane.xlu0 %4313
        %v4315 = vsub.f32 %v4303, %v4311
        %v4316 = vsub.f32 %v4306, %v4314
        %v4317 = vmul.f32 %v4315, 1.442695
        %v4318 = vpow.pop %v4317
        %v4319 = vmul.f32 %v4316, 1.442695
        %v4320 = vpow.pop %v4319
        %v4321 = vsel %vm1221, %v4318, 0.0
        %4322 = vadd.xlane.f32.xlu0 %v4321
        %v4323 = vpop.xlane.xlu0 %4322
        %v4324 = vsel %vm1221, %v4320, 0.0
        %4325 = vadd.xlane.f32.xlu0 %v4324
        %v4326 = vpop.xlane.xlu0 %4325
        %v4327 = vrcp.pop %v4323
        %v4328 = vrcp.pop %v4326
        %v4329 = vmul.f32 %v4318, %v4327
        %v4330 = vmul.f32 %v4320, %v4328
        %v4331 = vpack.c.bf16 %v4330, %v4329
        %4332 = vrot.lane.b32.xlu0 %v3894, 40
        %v4333 = vpop.permute.xlu0 %4332
        %v4336 = vsel %vm1221, %v4331, 0
        %4338 = vmatprep.subr.bf16.mxu0 0
        %4339 = vmatpush1.bf16.msra.mxu0 0
        %4340 = vmatprep.subr.bf16.mxu0 0
        %4341 = vmatpush1.bf16.msra.mxu0 0
        %4342 = vmatprep.subr.bf16.mxu0 0
        %4343 = vmatpush1.bf16.msra.mxu0 0
        %4344 = vmatprep.subr.bf16.mxu0 0
        %4345 = vmatpush1.bf16.msra.mxu0 0
        %4346 = vmatprep.subr.bf16.mxu0 0
        %4347 = vmatpush1.bf16.msra.mxu0 0
        %4348 = vmatprep.subr.bf16.mxu0 0
        %4349 = vmatpush1.bf16.msra.mxu0 0
        %4350 = vmatprep.subr.bf16.mxu0 0
        %4351 = vmatpush1.bf16.msra.mxu0 0
        %4352 = vmatprep.subr.bf16.mxu0 0
        %4353 = vmatpush1.bf16.msra.mxu0 %v4333
        %4354 = vmatprep.subr.bf16.mxu0 0
        %4355 = vmatpush2.bf16.msra.mxu0 0
        %4356 = vmatprep.subr.bf16.mxu0 0
        %4357 = vmatpush2.bf16.msra.mxu0 0
        %4358 = vmatprep.subr.bf16.mxu0 0
        %4359 = vmatpush2.bf16.msra.mxu0 0
        %4360 = vmatprep.subr.bf16.mxu0 0
        %4361 = vmatpush2.bf16.msra.mxu0 0
        %4362 = vmatprep.subr.bf16.mxu0 0
        %4363 = vmatpush2.bf16.msra.mxu0 0
        %4364 = vmatprep.subr.bf16.mxu0 0
        %4365 = vmatpush2.bf16.msra.mxu0 0
        %4366 = vmatprep.subr.bf16.mxu0 0
        %4367 = vmatpush2.bf16.msra.mxu0 0
        %4368 = vmatprep.subr.bf16.mxu0 0
        %4369 = vmatpush2.bf16.msra.mxu0 0
        %4370 = vmatprep.mubr.bf16.mxu0 0
        %4371 = vmatmul.mubr.bf16.gmra.mxu0 %v4336
        %v4372 = vpop.f32.mrf.mxu0
        %v4373 = vadd.f32 0.0, %v4372
        %v4374 = vpop.f32.mrf.mxu0
        %v4375 = vpop.f32.mrf.mxu0
        %v4376 = vadd.f32 0.0, %v4375
        %v4377 = vpop.f32.mrf.mxu0
        %4378 = vdwg.mxu0
        %4381 = vrot.lane.b32.xlu0 %v4131, 8
        %v4382 = vpop.permute.xlu0 %4381
        %4383 = vrot.lane.b32.xlu0 %v4134, 8
        %v4384 = vpop.permute.xlu0 %4383
        %4389 = vrot.lane.b32.xlu0 %v4252, 16
        %v4390 = vpop.permute.xlu0 %4389
        %4391 = vrot.lane.b32.xlu0 %v4255, 16
        %v4392 = vpop.permute.xlu0 %4391
        %4397 = vrot.lane.b32.xlu0 %v4373, 24
        %v4398 = vpop.permute.xlu0 %4397
        %4399 = vrot.lane.b32.xlu0 %v4376, 24
        %v4400 = vpop.permute.xlu0 %4399
        %v4403 = vsel %vm1023, %v4009, %v4382
        %v4404 = vsel %vm1023, %v4012, %v4384
        %v4405 = vsel %vm1221, %v4403, %v4390
        %v4406 = vsel %vm1221, %v4404, %v4392
        %v4407 = vsel %vm3066, %v4405, %v4398
        %v4408 = vsel %vm3066, %v4406, %v4400
        %v4409 = vpack.c.bf16 %v4408, %v4407
        %v4411 = vlaneseq
        %v4412 = vshrl.u32 %v4411, 7
        %v4413 = vsub.s32 0, %v4412
        %v4414 = vrot.slane %v3784, %v4413
        %v4420 = vunpack.c.l.b16 %v3780
        %v4421 = vunpack.c.l.b16 %v3781
        %v4422 = vunpack.c.l.b16 %v3782
        %v4423 = vunpack.c.l.b16 %v3783
        %v4424 = vpack.c.b16 %v4421, %v4420
        %v4425 = vpack.c.b16 %v4423, %v4422
        %v4429 = vsel %vm938, %v4409, 0
        %4431 = vmatprep.subr.bf16.mxu0 0
        %4432 = vmatpush1.bf16.msra.mxu0 0
        %4433 = vmatprep.subr.bf16.mxu0 0
        %4434 = vmatpush1.bf16.msra.mxu0 0
        %4435 = vmatprep.subr.bf16.mxu0 0
        %4436 = vmatpush1.bf16.msra.mxu0 0
        %4437 = vmatprep.subr.bf16.mxu0 0
        %4438 = vmatpush1.bf16.msra.mxu0 0
        %4439 = vmatprep.subr.bf16.mxu0 0
        %4440 = vmatpush1.bf16.msra.mxu0 0
        %4441 = vmatprep.subr.bf16.mxu0 0
        %4442 = vmatpush1.bf16.msra.mxu0 0
        %4443 = vmatprep.subr.bf16.mxu0 0
        %4444 = vmatpush1.bf16.msra.mxu0 %v4425
        %4445 = vmatprep.subr.bf16.mxu0 0
        %4446 = vmatpush1.bf16.msra.mxu0 %v4424
        %4447 = vmatprep.subr.bf16.mxu0 0
        %4448 = vmatpush2.bf16.msra.mxu0 0
        %4449 = vmatprep.subr.bf16.mxu0 0
        %4450 = vmatpush2.bf16.msra.mxu0 0
        %4451 = vmatprep.subr.bf16.mxu0 0
        %4452 = vmatpush2.bf16.msra.mxu0 0
        %4453 = vmatprep.subr.bf16.mxu0 0
        %4454 = vmatpush2.bf16.msra.mxu0 0
        %4455 = vmatprep.subr.bf16.mxu0 0
        %4456 = vmatpush2.bf16.msra.mxu0 0
        %4457 = vmatprep.subr.bf16.mxu0 0
        %4458 = vmatpush2.bf16.msra.mxu0 0
        %4459 = vmatprep.subr.bf16.mxu0 0
        %4460 = vmatpush2.bf16.msra.mxu0 0
        %4461 = vmatprep.subr.bf16.mxu0 0
        %4462 = vmatpush2.bf16.msra.mxu0 0
        %4463 = vmatprep.mubr.bf16.mxu0 0
        %4464 = vmatmul.mubr.bf16.gmra.mxu0 %v4429
        %v4465 = vpop.f32.mrf.mxu0
        %v4466 = vadd.f32 %v4414, %v4465
        %v4467 = vpop.f32.mrf.mxu0
        %v4468 = vpop.f32.mrf.mxu0
        %v4469 = vadd.f32 %v4414, %v4468
        %v4470 = vpop.f32.mrf.mxu0
        %4471 = vdwg.mxu0
        %4472 = vrot.lane.b32.xlu0 %v3893, 96
        %v4473 = vpop.permute.xlu0 %4472
        %v4475 = vsel %vm1023, %v3894, 0
        %v4478 = vsel %vm1023, %v4473, 0
        %4480 = vmatprep.subr.bf16.mxu0 0
        %4481 = vmatpush1.bf16.xpose.msra.mxu0 0
        %4482 = vmatprep.subr.bf16.mxu0 0
        %4483 = vmatpush1.bf16.xpose.msra.mxu0 0
        %4484 = vmatprep.subr.bf16.mxu0 0
        %4485 = vmatpush1.bf16.xpose.msra.mxu0 0
        %4486 = vmatprep.subr.bf16.mxu0 0
        %4487 = vmatpush1.bf16.xpose.msra.mxu0 0
        %4488 = vmatprep.subr.bf16.mxu0 0
        %4489 = vmatpush1.bf16.xpose.msra.mxu0 0
        %4490 = vmatprep.subr.bf16.mxu0 0
        %4491 = vmatpush1.bf16.xpose.msra.mxu0 0
        %4492 = vmatprep.subr.bf16.mxu0 0
        %4493 = vmatpush1.bf16.xpose.msra.mxu0 0
        %4494 = vmatprep.subr.bf16.mxu0 0
        %4495 = vmatpush1.bf16.xpose.msra.mxu0 %v4478
        %4496 = vmatprep.subr.bf16.mxu0 0
        %4497 = vmatpush2.bf16.xpose.msra.mxu0 0
        %4498 = vmatprep.subr.bf16.mxu0 0
        %4499 = vmatpush2.bf16.xpose.msra.mxu0 0
        %4500 = vmatprep.subr.bf16.mxu0 0
        %4501 = vmatpush2.bf16.xpose.msra.mxu0 0
        %4502 = vmatprep.subr.bf16.mxu0 0
        %4503 = vmatpush2.bf16.xpose.msra.mxu0 0
        %4504 = vmatprep.subr.bf16.mxu0 0
        %4505 = vmatpush2.bf16.xpose.msra.mxu0 0
        %4506 = vmatprep.subr.bf16.mxu0 0
        %4507 = vmatpush2.bf16.xpose.msra.mxu0 0
        %4508 = vmatprep.subr.bf16.mxu0 0
        %4509 = vmatpush2.bf16.xpose.msra.mxu0 0
        %4510 = vmatprep.subr.bf16.mxu0 0
        %4511 = vmatpush2.bf16.xpose.msra.mxu0 0
        %4512 = vmatprep.mubr.bf16.mxu0 0
        %4513 = vmatmul.mubr.bf16.gmra.mxu0 %v4475
        %v4514 = vpop.f32.mrf.mxu0
        %v4515 = vadd.f32 0.0, %v4514
        %v4516 = vpop.f32.mrf.mxu0
        %v4517 = vpop.f32.mrf.mxu0
        %v4518 = vadd.f32 0.0, %v4517
        %v4519 = vpop.f32.mrf.mxu0
        %4520 = vdwg.mxu0
        %v4521 = vsel %vm1221, %v4515, -inf
        %4522 = vmax.xlane.f32.xlu0 %v4521
        %v4523 = vpop.xlane.xlu0 %4522
        %v4524 = vsel %vm1221, %v4518, -inf
        %4525 = vmax.xlane.f32.xlu0 %v4524
        %v4526 = vpop.xlane.xlu0 %4525
        %v4527 = vsub.f32 %v4515, %v4523
        %v4528 = vsub.f32 %v4518, %v4526
        %v4529 = vmul.f32 %v4527, 1.442695
        %v4530 = vpow.pop %v4529
        %v4531 = vmul.f32 %v4528, 1.442695
        %v4532 = vpow.pop %v4531
        %v4533 = vsel %vm1221, %v4530, 0.0
        %4534 = vadd.xlane.f32.xlu0 %v4533
        %v4535 = vpop.xlane.xlu0 %4534
        %v4536 = vsel %vm1221, %v4532, 0.0
        %4537 = vadd.xlane.f32.xlu0 %v4536
        %v4538 = vpop.xlane.xlu0 %4537
        %v4539 = vrcp.pop %v4535
        %v4540 = vrcp.pop %v4538
        %v4541 = vmul.f32 %v4530, %v4539
        %v4542 = vmul.f32 %v4532, %v4540
        %v4543 = vpack.c.bf16 %v4542, %v4541
        %4544 = vrot.lane.b32.xlu0 %v3893, 64
        %v4545 = vpop.permute.xlu0 %4544
        %v4548 = vsel %vm1221, %v4543, 0
        %4550 = vmatprep.subr.bf16.mxu0 0
        %4551 = vmatpush1.bf16.msra.mxu0 0
        %4552 = vmatprep.subr.bf16.mxu0 0
        %4553 = vmatpush1.bf16.msra.mxu0 0
        %4554 = vmatprep.subr.bf16.mxu0 0
        %4555 = vmatpush1.bf16.msra.mxu0 0
        %4556 = vmatprep.subr.bf16.mxu0 0
        %4557 = vmatpush1.bf16.msra.mxu0 0
        %4558 = vmatprep.subr.bf16.mxu0 0
        %4559 = vmatpush1.bf16.msra.mxu0 0
        %4560 = vmatprep.subr.bf16.mxu0 0
        %4561 = vmatpush1.bf16.msra.mxu0 0
        %4562 = vmatprep.subr.bf16.mxu0 0
        %4563 = vmatpush1.bf16.msra.mxu0 0
        %4564 = vmatprep.subr.bf16.mxu0 0
        %4565 = vmatpush1.bf16.msra.mxu0 %v4545
        %4566 = vmatprep.subr.bf16.mxu0 0
        %4567 = vmatpush2.bf16.msra.mxu0 0
        %4568 = vmatprep.subr.bf16.mxu0 0
        %4569 = vmatpush2.bf16.msra.mxu0 0
        %4570 = vmatprep.subr.bf16.mxu0 0
        %4571 = vmatpush2.bf16.msra.mxu0 0
        %4572 = vmatprep.subr.bf16.mxu0 0
        %4573 = vmatpush2.bf16.msra.mxu0 0
        %4574 = vmatprep.subr.bf16.mxu0 0
        %4575 = vmatpush2.bf16.msra.mxu0 0
        %4576 = vmatprep.subr.bf16.mxu0 0
        %4577 = vmatpush2.bf16.msra.mxu0 0
        %4578 = vmatprep.subr.bf16.mxu0 0
        %4579 = vmatpush2.bf16.msra.mxu0 0
        %4580 = vmatprep.subr.bf16.mxu0 0
        %4581 = vmatpush2.bf16.msra.mxu0 0
        %4582 = vmatprep.mubr.bf16.mxu0 0
        %4583 = vmatmul.mubr.bf16.gmra.mxu0 %v4548
        %v4584 = vpop.f32.mrf.mxu0
        %v4585 = vadd.f32 0.0, %v4584
        %v4586 = vpop.f32.mrf.mxu0
        %v4587 = vpop.f32.mrf.mxu0
        %v4588 = vadd.f32 0.0, %v4587
        %v4589 = vpop.f32.mrf.mxu0
        %4590 = vdwg.mxu0
        %4591 = vrot.lane.b32.xlu0 %v3894, 120
        %v4592 = vpop.permute.xlu0 %4591
        %4593 = vrot.lane.b32.xlu0 %v3893, 88
        %v4594 = vpop.permute.xlu0 %4593
        %v4596 = vsel %vm1023, %v4592, 0
        %v4599 = vsel %vm1023, %v4594, 0
        %4601 = vmatprep.subr.bf16.mxu0 0
        %4602 = vmatpush1.bf16.xpose.msra.mxu0 0
        %4603 = vmatprep.subr.bf16.mxu0 0
        %4604 = vmatpush1.bf16.xpose.msra.mxu0 0
        %4605 = vmatprep.subr.bf16.mxu0 0
        %4606 = vmatpush1.bf16.xpose.msra.mxu0 0
        %4607 = vmatprep.subr.bf16.mxu0 0
        %4608 = vmatpush1.bf16.xpose.msra.mxu0 0
        %4609 = vmatprep.subr.bf16.mxu0 0
        %4610 = vmatpush1.bf16.xpose.msra.mxu0 0
        %4611 = vmatprep.subr.bf16.mxu0 0
        %4612 = vmatpush1.bf16.xpose.msra.mxu0 0
        %4613 = vmatprep.subr.bf16.mxu0 0
        %4614 = vmatpush1.bf16.xpose.msra.mxu0 0
        %4615 = vmatprep.subr.bf16.mxu0 0
        %4616 = vmatpush1.bf16.xpose.msra.mxu0 %v4599
        %4617 = vmatprep.subr.bf16.mxu0 0
        %4618 = vmatpush2.bf16.xpose.msra.mxu0 0
        %4619 = vmatprep.subr.bf16.mxu0 0
        %4620 = vmatpush2.bf16.xpose.msra.mxu0 0
        %4621 = vmatprep.subr.bf16.mxu0 0
        %4622 = vmatpush2.bf16.xpose.msra.mxu0 0
        %4623 = vmatprep.subr.bf16.mxu0 0
        %4624 = vmatpush2.bf16.xpose.msra.mxu0 0
        %4625 = vmatprep.subr.bf16.mxu0 0
        %4626 = vmatpush2.bf16.xpose.msra.mxu0 0
        %4627 = vmatprep.subr.bf16.mxu0 0
        %4628 = vmatpush2.bf16.xpose.msra.mxu0 0
        %4629 = vmatprep.subr.bf16.mxu0 0
        %4630 = vmatpush2.bf16.xpose.msra.mxu0 0
        %4631 = vmatprep.subr.bf16.mxu0 0
        %4632 = vmatpush2.bf16.xpose.msra.mxu0 0
        %4633 = vmatprep.mubr.bf16.mxu0 0
        %4634 = vmatmul.mubr.bf16.gmra.mxu0 %v4596
        %v4635 = vpop.f32.mrf.mxu0
        %v4636 = vadd.f32 0.0, %v4635
        %v4637 = vpop.f32.mrf.mxu0
        %v4638 = vpop.f32.mrf.mxu0
        %v4639 = vadd.f32 0.0, %v4638
        %v4640 = vpop.f32.mrf.mxu0
        %4641 = vdwg.mxu0
        %v4642 = vsel %vm1221, %v4636, -inf
        %4643 = vmax.xlane.f32.xlu0 %v4642
        %v4644 = vpop.xlane.xlu0 %4643
        %v4645 = vsel %vm1221, %v4639, -inf
        %4646 = vmax.xlane.f32.xlu0 %v4645
        %v4647 = vpop.xlane.xlu0 %4646
        %v4648 = vsub.f32 %v4636, %v4644
        %v4649 = vsub.f32 %v4639, %v4647
        %v4650 = vmul.f32 %v4648, 1.442695
        %v4651 = vpow.pop %v4650
        %v4652 = vmul.f32 %v4649, 1.442695
        %v4653 = vpow.pop %v4652
        %v4654 = vsel %vm1221, %v4651, 0.0
        %4655 = vadd.xlane.f32.xlu0 %v4654
        %v4656 = vpop.xlane.xlu0 %4655
        %v4657 = vsel %vm1221, %v4653, 0.0
        %4658 = vadd.xlane.f32.xlu0 %v4657
        %v4659 = vpop.xlane.xlu0 %4658
        %v4660 = vrcp.pop %v4656
        %v4661 = vrcp.pop %v4659
        %v4662 = vmul.f32 %v4651, %v4660
        %v4663 = vmul.f32 %v4653, %v4661
        %v4664 = vpack.c.bf16 %v4663, %v4662
        %4665 = vrot.lane.b32.xlu0 %v3893, 56
        %v4666 = vpop.permute.xlu0 %4665
        %v4669 = vsel %vm1221, %v4664, 0
        %4671 = vmatprep.subr.bf16.mxu0 0
        %4672 = vmatpush1.bf16.msra.mxu0 0
        %4673 = vmatprep.subr.bf16.mxu0 0
        %4674 = vmatpush1.bf16.msra.mxu0 0
        %4675 = vmatprep.subr.bf16.mxu0 0
        %4676 = vmatpush1.bf16.msra.mxu0 0
        %4677 = vmatprep.subr.bf16.mxu0 0
        %4678 = vmatpush1.bf16.msra.mxu0 0
        %4679 = vmatprep.subr.bf16.mxu0 0
        %4680 = vmatpush1.bf16.msra.mxu0 0
        %4681 = vmatprep.subr.bf16.mxu0 0
        %4682 = vmatpush1.bf16.msra.mxu0 0
        %4683 = vmatprep.subr.bf16.mxu0 0
        %4684 = vmatpush1.bf16.msra.mxu0 0
        %4685 = vmatprep.subr.bf16.mxu0 0
        %4686 = vmatpush1.bf16.msra.mxu0 %v4666
        %4687 = vmatprep.subr.bf16.mxu0 0
        %4688 = vmatpush2.bf16.msra.mxu0 0
        %4689 = vmatprep.subr.bf16.mxu0 0
        %4690 = vmatpush2.bf16.msra.mxu0 0
        %4691 = vmatprep.subr.bf16.mxu0 0
        %4692 = vmatpush2.bf16.msra.mxu0 0
        %4693 = vmatprep.subr.bf16.mxu0 0
        %4694 = vmatpush2.bf16.msra.mxu0 0
        %4695 = vmatprep.subr.bf16.mxu0 0
        %4696 = vmatpush2.bf16.msra.mxu0 0
        %4697 = vmatprep.subr.bf16.mxu0 0
        %4698 = vmatpush2.bf16.msra.mxu0 0
        %4699 = vmatprep.subr.bf16.mxu0 0
        %4700 = vmatpush2.bf16.msra.mxu0 0
        %4701 = vmatprep.subr.bf16.mxu0 0
        %4702 = vmatpush2.bf16.msra.mxu0 0
        %4703 = vmatprep.mubr.bf16.mxu0 0
        %4704 = vmatmul.mubr.bf16.gmra.mxu0 %v4669
        %v4705 = vpop.f32.mrf.mxu0
        %v4706 = vadd.f32 0.0, %v4705
        %v4707 = vpop.f32.mrf.mxu0
        %v4708 = vpop.f32.mrf.mxu0
        %v4709 = vadd.f32 0.0, %v4708
        %v4710 = vpop.f32.mrf.mxu0
        %4711 = vdwg.mxu0
        %4712 = vrot.lane.b32.xlu0 %v3894, 112
        %v4713 = vpop.permute.xlu0 %4712
        %4714 = vrot.lane.b32.xlu0 %v3893, 80
        %v4715 = vpop.permute.xlu0 %4714
        %v4717 = vsel %vm1023, %v4713, 0
        %v4720 = vsel %vm1023, %v4715, 0
        %4722 = vmatprep.subr.bf16.mxu0 0
        %4723 = vmatpush1.bf16.xpose.msra.mxu0 0
        %4724 = vmatprep.subr.bf16.mxu0 0
        %4725 = vmatpush1.bf16.xpose.msra.mxu0 0
        %4726 = vmatprep.subr.bf16.mxu0 0
        %4727 = vmatpush1.bf16.xpose.msra.mxu0 0
        %4728 = vmatprep.subr.bf16.mxu0 0
        %4729 = vmatpush1.bf16.xpose.msra.mxu0 0
        %4730 = vmatprep.subr.bf16.mxu0 0
        %4731 = vmatpush1.bf16.xpose.msra.mxu0 0
        %4732 = vmatprep.subr.bf16.mxu0 0
        %4733 = vmatpush1.bf16.xpose.msra.mxu0 0
        %4734 = vmatprep.subr.bf16.mxu0 0
        %4735 = vmatpush1.bf16.xpose.msra.mxu0 0
        %4736 = vmatprep.subr.bf16.mxu0 0
        %4737 = vmatpush1.bf16.xpose.msra.mxu0 %v4720
        %4738 = vmatprep.subr.bf16.mxu0 0
        %4739 = vmatpush2.bf16.xpose.msra.mxu0 0
        %4740 = vmatprep.subr.bf16.mxu0 0
        %4741 = vmatpush2.bf16.xpose.msra.mxu0 0
        %4742 = vmatprep.subr.bf16.mxu0 0
        %4743 = vmatpush2.bf16.xpose.msra.mxu0 0
        %4744 = vmatprep.subr.bf16.mxu0 0
        %4745 = vmatpush2.bf16.xpose.msra.mxu0 0
        %4746 = vmatprep.subr.bf16.mxu0 0
        %4747 = vmatpush2.bf16.xpose.msra.mxu0 0
        %4748 = vmatprep.subr.bf16.mxu0 0
        %4749 = vmatpush2.bf16.xpose.msra.mxu0 0
        %4750 = vmatprep.subr.bf16.mxu0 0
        %4751 = vmatpush2.bf16.xpose.msra.mxu0 0
        %4752 = vmatprep.subr.bf16.mxu0 0
        %4753 = vmatpush2.bf16.xpose.msra.mxu0 0
        %4754 = vmatprep.mubr.bf16.mxu0 0
        %4755 = vmatmul.mubr.bf16.gmra.mxu0 %v4717
        %v4756 = vpop.f32.mrf.mxu0
        %v4757 = vadd.f32 0.0, %v4756
        %v4758 = vpop.f32.mrf.mxu0
        %v4759 = vpop.f32.mrf.mxu0
        %v4760 = vadd.f32 0.0, %v4759
        %v4761 = vpop.f32.mrf.mxu0
        %4762 = vdwg.mxu0
        %v4763 = vsel %vm1221, %v4757, -inf
        %4764 = vmax.xlane.f32.xlu0 %v4763
        %v4765 = vpop.xlane.xlu0 %4764
        %v4766 = vsel %vm1221, %v4760, -inf
        %4767 = vmax.xlane.f32.xlu0 %v4766
        %v4768 = vpop.xlane.xlu0 %4767
        %v4769 = vsub.f32 %v4757, %v4765
        %v4770 = vsub.f32 %v4760, %v4768
        %v4771 = vmul.f32 %v4769, 1.442695
        %v4772 = vpow.pop %v4771
        %v4773 = vmul.f32 %v4770, 1.442695
        %v4774 = vpow.pop %v4773
        %v4775 = vsel %vm1221, %v4772, 0.0
        %4776 = vadd.xlane.f32.xlu0 %v4775
        %v4777 = vpop.xlane.xlu0 %4776
        %v4778 = vsel %vm1221, %v4774, 0.0
        %4779 = vadd.xlane.f32.xlu0 %v4778
        %v4780 = vpop.xlane.xlu0 %4779
        %v4781 = vrcp.pop %v4777
        %v4782 = vrcp.pop %v4780
        %v4783 = vmul.f32 %v4772, %v4781
        %v4784 = vmul.f32 %v4774, %v4782
        %v4785 = vpack.c.bf16 %v4784, %v4783
        %4786 = vrot.lane.b32.xlu0 %v3893, 48
        %v4787 = vpop.permute.xlu0 %4786
        %v4790 = vsel %vm1221, %v4785, 0
        %4792 = vmatprep.subr.bf16.mxu0 0
        %4793 = vmatpush1.bf16.msra.mxu0 0
        %4794 = vmatprep.subr.bf16.mxu0 0
        %4795 = vmatpush1.bf16.msra.mxu0 0
        %4796 = vmatprep.subr.bf16.mxu0 0
        %4797 = vmatpush1.bf16.msra.mxu0 0
        %4798 = vmatprep.subr.bf16.mxu0 0
        %4799 = vmatpush1.bf16.msra.mxu0 0
        %4800 = vmatprep.subr.bf16.mxu0 0
        %4801 = vmatpush1.bf16.msra.mxu0 0
        %4802 = vmatprep.subr.bf16.mxu0 0
        %4803 = vmatpush1.bf16.msra.mxu0 0
        %4804 = vmatprep.subr.bf16.mxu0 0
        %4805 = vmatpush1.bf16.msra.mxu0 0
        %4806 = vmatprep.subr.bf16.mxu0 0
        %4807 = vmatpush1.bf16.msra.mxu0 %v4787
        %4808 = vmatprep.subr.bf16.mxu0 0
        %4809 = vmatpush2.bf16.msra.mxu0 0
        %4810 = vmatprep.subr.bf16.mxu0 0
        %4811 = vmatpush2.bf16.msra.mxu0 0
        %4812 = vmatprep.subr.bf16.mxu0 0
        %4813 = vmatpush2.bf16.msra.mxu0 0
        %4814 = vmatprep.subr.bf16.mxu0 0
        %4815 = vmatpush2.bf16.msra.mxu0 0
        %4816 = vmatprep.subr.bf16.mxu0 0
        %4817 = vmatpush2.bf16.msra.mxu0 0
        %4818 = vmatprep.subr.bf16.mxu0 0
        %4819 = vmatpush2.bf16.msra.mxu0 0
        %4820 = vmatprep.subr.bf16.mxu0 0
        %4821 = vmatpush2.bf16.msra.mxu0 0
        %4822 = vmatprep.subr.bf16.mxu0 0
        %4823 = vmatpush2.bf16.msra.mxu0 0
        %4824 = vmatprep.mubr.bf16.mxu0 0
        %4825 = vmatmul.mubr.bf16.gmra.mxu0 %v4790
        %v4826 = vpop.f32.mrf.mxu0
        %v4827 = vadd.f32 0.0, %v4826
        %v4828 = vpop.f32.mrf.mxu0
        %v4829 = vpop.f32.mrf.mxu0
        %v4830 = vadd.f32 0.0, %v4829
        %v4831 = vpop.f32.mrf.mxu0
        %4832 = vdwg.mxu0
        %4833 = vrot.lane.b32.xlu0 %v3894, 104
        %v4834 = vpop.permute.xlu0 %4833
        %4835 = vrot.lane.b32.xlu0 %v3893, 72
        %v4836 = vpop.permute.xlu0 %4835
        %v4838 = vsel %vm1023, %v4834, 0
        %v4841 = vsel %vm1023, %v4836, 0
        %4843 = vmatprep.subr.bf16.mxu0 0
        %4844 = vmatpush1.bf16.xpose.msra.mxu0 0
        %4845 = vmatprep.subr.bf16.mxu0 0
        %4846 = vmatpush1.bf16.xpose.msra.mxu0 0
        %4847 = vmatprep.subr.bf16.mxu0 0
        %4848 = vmatpush1.bf16.xpose.msra.mxu0 0
        %4849 = vmatprep.subr.bf16.mxu0 0
        %4850 = vmatpush1.bf16.xpose.msra.mxu0 0
        %4851 = vmatprep.subr.bf16.mxu0 0
        %4852 = vmatpush1.bf16.xpose.msra.mxu0 0
        %4853 = vmatprep.subr.bf16.mxu0 0
        %4854 = vmatpush1.bf16.xpose.msra.mxu0 0
        %4855 = vmatprep.subr.bf16.mxu0 0
        %4856 = vmatpush1.bf16.xpose.msra.mxu0 0
        %4857 = vmatprep.subr.bf16.mxu0 0
        %4858 = vmatpush1.bf16.xpose.msra.mxu0 %v4841
        %4859 = vmatprep.subr.bf16.mxu0 0
        %4860 = vmatpush2.bf16.xpose.msra.mxu0 0
        %4861 = vmatprep.subr.bf16.mxu0 0
        %4862 = vmatpush2.bf16.xpose.msra.mxu0 0
        %4863 = vmatprep.subr.bf16.mxu0 0
        %4864 = vmatpush2.bf16.xpose.msra.mxu0 0
        %4865 = vmatprep.subr.bf16.mxu0 0
        %4866 = vmatpush2.bf16.xpose.msra.mxu0 0
        %4867 = vmatprep.subr.bf16.mxu0 0
        %4868 = vmatpush2.bf16.xpose.msra.mxu0 0
        %4869 = vmatprep.subr.bf16.mxu0 0
        %4870 = vmatpush2.bf16.xpose.msra.mxu0 0
        %4871 = vmatprep.subr.bf16.mxu0 0
        %4872 = vmatpush2.bf16.xpose.msra.mxu0 0
        %4873 = vmatprep.subr.bf16.mxu0 0
        %4874 = vmatpush2.bf16.xpose.msra.mxu0 0
        %4875 = vmatprep.mubr.bf16.mxu0 0
        %4876 = vmatmul.mubr.bf16.gmra.mxu0 %v4838
        %v4877 = vpop.f32.mrf.mxu0
        %v4878 = vadd.f32 0.0, %v4877
        %v4879 = vpop.f32.mrf.mxu0
        %v4880 = vpop.f32.mrf.mxu0
        %v4881 = vadd.f32 0.0, %v4880
        %v4882 = vpop.f32.mrf.mxu0
        %4883 = vdwg.mxu0
        %v4884 = vsel %vm1221, %v4878, -inf
        %4885 = vmax.xlane.f32.xlu0 %v4884
        %v4886 = vpop.xlane.xlu0 %4885
        %v4887 = vsel %vm1221, %v4881, -inf
        %4888 = vmax.xlane.f32.xlu0 %v4887
        %v4889 = vpop.xlane.xlu0 %4888
        %v4890 = vsub.f32 %v4878, %v4886
        %v4891 = vsub.f32 %v4881, %v4889
        %v4892 = vmul.f32 %v4890, 1.442695
        %v4893 = vpow.pop %v4892
        %v4894 = vmul.f32 %v4891, 1.442695
        %v4895 = vpow.pop %v4894
        %v4896 = vsel %vm1221, %v4893, 0.0
        %4897 = vadd.xlane.f32.xlu0 %v4896
        %v4898 = vpop.xlane.xlu0 %4897
        %v4899 = vsel %vm1221, %v4895, 0.0
        %4900 = vadd.xlane.f32.xlu0 %v4899
        %v4901 = vpop.xlane.xlu0 %4900
        %v4902 = vrcp.pop %v4898
        %v4903 = vrcp.pop %v4901
        %v4904 = vmul.f32 %v4893, %v4902
        %v4905 = vmul.f32 %v4895, %v4903
        %v4906 = vpack.c.bf16 %v4905, %v4904
        %4907 = vrot.lane.b32.xlu0 %v3893, 40
        %v4908 = vpop.permute.xlu0 %4907
        %v4911 = vsel %vm1221, %v4906, 0
        %4913 = vmatprep.subr.bf16.mxu0 0
        %4914 = vmatpush1.bf16.msra.mxu0 0
        %4915 = vmatprep.subr.bf16.mxu0 0
        %4916 = vmatpush1.bf16.msra.mxu0 0
        %4917 = vmatprep.subr.bf16.mxu0 0
        %4918 = vmatpush1.bf16.msra.mxu0 0
        %4919 = vmatprep.subr.bf16.mxu0 0
        %4920 = vmatpush1.bf16.msra.mxu0 0
        %4921 = vmatprep.subr.bf16.mxu0 0
        %4922 = vmatpush1.bf16.msra.mxu0 0
        %4923 = vmatprep.subr.bf16.mxu0 0
        %4924 = vmatpush1.bf16.msra.mxu0 0
        %4925 = vmatprep.subr.bf16.mxu0 0
        %4926 = vmatpush1.bf16.msra.mxu0 0
        %4927 = vmatprep.subr.bf16.mxu0 0
        %4928 = vmatpush1.bf16.msra.mxu0 %v4908
        %4929 = vmatprep.subr.bf16.mxu0 0
        %4930 = vmatpush2.bf16.msra.mxu0 0
        %4931 = vmatprep.subr.bf16.mxu0 0
        %4932 = vmatpush2.bf16.msra.mxu0 0
        %4933 = vmatprep.subr.bf16.mxu0 0
        %4934 = vmatpush2.bf16.msra.mxu0 0
        %4935 = vmatprep.subr.bf16.mxu0 0
        %4936 = vmatpush2.bf16.msra.mxu0 0
        %4937 = vmatprep.subr.bf16.mxu0 0
        %4938 = vmatpush2.bf16.msra.mxu0 0
        %4939 = vmatprep.subr.bf16.mxu0 0
        %4940 = vmatpush2.bf16.msra.mxu0 0
        %4941 = vmatprep.subr.bf16.mxu0 0
        %4942 = vmatpush2.bf16.msra.mxu0 0
        %4943 = vmatprep.subr.bf16.mxu0 0
        %4944 = vmatpush2.bf16.msra.mxu0 0
        %4945 = vmatprep.mubr.bf16.mxu0 0
        %4946 = vmatmul.mubr.bf16.gmra.mxu0 %v4911
        %v4947 = vpop.f32.mrf.mxu0
        %v4948 = vadd.f32 0.0, %v4947
        %v4949 = vpop.f32.mrf.mxu0
        %v4950 = vpop.f32.mrf.mxu0
        %v4951 = vadd.f32 0.0, %v4950
        %v4952 = vpop.f32.mrf.mxu0
        %4953 = vdwg.mxu0
        %4956 = vrot.lane.b32.xlu0 %v4706, 8
        %v4957 = vpop.permute.xlu0 %4956
        %4958 = vrot.lane.b32.xlu0 %v4709, 8
        %v4959 = vpop.permute.xlu0 %4958
        %4964 = vrot.lane.b32.xlu0 %v4827, 16
        %v4965 = vpop.permute.xlu0 %4964
        %4966 = vrot.lane.b32.xlu0 %v4830, 16
        %v4967 = vpop.permute.xlu0 %4966
        %4972 = vrot.lane.b32.xlu0 %v4948, 24
        %v4973 = vpop.permute.xlu0 %4972
        %4974 = vrot.lane.b32.xlu0 %v4951, 24
        %v4975 = vpop.permute.xlu0 %4974
        %v4978 = vsel %vm1023, %v4585, %v4957
        %v4979 = vsel %vm1023, %v4588, %v4959
        %v4980 = vsel %vm1221, %v4978, %v4965
        %v4981 = vsel %vm1221, %v4979, %v4967
        %v4982 = vsel %vm3066, %v4980, %v4973
        %v4983 = vsel %vm3066, %v4981, %v4975
        %v4984 = vpack.c.bf16 %v4983, %v4982
        %v4986 = vsel %vm938, %v4984, 0
        %4988 = vmatprep.subr.bf16.mxu0 0
        %4989 = vmatpush1.bf16.msra.mxu0 0
        %4990 = vmatprep.subr.bf16.mxu0 0
        %4991 = vmatpush1.bf16.msra.mxu0 0
        %4992 = vmatprep.subr.bf16.mxu0 0
        %4993 = vmatpush1.bf16.msra.mxu0 0
        %4994 = vmatprep.subr.bf16.mxu0 0
        %4995 = vmatpush1.bf16.msra.mxu0 0
        %4996 = vmatprep.subr.bf16.mxu0 0
        %4997 = vmatpush1.bf16.msra.mxu0 0
        %4998 = vmatprep.subr.bf16.mxu0 0
        %4999 = vmatpush1.bf16.msra.mxu0 0
        %5000 = vmatprep.subr.bf16.mxu0 0
        %5001 = vmatpush1.bf16.msra.mxu0 %v4425
        %5002 = vmatprep.subr.bf16.mxu0 0
        %5003 = vmatpush1.bf16.msra.mxu0 %v4424
        %5004 = vmatprep.subr.bf16.mxu0 0
        %5005 = vmatpush2.bf16.msra.mxu0 0
        %5006 = vmatprep.subr.bf16.mxu0 0
        %5007 = vmatpush2.bf16.msra.mxu0 0
        %5008 = vmatprep.subr.bf16.mxu0 0
        %5009 = vmatpush2.bf16.msra.mxu0 0
        %5010 = vmatprep.subr.bf16.mxu0 0
        %5011 = vmatpush2.bf16.msra.mxu0 0
        %5012 = vmatprep.subr.bf16.mxu0 0
        %5013 = vmatpush2.bf16.msra.mxu0 0
        %5014 = vmatprep.subr.bf16.mxu0 0
        %5015 = vmatpush2.bf16.msra.mxu0 0
        %5016 = vmatprep.subr.bf16.mxu0 0
        %5017 = vmatpush2.bf16.msra.mxu0 0
        %5018 = vmatprep.subr.bf16.mxu0 0
        %5019 = vmatpush2.bf16.msra.mxu0 0
        %5020 = vmatprep.mubr.bf16.mxu0 0
        %5021 = vmatmul.mubr.bf16.gmra.mxu0 %v4986
        %v5022 = vpop.f32.mrf.mxu0
        %v5023 = vadd.f32 %v4414, %v5022
        %v5024 = vpop.f32.mrf.mxu0
        %v5025 = vpop.f32.mrf.mxu0
        %v5026 = vadd.f32 %v4414, %v5025
        %v5027 = vpop.f32.mrf.mxu0
        %5028 = vdwg.mxu0
        %v5029 = vadd.f32 %v3767, %v5023
        %v5030 = vadd.f32 %v3768, %v5026
        %v5031 = vmul.f32 %v5029, 0.5
        %v5032 = vmul.f32 %v5030, 0.5
        %v5033 = vadd.f32 %v3769, %v4466
        %v5034 = vadd.f32 %v3770, %v4469
        %v5035 = vmul.f32 %v5033, 0.5
        %v5036 = vmul.f32 %v5034, 0.5
        %v5037 = vpack.c.bf16 %v5032, %v5031
        %v5039 = vsel %vm938, %v5037, 0
        %5041 = vmatprep.subr.bf16.mxu0 0
        %5042 = vmatpush1.bf16.msra.mxu0 0
        %5043 = vmatprep.subr.bf16.mxu0 0
        %5044 = vmatpush1.bf16.msra.mxu0 0
        %5045 = vmatprep.subr.bf16.mxu0 0
        %5046 = vmatpush1.bf16.msra.mxu0 0
        %5047 = vmatprep.subr.bf16.mxu0 0
        %5048 = vmatpush1.bf16.msra.mxu0 0
        %5049 = vmatprep.subr.bf16.mxu0 0
        %5050 = vmatpush1.bf16.msra.mxu0 0
        %5051 = vmatprep.subr.bf16.mxu0 0
        %5052 = vmatpush1.bf16.msra.mxu0 0
        %5053 = vmatprep.subr.bf16.mxu0 0
        %5054 = vmatpush1.bf16.msra.mxu0 %v3801
        %5055 = vmatprep.subr.bf16.mxu0 0
        %5056 = vmatpush1.bf16.msra.mxu0 %v3800
        %5057 = vmatprep.subr.bf16.mxu0 0
        %5058 = vmatpush2.bf16.msra.mxu0 0
        %5059 = vmatprep.subr.bf16.mxu0 0
        %5060 = vmatpush2.bf16.msra.mxu0 0
        %5061 = vmatprep.subr.bf16.mxu0 0
        %5062 = vmatpush2.bf16.msra.mxu0 0
        %5063 = vmatprep.subr.bf16.mxu0 0
        %5064 = vmatpush2.bf16.msra.mxu0 0
        %5065 = vmatprep.subr.bf16.mxu0 0
        %5066 = vmatpush2.bf16.msra.mxu0 0
        %5067 = vmatprep.subr.bf16.mxu0 0
        %5068 = vmatpush2.bf16.msra.mxu0 0
        %5069 = vmatprep.subr.bf16.mxu0 0
        %5070 = vmatpush2.bf16.msra.mxu0 0
        %5071 = vmatprep.subr.bf16.mxu0 0
        %5072 = vmatpush2.bf16.msra.mxu0 0
        %5073 = vmatprep.mubr.bf16.mxu0 0
        %5074 = vmatmul.mubr.bf16.gmra.mxu0 %v5039
        %v5075 = vpop.f32.mrf.mxu0
        %v5076 = vadd.f32 %v3790, %v5075
        %v5077 = vpop.f32.mrf.mxu0
        %v5078 = vpop.f32.mrf.mxu0
        %v5079 = vadd.f32 %v3790, %v5078
        %v5080 = vpop.f32.mrf.mxu0
        %5081 = vdwg.mxu0
        %v5082 = vpack.c.bf16 %v3772, %v3771
        %v5084 = vsel %vm938, %v5082, 0
        %5086 = vmatprep.subr.bf16.mxu0 0
        %5087 = vmatpush1.bf16.msra.mxu0 0
        %5088 = vmatprep.subr.bf16.mxu0 0
        %5089 = vmatpush1.bf16.msra.mxu0 0
        %5090 = vmatprep.subr.bf16.mxu0 0
        %5091 = vmatpush1.bf16.msra.mxu0 0
        %5092 = vmatprep.subr.bf16.mxu0 0
        %5093 = vmatpush1.bf16.msra.mxu0 0
        %5094 = vmatprep.subr.bf16.mxu0 0
        %5095 = vmatpush1.bf16.msra.mxu0 0
        %5096 = vmatprep.subr.bf16.mxu0 0
        %5097 = vmatpush1.bf16.msra.mxu0 0
        %5098 = vmatprep.subr.bf16.mxu0 0
        %5099 = vmatpush1.bf16.msra.mxu0 %v3801
        %5100 = vmatprep.subr.bf16.mxu0 0
        %5101 = vmatpush1.bf16.msra.mxu0 %v3800
        %5102 = vmatprep.subr.bf16.mxu0 0
        %5103 = vmatpush2.bf16.msra.mxu0 0
        %5104 = vmatprep.subr.bf16.mxu0 0
        %5105 = vmatpush2.bf16.msra.mxu0 0
        %5106 = vmatprep.subr.bf16.mxu0 0
        %5107 = vmatpush2.bf16.msra.mxu0 0
        %5108 = vmatprep.subr.bf16.mxu0 0
        %5109 = vmatpush2.bf16.msra.mxu0 0
        %5110 = vmatprep.subr.bf16.mxu0 0
        %5111 = vmatpush2.bf16.msra.mxu0 0
        %5112 = vmatprep.subr.bf16.mxu0 0
        %5113 = vmatpush2.bf16.msra.mxu0 0
        %5114 = vmatprep.subr.bf16.mxu0 0
        %5115 = vmatpush2.bf16.msra.mxu0 0
        %5116 = vmatprep.subr.bf16.mxu0 0
        %5117 = vmatpush2.bf16.msra.mxu0 0
        %5118 = vmatprep.mubr.bf16.mxu0 0
        %5119 = vmatmul.mubr.bf16.gmra.mxu0 %v5084
        %v5120 = vpop.f32.mrf.mxu0
        %v5121 = vadd.f32 %v3790, %v5120
        %v5122 = vpop.f32.mrf.mxu0
        %v5123 = vpop.f32.mrf.mxu0
        %v5124 = vadd.f32 %v3790, %v5123
        %v5125 = vpop.f32.mrf.mxu0
        %5126 = vdwg.mxu0
        %v5127 = vpack.c.bf16 %v5079, %v5076
        %v5128 = vpack.c.bf16 %v5124, %v5121
        %5130 = vrot.lane.b32.xlu0 %v5128, 96
        %v5131 = vpop.permute.xlu0 %5130
        %v5133 = vsel %vm1023, %v5127, 0
        %v5136 = vsel %vm1023, %v5131, 0
        %5138 = vmatprep.subr.bf16.mxu0 0
        %5139 = vmatpush1.bf16.xpose.msra.mxu0 0
        %5140 = vmatprep.subr.bf16.mxu0 0
        %5141 = vmatpush1.bf16.xpose.msra.mxu0 0
        %5142 = vmatprep.subr.bf16.mxu0 0
        %5143 = vmatpush1.bf16.xpose.msra.mxu0 0
        %5144 = vmatprep.subr.bf16.mxu0 0
        %5145 = vmatpush1.bf16.xpose.msra.mxu0 0
        %5146 = vmatprep.subr.bf16.mxu0 0
        %5147 = vmatpush1.bf16.xpose.msra.mxu0 0
        %5148 = vmatprep.subr.bf16.mxu0 0
        %5149 = vmatpush1.bf16.xpose.msra.mxu0 0
        %5150 = vmatprep.subr.bf16.mxu0 0
        %5151 = vmatpush1.bf16.xpose.msra.mxu0 0
        %5152 = vmatprep.subr.bf16.mxu0 0
        %5153 = vmatpush1.bf16.xpose.msra.mxu0 %v5136
        %5154 = vmatprep.subr.bf16.mxu0 0
        %5155 = vmatpush2.bf16.xpose.msra.mxu0 0
        %5156 = vmatprep.subr.bf16.mxu0 0
        %5157 = vmatpush2.bf16.xpose.msra.mxu0 0
        %5158 = vmatprep.subr.bf16.mxu0 0
        %5159 = vmatpush2.bf16.xpose.msra.mxu0 0
        %5160 = vmatprep.subr.bf16.mxu0 0
        %5161 = vmatpush2.bf16.xpose.msra.mxu0 0
        %5162 = vmatprep.subr.bf16.mxu0 0
        %5163 = vmatpush2.bf16.xpose.msra.mxu0 0
        %5164 = vmatprep.subr.bf16.mxu0 0
        %5165 = vmatpush2.bf16.xpose.msra.mxu0 0
        %5166 = vmatprep.subr.bf16.mxu0 0
        %5167 = vmatpush2.bf16.xpose.msra.mxu0 0
        %5168 = vmatprep.subr.bf16.mxu0 0
        %5169 = vmatpush2.bf16.xpose.msra.mxu0 0
        %5170 = vmatprep.mubr.bf16.mxu0 0
        %5171 = vmatmul.mubr.bf16.gmra.mxu0 %v5133
        %v5172 = vpop.f32.mrf.mxu0
        %v5173 = vadd.f32 0.0, %v5172
        %v5174 = vpop.f32.mrf.mxu0
        %v5175 = vpop.f32.mrf.mxu0
        %v5176 = vadd.f32 0.0, %v5175
        %v5177 = vpop.f32.mrf.mxu0
        %5178 = vdwg.mxu0
        %v5179 = vsel %vm1221, %v5173, -inf
        %5180 = vmax.xlane.f32.xlu0 %v5179
        %v5181 = vpop.xlane.xlu0 %5180
        %v5182 = vsel %vm1221, %v5176, -inf
        %5183 = vmax.xlane.f32.xlu0 %v5182
        %v5184 = vpop.xlane.xlu0 %5183
        %v5185 = vsub.f32 %v5173, %v5181
        %v5186 = vsub.f32 %v5176, %v5184
        %v5187 = vmul.f32 %v5185, 1.442695
        %v5188 = vpow.pop %v5187
        %v5189 = vmul.f32 %v5186, 1.442695
        %v5190 = vpow.pop %v5189
        %v5191 = vsel %vm1221, %v5188, 0.0
        %5192 = vadd.xlane.f32.xlu0 %v5191
        %v5193 = vpop.xlane.xlu0 %5192
        %v5194 = vsel %vm1221, %v5190, 0.0
        %5195 = vadd.xlane.f32.xlu0 %v5194
        %v5196 = vpop.xlane.xlu0 %5195
        %v5197 = vrcp.pop %v5193
        %v5198 = vrcp.pop %v5196
        %v5199 = vmul.f32 %v5188, %v5197
        %v5200 = vmul.f32 %v5190, %v5198
        %v5201 = vpack.c.bf16 %v5200, %v5199
        %5202 = vrot.lane.b32.xlu0 %v5128, 64
        %v5203 = vpop.permute.xlu0 %5202
        %v5206 = vsel %vm1221, %v5201, 0
        %5208 = vmatprep.subr.bf16.mxu0 0
        %5209 = vmatpush1.bf16.msra.mxu0 0
        %5210 = vmatprep.subr.bf16.mxu0 0
        %5211 = vmatpush1.bf16.msra.mxu0 0
        %5212 = vmatprep.subr.bf16.mxu0 0
        %5213 = vmatpush1.bf16.msra.mxu0 0
        %5214 = vmatprep.subr.bf16.mxu0 0
        %5215 = vmatpush1.bf16.msra.mxu0 0
        %5216 = vmatprep.subr.bf16.mxu0 0
        %5217 = vmatpush1.bf16.msra.mxu0 0
        %5218 = vmatprep.subr.bf16.mxu0 0
        %5219 = vmatpush1.bf16.msra.mxu0 0
        %5220 = vmatprep.subr.bf16.mxu0 0
        %5221 = vmatpush1.bf16.msra.mxu0 0
        %5222 = vmatprep.subr.bf16.mxu0 0
        %5223 = vmatpush1.bf16.msra.mxu0 %v5203
        %5224 = vmatprep.subr.bf16.mxu0 0
        %5225 = vmatpush2.bf16.msra.mxu0 0
        %5226 = vmatprep.subr.bf16.mxu0 0
        %5227 = vmatpush2.bf16.msra.mxu0 0
        %5228 = vmatprep.subr.bf16.mxu0 0
        %5229 = vmatpush2.bf16.msra.mxu0 0
        %5230 = vmatprep.subr.bf16.mxu0 0
        %5231 = vmatpush2.bf16.msra.mxu0 0
        %5232 = vmatprep.subr.bf16.mxu0 0
        %5233 = vmatpush2.bf16.msra.mxu0 0
        %5234 = vmatprep.subr.bf16.mxu0 0
        %5235 = vmatpush2.bf16.msra.mxu0 0
        %5236 = vmatprep.subr.bf16.mxu0 0
        %5237 = vmatpush2.bf16.msra.mxu0 0
        %5238 = vmatprep.subr.bf16.mxu0 0
        %5239 = vmatpush2.bf16.msra.mxu0 0
        %5240 = vmatprep.mubr.bf16.mxu0 0
        %5241 = vmatmul.mubr.bf16.gmra.mxu0 %v5206
        %v5242 = vpop.f32.mrf.mxu0
        %v5243 = vadd.f32 0.0, %v5242
        %v5244 = vpop.f32.mrf.mxu0
        %v5245 = vpop.f32.mrf.mxu0
        %v5246 = vadd.f32 0.0, %v5245
        %v5247 = vpop.f32.mrf.mxu0
        %5248 = vdwg.mxu0
        %5250 = vrot.lane.b32.xlu0 %v5127, 120
        %v5251 = vpop.permute.xlu0 %5250
        %5252 = vrot.lane.b32.xlu0 %v5128, 88
        %v5253 = vpop.permute.xlu0 %5252
        %v5255 = vsel %vm1023, %v5251, 0
        %v5258 = vsel %vm1023, %v5253, 0
        %5260 = vmatprep.subr.bf16.mxu0 0
        %5261 = vmatpush1.bf16.xpose.msra.mxu0 0
        %5262 = vmatprep.subr.bf16.mxu0 0
        %5263 = vmatpush1.bf16.xpose.msra.mxu0 0
        %5264 = vmatprep.subr.bf16.mxu0 0
        %5265 = vmatpush1.bf16.xpose.msra.mxu0 0
        %5266 = vmatprep.subr.bf16.mxu0 0
        %5267 = vmatpush1.bf16.xpose.msra.mxu0 0
        %5268 = vmatprep.subr.bf16.mxu0 0
        %5269 = vmatpush1.bf16.xpose.msra.mxu0 0
        %5270 = vmatprep.subr.bf16.mxu0 0
        %5271 = vmatpush1.bf16.xpose.msra.mxu0 0
        %5272 = vmatprep.subr.bf16.mxu0 0
        %5273 = vmatpush1.bf16.xpose.msra.mxu0 0
        %5274 = vmatprep.subr.bf16.mxu0 0
        %5275 = vmatpush1.bf16.xpose.msra.mxu0 %v5258
        %5276 = vmatprep.subr.bf16.mxu0 0
        %5277 = vmatpush2.bf16.xpose.msra.mxu0 0
        %5278 = vmatprep.subr.bf16.mxu0 0
        %5279 = vmatpush2.bf16.xpose.msra.mxu0 0
        %5280 = vmatprep.subr.bf16.mxu0 0
        %5281 = vmatpush2.bf16.xpose.msra.mxu0 0
        %5282 = vmatprep.subr.bf16.mxu0 0
        %5283 = vmatpush2.bf16.xpose.msra.mxu0 0
        %5284 = vmatprep.subr.bf16.mxu0 0
        %5285 = vmatpush2.bf16.xpose.msra.mxu0 0
        %5286 = vmatprep.subr.bf16.mxu0 0
        %5287 = vmatpush2.bf16.xpose.msra.mxu0 0
        %5288 = vmatprep.subr.bf16.mxu0 0
        %5289 = vmatpush2.bf16.xpose.msra.mxu0 0
        %5290 = vmatprep.subr.bf16.mxu0 0
        %5291 = vmatpush2.bf16.xpose.msra.mxu0 0
        %5292 = vmatprep.mubr.bf16.mxu0 0
        %5293 = vmatmul.mubr.bf16.gmra.mxu0 %v5255
        %v5294 = vpop.f32.mrf.mxu0
        %v5295 = vadd.f32 0.0, %v5294
        %v5296 = vpop.f32.mrf.mxu0
        %v5297 = vpop.f32.mrf.mxu0
        %v5298 = vadd.f32 0.0, %v5297
        %v5299 = vpop.f32.mrf.mxu0
        %5300 = vdwg.mxu0
        %v5301 = vsel %vm1221, %v5295, -inf
        %5302 = vmax.xlane.f32.xlu0 %v5301
        %v5303 = vpop.xlane.xlu0 %5302
        %v5304 = vsel %vm1221, %v5298, -inf
        %5305 = vmax.xlane.f32.xlu0 %v5304
        %v5306 = vpop.xlane.xlu0 %5305
        %v5307 = vsub.f32 %v5295, %v5303
        %v5308 = vsub.f32 %v5298, %v5306
        %v5309 = vmul.f32 %v5307, 1.442695
        %v5310 = vpow.pop %v5309
        %v5311 = vmul.f32 %v5308, 1.442695
        %v5312 = vpow.pop %v5311
        %v5313 = vsel %vm1221, %v5310, 0.0
        %5314 = vadd.xlane.f32.xlu0 %v5313
        %v5315 = vpop.xlane.xlu0 %5314
        %v5316 = vsel %vm1221, %v5312, 0.0
        %5317 = vadd.xlane.f32.xlu0 %v5316
        %v5318 = vpop.xlane.xlu0 %5317
        %v5319 = vrcp.pop %v5315
        %v5320 = vrcp.pop %v5318
        %v5321 = vmul.f32 %v5310, %v5319
        %v5322 = vmul.f32 %v5312, %v5320
        %v5323 = vpack.c.bf16 %v5322, %v5321
        %5324 = vrot.lane.b32.xlu0 %v5128, 56
        %v5325 = vpop.permute.xlu0 %5324
        %v5328 = vsel %vm1221, %v5323, 0
        %5330 = vmatprep.subr.bf16.mxu0 0
        %5331 = vmatpush1.bf16.msra.mxu0 0
        %5332 = vmatprep.subr.bf16.mxu0 0
        %5333 = vmatpush1.bf16.msra.mxu0 0
        %5334 = vmatprep.subr.bf16.mxu0 0
        %5335 = vmatpush1.bf16.msra.mxu0 0
        %5336 = vmatprep.subr.bf16.mxu0 0
        %5337 = vmatpush1.bf16.msra.mxu0 0
        %5338 = vmatprep.subr.bf16.mxu0 0
        %5339 = vmatpush1.bf16.msra.mxu0 0
        %5340 = vmatprep.subr.bf16.mxu0 0
        %5341 = vmatpush1.bf16.msra.mxu0 0
        %5342 = vmatprep.subr.bf16.mxu0 0
        %5343 = vmatpush1.bf16.msra.mxu0 0
        %5344 = vmatprep.subr.bf16.mxu0 0
        %5345 = vmatpush1.bf16.msra.mxu0 %v5325
        %5346 = vmatprep.subr.bf16.mxu0 0
        %5347 = vmatpush2.bf16.msra.mxu0 0
        %5348 = vmatprep.subr.bf16.mxu0 0
        %5349 = vmatpush2.bf16.msra.mxu0 0
        %5350 = vmatprep.subr.bf16.mxu0 0
        %5351 = vmatpush2.bf16.msra.mxu0 0
        %5352 = vmatprep.subr.bf16.mxu0 0
        %5353 = vmatpush2.bf16.msra.mxu0 0
        %5354 = vmatprep.subr.bf16.mxu0 0
        %5355 = vmatpush2.bf16.msra.mxu0 0
        %5356 = vmatprep.subr.bf16.mxu0 0
        %5357 = vmatpush2.bf16.msra.mxu0 0
        %5358 = vmatprep.subr.bf16.mxu0 0
        %5359 = vmatpush2.bf16.msra.mxu0 0
        %5360 = vmatprep.subr.bf16.mxu0 0
        %5361 = vmatpush2.bf16.msra.mxu0 0
        %5362 = vmatprep.mubr.bf16.mxu0 0
        %5363 = vmatmul.mubr.bf16.gmra.mxu0 %v5328
        %v5364 = vpop.f32.mrf.mxu0
        %v5365 = vadd.f32 0.0, %v5364
        %v5366 = vpop.f32.mrf.mxu0
        %v5367 = vpop.f32.mrf.mxu0
        %v5368 = vadd.f32 0.0, %v5367
        %v5369 = vpop.f32.mrf.mxu0
        %5370 = vdwg.mxu0
        %5371 = vrot.lane.b32.xlu0 %v5127, 112
        %v5372 = vpop.permute.xlu0 %5371
        %5373 = vrot.lane.b32.xlu0 %v5128, 80
        %v5374 = vpop.permute.xlu0 %5373
        %v5376 = vsel %vm1023, %v5372, 0
        %v5379 = vsel %vm1023, %v5374, 0
        %5381 = vmatprep.subr.bf16.mxu0 0
        %5382 = vmatpush1.bf16.xpose.msra.mxu0 0
        %5383 = vmatprep.subr.bf16.mxu0 0
        %5384 = vmatpush1.bf16.xpose.msra.mxu0 0
        %5385 = vmatprep.subr.bf16.mxu0 0
        %5386 = vmatpush1.bf16.xpose.msra.mxu0 0
        %5387 = vmatprep.subr.bf16.mxu0 0
        %5388 = vmatpush1.bf16.xpose.msra.mxu0 0
        %5389 = vmatprep.subr.bf16.mxu0 0
        %5390 = vmatpush1.bf16.xpose.msra.mxu0 0
        %5391 = vmatprep.subr.bf16.mxu0 0
        %5392 = vmatpush1.bf16.xpose.msra.mxu0 0
        %5393 = vmatprep.subr.bf16.mxu0 0
        %5394 = vmatpush1.bf16.xpose.msra.mxu0 0
        %5395 = vmatprep.subr.bf16.mxu0 0
        %5396 = vmatpush1.bf16.xpose.msra.mxu0 %v5379
        %5397 = vmatprep.subr.bf16.mxu0 0
        %5398 = vmatpush2.bf16.xpose.msra.mxu0 0
        %5399 = vmatprep.subr.bf16.mxu0 0
        %5400 = vmatpush2.bf16.xpose.msra.mxu0 0
        %5401 = vmatprep.subr.bf16.mxu0 0
        %5402 = vmatpush2.bf16.xpose.msra.mxu0 0
        %5403 = vmatprep.subr.bf16.mxu0 0
        %5404 = vmatpush2.bf16.xpose.msra.mxu0 0
        %5405 = vmatprep.subr.bf16.mxu0 0
        %5406 = vmatpush2.bf16.xpose.msra.mxu0 0
        %5407 = vmatprep.subr.bf16.mxu0 0
        %5408 = vmatpush2.bf16.xpose.msra.mxu0 0
        %5409 = vmatprep.subr.bf16.mxu0 0
        %5410 = vmatpush2.bf16.xpose.msra.mxu0 0
        %5411 = vmatprep.subr.bf16.mxu0 0
        %5412 = vmatpush2.bf16.xpose.msra.mxu0 0
        %5413 = vmatprep.mubr.bf16.mxu0 0
        %5414 = vmatmul.mubr.bf16.gmra.mxu0 %v5376
        %v5415 = vpop.f32.mrf.mxu0
        %v5416 = vadd.f32 0.0, %v5415
        %v5417 = vpop.f32.mrf.mxu0
        %v5418 = vpop.f32.mrf.mxu0
        %v5419 = vadd.f32 0.0, %v5418
        %v5420 = vpop.f32.mrf.mxu0
        %5421 = vdwg.mxu0
        %v5422 = vsel %vm1221, %v5416, -inf
        %5423 = vmax.xlane.f32.xlu0 %v5422
        %v5424 = vpop.xlane.xlu0 %5423
        %v5425 = vsel %vm1221, %v5419, -inf
        %5426 = vmax.xlane.f32.xlu0 %v5425
        %v5427 = vpop.xlane.xlu0 %5426
        %v5428 = vsub.f32 %v5416, %v5424
        %v5429 = vsub.f32 %v5419, %v5427
        %v5430 = vmul.f32 %v5428, 1.442695
        %v5431 = vpow.pop %v5430
        %v5432 = vmul.f32 %v5429, 1.442695
        %v5433 = vpow.pop %v5432
        %v5434 = vsel %vm1221, %v5431, 0.0
        %5435 = vadd.xlane.f32.xlu0 %v5434
        %v5436 = vpop.xlane.xlu0 %5435
        %v5437 = vsel %vm1221, %v5433, 0.0
        %5438 = vadd.xlane.f32.xlu0 %v5437
        %v5439 = vpop.xlane.xlu0 %5438
        %v5440 = vrcp.pop %v5436
        %v5441 = vrcp.pop %v5439
        %v5442 = vmul.f32 %v5431, %v5440
        %v5443 = vmul.f32 %v5433, %v5441
        %v5444 = vpack.c.bf16 %v5443, %v5442
        %5445 = vrot.lane.b32.xlu0 %v5128, 48
        %v5446 = vpop.permute.xlu0 %5445
        %v5449 = vsel %vm1221, %v5444, 0
        %5451 = vmatprep.subr.bf16.mxu0 0
        %5452 = vmatpush1.bf16.msra.mxu0 0
        %5453 = vmatprep.subr.bf16.mxu0 0
        %5454 = vmatpush1.bf16.msra.mxu0 0
        %5455 = vmatprep.subr.bf16.mxu0 0
        %5456 = vmatpush1.bf16.msra.mxu0 0
        %5457 = vmatprep.subr.bf16.mxu0 0
        %5458 = vmatpush1.bf16.msra.mxu0 0
        %5459 = vmatprep.subr.bf16.mxu0 0
        %5460 = vmatpush1.bf16.msra.mxu0 0
        %5461 = vmatprep.subr.bf16.mxu0 0
        %5462 = vmatpush1.bf16.msra.mxu0 0
        %5463 = vmatprep.subr.bf16.mxu0 0
        %5464 = vmatpush1.bf16.msra.mxu0 0
        %5465 = vmatprep.subr.bf16.mxu0 0
        %5466 = vmatpush1.bf16.msra.mxu0 %v5446
        %5467 = vmatprep.subr.bf16.mxu0 0
        %5468 = vmatpush2.bf16.msra.mxu0 0
        %5469 = vmatprep.subr.bf16.mxu0 0
        %5470 = vmatpush2.bf16.msra.mxu0 0
        %5471 = vmatprep.subr.bf16.mxu0 0
        %5472 = vmatpush2.bf16.msra.mxu0 0
        %5473 = vmatprep.subr.bf16.mxu0 0
        %5474 = vmatpush2.bf16.msra.mxu0 0
        %5475 = vmatprep.subr.bf16.mxu0 0
        %5476 = vmatpush2.bf16.msra.mxu0 0
        %5477 = vmatprep.subr.bf16.mxu0 0
        %5478 = vmatpush2.bf16.msra.mxu0 0
        %5479 = vmatprep.subr.bf16.mxu0 0
        %5480 = vmatpush2.bf16.msra.mxu0 0
        %5481 = vmatprep.subr.bf16.mxu0 0
        %5482 = vmatpush2.bf16.msra.mxu0 0
        %5483 = vmatprep.mubr.bf16.mxu0 0
        %5484 = vmatmul.mubr.bf16.gmra.mxu0 %v5449
        %v5485 = vpop.f32.mrf.mxu0
        %v5486 = vadd.f32 0.0, %v5485
        %v5487 = vpop.f32.mrf.mxu0
        %v5488 = vpop.f32.mrf.mxu0
        %v5489 = vadd.f32 0.0, %v5488
        %v5490 = vpop.f32.mrf.mxu0
        %5491 = vdwg.mxu0
        %5492 = vrot.lane.b32.xlu0 %v5127, 104
        %v5493 = vpop.permute.xlu0 %5492
        %5494 = vrot.lane.b32.xlu0 %v5128, 72
        %v5495 = vpop.permute.xlu0 %5494
        %v5497 = vsel %vm1023, %v5493, 0
        %v5500 = vsel %vm1023, %v5495, 0
        %5502 = vmatprep.subr.bf16.mxu0 0
        %5503 = vmatpush1.bf16.xpose.msra.mxu0 0
        %5504 = vmatprep.subr.bf16.mxu0 0
        %5505 = vmatpush1.bf16.xpose.msra.mxu0 0
        %5506 = vmatprep.subr.bf16.mxu0 0
        %5507 = vmatpush1.bf16.xpose.msra.mxu0 0
        %5508 = vmatprep.subr.bf16.mxu0 0
        %5509 = vmatpush1.bf16.xpose.msra.mxu0 0
        %5510 = vmatprep.subr.bf16.mxu0 0
        %5511 = vmatpush1.bf16.xpose.msra.mxu0 0
        %5512 = vmatprep.subr.bf16.mxu0 0
        %5513 = vmatpush1.bf16.xpose.msra.mxu0 0
        %5514 = vmatprep.subr.bf16.mxu0 0
        %5515 = vmatpush1.bf16.xpose.msra.mxu0 0
        %5516 = vmatprep.subr.bf16.mxu0 0
        %5517 = vmatpush1.bf16.xpose.msra.mxu0 %v5500
        %5518 = vmatprep.subr.bf16.mxu0 0
        %5519 = vmatpush2.bf16.xpose.msra.mxu0 0
        %5520 = vmatprep.subr.bf16.mxu0 0
        %5521 = vmatpush2.bf16.xpose.msra.mxu0 0
        %5522 = vmatprep.subr.bf16.mxu0 0
        %5523 = vmatpush2.bf16.xpose.msra.mxu0 0
        %5524 = vmatprep.subr.bf16.mxu0 0
        %5525 = vmatpush2.bf16.xpose.msra.mxu0 0
        %5526 = vmatprep.subr.bf16.mxu0 0
        %5527 = vmatpush2.bf16.xpose.msra.mxu0 0
        %5528 = vmatprep.subr.bf16.mxu0 0
        %5529 = vmatpush2.bf16.xpose.msra.mxu0 0
        %5530 = vmatprep.subr.bf16.mxu0 0
        %5531 = vmatpush2.bf16.xpose.msra.mxu0 0
        %5532 = vmatprep.subr.bf16.mxu0 0
        %5533 = vmatpush2.bf16.xpose.msra.mxu0 0
        %5534 = vmatprep.mubr.bf16.mxu0 0
        %5535 = vmatmul.mubr.bf16.gmra.mxu0 %v5497
        %v5536 = vpop.f32.mrf.mxu0
        %v5537 = vadd.f32 0.0, %v5536
        %v5538 = vpop.f32.mrf.mxu0
        %v5539 = vpop.f32.mrf.mxu0
        %v5540 = vadd.f32 0.0, %v5539
        %v5541 = vpop.f32.mrf.mxu0
        %5542 = vdwg.mxu0
        %v5543 = vsel %vm1221, %v5537, -inf
        %5544 = vmax.xlane.f32.xlu0 %v5543
        %v5545 = vpop.xlane.xlu0 %5544
        %v5546 = vsel %vm1221, %v5540, -inf
        %5547 = vmax.xlane.f32.xlu0 %v5546
        %v5548 = vpop.xlane.xlu0 %5547
        %v5549 = vsub.f32 %v5537, %v5545
        %v5550 = vsub.f32 %v5540, %v5548
        %v5551 = vmul.f32 %v5549, 1.442695
        %v5552 = vpow.pop %v5551
        %v5553 = vmul.f32 %v5550, 1.442695
        %v5554 = vpow.pop %v5553
        %v5555 = vsel %vm1221, %v5552, 0.0
        %5556 = vadd.xlane.f32.xlu0 %v5555
        %v5557 = vpop.xlane.xlu0 %5556
        %v5558 = vsel %vm1221, %v5554, 0.0
        %5559 = vadd.xlane.f32.xlu0 %v5558
        %v5560 = vpop.xlane.xlu0 %5559
        %v5561 = vrcp.pop %v5557
        %v5562 = vrcp.pop %v5560
        %v5563 = vmul.f32 %v5552, %v5561
        %v5564 = vmul.f32 %v5554, %v5562
        %v5565 = vpack.c.bf16 %v5564, %v5563
        %5566 = vrot.lane.b32.xlu0 %v5128, 40
        %v5567 = vpop.permute.xlu0 %5566
        %v5570 = vsel %vm1221, %v5565, 0
        %5572 = vmatprep.subr.bf16.mxu0 0
        %5573 = vmatpush1.bf16.msra.mxu0 0
        %5574 = vmatprep.subr.bf16.mxu0 0
        %5575 = vmatpush1.bf16.msra.mxu0 0
        %5576 = vmatprep.subr.bf16.mxu0 0
        %5577 = vmatpush1.bf16.msra.mxu0 0
        %5578 = vmatprep.subr.bf16.mxu0 0
        %5579 = vmatpush1.bf16.msra.mxu0 0
        %5580 = vmatprep.subr.bf16.mxu0 0
        %5581 = vmatpush1.bf16.msra.mxu0 0
        %5582 = vmatprep.subr.bf16.mxu0 0
        %5583 = vmatpush1.bf16.msra.mxu0 0
        %5584 = vmatprep.subr.bf16.mxu0 0
        %5585 = vmatpush1.bf16.msra.mxu0 0
        %5586 = vmatprep.subr.bf16.mxu0 0
        %5587 = vmatpush1.bf16.msra.mxu0 %v5567
        %5588 = vmatprep.subr.bf16.mxu0 0
        %5589 = vmatpush2.bf16.msra.mxu0 0
        %5590 = vmatprep.subr.bf16.mxu0 0
        %5591 = vmatpush2.bf16.msra.mxu0 0
        %5592 = vmatprep.subr.bf16.mxu0 0
        %5593 = vmatpush2.bf16.msra.mxu0 0
        %5594 = vmatprep.subr.bf16.mxu0 0
        %5595 = vmatpush2.bf16.msra.mxu0 0
        %5596 = vmatprep.subr.bf16.mxu0 0
        %5597 = vmatpush2.bf16.msra.mxu0 0
        %5598 = vmatprep.subr.bf16.mxu0 0
        %5599 = vmatpush2.bf16.msra.mxu0 0
        %5600 = vmatprep.subr.bf16.mxu0 0
        %5601 = vmatpush2.bf16.msra.mxu0 0
        %5602 = vmatprep.subr.bf16.mxu0 0
        %5603 = vmatpush2.bf16.msra.mxu0 0
        %5604 = vmatprep.mubr.bf16.mxu0 0
        %5605 = vmatmul.mubr.bf16.gmra.mxu0 %v5570
        %v5606 = vpop.f32.mrf.mxu0
        %v5607 = vadd.f32 0.0, %v5606
        %v5608 = vpop.f32.mrf.mxu0
        %v5609 = vpop.f32.mrf.mxu0
        %v5610 = vadd.f32 0.0, %v5609
        %v5611 = vpop.f32.mrf.mxu0
        %5612 = vdwg.mxu0
        %5615 = vrot.lane.b32.xlu0 %v5365, 8
        %v5616 = vpop.permute.xlu0 %5615
        %5617 = vrot.lane.b32.xlu0 %v5368, 8
        %v5618 = vpop.permute.xlu0 %5617
        %5623 = vrot.lane.b32.xlu0 %v5486, 16
        %v5624 = vpop.permute.xlu0 %5623
        %5625 = vrot.lane.b32.xlu0 %v5489, 16
        %v5626 = vpop.permute.xlu0 %5625
        %5631 = vrot.lane.b32.xlu0 %v5607, 24
        %v5632 = vpop.permute.xlu0 %5631
        %5633 = vrot.lane.b32.xlu0 %v5610, 24
        %v5634 = vpop.permute.xlu0 %5633
        %v5637 = vsel %vm1023, %v5243, %v5616
        %v5638 = vsel %vm1023, %v5246, %v5618
        %v5639 = vsel %vm1221, %v5637, %v5624
        %v5640 = vsel %vm1221, %v5638, %v5626
        %v5641 = vsel %vm3066, %v5639, %v5632
        %v5642 = vsel %vm3066, %v5640, %v5634
        %v5643 = vpack.c.bf16 %v5642, %v5641
        %v5645 = vsel %vm938, %v5643, 0
        %5647 = vmatprep.subr.bf16.mxu0 0
        %5648 = vmatpush1.bf16.msra.mxu0 0
        %5649 = vmatprep.subr.bf16.mxu0 0
        %5650 = vmatpush1.bf16.msra.mxu0 0
        %5651 = vmatprep.subr.bf16.mxu0 0
        %5652 = vmatpush1.bf16.msra.mxu0 0
        %5653 = vmatprep.subr.bf16.mxu0 0
        %5654 = vmatpush1.bf16.msra.mxu0 0
        %5655 = vmatprep.subr.bf16.mxu0 0
        %5656 = vmatpush1.bf16.msra.mxu0 0
        %5657 = vmatprep.subr.bf16.mxu0 0
        %5658 = vmatpush1.bf16.msra.mxu0 0
        %5659 = vmatprep.subr.bf16.mxu0 0
        %5660 = vmatpush1.bf16.msra.mxu0 %v4425
        %5661 = vmatprep.subr.bf16.mxu0 0
        %5662 = vmatpush1.bf16.msra.mxu0 %v4424
        %5663 = vmatprep.subr.bf16.mxu0 0
        %5664 = vmatpush2.bf16.msra.mxu0 0
        %5665 = vmatprep.subr.bf16.mxu0 0
        %5666 = vmatpush2.bf16.msra.mxu0 0
        %5667 = vmatprep.subr.bf16.mxu0 0
        %5668 = vmatpush2.bf16.msra.mxu0 0
        %5669 = vmatprep.subr.bf16.mxu0 0
        %5670 = vmatpush2.bf16.msra.mxu0 0
        %5671 = vmatprep.subr.bf16.mxu0 0
        %5672 = vmatpush2.bf16.msra.mxu0 0
        %5673 = vmatprep.subr.bf16.mxu0 0
        %5674 = vmatpush2.bf16.msra.mxu0 0
        %5675 = vmatprep.subr.bf16.mxu0 0
        %5676 = vmatpush2.bf16.msra.mxu0 0
        %5677 = vmatprep.subr.bf16.mxu0 0
        %5678 = vmatpush2.bf16.msra.mxu0 0
        %5679 = vmatprep.mubr.bf16.mxu0 0
        %5680 = vmatmul.mubr.bf16.gmra.mxu0 %v5645
        %v5681 = vpop.f32.mrf.mxu0
        %v5682 = vadd.f32 %v4414, %v5681
        %v5683 = vpop.f32.mrf.mxu0
        %v5684 = vpop.f32.mrf.mxu0
        %v5685 = vadd.f32 %v4414, %v5684
        %v5686 = vpop.f32.mrf.mxu0
        %5687 = vdwg.mxu0
        %5688 = vrot.lane.b32.xlu0 %v5127, 96
        %v5689 = vpop.permute.xlu0 %5688
        %v5691 = vsel %vm1023, %v5128, 0
        %v5694 = vsel %vm1023, %v5689, 0
        %5696 = vmatprep.subr.bf16.mxu0 0
        %5697 = vmatpush1.bf16.xpose.msra.mxu0 0
        %5698 = vmatprep.subr.bf16.mxu0 0
        %5699 = vmatpush1.bf16.xpose.msra.mxu0 0
        %5700 = vmatprep.subr.bf16.mxu0 0
        %5701 = vmatpush1.bf16.xpose.msra.mxu0 0
        %5702 = vmatprep.subr.bf16.mxu0 0
        %5703 = vmatpush1.bf16.xpose.msra.mxu0 0
        %5704 = vmatprep.subr.bf16.mxu0 0
        %5705 = vmatpush1.bf16.xpose.msra.mxu0 0
        %5706 = vmatprep.subr.bf16.mxu0 0
        %5707 = vmatpush1.bf16.xpose.msra.mxu0 0
        %5708 = vmatprep.subr.bf16.mxu0 0
        %5709 = vmatpush1.bf16.xpose.msra.mxu0 0
        %5710 = vmatprep.subr.bf16.mxu0 0
        %5711 = vmatpush1.bf16.xpose.msra.mxu0 %v5694
        %5712 = vmatprep.subr.bf16.mxu0 0
        %5713 = vmatpush2.bf16.xpose.msra.mxu0 0
        %5714 = vmatprep.subr.bf16.mxu0 0
        %5715 = vmatpush2.bf16.xpose.msra.mxu0 0
        %5716 = vmatprep.subr.bf16.mxu0 0
        %5717 = vmatpush2.bf16.xpose.msra.mxu0 0
        %5718 = vmatprep.subr.bf16.mxu0 0
        %5719 = vmatpush2.bf16.xpose.msra.mxu0 0
        %5720 = vmatprep.subr.bf16.mxu0 0
        %5721 = vmatpush2.bf16.xpose.msra.mxu0 0
        %5722 = vmatprep.subr.bf16.mxu0 0
        %5723 = vmatpush2.bf16.xpose.msra.mxu0 0
        %5724 = vmatprep.subr.bf16.mxu0 0
        %5725 = vmatpush2.bf16.xpose.msra.mxu0 0
        %5726 = vmatprep.subr.bf16.mxu0 0
        %5727 = vmatpush2.bf16.xpose.msra.mxu0 0
        %5728 = vmatprep.mubr.bf16.mxu0 0
        %5729 = vmatmul.mubr.bf16.gmra.mxu0 %v5691
        %v5730 = vpop.f32.mrf.mxu0
        %v5731 = vadd.f32 0.0, %v5730
        %v5732 = vpop.f32.mrf.mxu0
        %v5733 = vpop.f32.mrf.mxu0
        %v5734 = vadd.f32 0.0, %v5733
        %v5735 = vpop.f32.mrf.mxu0
        %5736 = vdwg.mxu0
        %v5737 = vsel %vm1221, %v5731, -inf
        %5738 = vmax.xlane.f32.xlu0 %v5737
        %v5739 = vpop.xlane.xlu0 %5738
        %v5740 = vsel %vm1221, %v5734, -inf
        %5741 = vmax.xlane.f32.xlu0 %v5740
        %v5742 = vpop.xlane.xlu0 %5741
        %v5743 = vsub.f32 %v5731, %v5739
        %v5744 = vsub.f32 %v5734, %v5742
        %v5745 = vmul.f32 %v5743, 1.442695
        %v5746 = vpow.pop %v5745
        %v5747 = vmul.f32 %v5744, 1.442695
        %v5748 = vpow.pop %v5747
        %v5749 = vsel %vm1221, %v5746, 0.0
        %5750 = vadd.xlane.f32.xlu0 %v5749
        %v5751 = vpop.xlane.xlu0 %5750
        %v5752 = vsel %vm1221, %v5748, 0.0
        %5753 = vadd.xlane.f32.xlu0 %v5752
        %v5754 = vpop.xlane.xlu0 %5753
        %v5755 = vrcp.pop %v5751
        %v5756 = vrcp.pop %v5754
        %v5757 = vmul.f32 %v5746, %v5755
        %v5758 = vmul.f32 %v5748, %v5756
        %v5759 = vpack.c.bf16 %v5758, %v5757
        %5760 = vrot.lane.b32.xlu0 %v5127, 64
        %v5761 = vpop.permute.xlu0 %5760
        %v5764 = vsel %vm1221, %v5759, 0
        %5766 = vmatprep.subr.bf16.mxu0 0
        %5767 = vmatpush1.bf16.msra.mxu0 0
        %5768 = vmatprep.subr.bf16.mxu0 0
        %5769 = vmatpush1.bf16.msra.mxu0 0
        %5770 = vmatprep.subr.bf16.mxu0 0
        %5771 = vmatpush1.bf16.msra.mxu0 0
        %5772 = vmatprep.subr.bf16.mxu0 0
        %5773 = vmatpush1.bf16.msra.mxu0 0
        %5774 = vmatprep.subr.bf16.mxu0 0
        %5775 = vmatpush1.bf16.msra.mxu0 0
        %5776 = vmatprep.subr.bf16.mxu0 0
        %5777 = vmatpush1.bf16.msra.mxu0 0
        %5778 = vmatprep.subr.bf16.mxu0 0
        %5779 = vmatpush1.bf16.msra.mxu0 0
        %5780 = vmatprep.subr.bf16.mxu0 0
        %5781 = vmatpush1.bf16.msra.mxu0 %v5761
        %5782 = vmatprep.subr.bf16.mxu0 0
        %5783 = vmatpush2.bf16.msra.mxu0 0
        %5784 = vmatprep.subr.bf16.mxu0 0
        %5785 = vmatpush2.bf16.msra.mxu0 0
        %5786 = vmatprep.subr.bf16.mxu0 0
        %5787 = vmatpush2.bf16.msra.mxu0 0
        %5788 = vmatprep.subr.bf16.mxu0 0
        %5789 = vmatpush2.bf16.msra.mxu0 0
        %5790 = vmatprep.subr.bf16.mxu0 0
        %5791 = vmatpush2.bf16.msra.mxu0 0
        %5792 = vmatprep.subr.bf16.mxu0 0
        %5793 = vmatpush2.bf16.msra.mxu0 0
        %5794 = vmatprep.subr.bf16.mxu0 0
        %5795 = vmatpush2.bf16.msra.mxu0 0
        %5796 = vmatprep.subr.bf16.mxu0 0
        %5797 = vmatpush2.bf16.msra.mxu0 0
        %5798 = vmatprep.mubr.bf16.mxu0 0
        %5799 = vmatmul.mubr.bf16.gmra.mxu0 %v5764
        %v5800 = vpop.f32.mrf.mxu0
        %v5801 = vadd.f32 0.0, %v5800
        %v5802 = vpop.f32.mrf.mxu0
        %v5803 = vpop.f32.mrf.mxu0
        %v5804 = vadd.f32 0.0, %v5803
        %v5805 = vpop.f32.mrf.mxu0
        %5806 = vdwg.mxu0
        %5807 = vrot.lane.b32.xlu0 %v5128, 120
        %v5808 = vpop.permute.xlu0 %5807
        %5809 = vrot.lane.b32.xlu0 %v5127, 88
        %v5810 = vpop.permute.xlu0 %5809
        %v5812 = vsel %vm1023, %v5808, 0
        %v5815 = vsel %vm1023, %v5810, 0
        %5817 = vmatprep.subr.bf16.mxu0 0
        %5818 = vmatpush1.bf16.xpose.msra.mxu0 0
        %5819 = vmatprep.subr.bf16.mxu0 0
        %5820 = vmatpush1.bf16.xpose.msra.mxu0 0
        %5821 = vmatprep.subr.bf16.mxu0 0
        %5822 = vmatpush1.bf16.xpose.msra.mxu0 0
        %5823 = vmatprep.subr.bf16.mxu0 0
        %5824 = vmatpush1.bf16.xpose.msra.mxu0 0
        %5825 = vmatprep.subr.bf16.mxu0 0
        %5826 = vmatpush1.bf16.xpose.msra.mxu0 0
        %5827 = vmatprep.subr.bf16.mxu0 0
        %5828 = vmatpush1.bf16.xpose.msra.mxu0 0
        %5829 = vmatprep.subr.bf16.mxu0 0
        %5830 = vmatpush1.bf16.xpose.msra.mxu0 0
        %5831 = vmatprep.subr.bf16.mxu0 0
        %5832 = vmatpush1.bf16.xpose.msra.mxu0 %v5815
        %5833 = vmatprep.subr.bf16.mxu0 0
        %5834 = vmatpush2.bf16.xpose.msra.mxu0 0
        %5835 = vmatprep.subr.bf16.mxu0 0
        %5836 = vmatpush2.bf16.xpose.msra.mxu0 0
        %5837 = vmatprep.subr.bf16.mxu0 0
        %5838 = vmatpush2.bf16.xpose.msra.mxu0 0
        %5839 = vmatprep.subr.bf16.mxu0 0
        %5840 = vmatpush2.bf16.xpose.msra.mxu0 0
        %5841 = vmatprep.subr.bf16.mxu0 0
        %5842 = vmatpush2.bf16.xpose.msra.mxu0 0
        %5843 = vmatprep.subr.bf16.mxu0 0
        %5844 = vmatpush2.bf16.xpose.msra.mxu0 0
        %5845 = vmatprep.subr.bf16.mxu0 0
        %5846 = vmatpush2.bf16.xpose.msra.mxu0 0
        %5847 = vmatprep.subr.bf16.mxu0 0
        %5848 = vmatpush2.bf16.xpose.msra.mxu0 0
        %5849 = vmatprep.mubr.bf16.mxu0 0
        %5850 = vmatmul.mubr.bf16.gmra.mxu0 %v5812
        %v5851 = vpop.f32.mrf.mxu0
        %v5852 = vadd.f32 0.0, %v5851
        %v5853 = vpop.f32.mrf.mxu0
        %v5854 = vpop.f32.mrf.mxu0
        %v5855 = vadd.f32 0.0, %v5854
        %v5856 = vpop.f32.mrf.mxu0
        %5857 = vdwg.mxu0
        %v5858 = vsel %vm1221, %v5852, -inf
        %5859 = vmax.xlane.f32.xlu0 %v5858
        %v5860 = vpop.xlane.xlu0 %5859
        %v5861 = vsel %vm1221, %v5855, -inf
        %5862 = vmax.xlane.f32.xlu0 %v5861
        %v5863 = vpop.xlane.xlu0 %5862
        %v5864 = vsub.f32 %v5852, %v5860
        %v5865 = vsub.f32 %v5855, %v5863
        %v5866 = vmul.f32 %v5864, 1.442695
        %v5867 = vpow.pop %v5866
        %v5868 = vmul.f32 %v5865, 1.442695
        %v5869 = vpow.pop %v5868
        %v5870 = vsel %vm1221, %v5867, 0.0
        %5871 = vadd.xlane.f32.xlu0 %v5870
        %v5872 = vpop.xlane.xlu0 %5871
        %v5873 = vsel %vm1221, %v5869, 0.0
        %5874 = vadd.xlane.f32.xlu0 %v5873
        %v5875 = vpop.xlane.xlu0 %5874
        %v5876 = vrcp.pop %v5872
        %v5877 = vrcp.pop %v5875
        %v5878 = vmul.f32 %v5867, %v5876
        %v5879 = vmul.f32 %v5869, %v5877
        %v5880 = vpack.c.bf16 %v5879, %v5878
        %5881 = vrot.lane.b32.xlu0 %v5127, 56
        %v5882 = vpop.permute.xlu0 %5881
        %v5885 = vsel %vm1221, %v5880, 0
        %5887 = vmatprep.subr.bf16.mxu0 0
        %5888 = vmatpush1.bf16.msra.mxu0 0
        %5889 = vmatprep.subr.bf16.mxu0 0
        %5890 = vmatpush1.bf16.msra.mxu0 0
        %5891 = vmatprep.subr.bf16.mxu0 0
        %5892 = vmatpush1.bf16.msra.mxu0 0
        %5893 = vmatprep.subr.bf16.mxu0 0
        %5894 = vmatpush1.bf16.msra.mxu0 0
        %5895 = vmatprep.subr.bf16.mxu0 0
        %5896 = vmatpush1.bf16.msra.mxu0 0
        %5897 = vmatprep.subr.bf16.mxu0 0
        %5898 = vmatpush1.bf16.msra.mxu0 0
        %5899 = vmatprep.subr.bf16.mxu0 0
        %5900 = vmatpush1.bf16.msra.mxu0 0
        %5901 = vmatprep.subr.bf16.mxu0 0
        %5902 = vmatpush1.bf16.msra.mxu0 %v5882
        %5903 = vmatprep.subr.bf16.mxu0 0
        %5904 = vmatpush2.bf16.msra.mxu0 0
        %5905 = vmatprep.subr.bf16.mxu0 0
        %5906 = vmatpush2.bf16.msra.mxu0 0
        %5907 = vmatprep.subr.bf16.mxu0 0
        %5908 = vmatpush2.bf16.msra.mxu0 0
        %5909 = vmatprep.subr.bf16.mxu0 0
        %5910 = vmatpush2.bf16.msra.mxu0 0
        %5911 = vmatprep.subr.bf16.mxu0 0
        %5912 = vmatpush2.bf16.msra.mxu0 0
        %5913 = vmatprep.subr.bf16.mxu0 0
        %5914 = vmatpush2.bf16.msra.mxu0 0
        %5915 = vmatprep.subr.bf16.mxu0 0
        %5916 = vmatpush2.bf16.msra.mxu0 0
        %5917 = vmatprep.subr.bf16.mxu0 0
        %5918 = vmatpush2.bf16.msra.mxu0 0
        %5919 = vmatprep.mubr.bf16.mxu0 0
        %5920 = vmatmul.mubr.bf16.gmra.mxu0 %v5885
        %v5921 = vpop.f32.mrf.mxu0
        %v5922 = vadd.f32 0.0, %v5921
        %v5923 = vpop.f32.mrf.mxu0
        %v5924 = vpop.f32.mrf.mxu0
        %v5925 = vadd.f32 0.0, %v5924
        %v5926 = vpop.f32.mrf.mxu0
        %5927 = vdwg.mxu0
        %5928 = vrot.lane.b32.xlu0 %v5128, 112
        %v5929 = vpop.permute.xlu0 %5928
        %5930 = vrot.lane.b32.xlu0 %v5127, 80
        %v5931 = vpop.permute.xlu0 %5930
        %v5933 = vsel %vm1023, %v5929, 0
        %v5936 = vsel %vm1023, %v5931, 0
        %5938 = vmatprep.subr.bf16.mxu0 0
        %5939 = vmatpush1.bf16.xpose.msra.mxu0 0
        %5940 = vmatprep.subr.bf16.mxu0 0
        %5941 = vmatpush1.bf16.xpose.msra.mxu0 0
        %5942 = vmatprep.subr.bf16.mxu0 0
        %5943 = vmatpush1.bf16.xpose.msra.mxu0 0
        %5944 = vmatprep.subr.bf16.mxu0 0
        %5945 = vmatpush1.bf16.xpose.msra.mxu0 0
        %5946 = vmatprep.subr.bf16.mxu0 0
        %5947 = vmatpush1.bf16.xpose.msra.mxu0 0
        %5948 = vmatprep.subr.bf16.mxu0 0
        %5949 = vmatpush1.bf16.xpose.msra.mxu0 0
        %5950 = vmatprep.subr.bf16.mxu0 0
        %5951 = vmatpush1.bf16.xpose.msra.mxu0 0
        %5952 = vmatprep.subr.bf16.mxu0 0
        %5953 = vmatpush1.bf16.xpose.msra.mxu0 %v5936
        %5954 = vmatprep.subr.bf16.mxu0 0
        %5955 = vmatpush2.bf16.xpose.msra.mxu0 0
        %5956 = vmatprep.subr.bf16.mxu0 0
        %5957 = vmatpush2.bf16.xpose.msra.mxu0 0
        %5958 = vmatprep.subr.bf16.mxu0 0
        %5959 = vmatpush2.bf16.xpose.msra.mxu0 0
        %5960 = vmatprep.subr.bf16.mxu0 0
        %5961 = vmatpush2.bf16.xpose.msra.mxu0 0
        %5962 = vmatprep.subr.bf16.mxu0 0
        %5963 = vmatpush2.bf16.xpose.msra.mxu0 0
        %5964 = vmatprep.subr.bf16.mxu0 0
        %5965 = vmatpush2.bf16.xpose.msra.mxu0 0
        %5966 = vmatprep.subr.bf16.mxu0 0
        %5967 = vmatpush2.bf16.xpose.msra.mxu0 0
        %5968 = vmatprep.subr.bf16.mxu0 0
        %5969 = vmatpush2.bf16.xpose.msra.mxu0 0
        %5970 = vmatprep.mubr.bf16.mxu0 0
        %5971 = vmatmul.mubr.bf16.gmra.mxu0 %v5933
        %v5972 = vpop.f32.mrf.mxu0
        %v5973 = vadd.f32 0.0, %v5972
        %v5974 = vpop.f32.mrf.mxu0
        %v5975 = vpop.f32.mrf.mxu0
        %v5976 = vadd.f32 0.0, %v5975
        %v5977 = vpop.f32.mrf.mxu0
        %5978 = vdwg.mxu0
        %v5979 = vsel %vm1221, %v5973, -inf
        %5980 = vmax.xlane.f32.xlu0 %v5979
        %v5981 = vpop.xlane.xlu0 %5980
        %v5982 = vsel %vm1221, %v5976, -inf
        %5983 = vmax.xlane.f32.xlu0 %v5982
        %v5984 = vpop.xlane.xlu0 %5983
        %v5985 = vsub.f32 %v5973, %v5981
        %v5986 = vsub.f32 %v5976, %v5984
        %v5987 = vmul.f32 %v5985, 1.442695
        %v5988 = vpow.pop %v5987
        %v5989 = vmul.f32 %v5986, 1.442695
        %v5990 = vpow.pop %v5989
        %v5991 = vsel %vm1221, %v5988, 0.0
        %5992 = vadd.xlane.f32.xlu0 %v5991
        %v5993 = vpop.xlane.xlu0 %5992
        %v5994 = vsel %vm1221, %v5990, 0.0
        %5995 = vadd.xlane.f32.xlu0 %v5994
        %v5996 = vpop.xlane.xlu0 %5995
        %v5997 = vrcp.pop %v5993
        %v5998 = vrcp.pop %v5996
        %v5999 = vmul.f32 %v5988, %v5997
        %v6000 = vmul.f32 %v5990, %v5998
        %v6001 = vpack.c.bf16 %v6000, %v5999
        %6002 = vrot.lane.b32.xlu0 %v5127, 48
        %v6003 = vpop.permute.xlu0 %6002
        %v6006 = vsel %vm1221, %v6001, 0
        %6008 = vmatprep.subr.bf16.mxu0 0
        %6009 = vmatpush1.bf16.msra.mxu0 0
        %6010 = vmatprep.subr.bf16.mxu0 0
        %6011 = vmatpush1.bf16.msra.mxu0 0
        %6012 = vmatprep.subr.bf16.mxu0 0
        %6013 = vmatpush1.bf16.msra.mxu0 0
        %6014 = vmatprep.subr.bf16.mxu0 0
        %6015 = vmatpush1.bf16.msra.mxu0 0
        %6016 = vmatprep.subr.bf16.mxu0 0
        %6017 = vmatpush1.bf16.msra.mxu0 0
        %6018 = vmatprep.subr.bf16.mxu0 0
        %6019 = vmatpush1.bf16.msra.mxu0 0
        %6020 = vmatprep.subr.bf16.mxu0 0
        %6021 = vmatpush1.bf16.msra.mxu0 0
        %6022 = vmatprep.subr.bf16.mxu0 0
        %6023 = vmatpush1.bf16.msra.mxu0 %v6003
        %6024 = vmatprep.subr.bf16.mxu0 0
        %6025 = vmatpush2.bf16.msra.mxu0 0
        %6026 = vmatprep.subr.bf16.mxu0 0
        %6027 = vmatpush2.bf16.msra.mxu0 0
        %6028 = vmatprep.subr.bf16.mxu0 0
        %6029 = vmatpush2.bf16.msra.mxu0 0
        %6030 = vmatprep.subr.bf16.mxu0 0
        %6031 = vmatpush2.bf16.msra.mxu0 0
        %6032 = vmatprep.subr.bf16.mxu0 0
        %6033 = vmatpush2.bf16.msra.mxu0 0
        %6034 = vmatprep.subr.bf16.mxu0 0
        %6035 = vmatpush2.bf16.msra.mxu0 0
        %6036 = vmatprep.subr.bf16.mxu0 0
        %6037 = vmatpush2.bf16.msra.mxu0 0
        %6038 = vmatprep.subr.bf16.mxu0 0
        %6039 = vmatpush2.bf16.msra.mxu0 0
        %6040 = vmatprep.mubr.bf16.mxu0 0
        %6041 = vmatmul.mubr.bf16.gmra.mxu0 %v6006
        %v6042 = vpop.f32.mrf.mxu0
        %v6043 = vadd.f32 0.0, %v6042
        %v6044 = vpop.f32.mrf.mxu0
        %v6045 = vpop.f32.mrf.mxu0
        %v6046 = vadd.f32 0.0, %v6045
        %v6047 = vpop.f32.mrf.mxu0
        %6048 = vdwg.mxu0
        %6049 = vrot.lane.b32.xlu0 %v5128, 104
        %v6050 = vpop.permute.xlu0 %6049
        %6051 = vrot.lane.b32.xlu0 %v5127, 72
        %v6052 = vpop.permute.xlu0 %6051
        %v6054 = vsel %vm1023, %v6050, 0
        %v6057 = vsel %vm1023, %v6052, 0
        %6059 = vmatprep.subr.bf16.mxu0 0
        %6060 = vmatpush1.bf16.xpose.msra.mxu0 0
        %6061 = vmatprep.subr.bf16.mxu0 0
        %6062 = vmatpush1.bf16.xpose.msra.mxu0 0
        %6063 = vmatprep.subr.bf16.mxu0 0
        %6064 = vmatpush1.bf16.xpose.msra.mxu0 0
        %6065 = vmatprep.subr.bf16.mxu0 0
        %6066 = vmatpush1.bf16.xpose.msra.mxu0 0
        %6067 = vmatprep.subr.bf16.mxu0 0
        %6068 = vmatpush1.bf16.xpose.msra.mxu0 0
        %6069 = vmatprep.subr.bf16.mxu0 0
        %6070 = vmatpush1.bf16.xpose.msra.mxu0 0
        %6071 = vmatprep.subr.bf16.mxu0 0
        %6072 = vmatpush1.bf16.xpose.msra.mxu0 0
        %6073 = vmatprep.subr.bf16.mxu0 0
        %6074 = vmatpush1.bf16.xpose.msra.mxu0 %v6057
        %6075 = vmatprep.subr.bf16.mxu0 0
        %6076 = vmatpush2.bf16.xpose.msra.mxu0 0
        %6077 = vmatprep.subr.bf16.mxu0 0
        %6078 = vmatpush2.bf16.xpose.msra.mxu0 0
        %6079 = vmatprep.subr.bf16.mxu0 0
        %6080 = vmatpush2.bf16.xpose.msra.mxu0 0
        %6081 = vmatprep.subr.bf16.mxu0 0
        %6082 = vmatpush2.bf16.xpose.msra.mxu0 0
        %6083 = vmatprep.subr.bf16.mxu0 0
        %6084 = vmatpush2.bf16.xpose.msra.mxu0 0
        %6085 = vmatprep.subr.bf16.mxu0 0
        %6086 = vmatpush2.bf16.xpose.msra.mxu0 0
        %6087 = vmatprep.subr.bf16.mxu0 0
        %6088 = vmatpush2.bf16.xpose.msra.mxu0 0
        %6089 = vmatprep.subr.bf16.mxu0 0
        %6090 = vmatpush2.bf16.xpose.msra.mxu0 0
        %6091 = vmatprep.mubr.bf16.mxu0 0
        %6092 = vmatmul.mubr.bf16.gmra.mxu0 %v6054
        %v6093 = vpop.f32.mrf.mxu0
        %v6094 = vadd.f32 0.0, %v6093
        %v6095 = vpop.f32.mrf.mxu0
        %v6096 = vpop.f32.mrf.mxu0
        %v6097 = vadd.f32 0.0, %v6096
        %v6098 = vpop.f32.mrf.mxu0
        %6099 = vdwg.mxu0
        %v6100 = vsel %vm1221, %v6094, -inf
        %6101 = vmax.xlane.f32.xlu0 %v6100
        %v6102 = vpop.xlane.xlu0 %6101
        %v6103 = vsel %vm1221, %v6097, -inf
        %6104 = vmax.xlane.f32.xlu0 %v6103
        %v6105 = vpop.xlane.xlu0 %6104
        %v6106 = vsub.f32 %v6094, %v6102
        %v6107 = vsub.f32 %v6097, %v6105
        %v6108 = vmul.f32 %v6106, 1.442695
        %v6109 = vpow.pop %v6108
        %v6110 = vmul.f32 %v6107, 1.442695
        %v6111 = vpow.pop %v6110
        %v6112 = vsel %vm1221, %v6109, 0.0
        %6113 = vadd.xlane.f32.xlu0 %v6112
        %v6114 = vpop.xlane.xlu0 %6113
        %v6115 = vsel %vm1221, %v6111, 0.0
        %6116 = vadd.xlane.f32.xlu0 %v6115
        %v6117 = vpop.xlane.xlu0 %6116
        %v6118 = vrcp.pop %v6114
        %v6119 = vrcp.pop %v6117
        %v6120 = vmul.f32 %v6109, %v6118
        %v6121 = vmul.f32 %v6111, %v6119
        %v6122 = vpack.c.bf16 %v6121, %v6120
        %6123 = vrot.lane.b32.xlu0 %v5127, 40
        %v6124 = vpop.permute.xlu0 %6123
        %v6127 = vsel %vm1221, %v6122, 0
        %6129 = vmatprep.subr.bf16.mxu0 0
        %6130 = vmatpush1.bf16.msra.mxu0 0
        %6131 = vmatprep.subr.bf16.mxu0 0
        %6132 = vmatpush1.bf16.msra.mxu0 0
        %6133 = vmatprep.subr.bf16.mxu0 0
        %6134 = vmatpush1.bf16.msra.mxu0 0
        %6135 = vmatprep.subr.bf16.mxu0 0
        %6136 = vmatpush1.bf16.msra.mxu0 0
        %6137 = vmatprep.subr.bf16.mxu0 0
        %6138 = vmatpush1.bf16.msra.mxu0 0
        %6139 = vmatprep.subr.bf16.mxu0 0
        %6140 = vmatpush1.bf16.msra.mxu0 0
        %6141 = vmatprep.subr.bf16.mxu0 0
        %6142 = vmatpush1.bf16.msra.mxu0 0
        %6143 = vmatprep.subr.bf16.mxu0 0
        %6144 = vmatpush1.bf16.msra.mxu0 %v6124
        %6145 = vmatprep.subr.bf16.mxu0 0
        %6146 = vmatpush2.bf16.msra.mxu0 0
        %6147 = vmatprep.subr.bf16.mxu0 0
        %6148 = vmatpush2.bf16.msra.mxu0 0
        %6149 = vmatprep.subr.bf16.mxu0 0
        %6150 = vmatpush2.bf16.msra.mxu0 0
        %6151 = vmatprep.subr.bf16.mxu0 0
        %6152 = vmatpush2.bf16.msra.mxu0 0
        %6153 = vmatprep.subr.bf16.mxu0 0
        %6154 = vmatpush2.bf16.msra.mxu0 0
        %6155 = vmatprep.subr.bf16.mxu0 0
        %6156 = vmatpush2.bf16.msra.mxu0 0
        %6157 = vmatprep.subr.bf16.mxu0 0
        %6158 = vmatpush2.bf16.msra.mxu0 0
        %6159 = vmatprep.subr.bf16.mxu0 0
        %6160 = vmatpush2.bf16.msra.mxu0 0
        %6161 = vmatprep.mubr.bf16.mxu0 0
        %6162 = vmatmul.mubr.bf16.gmra.mxu0 %v6127
        %v6163 = vpop.f32.mrf.mxu0
        %v6164 = vadd.f32 0.0, %v6163
        %v6165 = vpop.f32.mrf.mxu0
        %v6166 = vpop.f32.mrf.mxu0
        %v6167 = vadd.f32 0.0, %v6166
        %v6168 = vpop.f32.mrf.mxu0
        %6169 = vdwg.mxu0
        %6172 = vrot.lane.b32.xlu0 %v5922, 8
        %v6173 = vpop.permute.xlu0 %6172
        %6174 = vrot.lane.b32.xlu0 %v5925, 8
        %v6175 = vpop.permute.xlu0 %6174
        %6180 = vrot.lane.b32.xlu0 %v6043, 16
        %v6181 = vpop.permute.xlu0 %6180
        %6182 = vrot.lane.b32.xlu0 %v6046, 16
        %v6183 = vpop.permute.xlu0 %6182
        %6188 = vrot.lane.b32.xlu0 %v6164, 24
        %v6189 = vpop.permute.xlu0 %6188
        %6190 = vrot.lane.b32.xlu0 %v6167, 24
        %v6191 = vpop.permute.xlu0 %6190
        %v6194 = vsel %vm1023, %v5801, %v6173
        %v6195 = vsel %vm1023, %v5804, %v6175
        %v6196 = vsel %vm1221, %v6194, %v6181
        %v6197 = vsel %vm1221, %v6195, %v6183
        %v6198 = vsel %vm3066, %v6196, %v6189
        %v6199 = vsel %vm3066, %v6197, %v6191
        %v6200 = vpack.c.bf16 %v6199, %v6198
        %v6202 = vsel %vm938, %v6200, 0
        %6204 = vmatprep.subr.bf16.mxu0 0
        %6205 = vmatpush1.bf16.msra.mxu0 0
        %6206 = vmatprep.subr.bf16.mxu0 0
        %6207 = vmatpush1.bf16.msra.mxu0 0
        %6208 = vmatprep.subr.bf16.mxu0 0
        %6209 = vmatpush1.bf16.msra.mxu0 0
        %6210 = vmatprep.subr.bf16.mxu0 0
        %6211 = vmatpush1.bf16.msra.mxu0 0
        %6212 = vmatprep.subr.bf16.mxu0 0
        %6213 = vmatpush1.bf16.msra.mxu0 0
        %6214 = vmatprep.subr.bf16.mxu0 0
        %6215 = vmatpush1.bf16.msra.mxu0 0
        %6216 = vmatprep.subr.bf16.mxu0 0
        %6217 = vmatpush1.bf16.msra.mxu0 %v4425
        %6218 = vmatprep.subr.bf16.mxu0 0
        %6219 = vmatpush1.bf16.msra.mxu0 %v4424
        %6220 = vmatprep.subr.bf16.mxu0 0
        %6221 = vmatpush2.bf16.msra.mxu0 0
        %6222 = vmatprep.subr.bf16.mxu0 0
        %6223 = vmatpush2.bf16.msra.mxu0 0
        %6224 = vmatprep.subr.bf16.mxu0 0
        %6225 = vmatpush2.bf16.msra.mxu0 0
        %6226 = vmatprep.subr.bf16.mxu0 0
        %6227 = vmatpush2.bf16.msra.mxu0 0
        %6228 = vmatprep.subr.bf16.mxu0 0
        %6229 = vmatpush2.bf16.msra.mxu0 0
        %6230 = vmatprep.subr.bf16.mxu0 0
        %6231 = vmatpush2.bf16.msra.mxu0 0
        %6232 = vmatprep.subr.bf16.mxu0 0
        %6233 = vmatpush2.bf16.msra.mxu0 0
        %6234 = vmatprep.subr.bf16.mxu0 0
        %6235 = vmatpush2.bf16.msra.mxu0 0
        %6236 = vmatprep.mubr.bf16.mxu0 0
        %6237 = vmatmul.mubr.bf16.gmra.mxu0 %v6202
        %v6238 = vpop.f32.mrf.mxu0
        %v6239 = vadd.f32 %v4414, %v6238
        %v6240 = vpop.f32.mrf.mxu0
        %v6241 = vpop.f32.mrf.mxu0
        %v6242 = vadd.f32 %v4414, %v6241
        %v6243 = vpop.f32.mrf.mxu0
        %6244 = vdwg.mxu0
        %v6245 = vadd.f32 %v5031, %v6239
        %v6246 = vadd.f32 %v5032, %v6242
        %v6247 = vmul.f32 %v6245, 0.5
        %v6248 = vmul.f32 %v6246, 0.5
        %v6249 = vadd.f32 %v3771, %v5682
        %v6250 = vadd.f32 %v3772, %v5685
        %v6251 = vmul.f32 %v6249, 0.5
        %v6252 = vmul.f32 %v6250, 0.5
        %v6253 = vpack.c.bf16 %v6248, %v6247
        %v6255 = vsel %vm938, %v6253, 0
        %6257 = vmatprep.subr.bf16.mxu0 0
        %6258 = vmatpush1.bf16.msra.mxu0 0
        %6259 = vmatprep.subr.bf16.mxu0 0
        %6260 = vmatpush1.bf16.msra.mxu0 0
        %6261 = vmatprep.subr.bf16.mxu0 0
        %6262 = vmatpush1.bf16.msra.mxu0 0
        %6263 = vmatprep.subr.bf16.mxu0 0
        %6264 = vmatpush1.bf16.msra.mxu0 0
        %6265 = vmatprep.subr.bf16.mxu0 0
        %6266 = vmatpush1.bf16.msra.mxu0 0
        %6267 = vmatprep.subr.bf16.mxu0 0
        %6268 = vmatpush1.bf16.msra.mxu0 0
        %6269 = vmatprep.subr.bf16.mxu0 0
        %6270 = vmatpush1.bf16.msra.mxu0 %v3801
        %6271 = vmatprep.subr.bf16.mxu0 0
        %6272 = vmatpush1.bf16.msra.mxu0 %v3800
        %6273 = vmatprep.subr.bf16.mxu0 0
        %6274 = vmatpush2.bf16.msra.mxu0 0
        %6275 = vmatprep.subr.bf16.mxu0 0
        %6276 = vmatpush2.bf16.msra.mxu0 0
        %6277 = vmatprep.subr.bf16.mxu0 0
        %6278 = vmatpush2.bf16.msra.mxu0 0
        %6279 = vmatprep.subr.bf16.mxu0 0
        %6280 = vmatpush2.bf16.msra.mxu0 0
        %6281 = vmatprep.subr.bf16.mxu0 0
        %6282 = vmatpush2.bf16.msra.mxu0 0
        %6283 = vmatprep.subr.bf16.mxu0 0
        %6284 = vmatpush2.bf16.msra.mxu0 0
        %6285 = vmatprep.subr.bf16.mxu0 0
        %6286 = vmatpush2.bf16.msra.mxu0 0
        %6287 = vmatprep.subr.bf16.mxu0 0
        %6288 = vmatpush2.bf16.msra.mxu0 0
        %6289 = vmatprep.mubr.bf16.mxu0 0
        %6290 = vmatmul.mubr.bf16.gmra.mxu0 %v6255
        %v6291 = vpop.f32.mrf.mxu0
        %v6292 = vadd.f32 %v3790, %v6291
        %v6293 = vpop.f32.mrf.mxu0
        %v6294 = vpop.f32.mrf.mxu0
        %v6295 = vadd.f32 %v3790, %v6294
        %v6296 = vpop.f32.mrf.mxu0
        %6297 = vdwg.mxu0
        %v6298 = vpack.c.bf16 %v3774, %v3773
        %v6300 = vsel %vm938, %v6298, 0
        %6302 = vmatprep.subr.bf16.mxu0 0
        %6303 = vmatpush1.bf16.msra.mxu0 0
        %6304 = vmatprep.subr.bf16.mxu0 0
        %6305 = vmatpush1.bf16.msra.mxu0 0
        %6306 = vmatprep.subr.bf16.mxu0 0
        %6307 = vmatpush1.bf16.msra.mxu0 0
        %6308 = vmatprep.subr.bf16.mxu0 0
        %6309 = vmatpush1.bf16.msra.mxu0 0
        %6310 = vmatprep.subr.bf16.mxu0 0
        %6311 = vmatpush1.bf16.msra.mxu0 0
        %6312 = vmatprep.subr.bf16.mxu0 0
        %6313 = vmatpush1.bf16.msra.mxu0 0
        %6314 = vmatprep.subr.bf16.mxu0 0
        %6315 = vmatpush1.bf16.msra.mxu0 %v3801
        %6316 = vmatprep.subr.bf16.mxu0 0
        %6317 = vmatpush1.bf16.msra.mxu0 %v3800
        %6318 = vmatprep.subr.bf16.mxu0 0
        %6319 = vmatpush2.bf16.msra.mxu0 0
        %6320 = vmatprep.subr.bf16.mxu0 0
        %6321 = vmatpush2.bf16.msra.mxu0 0
        %6322 = vmatprep.subr.bf16.mxu0 0
        %6323 = vmatpush2.bf16.msra.mxu0 0
        %6324 = vmatprep.subr.bf16.mxu0 0
        %6325 = vmatpush2.bf16.msra.mxu0 0
        %6326 = vmatprep.subr.bf16.mxu0 0
        %6327 = vmatpush2.bf16.msra.mxu0 0
        %6328 = vmatprep.subr.bf16.mxu0 0
        %6329 = vmatpush2.bf16.msra.mxu0 0
        %6330 = vmatprep.subr.bf16.mxu0 0
        %6331 = vmatpush2.bf16.msra.mxu0 0
        %6332 = vmatprep.subr.bf16.mxu0 0
        %6333 = vmatpush2.bf16.msra.mxu0 0
        %6334 = vmatprep.mubr.bf16.mxu0 0
        %6335 = vmatmul.mubr.bf16.gmra.mxu0 %v6300
        %v6336 = vpop.f32.mrf.mxu0
        %v6337 = vadd.f32 %v3790, %v6336
        %v6338 = vpop.f32.mrf.mxu0
        %v6339 = vpop.f32.mrf.mxu0
        %v6340 = vadd.f32 %v3790, %v6339
        %v6341 = vpop.f32.mrf.mxu0
        %6342 = vdwg.mxu0
        %v6343 = vpack.c.bf16 %v6295, %v6292
        %v6344 = vpack.c.bf16 %v6340, %v6337
        %6346 = vrot.lane.b32.xlu0 %v6344, 96
        %v6347 = vpop.permute.xlu0 %6346
        %v6349 = vsel %vm1023, %v6343, 0
        %v6352 = vsel %vm1023, %v6347, 0
        %6354 = vmatprep.subr.bf16.mxu0 0
        %6355 = vmatpush1.bf16.xpose.msra.mxu0 0
        %6356 = vmatprep.subr.bf16.mxu0 0
        %6357 = vmatpush1.bf16.xpose.msra.mxu0 0
        %6358 = vmatprep.subr.bf16.mxu0 0
        %6359 = vmatpush1.bf16.xpose.msra.mxu0 0
        %6360 = vmatprep.subr.bf16.mxu0 0
        %6361 = vmatpush1.bf16.xpose.msra.mxu0 0
        %6362 = vmatprep.subr.bf16.mxu0 0
        %6363 = vmatpush1.bf16.xpose.msra.mxu0 0
        %6364 = vmatprep.subr.bf16.mxu0 0
        %6365 = vmatpush1.bf16.xpose.msra.mxu0 0
        %6366 = vmatprep.subr.bf16.mxu0 0
        %6367 = vmatpush1.bf16.xpose.msra.mxu0 0
        %6368 = vmatprep.subr.bf16.mxu0 0
        %6369 = vmatpush1.bf16.xpose.msra.mxu0 %v6352
        %6370 = vmatprep.subr.bf16.mxu0 0
        %6371 = vmatpush2.bf16.xpose.msra.mxu0 0
        %6372 = vmatprep.subr.bf16.mxu0 0
        %6373 = vmatpush2.bf16.xpose.msra.mxu0 0
        %6374 = vmatprep.subr.bf16.mxu0 0
        %6375 = vmatpush2.bf16.xpose.msra.mxu0 0
        %6376 = vmatprep.subr.bf16.mxu0 0
        %6377 = vmatpush2.bf16.xpose.msra.mxu0 0
        %6378 = vmatprep.subr.bf16.mxu0 0
        %6379 = vmatpush2.bf16.xpose.msra.mxu0 0
        %6380 = vmatprep.subr.bf16.mxu0 0
        %6381 = vmatpush2.bf16.xpose.msra.mxu0 0
        %6382 = vmatprep.subr.bf16.mxu0 0
        %6383 = vmatpush2.bf16.xpose.msra.mxu0 0
        %6384 = vmatprep.subr.bf16.mxu0 0
        %6385 = vmatpush2.bf16.xpose.msra.mxu0 0
        %6386 = vmatprep.mubr.bf16.mxu0 0
        %6387 = vmatmul.mubr.bf16.gmra.mxu0 %v6349
        %v6388 = vpop.f32.mrf.mxu0
        %v6389 = vadd.f32 0.0, %v6388
        %v6390 = vpop.f32.mrf.mxu0
        %v6391 = vpop.f32.mrf.mxu0
        %v6392 = vadd.f32 0.0, %v6391
        %v6393 = vpop.f32.mrf.mxu0
        %6394 = vdwg.mxu0
        %v6395 = vsel %vm1221, %v6389, -inf
        %6396 = vmax.xlane.f32.xlu0 %v6395
        %v6397 = vpop.xlane.xlu0 %6396
        %v6398 = vsel %vm1221, %v6392, -inf
        %6399 = vmax.xlane.f32.xlu0 %v6398
        %v6400 = vpop.xlane.xlu0 %6399
        %v6401 = vsub.f32 %v6389, %v6397
        %v6402 = vsub.f32 %v6392, %v6400
        %v6403 = vmul.f32 %v6401, 1.442695
        %v6404 = vpow.pop %v6403
        %v6405 = vmul.f32 %v6402, 1.442695
        %v6406 = vpow.pop %v6405
        %v6407 = vsel %vm1221, %v6404, 0.0
        %6408 = vadd.xlane.f32.xlu0 %v6407
        %v6409 = vpop.xlane.xlu0 %6408
        %v6410 = vsel %vm1221, %v6406, 0.0
        %6411 = vadd.xlane.f32.xlu0 %v6410
        %v6412 = vpop.xlane.xlu0 %6411
        %v6413 = vrcp.pop %v6409
        %v6414 = vrcp.pop %v6412
        %v6415 = vmul.f32 %v6404, %v6413
        %v6416 = vmul.f32 %v6406, %v6414
        %v6417 = vpack.c.bf16 %v6416, %v6415
        %6418 = vrot.lane.b32.xlu0 %v6344, 64
        %v6419 = vpop.permute.xlu0 %6418
        %v6422 = vsel %vm1221, %v6417, 0
        %6424 = vmatprep.subr.bf16.mxu0 0
        %6425 = vmatpush1.bf16.msra.mxu0 0
        %6426 = vmatprep.subr.bf16.mxu0 0
        %6427 = vmatpush1.bf16.msra.mxu0 0
        %6428 = vmatprep.subr.bf16.mxu0 0
        %6429 = vmatpush1.bf16.msra.mxu0 0
        %6430 = vmatprep.subr.bf16.mxu0 0
        %6431 = vmatpush1.bf16.msra.mxu0 0
        %6432 = vmatprep.subr.bf16.mxu0 0
        %6433 = vmatpush1.bf16.msra.mxu0 0
        %6434 = vmatprep.subr.bf16.mxu0 0
        %6435 = vmatpush1.bf16.msra.mxu0 0
        %6436 = vmatprep.subr.bf16.mxu0 0
        %6437 = vmatpush1.bf16.msra.mxu0 0
        %6438 = vmatprep.subr.bf16.mxu0 0
        %6439 = vmatpush1.bf16.msra.mxu0 %v6419
        %6440 = vmatprep.subr.bf16.mxu0 0
        %6441 = vmatpush2.bf16.msra.mxu0 0
        %6442 = vmatprep.subr.bf16.mxu0 0
        %6443 = vmatpush2.bf16.msra.mxu0 0
        %6444 = vmatprep.subr.bf16.mxu0 0
        %6445 = vmatpush2.bf16.msra.mxu0 0
        %6446 = vmatprep.subr.bf16.mxu0 0
        %6447 = vmatpush2.bf16.msra.mxu0 0
        %6448 = vmatprep.subr.bf16.mxu0 0
        %6449 = vmatpush2.bf16.msra.mxu0 0
        %6450 = vmatprep.subr.bf16.mxu0 0
        %6451 = vmatpush2.bf16.msra.mxu0 0
        %6452 = vmatprep.subr.bf16.mxu0 0
        %6453 = vmatpush2.bf16.msra.mxu0 0
        %6454 = vmatprep.subr.bf16.mxu0 0
        %6455 = vmatpush2.bf16.msra.mxu0 0
        %6456 = vmatprep.mubr.bf16.mxu0 0
        %6457 = vmatmul.mubr.bf16.gmra.mxu0 %v6422
        %v6458 = vpop.f32.mrf.mxu0
        %v6459 = vadd.f32 0.0, %v6458
        %v6460 = vpop.f32.mrf.mxu0
        %v6461 = vpop.f32.mrf.mxu0
        %v6462 = vadd.f32 0.0, %v6461
        %v6463 = vpop.f32.mrf.mxu0
        %6464 = vdwg.mxu0
        %6466 = vrot.lane.b32.xlu0 %v6343, 120
        %v6467 = vpop.permute.xlu0 %6466
        %6468 = vrot.lane.b32.xlu0 %v6344, 88
        %v6469 = vpop.permute.xlu0 %6468
        %v6471 = vsel %vm1023, %v6467, 0
        %v6474 = vsel %vm1023, %v6469, 0
        %6476 = vmatprep.subr.bf16.mxu0 0
        %6477 = vmatpush1.bf16.xpose.msra.mxu0 0
        %6478 = vmatprep.subr.bf16.mxu0 0
        %6479 = vmatpush1.bf16.xpose.msra.mxu0 0
        %6480 = vmatprep.subr.bf16.mxu0 0
        %6481 = vmatpush1.bf16.xpose.msra.mxu0 0
        %6482 = vmatprep.subr.bf16.mxu0 0
        %6483 = vmatpush1.bf16.xpose.msra.mxu0 0
        %6484 = vmatprep.subr.bf16.mxu0 0
        %6485 = vmatpush1.bf16.xpose.msra.mxu0 0
        %6486 = vmatprep.subr.bf16.mxu0 0
        %6487 = vmatpush1.bf16.xpose.msra.mxu0 0
        %6488 = vmatprep.subr.bf16.mxu0 0
        %6489 = vmatpush1.bf16.xpose.msra.mxu0 0
        %6490 = vmatprep.subr.bf16.mxu0 0
        %6491 = vmatpush1.bf16.xpose.msra.mxu0 %v6474
        %6492 = vmatprep.subr.bf16.mxu0 0
        %6493 = vmatpush2.bf16.xpose.msra.mxu0 0
        %6494 = vmatprep.subr.bf16.mxu0 0
        %6495 = vmatpush2.bf16.xpose.msra.mxu0 0
        %6496 = vmatprep.subr.bf16.mxu0 0
        %6497 = vmatpush2.bf16.xpose.msra.mxu0 0
        %6498 = vmatprep.subr.bf16.mxu0 0
        %6499 = vmatpush2.bf16.xpose.msra.mxu0 0
        %6500 = vmatprep.subr.bf16.mxu0 0
        %6501 = vmatpush2.bf16.xpose.msra.mxu0 0
        %6502 = vmatprep.subr.bf16.mxu0 0
        %6503 = vmatpush2.bf16.xpose.msra.mxu0 0
        %6504 = vmatprep.subr.bf16.mxu0 0
        %6505 = vmatpush2.bf16.xpose.msra.mxu0 0
        %6506 = vmatprep.subr.bf16.mxu0 0
        %6507 = vmatpush2.bf16.xpose.msra.mxu0 0
        %6508 = vmatprep.mubr.bf16.mxu0 0
        %6509 = vmatmul.mubr.bf16.gmra.mxu0 %v6471
        %v6510 = vpop.f32.mrf.mxu0
        %v6511 = vadd.f32 0.0, %v6510
        %v6512 = vpop.f32.mrf.mxu0
        %v6513 = vpop.f32.mrf.mxu0
        %v6514 = vadd.f32 0.0, %v6513
        %v6515 = vpop.f32.mrf.mxu0
        %6516 = vdwg.mxu0
        %v6517 = vsel %vm1221, %v6511, -inf
        %6518 = vmax.xlane.f32.xlu0 %v6517
        %v6519 = vpop.xlane.xlu0 %6518
        %v6520 = vsel %vm1221, %v6514, -inf
        %6521 = vmax.xlane.f32.xlu0 %v6520
        %v6522 = vpop.xlane.xlu0 %6521
        %v6523 = vsub.f32 %v6511, %v6519
        %v6524 = vsub.f32 %v6514, %v6522
        %v6525 = vmul.f32 %v6523, 1.442695
        %v6526 = vpow.pop %v6525
        %v6527 = vmul.f32 %v6524, 1.442695
        %v6528 = vpow.pop %v6527
        %v6529 = vsel %vm1221, %v6526, 0.0
        %6530 = vadd.xlane.f32.xlu0 %v6529
        %v6531 = vpop.xlane.xlu0 %6530
        %v6532 = vsel %vm1221, %v6528, 0.0
        %6533 = vadd.xlane.f32.xlu0 %v6532
        %v6534 = vpop.xlane.xlu0 %6533
        %v6535 = vrcp.pop %v6531
        %v6536 = vrcp.pop %v6534
        %v6537 = vmul.f32 %v6526, %v6535
        %v6538 = vmul.f32 %v6528, %v6536
        %v6539 = vpack.c.bf16 %v6538, %v6537
        %6540 = vrot.lane.b32.xlu0 %v6344, 56
        %v6541 = vpop.permute.xlu0 %6540
        %v6544 = vsel %vm1221, %v6539, 0
        %6546 = vmatprep.subr.bf16.mxu0 0
        %6547 = vmatpush1.bf16.msra.mxu0 0
        %6548 = vmatprep.subr.bf16.mxu0 0
        %6549 = vmatpush1.bf16.msra.mxu0 0
        %6550 = vmatprep.subr.bf16.mxu0 0
        %6551 = vmatpush1.bf16.msra.mxu0 0
        %6552 = vmatprep.subr.bf16.mxu0 0
        %6553 = vmatpush1.bf16.msra.mxu0 0
        %6554 = vmatprep.subr.bf16.mxu0 0
        %6555 = vmatpush1.bf16.msra.mxu0 0
        %6556 = vmatprep.subr.bf16.mxu0 0
        %6557 = vmatpush1.bf16.msra.mxu0 0
        %6558 = vmatprep.subr.bf16.mxu0 0
        %6559 = vmatpush1.bf16.msra.mxu0 0
        %6560 = vmatprep.subr.bf16.mxu0 0
        %6561 = vmatpush1.bf16.msra.mxu0 %v6541
        %6562 = vmatprep.subr.bf16.mxu0 0
        %6563 = vmatpush2.bf16.msra.mxu0 0
        %6564 = vmatprep.subr.bf16.mxu0 0
        %6565 = vmatpush2.bf16.msra.mxu0 0
        %6566 = vmatprep.subr.bf16.mxu0 0
        %6567 = vmatpush2.bf16.msra.mxu0 0
        %6568 = vmatprep.subr.bf16.mxu0 0
        %6569 = vmatpush2.bf16.msra.mxu0 0
        %6570 = vmatprep.subr.bf16.mxu0 0
        %6571 = vmatpush2.bf16.msra.mxu0 0
        %6572 = vmatprep.subr.bf16.mxu0 0
        %6573 = vmatpush2.bf16.msra.mxu0 0
        %6574 = vmatprep.subr.bf16.mxu0 0
        %6575 = vmatpush2.bf16.msra.mxu0 0
        %6576 = vmatprep.subr.bf16.mxu0 0
        %6577 = vmatpush2.bf16.msra.mxu0 0
        %6578 = vmatprep.mubr.bf16.mxu0 0
        %6579 = vmatmul.mubr.bf16.gmra.mxu0 %v6544
        %v6580 = vpop.f32.mrf.mxu0
        %v6581 = vadd.f32 0.0, %v6580
        %v6582 = vpop.f32.mrf.mxu0
        %v6583 = vpop.f32.mrf.mxu0
        %v6584 = vadd.f32 0.0, %v6583
        %v6585 = vpop.f32.mrf.mxu0
        %6586 = vdwg.mxu0
        %6587 = vrot.lane.b32.xlu0 %v6343, 112
        %v6588 = vpop.permute.xlu0 %6587
        %6589 = vrot.lane.b32.xlu0 %v6344, 80
        %v6590 = vpop.permute.xlu0 %6589
        %v6592 = vsel %vm1023, %v6588, 0
        %v6595 = vsel %vm1023, %v6590, 0
        %6597 = vmatprep.subr.bf16.mxu0 0
        %6598 = vmatpush1.bf16.xpose.msra.mxu0 0
        %6599 = vmatprep.subr.bf16.mxu0 0
        %6600 = vmatpush1.bf16.xpose.msra.mxu0 0
        %6601 = vmatprep.subr.bf16.mxu0 0
        %6602 = vmatpush1.bf16.xpose.msra.mxu0 0
        %6603 = vmatprep.subr.bf16.mxu0 0
        %6604 = vmatpush1.bf16.xpose.msra.mxu0 0
        %6605 = vmatprep.subr.bf16.mxu0 0
        %6606 = vmatpush1.bf16.xpose.msra.mxu0 0
        %6607 = vmatprep.subr.bf16.mxu0 0
        %6608 = vmatpush1.bf16.xpose.msra.mxu0 0
        %6609 = vmatprep.subr.bf16.mxu0 0
        %6610 = vmatpush1.bf16.xpose.msra.mxu0 0
        %6611 = vmatprep.subr.bf16.mxu0 0
        %6612 = vmatpush1.bf16.xpose.msra.mxu0 %v6595
        %6613 = vmatprep.subr.bf16.mxu0 0
        %6614 = vmatpush2.bf16.xpose.msra.mxu0 0
        %6615 = vmatprep.subr.bf16.mxu0 0
        %6616 = vmatpush2.bf16.xpose.msra.mxu0 0
        %6617 = vmatprep.subr.bf16.mxu0 0
        %6618 = vmatpush2.bf16.xpose.msra.mxu0 0
        %6619 = vmatprep.subr.bf16.mxu0 0
        %6620 = vmatpush2.bf16.xpose.msra.mxu0 0
        %6621 = vmatprep.subr.bf16.mxu0 0
        %6622 = vmatpush2.bf16.xpose.msra.mxu0 0
        %6623 = vmatprep.subr.bf16.mxu0 0
        %6624 = vmatpush2.bf16.xpose.msra.mxu0 0
        %6625 = vmatprep.subr.bf16.mxu0 0
        %6626 = vmatpush2.bf16.xpose.msra.mxu0 0
        %6627 = vmatprep.subr.bf16.mxu0 0
        %6628 = vmatpush2.bf16.xpose.msra.mxu0 0
        %6629 = vmatprep.mubr.bf16.mxu0 0
        %6630 = vmatmul.mubr.bf16.gmra.mxu0 %v6592
        %v6631 = vpop.f32.mrf.mxu0
        %v6632 = vadd.f32 0.0, %v6631
        %v6633 = vpop.f32.mrf.mxu0
        %v6634 = vpop.f32.mrf.mxu0
        %v6635 = vadd.f32 0.0, %v6634
        %v6636 = vpop.f32.mrf.mxu0
        %6637 = vdwg.mxu0
        %v6638 = vsel %vm1221, %v6632, -inf
        %6639 = vmax.xlane.f32.xlu0 %v6638
        %v6640 = vpop.xlane.xlu0 %6639
        %v6641 = vsel %vm1221, %v6635, -inf
        %6642 = vmax.xlane.f32.xlu0 %v6641
        %v6643 = vpop.xlane.xlu0 %6642
        %v6644 = vsub.f32 %v6632, %v6640
        %v6645 = vsub.f32 %v6635, %v6643
        %v6646 = vmul.f32 %v6644, 1.442695
        %v6647 = vpow.pop %v6646
        %v6648 = vmul.f32 %v6645, 1.442695
        %v6649 = vpow.pop %v6648
        %v6650 = vsel %vm1221, %v6647, 0.0
        %6651 = vadd.xlane.f32.xlu0 %v6650
        %v6652 = vpop.xlane.xlu0 %6651
        %v6653 = vsel %vm1221, %v6649, 0.0
        %6654 = vadd.xlane.f32.xlu0 %v6653
        %v6655 = vpop.xlane.xlu0 %6654
        %v6656 = vrcp.pop %v6652
        %v6657 = vrcp.pop %v6655
        %v6658 = vmul.f32 %v6647, %v6656
        %v6659 = vmul.f32 %v6649, %v6657
        %v6660 = vpack.c.bf16 %v6659, %v6658
        %6661 = vrot.lane.b32.xlu0 %v6344, 48
        %v6662 = vpop.permute.xlu0 %6661
        %v6665 = vsel %vm1221, %v6660, 0
        %6667 = vmatprep.subr.bf16.mxu0 0
        %6668 = vmatpush1.bf16.msra.mxu0 0
        %6669 = vmatprep.subr.bf16.mxu0 0
        %6670 = vmatpush1.bf16.msra.mxu0 0
        %6671 = vmatprep.subr.bf16.mxu0 0
        %6672 = vmatpush1.bf16.msra.mxu0 0
        %6673 = vmatprep.subr.bf16.mxu0 0
        %6674 = vmatpush1.bf16.msra.mxu0 0
        %6675 = vmatprep.subr.bf16.mxu0 0
        %6676 = vmatpush1.bf16.msra.mxu0 0
        %6677 = vmatprep.subr.bf16.mxu0 0
        %6678 = vmatpush1.bf16.msra.mxu0 0
        %6679 = vmatprep.subr.bf16.mxu0 0
        %6680 = vmatpush1.bf16.msra.mxu0 0
        %6681 = vmatprep.subr.bf16.mxu0 0
        %6682 = vmatpush1.bf16.msra.mxu0 %v6662
        %6683 = vmatprep.subr.bf16.mxu0 0
        %6684 = vmatpush2.bf16.msra.mxu0 0
        %6685 = vmatprep.subr.bf16.mxu0 0
        %6686 = vmatpush2.bf16.msra.mxu0 0
        %6687 = vmatprep.subr.bf16.mxu0 0
        %6688 = vmatpush2.bf16.msra.mxu0 0
        %6689 = vmatprep.subr.bf16.mxu0 0
        %6690 = vmatpush2.bf16.msra.mxu0 0
        %6691 = vmatprep.subr.bf16.mxu0 0
        %6692 = vmatpush2.bf16.msra.mxu0 0
        %6693 = vmatprep.subr.bf16.mxu0 0
        %6694 = vmatpush2.bf16.msra.mxu0 0
        %6695 = vmatprep.subr.bf16.mxu0 0
        %6696 = vmatpush2.bf16.msra.mxu0 0
        %6697 = vmatprep.subr.bf16.mxu0 0
        %6698 = vmatpush2.bf16.msra.mxu0 0
        %6699 = vmatprep.mubr.bf16.mxu0 0
        %6700 = vmatmul.mubr.bf16.gmra.mxu0 %v6665
        %v6701 = vpop.f32.mrf.mxu0
        %v6702 = vadd.f32 0.0, %v6701
        %v6703 = vpop.f32.mrf.mxu0
        %v6704 = vpop.f32.mrf.mxu0
        %v6705 = vadd.f32 0.0, %v6704
        %v6706 = vpop.f32.mrf.mxu0
        %6707 = vdwg.mxu0
        %6708 = vrot.lane.b32.xlu0 %v6343, 104
        %v6709 = vpop.permute.xlu0 %6708
        %6710 = vrot.lane.b32.xlu0 %v6344, 72
        %v6711 = vpop.permute.xlu0 %6710
        %v6713 = vsel %vm1023, %v6709, 0
        %v6716 = vsel %vm1023, %v6711, 0
        %6718 = vmatprep.subr.bf16.mxu0 0
        %6719 = vmatpush1.bf16.xpose.msra.mxu0 0
        %6720 = vmatprep.subr.bf16.mxu0 0
        %6721 = vmatpush1.bf16.xpose.msra.mxu0 0
        %6722 = vmatprep.subr.bf16.mxu0 0
        %6723 = vmatpush1.bf16.xpose.msra.mxu0 0
        %6724 = vmatprep.subr.bf16.mxu0 0
        %6725 = vmatpush1.bf16.xpose.msra.mxu0 0
        %6726 = vmatprep.subr.bf16.mxu0 0
        %6727 = vmatpush1.bf16.xpose.msra.mxu0 0
        %6728 = vmatprep.subr.bf16.mxu0 0
        %6729 = vmatpush1.bf16.xpose.msra.mxu0 0
        %6730 = vmatprep.subr.bf16.mxu0 0
        %6731 = vmatpush1.bf16.xpose.msra.mxu0 0
        %6732 = vmatprep.subr.bf16.mxu0 0
        %6733 = vmatpush1.bf16.xpose.msra.mxu0 %v6716
        %6734 = vmatprep.subr.bf16.mxu0 0
        %6735 = vmatpush2.bf16.xpose.msra.mxu0 0
        %6736 = vmatprep.subr.bf16.mxu0 0
        %6737 = vmatpush2.bf16.xpose.msra.mxu0 0
        %6738 = vmatprep.subr.bf16.mxu0 0
        %6739 = vmatpush2.bf16.xpose.msra.mxu0 0
        %6740 = vmatprep.subr.bf16.mxu0 0
        %6741 = vmatpush2.bf16.xpose.msra.mxu0 0
        %6742 = vmatprep.subr.bf16.mxu0 0
        %6743 = vmatpush2.bf16.xpose.msra.mxu0 0
        %6744 = vmatprep.subr.bf16.mxu0 0
        %6745 = vmatpush2.bf16.xpose.msra.mxu0 0
        %6746 = vmatprep.subr.bf16.mxu0 0
        %6747 = vmatpush2.bf16.xpose.msra.mxu0 0
        %6748 = vmatprep.subr.bf16.mxu0 0
        %6749 = vmatpush2.bf16.xpose.msra.mxu0 0
        %6750 = vmatprep.mubr.bf16.mxu0 0
        %6751 = vmatmul.mubr.bf16.gmra.mxu0 %v6713
        %v6752 = vpop.f32.mrf.mxu0
        %v6753 = vadd.f32 0.0, %v6752
        %v6754 = vpop.f32.mrf.mxu0
        %v6755 = vpop.f32.mrf.mxu0
        %v6756 = vadd.f32 0.0, %v6755
        %v6757 = vpop.f32.mrf.mxu0
        %6758 = vdwg.mxu0
        %v6759 = vsel %vm1221, %v6753, -inf
        %6760 = vmax.xlane.f32.xlu0 %v6759
        %v6761 = vpop.xlane.xlu0 %6760
        %v6762 = vsel %vm1221, %v6756, -inf
        %6763 = vmax.xlane.f32.xlu0 %v6762
        %v6764 = vpop.xlane.xlu0 %6763
        %v6765 = vsub.f32 %v6753, %v6761
        %v6766 = vsub.f32 %v6756, %v6764
        %v6767 = vmul.f32 %v6765, 1.442695
        %v6768 = vpow.pop %v6767
        %v6769 = vmul.f32 %v6766, 1.442695
        %v6770 = vpow.pop %v6769
        %v6771 = vsel %vm1221, %v6768, 0.0
        %6772 = vadd.xlane.f32.xlu0 %v6771
        %v6773 = vpop.xlane.xlu0 %6772
        %v6774 = vsel %vm1221, %v6770, 0.0
        %6775 = vadd.xlane.f32.xlu0 %v6774
        %v6776 = vpop.xlane.xlu0 %6775
        %v6777 = vrcp.pop %v6773
        %v6778 = vrcp.pop %v6776
        %v6779 = vmul.f32 %v6768, %v6777
        %v6780 = vmul.f32 %v6770, %v6778
        %v6781 = vpack.c.bf16 %v6780, %v6779
        %6782 = vrot.lane.b32.xlu0 %v6344, 40
        %v6783 = vpop.permute.xlu0 %6782
        %v6786 = vsel %vm1221, %v6781, 0
        %6788 = vmatprep.subr.bf16.mxu0 0
        %6789 = vmatpush1.bf16.msra.mxu0 0
        %6790 = vmatprep.subr.bf16.mxu0 0
        %6791 = vmatpush1.bf16.msra.mxu0 0
        %6792 = vmatprep.subr.bf16.mxu0 0
        %6793 = vmatpush1.bf16.msra.mxu0 0
        %6794 = vmatprep.subr.bf16.mxu0 0
        %6795 = vmatpush1.bf16.msra.mxu0 0
        %6796 = vmatprep.subr.bf16.mxu0 0
        %6797 = vmatpush1.bf16.msra.mxu0 0
        %6798 = vmatprep.subr.bf16.mxu0 0
        %6799 = vmatpush1.bf16.msra.mxu0 0
        %6800 = vmatprep.subr.bf16.mxu0 0
        %6801 = vmatpush1.bf16.msra.mxu0 0
        %6802 = vmatprep.subr.bf16.mxu0 0
        %6803 = vmatpush1.bf16.msra.mxu0 %v6783
        %6804 = vmatprep.subr.bf16.mxu0 0
        %6805 = vmatpush2.bf16.msra.mxu0 0
        %6806 = vmatprep.subr.bf16.mxu0 0
        %6807 = vmatpush2.bf16.msra.mxu0 0
        %6808 = vmatprep.subr.bf16.mxu0 0
        %6809 = vmatpush2.bf16.msra.mxu0 0
        %6810 = vmatprep.subr.bf16.mxu0 0
        %6811 = vmatpush2.bf16.msra.mxu0 0
        %6812 = vmatprep.subr.bf16.mxu0 0
        %6813 = vmatpush2.bf16.msra.mxu0 0
        %6814 = vmatprep.subr.bf16.mxu0 0
        %6815 = vmatpush2.bf16.msra.mxu0 0
        %6816 = vmatprep.subr.bf16.mxu0 0
        %6817 = vmatpush2.bf16.msra.mxu0 0
        %6818 = vmatprep.subr.bf16.mxu0 0
        %6819 = vmatpush2.bf16.msra.mxu0 0
        %6820 = vmatprep.mubr.bf16.mxu0 0
        %6821 = vmatmul.mubr.bf16.gmra.mxu0 %v6786
        %v6822 = vpop.f32.mrf.mxu0
        %v6823 = vadd.f32 0.0, %v6822
        %v6824 = vpop.f32.mrf.mxu0
        %v6825 = vpop.f32.mrf.mxu0
        %v6826 = vadd.f32 0.0, %v6825
        %v6827 = vpop.f32.mrf.mxu0
        %6828 = vdwg.mxu0
        %6831 = vrot.lane.b32.xlu0 %v6581, 8
        %v6832 = vpop.permute.xlu0 %6831
        %6833 = vrot.lane.b32.xlu0 %v6584, 8
        %v6834 = vpop.permute.xlu0 %6833
        %6839 = vrot.lane.b32.xlu0 %v6702, 16
        %v6840 = vpop.permute.xlu0 %6839
        %6841 = vrot.lane.b32.xlu0 %v6705, 16
        %v6842 = vpop.permute.xlu0 %6841
        %6847 = vrot.lane.b32.xlu0 %v6823, 24
        %v6848 = vpop.permute.xlu0 %6847
        %6849 = vrot.lane.b32.xlu0 %v6826, 24
        %v6850 = vpop.permute.xlu0 %6849
        %v6853 = vsel %vm1023, %v6459, %v6832
        %v6854 = vsel %vm1023, %v6462, %v6834
        %v6855 = vsel %vm1221, %v6853, %v6840
        %v6856 = vsel %vm1221, %v6854, %v6842
        %v6857 = vsel %vm3066, %v6855, %v6848
        %v6858 = vsel %vm3066, %v6856, %v6850
        %v6859 = vpack.c.bf16 %v6858, %v6857
        %v6861 = vsel %vm938, %v6859, 0
        %6863 = vmatprep.subr.bf16.mxu0 0
        %6864 = vmatpush1.bf16.msra.mxu0 0
        %6865 = vmatprep.subr.bf16.mxu0 0
        %6866 = vmatpush1.bf16.msra.mxu0 0
        %6867 = vmatprep.subr.bf16.mxu0 0
        %6868 = vmatpush1.bf16.msra.mxu0 0
        %6869 = vmatprep.subr.bf16.mxu0 0
        %6870 = vmatpush1.bf16.msra.mxu0 0
        %6871 = vmatprep.subr.bf16.mxu0 0
        %6872 = vmatpush1.bf16.msra.mxu0 0
        %6873 = vmatprep.subr.bf16.mxu0 0
        %6874 = vmatpush1.bf16.msra.mxu0 0
        %6875 = vmatprep.subr.bf16.mxu0 0
        %6876 = vmatpush1.bf16.msra.mxu0 %v4425
        %6877 = vmatprep.subr.bf16.mxu0 0
        %6878 = vmatpush1.bf16.msra.mxu0 %v4424
        %6879 = vmatprep.subr.bf16.mxu0 0
        %6880 = vmatpush2.bf16.msra.mxu0 0
        %6881 = vmatprep.subr.bf16.mxu0 0
        %6882 = vmatpush2.bf16.msra.mxu0 0
        %6883 = vmatprep.subr.bf16.mxu0 0
        %6884 = vmatpush2.bf16.msra.mxu0 0
        %6885 = vmatprep.subr.bf16.mxu0 0
        %6886 = vmatpush2.bf16.msra.mxu0 0
        %6887 = vmatprep.subr.bf16.mxu0 0
        %6888 = vmatpush2.bf16.msra.mxu0 0
        %6889 = vmatprep.subr.bf16.mxu0 0
        %6890 = vmatpush2.bf16.msra.mxu0 0
        %6891 = vmatprep.subr.bf16.mxu0 0
        %6892 = vmatpush2.bf16.msra.mxu0 0
        %6893 = vmatprep.subr.bf16.mxu0 0
        %6894 = vmatpush2.bf16.msra.mxu0 0
        %6895 = vmatprep.mubr.bf16.mxu0 0
        %6896 = vmatmul.mubr.bf16.gmra.mxu0 %v6861
        %v6897 = vpop.f32.mrf.mxu0
        %v6898 = vadd.f32 %v4414, %v6897
        %v6899 = vpop.f32.mrf.mxu0
        %v6900 = vpop.f32.mrf.mxu0
        %v6901 = vadd.f32 %v4414, %v6900
        %v6902 = vpop.f32.mrf.mxu0
        %6903 = vdwg.mxu0
        %v6904 = vadd.f32 %v3773, %v6898
        %v6905 = vadd.f32 %v3774, %v6901
        %v6906 = vmul.f32 %v6904, 0.5
        %v6907 = vmul.f32 %v6905, 0.5
        %v6908 = vadd.f32 %v3767, %v3767
        %v6909 = vadd.f32 %v3768, %v3768
        %v6910 = vadd.f32 %v3769, %v5035
        %v6911 = vadd.f32 %v3770, %v5036
        %v6912 = vadd.f32 %v3771, %v6251
        %v6913 = vadd.f32 %v3772, %v6252
        %v6914 = vadd.f32 %v3773, %v6906
        %v6915 = vadd.f32 %v3774, %v6907
        %v6916 = vld [vmem:[%s17] sm:$0x1]
        %v6917 = vld [vmem:[%s18] sm:$0x1]
        %v6918 = vsel %vm938, %v6908, 0.0
        %6919 = vadd.xlane.f32.xlu0 %v6918
        %v6920 = vpop.xlane.xlu0 %6919
        %v6921 = vsel %vm938, %v6909, 0.0
        %6922 = vadd.xlane.f32.xlu0 %v6921
        %v6923 = vpop.xlane.xlu0 %6922
        %v6924 = vsel %vm938, %v6910, 0.0
        %6925 = vadd.xlane.f32.xlu0 %v6924
        %v6926 = vpop.xlane.xlu0 %6925
        %v6927 = vsel %vm938, %v6911, 0.0
        %6928 = vadd.xlane.f32.xlu0 %v6927
        %v6929 = vpop.xlane.xlu0 %6928
        %v6930 = vsel %vm938, %v6912, 0.0
        %6931 = vadd.xlane.f32.xlu0 %v6930
        %v6932 = vpop.xlane.xlu0 %6931
        %v6933 = vsel %vm938, %v6913, 0.0
        %6934 = vadd.xlane.f32.xlu0 %v6933
        %v6935 = vpop.xlane.xlu0 %6934
        %v6936 = vsel %vm938, %v6914, 0.0
        %6937 = vadd.xlane.f32.xlu0 %v6936
        %v6938 = vpop.xlane.xlu0 %6937
        %v6939 = vsel %vm938, %v6915, 0.0
        %6940 = vadd.xlane.f32.xlu0 %v6939
        %v6941 = vpop.xlane.xlu0 %6940
        %v6942 = vmul.f32 %v6920, %v3208
        %v6943 = vmul.f32 %v6923, %v3208
        %v6944 = vmul.f32 %v6926, %v3208
        %v6945 = vmul.f32 %v6929, %v3208
        %v6946 = vmul.f32 %v6932, %v3208
        %v6947 = vmul.f32 %v6935, %v3208
        %v6948 = vmul.f32 %v6938, %v3208
        %v6949 = vmul.f32 %v6941, %v3208
        %v6950 = vsub.f32 %v6908, %v6942
        %v6951 = vsub.f32 %v6909, %v6943
        %v6952 = vsub.f32 %v6910, %v6944
        %v6953 = vsub.f32 %v6911, %v6945
        %v6954 = vsub.f32 %v6912, %v6946
        %v6955 = vsub.f32 %v6913, %v6947
        %v6956 = vsub.f32 %v6914, %v6948
        %v6957 = vsub.f32 %v6915, %v6949
        %v6958 = vmul.f32 %v6950, %v6950
        %v6959 = vmul.f32 %v6951, %v6951
        %v6960 = vmul.f32 %v6952, %v6952
        %v6961 = vmul.f32 %v6953, %v6953
        %v6962 = vmul.f32 %v6954, %v6954
        %v6963 = vmul.f32 %v6955, %v6955
        %v6964 = vmul.f32 %v6956, %v6956
        %v6965 = vmul.f32 %v6957, %v6957
        %v6966 = vsel %vm938, %v6958, 0.0
        %6967 = vadd.xlane.f32.xlu0 %v6966
        %v6968 = vpop.xlane.xlu0 %6967
        %v6969 = vsel %vm938, %v6959, 0.0
        %6970 = vadd.xlane.f32.xlu0 %v6969
        %v6971 = vpop.xlane.xlu0 %6970
        %v6972 = vsel %vm938, %v6960, 0.0
        %6973 = vadd.xlane.f32.xlu0 %v6972
        %v6974 = vpop.xlane.xlu0 %6973
        %v6975 = vsel %vm938, %v6961, 0.0
        %6976 = vadd.xlane.f32.xlu0 %v6975
        %v6977 = vpop.xlane.xlu0 %6976
        %v6978 = vsel %vm938, %v6962, 0.0
        %6979 = vadd.xlane.f32.xlu0 %v6978
        %v6980 = vpop.xlane.xlu0 %6979
        %v6981 = vsel %vm938, %v6963, 0.0
        %6982 = vadd.xlane.f32.xlu0 %v6981
        %v6983 = vpop.xlane.xlu0 %6982
        %v6984 = vsel %vm938, %v6964, 0.0
        %6985 = vadd.xlane.f32.xlu0 %v6984
        %v6986 = vpop.xlane.xlu0 %6985
        %v6987 = vsel %vm938, %v6965, 0.0
        %6988 = vadd.xlane.f32.xlu0 %v6987
        %v6989 = vpop.xlane.xlu0 %6988
        %v6990 = vmul.f32 %v6968, %v3208
        %v6991 = vmul.f32 %v6971, %v3208
        %v6992 = vmul.f32 %v6974, %v3208
        %v6993 = vmul.f32 %v6977, %v3208
        %v6994 = vmul.f32 %v6980, %v3208
        %v6995 = vmul.f32 %v6983, %v3208
        %v6996 = vmul.f32 %v6986, %v3208
        %v6997 = vmul.f32 %v6989, %v3208
        %v6998 = vadd.f32 %v6990, 1e-05
        %v6999 = vadd.f32 %v6991, 1e-05
        %v7000 = vadd.f32 %v6992, 1e-05
        %v7001 = vadd.f32 %v6993, 1e-05
        %v7002 = vadd.f32 %v6994, 1e-05
        %v7003 = vadd.f32 %v6995, 1e-05
        %v7004 = vadd.f32 %v6996, 1e-05
        %v7005 = vadd.f32 %v6997, 1e-05
        %v7006 = vrsqrt.pop %v6998
        %v7007 = vrsqrt.pop %v6999
        %v7008 = vrsqrt.pop %v7000
        %v7009 = vrsqrt.pop %v7001
        %v7010 = vrsqrt.pop %v7002
        %v7011 = vrsqrt.pop %v7003
        %v7012 = vrsqrt.pop %v7004
        %v7013 = vrsqrt.pop %v7005
        %v7014 = vmul.f32 %v6950, %v7006
        %v7015 = vmul.f32 %v6951, %v7007
        %v7016 = vmul.f32 %v6952, %v7008
        %v7017 = vmul.f32 %v6953, %v7009
        %v7018 = vmul.f32 %v6954, %v7010
        %v7019 = vmul.f32 %v6955, %v7011
        %v7020 = vmul.f32 %v6956, %v7012
        %v7021 = vmul.f32 %v6957, %v7013
        %v7023 = vlaneseq
        %v7024 = vshrl.u32 %v7023, 7
        %v7025 = vsub.s32 0, %v7024
        %v7026 = vrot.slane %v6916, %v7025
        %v7028 = vmul.f32 %v7014, %v7026
        %v7029 = vmul.f32 %v7015, %v7026
        %v7030 = vmul.f32 %v7016, %v7026
        %v7031 = vmul.f32 %v7017, %v7026
        %v7032 = vmul.f32 %v7018, %v7026
        %v7033 = vmul.f32 %v7019, %v7026
        %v7034 = vmul.f32 %v7020, %v7026
        %v7035 = vmul.f32 %v7021, %v7026
        %v7037 = vlaneseq
        %v7038 = vshrl.u32 %v7037, 7
        %v7039 = vsub.s32 0, %v7038
        %v7040 = vrot.slane %v6917, %v7039
        %v7042 = vadd.f32 %v7028, %v7040
        %v7043 = vadd.f32 %v7029, %v7040
        %v7044 = vadd.f32 %v7030, %v7040
        %v7045 = vadd.f32 %v7031, %v7040
        %v7046 = vadd.f32 %v7032, %v7040
        %v7047 = vadd.f32 %v7033, %v7040
        %v7048 = vadd.f32 %v7034, %v7040
        %v7049 = vadd.f32 %v7035, %v7040
        %v7050 = vld [vmem:[#allocation14] sm:$0xf]
        %v7051 = vld [vmem:[#allocation14 + $0x4] sm:$0xf]
        %v7052 = vld [vmem:[#allocation14 + $0x8] sm:$0xf]
        %v7053 = vld [vmem:[#allocation14 + $0xc] sm:$0xf]
        %v7054 = vld [vmem:[#allocation16] sm:$0x1]
        %v7055 = vld [vmem:[%s21] sm:$0xf]
        %v7056 = vld [vmem:[%s21 + $0x4] sm:$0xf]
        %v7057 = vld [vmem:[%s21 + $0x8] sm:$0xf]
        %v7058 = vld [vmem:[%s21 + $0xc] sm:$0xf]
        %v7059 = vld [vmem:[%s21 + $0x10] sm:$0xf]
        %v7060 = vld [vmem:[%s21 + $0x14] sm:$0xf]
        %v7061 = vld [vmem:[%s21 + $0x18] sm:$0xf]
        %v7062 = vld [vmem:[%s21 + $0x1c] sm:$0xf]
        %v7063 = vld [vmem:[%s21 + $0x20] sm:$0xf]
        %v7064 = vld [vmem:[%s21 + $0x24] sm:$0xf]
        %v7065 = vld [vmem:[%s21 + $0x28] sm:$0xf]
        %v7066 = vld [vmem:[%s21 + $0x2c] sm:$0xf]
        %v7067 = vld [vmem:[%s21 + $0x30] sm:$0xf]
        %v7068 = vld [vmem:[%s21 + $0x34] sm:$0xf]
        %v7069 = vld [vmem:[%s21 + $0x38] sm:$0xf]
        %v7070 = vld [vmem:[%s21 + $0x3c] sm:$0xf]
        %v7071 = vld [vmem:[#allocation17] sm:$0x1]
        %v7072 = vpack.c.bf16 %v7043, %v7042
        %v7073 = vpack.c.bf16 %v7045, %v7044
        %v7074 = vpack.c.bf16 %v7047, %v7046
        %v7075 = vpack.c.bf16 %v7049, %v7048
        %v7077 = vlaneseq
        %v7078 = vshrl.u32 %v7077, 7
        %v7079 = vsub.s32 0, %v7078
        %v7080 = vrot.slane %v7054, %v7079
        %v7086 = vunpack.c.l.b16 %v7050
        %v7087 = vunpack.c.l.b16 %v7051
        %v7088 = vunpack.c.l.b16 %v7052
        %v7089 = vunpack.c.l.b16 %v7053
        %v7090 = vpack.c.b16 %v7087, %v7086
        %v7091 = vpack.c.b16 %v7089, %v7088
        %v7095 = vsel %vm938, %v7072, 0
        %v7098 = vsel %vm938, %v7073, 0
        %v7101 = vsel %vm938, %v7074, 0
        %v7104 = vsel %vm938, %v7075, 0
        %7106 = vmatprep.subr.bf16.mxu0 0
        %7107 = vmatpush1.bf16.msra.mxu0 0
        %7108 = vmatprep.subr.bf16.mxu0 0
        %7109 = vmatpush1.bf16.msra.mxu0 0
        %7110 = vmatprep.subr.bf16.mxu0 0
        %7111 = vmatpush1.bf16.msra.mxu0 0
        %7112 = vmatprep.subr.bf16.mxu0 0
        %7113 = vmatpush1.bf16.msra.mxu0 0
        %7114 = vmatprep.subr.bf16.mxu0 0
        %7115 = vmatpush1.bf16.msra.mxu0 0
        %7116 = vmatprep.subr.bf16.mxu0 0
        %7117 = vmatpush1.bf16.msra.mxu0 0
        %7118 = vmatprep.subr.bf16.mxu0 0
        %7119 = vmatpush1.bf16.msra.mxu0 %v7091
        %7120 = vmatprep.subr.bf16.mxu0 0
        %7121 = vmatpush1.bf16.msra.mxu0 %v7090
        %7122 = vmatprep.subr.bf16.mxu0 0
        %7123 = vmatpush2.bf16.msra.mxu0 0
        %7124 = vmatprep.subr.bf16.mxu0 0
        %7125 = vmatpush2.bf16.msra.mxu0 0
        %7126 = vmatprep.subr.bf16.mxu0 0
        %7127 = vmatpush2.bf16.msra.mxu0 0
        %7128 = vmatprep.subr.bf16.mxu0 0
        %7129 = vmatpush2.bf16.msra.mxu0 0
        %7130 = vmatprep.subr.bf16.mxu0 0
        %7131 = vmatpush2.bf16.msra.mxu0 0
        %7132 = vmatprep.subr.bf16.mxu0 0
        %7133 = vmatpush2.bf16.msra.mxu0 0
        %7134 = vmatprep.subr.bf16.mxu0 0
        %7135 = vmatpush2.bf16.msra.mxu0 0
        %7136 = vmatprep.subr.bf16.mxu0 0
        %7137 = vmatpush2.bf16.msra.mxu0 0
        %7138 = vmatprep.mubr.bf16.mxu0 0
        %7139 = vmatmul.mubr.bf16.gmra.mxu0 %v7095
        %v7140 = vpop.f32.mrf.mxu0
        %v7141 = vadd.f32 %v7080, %v7140
        %v7142 = vpop.f32.mrf.mxu0
        %v7143 = vpop.f32.mrf.mxu0
        %v7144 = vadd.f32 %v7080, %v7143
        %v7145 = vpop.f32.mrf.mxu0
        %7146 = vmatprep.mubr.bf16.mxu0 0
        %7147 = vmatmul.mubr.bf16.gmra.mxu0 %v7098
        %v7148 = vpop.f32.mrf.mxu0
        %v7149 = vadd.f32 %v7080, %v7148
        %v7150 = vpop.f32.mrf.mxu0
        %v7151 = vpop.f32.mrf.mxu0
        %v7152 = vadd.f32 %v7080, %v7151
        %v7153 = vpop.f32.mrf.mxu0
        %7154 = vmatprep.mubr.bf16.mxu0 0
        %7155 = vmatmul.mubr.bf16.gmra.mxu0 %v7101
        %v7156 = vpop.f32.mrf.mxu0
        %v7157 = vadd.f32 %v7080, %v7156
        %v7158 = vpop.f32.mrf.mxu0
        %v7159 = vpop.f32.mrf.mxu0
        %v7160 = vadd.f32 %v7080, %v7159
        %v7161 = vpop.f32.mrf.mxu0
        %7162 = vmatprep.mubr.bf16.mxu0 0
        %7163 = vmatmul.mubr.bf16.gmra.mxu0 %v7104
        %v7164 = vpop.f32.mrf.mxu0
        %v7165 = vadd.f32 %v7080, %v7164
        %v7166 = vpop.f32.mrf.mxu0
        %v7167 = vpop.f32.mrf.mxu0
        %v7168 = vadd.f32 %v7080, %v7167
        %v7169 = vpop.f32.mrf.mxu0
        %7170 = vdwg.mxu0
        %v7171 = vmul.f32 %v7141, %v7141
        %v7172 = vmul.f32 %v7144, %v7144
        %v7173 = vmul.f32 %v7149, %v7149
        %v7174 = vmul.f32 %v7152, %v7152
        %v7175 = vmul.f32 %v7157, %v7157
        %v7176 = vmul.f32 %v7160, %v7160
        %v7177 = vmul.f32 %v7165, %v7165
        %v7178 = vmul.f32 %v7168, %v7168
        %v7179 = vmul.f32 %v7141, %v7171
        %v7180 = vmul.f32 %v7144, %v7172
        %v7181 = vmul.f32 %v7149, %v7173
        %v7182 = vmul.f32 %v7152, %v7174
        %v7183 = vmul.f32 %v7157, %v7175
        %v7184 = vmul.f32 %v7160, %v7176
        %v7185 = vmul.f32 %v7165, %v7177
        %v7186 = vmul.f32 %v7168, %v7178
        %v7187 = vmul.f32 %v7179, 0.044715
        %v7188 = vmul.f32 %v7180, 0.044715
        %v7189 = vmul.f32 %v7181, 0.044715
        %v7190 = vmul.f32 %v7182, 0.044715
        %v7191 = vmul.f32 %v7183, 0.044715
        %v7192 = vmul.f32 %v7184, 0.044715
        %v7193 = vmul.f32 %v7185, 0.044715
        %v7194 = vmul.f32 %v7186, 0.044715
        %v7195 = vadd.f32 %v7141, %v7187
        %v7196 = vadd.f32 %v7144, %v7188
        %v7197 = vadd.f32 %v7149, %v7189
        %v7198 = vadd.f32 %v7152, %v7190
        %v7199 = vadd.f32 %v7157, %v7191
        %v7200 = vadd.f32 %v7160, %v7192
        %v7201 = vadd.f32 %v7165, %v7193
        %v7202 = vadd.f32 %v7168, %v7194
        %v7203 = vmul.f32 %v7195, 0.7978846
        %v7204 = vmul.f32 %v7196, 0.7978846
        %v7205 = vmul.f32 %v7197, 0.7978846
        %v7206 = vmul.f32 %v7198, 0.7978846
        %v7207 = vmul.f32 %v7199, 0.7978846
        %v7208 = vmul.f32 %v7200, 0.7978846
        %v7209 = vmul.f32 %v7201, 0.7978846
        %v7210 = vmul.f32 %v7202, 0.7978846
        %v7211 = vtanh.pop %v7203
        %v7212 = vtanh.pop %v7204
        %v7213 = vtanh.pop %v7205
        %v7214 = vtanh.pop %v7206
        %v7215 = vtanh.pop %v7207
        %v7216 = vtanh.pop %v7208
        %v7217 = vtanh.pop %v7209
        %v7218 = vtanh.pop %v7210
        %v7219 = vadd.f32 %v7211, 1.0
        %v7220 = vadd.f32 %v7212, 1.0
        %v7221 = vadd.f32 %v7213, 1.0
        %v7222 = vadd.f32 %v7214, 1.0
        %v7223 = vadd.f32 %v7215, 1.0
        %v7224 = vadd.f32 %v7216, 1.0
        %v7225 = vadd.f32 %v7217, 1.0
        %v7226 = vadd.f32 %v7218, 1.0
        %v7227 = vmul.f32 %v7219, 0.5
        %v7228 = vmul.f32 %v7220, 0.5
        %v7229 = vmul.f32 %v7221, 0.5
        %v7230 = vmul.f32 %v7222, 0.5
        %v7231 = vmul.f32 %v7223, 0.5
        %v7232 = vmul.f32 %v7224, 0.5
        %v7233 = vmul.f32 %v7225, 0.5
        %v7234 = vmul.f32 %v7226, 0.5
        %v7235 = vmul.f32 %v7141, %v7227
        %v7236 = vmul.f32 %v7144, %v7228
        %v7237 = vmul.f32 %v7149, %v7229
        %v7238 = vmul.f32 %v7152, %v7230
        %v7239 = vmul.f32 %v7157, %v7231
        %v7240 = vmul.f32 %v7160, %v7232
        %v7241 = vmul.f32 %v7165, %v7233
        %v7242 = vmul.f32 %v7168, %v7234
        %v7243 = vpack.c.bf16 %v7236, %v7235
        %v7244 = vpack.c.bf16 %v7238, %v7237
        %v7245 = vpack.c.bf16 %v7240, %v7239
        %v7246 = vpack.c.bf16 %v7242, %v7241
        %v7248 = vlaneseq
        %v7249 = vshrl.u32 %v7248, 7
        %v7250 = vsub.s32 0, %v7249
        %v7251 = vrot.slane %v7071, %v7250
        %v7269 = vunpack.c.l.b16 %v7055
        %v7270 = vunpack.c.l.b16 %v7056
        %v7271 = vunpack.c.l.b16 %v7057
        %v7272 = vunpack.c.l.b16 %v7058
        %v7273 = vunpack.c.l.b16 %v7059
        %v7274 = vunpack.c.l.b16 %v7060
        %v7275 = vunpack.c.l.b16 %v7061
        %v7276 = vunpack.c.l.b16 %v7062
        %v7277 = vunpack.c.l.b16 %v7063
        %v7278 = vunpack.c.l.b16 %v7064
        %v7279 = vunpack.c.l.b16 %v7065
        %v7280 = vunpack.c.l.b16 %v7066
        %v7281 = vunpack.c.l.b16 %v7067
        %v7282 = vunpack.c.l.b16 %v7068
        %v7283 = vunpack.c.l.b16 %v7069
        %v7284 = vunpack.c.l.b16 %v7070
        %v7285 = vpack.c.b16 %v7270, %v7269
        %v7286 = vpack.c.b16 %v7272, %v7271
        %v7287 = vpack.c.b16 %v7274, %v7273
        %v7288 = vpack.c.b16 %v7276, %v7275
        %v7289 = vpack.c.b16 %v7278, %v7277
        %v7290 = vpack.c.b16 %v7280, %v7279
        %v7291 = vpack.c.b16 %v7282, %v7281
        %v7292 = vpack.c.b16 %v7284, %v7283
        %7301 = vmatprep.subr.bf16.mxu0 0
        %7302 = vmatpush1.bf16.msra.mxu0 %v7292
        %7303 = vmatprep.subr.bf16.mxu0 0
        %7304 = vmatpush1.bf16.msra.mxu0 %v7291
        %7305 = vmatprep.subr.bf16.mxu0 0
        %7306 = vmatpush1.bf16.msra.mxu0 %v7290
        %7307 = vmatprep.subr.bf16.mxu0 0
        %7308 = vmatpush1.bf16.msra.mxu0 %v7289
        %7309 = vmatprep.subr.bf16.mxu0 0
        %7310 = vmatpush1.bf16.msra.mxu0 %v7288
        %7311 = vmatprep.subr.bf16.mxu0 0
        %7312 = vmatpush1.bf16.msra.mxu0 %v7287
        %7313 = vmatprep.subr.bf16.mxu0 0
        %7314 = vmatpush1.bf16.msra.mxu0 %v7286
        %7315 = vmatprep.subr.bf16.mxu0 0
        %7316 = vmatpush1.bf16.msra.mxu0 %v7285
        %7317 = vmatprep.subr.bf16.mxu0 0
        %7318 = vmatpush2.bf16.msra.mxu0 0
        %7319 = vmatprep.subr.bf16.mxu0 0
        %7320 = vmatpush2.bf16.msra.mxu0 0
        %7321 = vmatprep.subr.bf16.mxu0 0
        %7322 = vmatpush2.bf16.msra.mxu0 0
        %7323 = vmatprep.subr.bf16.mxu0 0
        %7324 = vmatpush2.bf16.msra.mxu0 0
        %7325 = vmatprep.subr.bf16.mxu0 0
        %7326 = vmatpush2.bf16.msra.mxu0 0
        %7327 = vmatprep.subr.bf16.mxu0 0
        %7328 = vmatpush2.bf16.msra.mxu0 0
        %7329 = vmatprep.subr.bf16.mxu0 0
        %7330 = vmatpush2.bf16.msra.mxu0 0
        %7331 = vmatprep.subr.bf16.mxu0 0
        %7332 = vmatpush2.bf16.msra.mxu0 0
        %7333 = vmatprep.mubr.bf16.mxu0 0
        %7334 = vmatmul.mubr.bf16.gmra.mxu0 %v7243
        %v7335 = vpop.f32.mrf.mxu0
        %v7336 = vadd.f32 %v7251, %v7335
        %v7337 = vpop.f32.mrf.mxu0
        %v7338 = vpop.f32.mrf.mxu0
        %v7339 = vadd.f32 %v7251, %v7338
        %v7340 = vpop.f32.mrf.mxu0
        %7341 = vmatprep.mubr.bf16.mxu0 0
        %7342 = vmatmul.mubr.bf16.gmra.mxu0 %v7244
        %v7343 = vpop.f32.mrf.mxu0
        %v7344 = vadd.f32 %v7251, %v7343
        %v7345 = vpop.f32.mrf.mxu0
        %v7346 = vpop.f32.mrf.mxu0
        %v7347 = vadd.f32 %v7251, %v7346
        %v7348 = vpop.f32.mrf.mxu0
        %7349 = vmatprep.mubr.bf16.mxu0 0
        %7350 = vmatmul.mubr.bf16.gmra.mxu0 %v7245
        %v7351 = vpop.f32.mrf.mxu0
        %v7352 = vadd.f32 %v7251, %v7351
        %v7353 = vpop.f32.mrf.mxu0
        %v7354 = vpop.f32.mrf.mxu0
        %v7355 = vadd.f32 %v7251, %v7354
        %v7356 = vpop.f32.mrf.mxu0
        %7357 = vmatprep.mubr.bf16.mxu0 0
        %7358 = vmatmul.mubr.bf16.gmra.mxu0 %v7246
        %v7359 = vpop.f32.mrf.mxu0
        %v7360 = vadd.f32 %v7251, %v7359
        %v7361 = vpop.f32.mrf.mxu0
        %v7362 = vpop.f32.mrf.mxu0
        %v7363 = vadd.f32 %v7251, %v7362
        %v7364 = vpop.f32.mrf.mxu0
        %7365 = vdwg.mxu0
        %v7366 = vadd.f32 %v7042, %v7336
        %v7367 = vadd.f32 %v7043, %v7339
        %v7368 = vadd.f32 %v7044, %v7344
        %v7369 = vadd.f32 %v7045, %v7347
        %v7370 = vadd.f32 %v7046, %v7352
        %v7371 = vadd.f32 %v7047, %v7355
        %v7372 = vadd.f32 %v7048, %v7360
        %v7373 = vadd.f32 %v7049, %v7363
        %v7374 = vld [vmem:[%s23] sm:$0x1]
        %v7375 = vld [vmem:[%s24] sm:$0x1]
        %v7376 = vsel %vm938, %v7366, 0.0
        %7377 = vadd.xlane.f32.xlu0 %v7376
        %v7378 = vpop.xlane.xlu0 %7377
        %v7379 = vsel %vm938, %v7367, 0.0
        %7380 = vadd.xlane.f32.xlu0 %v7379
        %v7381 = vpop.xlane.xlu0 %7380
        %v7382 = vsel %vm938, %v7368, 0.0
        %7383 = vadd.xlane.f32.xlu0 %v7382
        %v7384 = vpop.xlane.xlu0 %7383
        %v7385 = vsel %vm938, %v7369, 0.0
        %7386 = vadd.xlane.f32.xlu0 %v7385
        %v7387 = vpop.xlane.xlu0 %7386
        %v7388 = vsel %vm938, %v7370, 0.0
        %7389 = vadd.xlane.f32.xlu0 %v7388
        %v7390 = vpop.xlane.xlu0 %7389
        %v7391 = vsel %vm938, %v7371, 0.0
        %7392 = vadd.xlane.f32.xlu0 %v7391
        %v7393 = vpop.xlane.xlu0 %7392
        %v7394 = vsel %vm938, %v7372, 0.0
        %7395 = vadd.xlane.f32.xlu0 %v7394
        %v7396 = vpop.xlane.xlu0 %7395
        %v7397 = vsel %vm938, %v7373, 0.0
        %7398 = vadd.xlane.f32.xlu0 %v7397
        %v7399 = vpop.xlane.xlu0 %7398
        %v7400 = vmul.f32 %v7378, %v3208
        %v7401 = vmul.f32 %v7381, %v3208
        %v7402 = vmul.f32 %v7384, %v3208
        %v7403 = vmul.f32 %v7387, %v3208
        %v7404 = vmul.f32 %v7390, %v3208
        %v7405 = vmul.f32 %v7393, %v3208
        %v7406 = vmul.f32 %v7396, %v3208
        %v7407 = vmul.f32 %v7399, %v3208
        %v7408 = vsub.f32 %v7366, %v7400
        %v7409 = vsub.f32 %v7367, %v7401
        %v7410 = vsub.f32 %v7368, %v7402
        %v7411 = vsub.f32 %v7369, %v7403
        %v7412 = vsub.f32 %v7370, %v7404
        %v7413 = vsub.f32 %v7371, %v7405
        %v7414 = vsub.f32 %v7372, %v7406
        %v7415 = vsub.f32 %v7373, %v7407
        %v7416 = vmul.f32 %v7408, %v7408
        %v7417 = vmul.f32 %v7409, %v7409
        %v7418 = vmul.f32 %v7410, %v7410
        %v7419 = vmul.f32 %v7411, %v7411
        %v7420 = vmul.f32 %v7412, %v7412
        %v7421 = vmul.f32 %v7413, %v7413
        %v7422 = vmul.f32 %v7414, %v7414
        %v7423 = vmul.f32 %v7415, %v7415
        %v7424 = vsel %vm938, %v7416, 0.0
        %7425 = vadd.xlane.f32.xlu0 %v7424
        %v7426 = vpop.xlane.xlu0 %7425
        %v7427 = vsel %vm938, %v7417, 0.0
        %7428 = vadd.xlane.f32.xlu0 %v7427
        %v7429 = vpop.xlane.xlu0 %7428
        %v7430 = vsel %vm938, %v7418, 0.0
        %7431 = vadd.xlane.f32.xlu0 %v7430
        %v7432 = vpop.xlane.xlu0 %7431
        %v7433 = vsel %vm938, %v7419, 0.0
        %7434 = vadd.xlane.f32.xlu0 %v7433
        %v7435 = vpop.xlane.xlu0 %7434
        %v7436 = vsel %vm938, %v7420, 0.0
        %7437 = vadd.xlane.f32.xlu0 %v7436
        %v7438 = vpop.xlane.xlu0 %7437
        %v7439 = vsel %vm938, %v7421, 0.0
        %7440 = vadd.xlane.f32.xlu0 %v7439
        %v7441 = vpop.xlane.xlu0 %7440
        %v7442 = vsel %vm938, %v7422, 0.0
        %7443 = vadd.xlane.f32.xlu0 %v7442
        %v7444 = vpop.xlane.xlu0 %7443
        %v7445 = vsel %vm938, %v7423, 0.0
        %7446 = vadd.xlane.f32.xlu0 %v7445
        %v7447 = vpop.xlane.xlu0 %7446
        %v7448 = vmul.f32 %v7426, %v3208
        %v7449 = vmul.f32 %v7429, %v3208
        %v7450 = vmul.f32 %v7432, %v3208
        %v7451 = vmul.f32 %v7435, %v3208
        %v7452 = vmul.f32 %v7438, %v3208
        %v7453 = vmul.f32 %v7441, %v3208
        %v7454 = vmul.f32 %v7444, %v3208
        %v7455 = vmul.f32 %v7447, %v3208
        %v7456 = vadd.f32 %v7448, 1e-05
        %v7457 = vadd.f32 %v7449, 1e-05
        %v7458 = vadd.f32 %v7450, 1e-05
        %v7459 = vadd.f32 %v7451, 1e-05
        %v7460 = vadd.f32 %v7452, 1e-05
        %v7461 = vadd.f32 %v7453, 1e-05
        %v7462 = vadd.f32 %v7454, 1e-05
        %v7463 = vadd.f32 %v7455, 1e-05
        %v7464 = vrsqrt.pop %v7456
        %v7465 = vrsqrt.pop %v7457
        %v7466 = vrsqrt.pop %v7458
        %v7467 = vrsqrt.pop %v7459
        %v7468 = vrsqrt.pop %v7460
        %v7469 = vrsqrt.pop %v7461
        %v7470 = vrsqrt.pop %v7462
        %v7471 = vrsqrt.pop %v7463
        %v7472 = vmul.f32 %v7408, %v7464
        %v7473 = vmul.f32 %v7409, %v7465
        %v7474 = vmul.f32 %v7410, %v7466
        %v7475 = vmul.f32 %v7411, %v7467
        %v7476 = vmul.f32 %v7412, %v7468
        %v7477 = vmul.f32 %v7413, %v7469
        %v7478 = vmul.f32 %v7414, %v7470
        %v7479 = vmul.f32 %v7415, %v7471
        %v7481 = vlaneseq
        %v7482 = vshrl.u32 %v7481, 7
        %v7483 = vsub.s32 0, %v7482
        %v7484 = vrot.slane %v7374, %v7483
        %v7486 = vmul.f32 %v7472, %v7484
        %v7487 = vmul.f32 %v7473, %v7484
        %v7488 = vmul.f32 %v7474, %v7484
        %v7489 = vmul.f32 %v7475, %v7484
        %v7490 = vmul.f32 %v7476, %v7484
        %v7491 = vmul.f32 %v7477, %v7484
        %v7492 = vmul.f32 %v7478, %v7484
        %v7493 = vmul.f32 %v7479, %v7484
        %v7495 = vlaneseq
        %v7496 = vshrl.u32 %v7495, 7
        %v7497 = vsub.s32 0, %v7496
        %v7498 = vrot.slane %v7375, %v7497
        %v7500 = vadd.f32 %v7486, %v7498
        %v7501 = vadd.f32 %v7487, %v7498
        %v7502 = vadd.f32 %v7488, %v7498
        %v7503 = vadd.f32 %v7489, %v7498
        %v7504 = vadd.f32 %v7490, %v7498
        %v7505 = vadd.f32 %v7491, %v7498
        %v7506 = vadd.f32 %v7492, %v7498
        %v7507 = vadd.f32 %v7493, %v7498
        %7508 = vst.msk [vmem:[%s891] sm:$0xff] %vm938, %v7500
        %7509 = vst.msk [vmem:[%s891 + $0x8] sm:$0xff] %vm938, %v7501
        %7510 = vst.msk [vmem:[%s891 + $0x10] sm:$0xff] %vm938, %v7502
        %7511 = vst.msk [vmem:[%s891 + $0x18] sm:$0xff] %vm938, %v7503
        %7512 = vst.msk [vmem:[%s891 + $0x20] sm:$0xff] %vm938, %v7504
        %7513 = vst.msk [vmem:[%s891 + $0x28] sm:$0xff] %vm938, %v7505
        %7514 = vst.msk [vmem:[%s891 + $0x30] sm:$0xff] %vm938, %v7506
        %7515 = vst.msk [vmem:[%s891 + $0x38] sm:$0xff] %vm938, %v7507
        %s7516 = sand.u32 %s583, 1
        %s7517 = scalar_lea.sflag [#allocation4], %s7516
        %s7518 = sand.u32 %s583, 1
        %s7519 = smul.addr %s7518, 64
        %s7520 = scalar_lea.vmem [#allocation19], %s7519
        // Predicated region
        $region161: #{mwin_attention_layer_forward.1} parent=119 // pred_check
          %p7521 = pneg %p593
        $region162: #{mwin_attention_layer_forward.1} parent=119 // pred_check_branch
          %7523 = sbr.rel (%p7521) target = $region164
        $region163: #{mwin_attention_layer_forward.1} parent=119 // pred_region
          %s7525 = ssub.s32 1024, 1024
          %7526 = vsyncadd %s7517, %s7525
          %s7527 = smul.addr %s45, 8
          %s7528 = smul.addr %s7527, 128
          %s7529 = scalar_lea.hbm %s25, %s7528
          %s7530 = sshll.u32 %s7520, 4
          %s7531 = int_to_ptr.vmem [resolvable:$true] %s7530
          %7536 = dma.vmem_to_hbm [thread:$0]  %s7531, 1024, %s7529, %s7517, 128, 128, 8
        $region164: #{mwin_attention_layer_forward.1} parent=119 // pred_fallthru
          _
      $region120: #{mwin_attention_layer_forward.1} parent=5 // pred_fallthru
        _
      %p7537 = scmp.le.s32.totalorder 2, %s40
      // Predicated region
      $region165: #{mwin_attention_layer_forward.1} parent=5 // pred_check
        %p7538 = pneg %p7537
      $region166: #{mwin_attention_layer_forward.1} parent=5 // pred_check_branch
        %7540 = sbr.rel (%p7538) target = $region168
      $region167: #{mwin_attention_layer_forward.1} parent=5 // pred_region
        %s7541 = ssub.s32 %s40, 2
        // Predicated region
        $region169: #{mwin_attention_layer_forward.1} parent=167 // pred_check
          %p7542 = pneg %p599
        $region170: #{mwin_attention_layer_forward.1} parent=167 // pred_check_branch
          %7544 = sbr.rel (%p7542) target = $region172
        $region171: #{mwin_attention_layer_forward.1} parent=167 // pred_region
          %s7545 = sand.u32 %s584, 1
          %s7546 = scalar_lea.sflag [#allocation4], %s7545
          %s7547 = sand.u32 %s584, 1
          %s7548 = smul.addr %s7547, 64
          %s7549 = scalar_lea.vmem [#allocation19], %s7548
          %7550 = dma.done %s7546, 1024
        $region172: #{mwin_attention_layer_forward.1} parent=167 // pred_fallthru
          _
      $region168: #{mwin_attention_layer_forward.1} parent=5 // pred_fallthru
        _
    $region6: #{mwin_attention_layer_forward.1} parent=1 // loop_footer
      %s44 = sadd.s32 1, %s40
    $region7: #{mwin_attention_layer_forward.1} parent=1 // loop_footer_branch
      %39 = sbr.rel target = $region3
    $region8: #{mwin_attention_layer_forward.1} parent=1 // loop_exit
      _
    %7551 = vsyncpa [#allocation3], 1
    %s7552 = scalar_lea.sflag [#allocation3], 1
    %7553 = vsyncpa %s7552, 1
    %7554 = vsyncpa [#allocation6], 1
    %7555 = vsyncpa [#allocation9], 1
    %7556 = vsyncpa [#allocation12], 1
    %7557 = vsyncpa [#allocation15], 1
    %7558 = vsyncpa [#allocation18], 1
    %7559 = vsyncpa [#allocation4], 1
    %s7560 = scalar_lea.sflag [#allocation4], 1
    %7561 = vsyncpa %s7560, 1

</llo_original>
